<compile_context>
chip_gen: v7x
topology: tpu7x:2x2x1
jax: 0.10.0
libtpu: 0.0.40
codegen_flags: <defaults>
</compile_context>

<pallas_src>
import jax
import jax.numpy as jnp
from jax.experimental import pallas as pl
from jax.experimental.pallas import tpu as pltpu

HISTORICAL_STEPS = 8
EMBED_DIM = 32
EDGE_DIM = 2
NUM_HEADS = 8
NUM_LAYERS = 3
N_NODES = 16
LN_EPS = 1e-5


def _dot(a, b):
    # f32 matmul (used only for LayerNorm statistics inside the MIE).
    return jnp.dot(a, b, preferred_element_type=jnp.float32)


def _dotb(a, b):
    # bf16-operand MXU matmul with f32 accumulation.
    return jnp.dot(a.astype(jnp.bfloat16), b.astype(jnp.bfloat16),
                   preferred_element_type=jnp.float32)


def _layer_norm(x, g, b):
    mu = jnp.mean(x, axis=-1, keepdims=True)
    var = jnp.mean((x - mu) ** 2, axis=-1, keepdims=True)
    return (x - mu) * jax.lax.rsqrt(var + LN_EPS) * g + b


# ----------------------------------------------------------------------------
# Fused kernel: MultipleInputEmbedding (edges) + 3 GlobalInteractorLayers
# ----------------------------------------------------------------------------
def _fused_kernel(pa_ref, mask_ref, x0_ref, csts_ref, re_ref,
                  wkve_ref, wslab_ref, wm1_ref, wm2_ref, bw_ref, b32_ref,
                  out_ref, kve_scr):
    n, d = N_NODES, EMBED_DIM

    m16 = csts_ref[0:d, :]          # [32,32] per-16-half LN averaging matrix
    hbs = csts_ref[d:2 * d, :]      # [32,32] head-sum+broadcast, pre-scaled

    # ---------------- MultipleInputEmbedding over all N*N edges -------------
    re_w2 = re_ref[0:d, :]
    re_aw = re_ref[d:2 * d, :]
    re_w1 = re_ref[2 * d:2 * d + 2 * EDGE_DIM, :]          # [4,32] block-diag
    pb = re_ref[2 * d + 8:2 * d + 17, :]                   # [9,32] bias/LN stack

    hcat = _dotb(pa_ref[...], re_w1) + pb[0:1, :]          # [E,32] = [h0 | h1]
    mu = _dot(hcat, m16)                                   # per-half mean
    c = hcat - mu
    var = _dot(c * c, m16)                                 # per-half variance
    hn = c * jax.lax.rsqrt(var + LN_EPS) * pb[1:2, :] + pb[2:3, :]
    s = _dotb(jnp.maximum(hn, 0.0), re_w2) + pb[3:4, :]    # sum of both branches
    a = jnp.maximum(_layer_norm(s, pb[4:5, :], pb[5:6, :]), 0.0)
    a = _dotb(a, re_aw) + pb[6:7, :]
    rel = _layer_norm(a, pb[7:8, :], pb[8:9, :])           # [E,32] rel_embed

    # -------- layer-invariant edge K/V for ALL layers in one wide matmul ----
    kve_scr[...] = _dotb(rel, wkve_ref[...])               # [E, L*64]

    mask3 = mask_ref[...].reshape(n, n, 1)                 # [N,N,1] (tgt, src)
    x = x0_ref[...]                                        # [N,32]

    for l in range(NUM_LAYERS):                            # unrolled
        b32 = b32_ref[l]                                   # [8,32]
        bw = bw_ref[l]                                     # [2,160]
        wsl = wslab_ref[l]                                 # [32,224]

        xn = _layer_norm(x, b32[3:4, :], b32[4:5, :])      # norm1(x)
        # one MXU call for every projection whose LHS is xn
        y = _dotb(xn, wsl[:, 0:5 * d]) + bw[0:1, :]        # [16,160]
        q = y[:, 0:d]
        kvn = y[:, d:3 * d]                                # [k_node | v_node]
        self_x = y[:, 3 * d:4 * d]
        hh_x = y[:, 4 * d:5 * d]

        # per-edge k|v: edge part (hoisted) + source-node part (broadcast)
        kv3 = (kve_scr[:, l * 2 * d:(l + 1) * 2 * d].reshape(n, n, 2 * d)
               + kvn[None, :, :])                          # [N,N,64]
        k3 = kv3[:, :, 0:d]
        v3 = kv3[:, :, d:2 * d]

        # logits: per-head dot, summed & broadcast across head dims (32 lanes)
        s_pre = (q[:, None, :] * k3).reshape(n * n, d)     # [E,32]
        logits3 = _dotb(s_pre, hbs).reshape(n, n, d)       # scaled, head-bcast
        logits3 = jnp.where(mask3 > 0.0, logits3, -1e30)
        m3 = jnp.max(logits3, axis=1, keepdims=True)       # per-(target,head) max
        p3 = jnp.exp(logits3 - m3) * mask3                 # keep explicit mask
        num = jnp.sum(p3 * v3, axis=1)                     # [N,32] weighted vals
        den = jnp.sum(p3, axis=1)                          # [N,32] denom (bcast)
        inputs = num / jnp.maximum(den, 1e-20)             # exact softmax norm

        # update(): GRU-style gate + out_proj
        gate = jax.nn.sigmoid(_dotb(inputs, wsl[:, 5 * d:6 * d]) + b32[0:1, :]
                              + hh_x)
        upd = inputs + gate * (self_x - inputs)
        mha = _dotb(upd, wsl[:, 6 * d:7 * d]) + b32[1:2, :]

        x = x + mha
        xn2 = _layer_norm(x, b32[5:6, :], b32[6:7, :])     # norm2
        hmlp = jnp.maximum(_dotb(xn2, wm1_ref[l]) + bw[1:2, 0:4 * d], 0.0)
        x = x + _dotb(hmlp, wm2_ref[l]) + b32[2:3, :]

    out_ref[...] = x


# ----------------------------------------------------------------------------
# Wrapper-side constants (fold at trace time under jit)
# ----------------------------------------------------------------------------
def _build_constants():
    d = EMBED_DIM
    hd = d // NUM_HEADS
    half = d // 2
    i = jnp.arange(d)
    m16 = ((i[:, None] // half) == (i[None, :] // half)).astype(jnp.float32) / half
    hbs = ((i[:, None] // hd) == (i[None, :] // hd)).astype(jnp.float32) / (hd ** 0.5)
    return jnp.concatenate([m16, hbs], axis=0)             # [64,32]


def _scene_spec(a):
    return pl.BlockSpec((None,) + tuple(a.shape[1:]),
                        lambda b: (b,) + (0,) * (a.ndim - 1))


def _full_spec(a):
    nd = a.ndim
    return pl.BlockSpec(tuple(a.shape), lambda b, _nd=nd: (0,) * _nd)


# ----------------------------------------------------------------------------
# GlobalInteractor.forward, batched over scenes (single fused pallas_call)
# ----------------------------------------------------------------------------
@jax.jit
def global_interactor_forward(positions, padding_mask, rotate_angles,
                              local_embed, packed_params):
    """positions [B,N,T,2], padding_mask [B,N,T] bool, rotate_angles [B,N,T],
    local_embed [B,N,D] -> [B,N,D]."""
    bsz, n = positions.shape[0], positions.shape[1]
    t = HISTORICAL_STEPS
    pos_t = positions[:, :, t - 1]
    theta = rotate_angles[:, :, t - 1]
    valid = jnp.logical_not(padding_mask[:, :, t - 1])

    cos, sin = jnp.cos(theta), jnp.sin(theta)
    rot = jnp.stack([jnp.stack([cos, -sin], -1),
                     jnp.stack([sin, cos], -1)], -2)                  # [B,N,2,2]
    rel_raw = pos_t[:, None, :, :] - pos_t[:, :, None, :]             # pos[j]-pos[i]
    rel_pos = jnp.einsum('bijk,bikl->bijl', rel_raw, rot)
    rel_theta = theta[:, None, :] - theta[:, :, None]
    ang = jnp.stack([jnp.cos(rel_theta), jnp.sin(rel_theta)], -1)

    eye = jnp.eye(n, dtype=bool)[None]
    mask = valid[:, :, None] & valid[:, None, :] & jnp.logical_not(eye)
    mask_e = mask.astype(jnp.float32).reshape(bsz, n * n, 1)
    pa = jnp.concatenate([rel_pos.reshape(bsz, n * n, EDGE_DIM),
                          ang.reshape(bsz, n * n, EDGE_DIM)],
                         axis=-1).astype(jnp.float32)
    x0 = local_embed.astype(jnp.float32)

    csts = _build_constants()
    args = (pa, mask_e, x0, csts) + tuple(packed_params)
    in_specs = ([_scene_spec(pa), _scene_spec(mask_e), _scene_spec(x0)]
                + [_full_spec(a) for a in args[3:]])

    out = pl.pallas_call(
        _fused_kernel,
        out_shape=jax.ShapeDtypeStruct((bsz, n, EMBED_DIM), jnp.float32),
        grid=(bsz,),
        in_specs=in_specs,
        out_specs=pl.BlockSpec((None, n, EMBED_DIM), lambda b: (b, 0, 0)),
        scratch_shapes=[pltpu.VMEM((n * n, NUM_LAYERS * 2 * EMBED_DIM),
                                   jnp.float32)],
        compiler_params=pltpu.CompilerParams(dimension_semantics=("parallel",)),
    )(*args)
    # TODO(synk): the original GlobalInteractor's nearby/far boolean-mask output
    # split has a data-dependent shape; callers must do it eagerly outside jit.
    return out


# ----------------------------------------------------------------------------
# Parameter init (mirrors init_weights) + packing into kernel slabs (run ONCE)
# ----------------------------------------------------------------------------
def _xavier(key, fan_in, fan_out):
    bound = (6.0 / (fan_in + fan_out)) ** 0.5
    return jax.random.uniform(key, (fan_in, fan_out), jnp.float32, -bound, bound)


def _linear(key, fan_in, fan_out):
    return _xavier(key, fan_in, fan_out), jnp.zeros((1, fan_out), jnp.float32)


def _ln_params(dim):
    return jnp.ones((1, dim), jnp.float32), jnp.zeros((1, dim), jnp.float32)


def init_rel_embed_params(key):
    d = EMBED_DIM
    ks = jax.random.split(key, 5)
    w0a, b0a = _linear(ks[0], EDGE_DIM, d // 2); g0, be0 = _ln_params(d // 2)
    w0b, b0b = _linear(ks[1], d // 2, d)
    w1a, b1a = _linear(ks[2], EDGE_DIM, d // 2); g1, be1 = _ln_params(d // 2)
    w1b, b1b = _linear(ks[3], d // 2, d)
    ag1, ab1 = _ln_params(d)
    aw, ab = _linear(ks[4], d, d)
    ag2, ab2 = _ln_params(d)
    return (w0a, b0a, g0, be0, w0b, b0b, w1a, b1a, g1, be1, w1b, b1b,
            ag1, ab1, aw, ab, ag2, ab2)


def init_layer_params(key):
    d = EMBED_DIM
    ks = jax.random.split(key, 11)
    wq, bq = _linear(ks[0], d, d)
    wkn, bkn = _linear(ks[1], d, d)
    wke, bke = _linear(ks[2], d, d)
    wvn, bvn = _linear(ks[3], d, d)
    wve, bve = _linear(ks[4], d, d)
    wself, bself = _linear(ks[5], d, d)
    wih, bih = _linear(ks[6], d, d)
    whh, bhh = _linear(ks[7], d, d)
    wout, bout = _linear(ks[8], d, d)
    ln1g, ln1b = _ln_params(d)
    ln2g, ln2b = _ln_params(d)
    wm1, bm1 = _linear(ks[9], d, 4 * d)
    wm2, bm2 = _linear(ks[10], 4 * d, d)
    return (wq, bq, wkn, bkn, wke, bke, wvn, bvn, wve, bve,
            wself, bself, wih, bih, whh, bhh, wout, bout,
            ln1g, ln1b, ln2g, ln2b, wm1, bm1, wm2, bm2)


def pack_rel_params(rp):
    (w0a, b0a, g0, be0, w0b, b0b, w1a, b1a, g1, be1, w1b, b1b,
     ag1, ab1, aw, ab, ag2, ab2) = rp
    hf = EMBED_DIM // 2
    z = jnp.zeros((EDGE_DIM, hf), jnp.float32)
    re_w1 = jnp.concatenate([jnp.concatenate([w0a, z], 1),
                             jnp.concatenate([z, w1a], 1)], 0)        # [4,32]
    re_w1 = jnp.concatenate([re_w1,
                             jnp.zeros((8 - 2 * EDGE_DIM, EMBED_DIM),
                                       jnp.float32)], 0)              # pad to 8 rows
    re_w2 = jnp.concatenate([w0b, w1b], 0)                            # [32,32]
    re_pb = jnp.concatenate([
        jnp.concatenate([b0a, b1a], 1),       # 0: first-linear bias
        jnp.concatenate([g0, g1], 1),         # 1: branch LN gamma
        jnp.concatenate([be0, be1], 1),       # 2: branch LN beta
        b0b + b1b,                            # 3: summed second-linear bias
        ag1, ab1, ab, ag2, ab2], 0)           # 4..8: aggr LN/linear params
    return jnp.concatenate([re_w2, aw, re_w1, re_pb], axis=0)         # [81,32]


def pack_layer_params(lps):
    d = EMBED_DIM
    wslab, wkve, wm1s, wm2s, bws, b32s = [], [], [], [], [], []
    for lp in lps:
        (wq, bq, wkn, bkn, wke, bke, wvn, bvn, wve, bve,
         wslf, bslf, wih, bih, whh, bhh, wo, bo,
         ln1g, ln1b, ln2g, ln2b, wm1, bm1, wm2, bm2) = lp
        wslab.append(jnp.concatenate([wq, wkn, wvn, wslf, whh, wih, wo], axis=1))
        wkve.append(jnp.concatenate([wke, wve], axis=1))               # [32,64]
        wm1s.append(wm1)
        wm2s.append(wm2)
        # edge biases algebraically folded into node biases (k/v add linearly)
        b_big = jnp.concatenate([bq, bkn + bke, bvn + bve, bslf, bhh], axis=1)
        b_m1p = jnp.concatenate([bm1, jnp.zeros((1, d), jnp.float32)], axis=1)
        bws.append(jnp.concatenate([b_big, b_m1p], axis=0))            # [2,160]
        b32s.append(jnp.concatenate([bih, bo, bm2, ln1g, ln1b, ln2g, ln2b,
                                     jnp.zeros((1, d), jnp.float32)], axis=0))
    return (jnp.concatenate(wkve, axis=1),      # [32, L*64]
            jnp.stack(wslab),                   # [L,32,224]
            jnp.stack(wm1s),                    # [L,32,128]
            jnp.stack(wm2s),                    # [L,128,32]
            jnp.stack(bws),                     # [L,2,160]
            jnp.stack(b32s))                    # [L,8,32]


if __name__ == "__main__":
    key = jax.random.PRNGKey(0)
    k_pos, k_ang, k_emb, k_params = jax.random.split(key, 4)
    B = 2

    positions = jax.random.normal(k_pos, (B, N_NODES, HISTORICAL_STEPS, 2),
                                  jnp.float32) * 5.0
    rotate_angles = jax.random.uniform(k_ang, (B, N_NODES, HISTORICAL_STEPS),
                                       jnp.float32, -3.14159, 3.14159)
    padding_mask = jnp.zeros((B, N_NODES, HISTORICAL_STEPS), dtype=bool)
    padding_mask = padding_mask.at[:, -2:, :].set(True)   # two fully-padded nodes
    local_embed = jax.random.normal(k_emb, (B, N_NODES, EMBED_DIM), jnp.float32)

    kp = jax.random.split(k_params, NUM_LAYERS + 1)
    rel_params = init_rel_embed_params(kp[0])
    layer_params_list = [init_layer_params(kp[i + 1]) for i in range(NUM_LAYERS)]
    # Packing done ONCE, outside the jitted per-call path.
    packed = (pack_rel_params(rel_params),) + pack_layer_params(layer_params_list)

    out = global_interactor_forward(positions, padding_mask, rotate_angles,
                                    local_embed, packed)
    jax.block_until_ready(out)
    assert out.shape == (B, N_NODES, EMBED_DIM)
    assert bool(jnp.all(jnp.isfinite(out)))
    print("KERNEL_OK")
</pallas_src>

<mosaic_0001>
module attributes {stable_mosaic.version = 11 : i64} {
  func.func @_fused_kernel(%arg0: i32, %arg1: memref<1x256x4xf32, #tpu.memory_space<vmem>>, %arg2: memref<1x256x1xf32, #tpu.memory_space<vmem>>, %arg3: memref<1x16x32xf32, #tpu.memory_space<vmem>>, %arg4: memref<64x32xf32, #tpu.memory_space<vmem>>, %arg5: memref<81x32xf32, #tpu.memory_space<vmem>>, %arg6: memref<32x192xf32, #tpu.memory_space<vmem>>, %arg7: memref<3x32x224xf32, #tpu.memory_space<vmem>>, %arg8: memref<3x32x128xf32, #tpu.memory_space<vmem>>, %arg9: memref<3x128x32xf32, #tpu.memory_space<vmem>>, %arg10: memref<3x2x160xf32, #tpu.memory_space<vmem>>, %arg11: memref<3x8x32xf32, #tpu.memory_space<vmem>>, %arg12: memref<1x16x32xf32, #tpu.memory_space<vmem>>, %arg13: memref<256x192xf32, #tpu.memory_space<vmem>>) attributes {dimension_semantics = [#tpu.dimension_semantics<parallel>], iteration_bounds = array<i64: 2>, scalar_prefetch = 0 : i64, scratch_operands = 1 : i64, tpu.core_type = #tpu.core_type<tc>, window_params = [{transform_indices = @transform_0, window_bounds = array<i64: 1, 256, 4>}, {transform_indices = @transform_1, window_bounds = array<i64: 1, 256, 1>}, {transform_indices = @transform_2, window_bounds = array<i64: 1, 16, 32>}, {pipeline_mode = #tpu.pipeline_mode<synchronous>, transform_indices = @transform_3, window_bounds = array<i64: 64, 32>}, {pipeline_mode = #tpu.pipeline_mode<synchronous>, transform_indices = @transform_4, window_bounds = array<i64: 81, 32>}, {pipeline_mode = #tpu.pipeline_mode<synchronous>, transform_indices = @transform_5, window_bounds = array<i64: 32, 192>}, {pipeline_mode = #tpu.pipeline_mode<synchronous>, transform_indices = @transform_6, window_bounds = array<i64: 3, 32, 224>}, {pipeline_mode = #tpu.pipeline_mode<synchronous>, transform_indices = @transform_7, window_bounds = array<i64: 3, 32, 128>}, {pipeline_mode = #tpu.pipeline_mode<synchronous>, transform_indices = @transform_8, window_bounds = array<i64: 3, 128, 32>}, {pipeline_mode = #tpu.pipeline_mode<synchronous>, transform_indices = @transform_9, window_bounds = array<i64: 3, 2, 160>}, {pipeline_mode = #tpu.pipeline_mode<synchronous>, transform_indices = @transform_10, window_bounds = array<i64: 3, 8, 32>}, {transform_indices = @transform_11, window_bounds = array<i64: 1, 16, 32>}]} {
    %c0 = arith.constant 0 : index
    %c0_0 = arith.constant 0 : index
    %0 = vector.load %arg4[%c0, %c0_0] : memref<64x32xf32, #tpu.memory_space<vmem>>, vector<32x32xf32>
    %c32 = arith.constant 32 : index
    %c0_1 = arith.constant 0 : index
    %1 = vector.load %arg4[%c32, %c0_1] : memref<64x32xf32, #tpu.memory_space<vmem>>, vector<32x32xf32>
    %c0_2 = arith.constant 0 : index
    %c0_3 = arith.constant 0 : index
    %2 = vector.load %arg5[%c0_2, %c0_3] : memref<81x32xf32, #tpu.memory_space<vmem>>, vector<32x32xf32>
    %c32_4 = arith.constant 32 : index
    %c0_5 = arith.constant 0 : index
    %3 = vector.load %arg5[%c32_4, %c0_5] : memref<81x32xf32, #tpu.memory_space<vmem>>, vector<32x32xf32>
    %c64 = arith.constant 64 : index
    %c0_6 = arith.constant 0 : index
    %4 = vector.load %arg5[%c64, %c0_6] : memref<81x32xf32, #tpu.memory_space<vmem>>, vector<4x32xf32>
    %c72 = arith.constant 72 : index
    %c0_7 = arith.constant 0 : index
    %5 = vector.load %arg5[%c72, %c0_7] : memref<81x32xf32, #tpu.memory_space<vmem>>, vector<9x32xf32>
    %c0_8 = arith.constant 0 : index
    %c0_9 = arith.constant 0 : index
    %c0_10 = arith.constant 0 : index
    %6 = vector.load %arg1[%c0_8, %c0_9, %c0_10] : memref<1x256x4xf32, #tpu.memory_space<vmem>>, vector<1x256x4xf32>
    %7 = vector.shape_cast %6 : vector<1x256x4xf32> to vector<256x4xf32>
    %8 = arith.truncf %7 : vector<256x4xf32> to vector<256x4xbf16>
    %9 = arith.truncf %4 : vector<4x32xf32> to vector<4x32xbf16>
    %cst = arith.constant dense<0.000000e+00> : vector<256x32xf32>
    %10 = tpu.matmul %8, %9, %cst {dimension_numbers = #tpu.dot_dimension_numbers<[1], [0], [0], [1], [0, 0, 1, 1], [], []>} : vector<256x4xbf16>, vector<4x32xbf16>, vector<256x32xf32> -> vector<256x32xf32>
    %11 = vector.extract_strided_slice %5 {offsets = [0, 0], sizes = [1, 32], strides = [1, 1]} : vector<9x32xf32> to vector<1x32xf32>
    %12 = vector.broadcast %11 : vector<1x32xf32> to vector<256x32xf32>
    %13 = arith.addf %10, %12 : vector<256x32xf32>
    %cst_11 = arith.constant dense<0.000000e+00> : vector<256x32xf32>
    %14 = tpu.matmul %13, %0, %cst_11 {dimension_numbers = #tpu.dot_dimension_numbers<[1], [0], [0], [1], [0, 0, 1, 1], [], []>} : vector<256x32xf32>, vector<32x32xf32>, vector<256x32xf32> -> vector<256x32xf32>
    %15 = arith.subf %13, %14 : vector<256x32xf32>
    %16 = arith.mulf %15, %15 : vector<256x32xf32>
    %cst_12 = arith.constant dense<0.000000e+00> : vector<256x32xf32>
    %17 = tpu.matmul %16, %0, %cst_12 {dimension_numbers = #tpu.dot_dimension_numbers<[1], [0], [0], [1], [0, 0, 1, 1], [], []>} : vector<256x32xf32>, vector<32x32xf32>, vector<256x32xf32> -> vector<256x32xf32>
    %cst_13 = arith.constant 9.99999974E-6 : f32
    %18 = vector.broadcast %cst_13 : f32 to vector<256x32xf32>
    %19 = arith.addf %17, %18 : vector<256x32xf32>
    %20 = math.rsqrt %19 : vector<256x32xf32>
    %21 = arith.mulf %15, %20 : vector<256x32xf32>
    %22 = vector.extract_strided_slice %5 {offsets = [1, 0], sizes = [1, 32], strides = [1, 1]} : vector<9x32xf32> to vector<1x32xf32>
    %23 = vector.broadcast %22 : vector<1x32xf32> to vector<256x32xf32>
    %24 = arith.mulf %21, %23 : vector<256x32xf32>
    %25 = vector.extract_strided_slice %5 {offsets = [2, 0], sizes = [1, 32], strides = [1, 1]} : vector<9x32xf32> to vector<1x32xf32>
    %26 = vector.broadcast %25 : vector<1x32xf32> to vector<256x32xf32>
    %27 = arith.addf %24, %26 : vector<256x32xf32>
    %cst_14 = arith.constant 0.000000e+00 : f32
    %28 = vector.broadcast %cst_14 : f32 to vector<256x32xf32>
    %29 = arith.maximumf %27, %28 : vector<256x32xf32>
    %30 = arith.truncf %29 : vector<256x32xf32> to vector<256x32xbf16>
    %31 = arith.truncf %2 : vector<32x32xf32> to vector<32x32xbf16>
    %cst_15 = arith.constant dense<0.000000e+00> : vector<256x32xf32>
    %32 = tpu.matmul %30, %31, %cst_15 {dimension_numbers = #tpu.dot_dimension_numbers<[1], [0], [0], [1], [0, 0, 1, 1], [], []>} : vector<256x32xbf16>, vector<32x32xbf16>, vector<256x32xf32> -> vector<256x32xf32>
    %33 = vector.extract_strided_slice %5 {offsets = [3, 0], sizes = [1, 32], strides = [1, 1]} : vector<9x32xf32> to vector<1x32xf32>
    %34 = vector.broadcast %33 : vector<1x32xf32> to vector<256x32xf32>
    %35 = arith.addf %32, %34 : vector<256x32xf32>
    %36 = vector.extract_strided_slice %5 {offsets = [4, 0], sizes = [1, 32], strides = [1, 1]} : vector<9x32xf32> to vector<1x32xf32>
    %37 = vector.extract_strided_slice %5 {offsets = [5, 0], sizes = [1, 32], strides = [1, 1]} : vector<9x32xf32> to vector<1x32xf32>
    %cst_16 = arith.constant dense<0.000000e+00> : vector<256xf32>
    %38 = vector.multi_reduction <add>, %35, %cst_16 [1] : vector<256x32xf32> to vector<256xf32>
    %39 = vector.shape_cast %38 : vector<256xf32> to vector<256x1xf32>
    %cst_17 = arith.constant 3.200000e+01 : f32
    %40 = vector.broadcast %cst_17 : f32 to vector<256x1xf32>
    %41 = arith.divf %39, %40 : vector<256x1xf32>
    %42 = vector.broadcast %41 : vector<256x1xf32> to vector<256x32xf32>
    %43 = arith.subf %35, %42 : vector<256x32xf32>
    %44 = arith.mulf %43, %43 : vector<256x32xf32>
    %cst_18 = arith.constant dense<0.000000e+00> : vector<256xf32>
    %45 = vector.multi_reduction <add>, %44, %cst_18 [1] : vector<256x32xf32> to vector<256xf32>
    %46 = vector.shape_cast %45 : vector<256xf32> to vector<256x1xf32>
    %cst_19 = arith.constant 3.200000e+01 : f32
    %47 = vector.broadcast %cst_19 : f32 to vector<256x1xf32>
    %48 = arith.divf %46, %47 : vector<256x1xf32>
    %49 = vector.broadcast %41 : vector<256x1xf32> to vector<256x32xf32>
    %50 = arith.subf %35, %49 : vector<256x32xf32>
    %cst_20 = arith.constant 9.99999974E-6 : f32
    %51 = vector.broadcast %cst_20 : f32 to vector<256x1xf32>
    %52 = arith.addf %48, %51 : vector<256x1xf32>
    %53 = math.rsqrt %52 : vector<256x1xf32>
    %54 = vector.broadcast %53 : vector<256x1xf32> to vector<256x32xf32>
    %55 = arith.mulf %50, %54 : vector<256x32xf32>
    %56 = vector.broadcast %36 : vector<1x32xf32> to vector<256x32xf32>
    %57 = arith.mulf %55, %56 : vector<256x32xf32>
    %58 = vector.broadcast %37 : vector<1x32xf32> to vector<256x32xf32>
    %59 = arith.addf %57, %58 : vector<256x32xf32>
    %cst_21 = arith.constant 0.000000e+00 : f32
    %60 = vector.broadcast %cst_21 : f32 to vector<256x32xf32>
    %61 = arith.maximumf %59, %60 : vector<256x32xf32>
    %62 = arith.truncf %61 : vector<256x32xf32> to vector<256x32xbf16>
    %63 = arith.truncf %3 : vector<32x32xf32> to vector<32x32xbf16>
    %cst_22 = arith.constant dense<0.000000e+00> : vector<256x32xf32>
    %64 = tpu.matmul %62, %63, %cst_22 {dimension_numbers = #tpu.dot_dimension_numbers<[1], [0], [0], [1], [0, 0, 1, 1], [], []>} : vector<256x32xbf16>, vector<32x32xbf16>, vector<256x32xf32> -> vector<256x32xf32>
    %65 = vector.extract_strided_slice %5 {offsets = [6, 0], sizes = [1, 32], strides = [1, 1]} : vector<9x32xf32> to vector<1x32xf32>
    %66 = vector.broadcast %65 : vector<1x32xf32> to vector<256x32xf32>
    %67 = arith.addf %64, %66 : vector<256x32xf32>
    %68 = vector.extract_strided_slice %5 {offsets = [7, 0], sizes = [1, 32], strides = [1, 1]} : vector<9x32xf32> to vector<1x32xf32>
    %69 = vector.extract_strided_slice %5 {offsets = [8, 0], sizes = [1, 32], strides = [1, 1]} : vector<9x32xf32> to vector<1x32xf32>
    %cst_23 = arith.constant dense<0.000000e+00> : vector<256xf32>
    %70 = vector.multi_reduction <add>, %67, %cst_23 [1] : vector<256x32xf32> to vector<256xf32>
    %71 = vector.shape_cast %70 : vector<256xf32> to vector<256x1xf32>
    %cst_24 = arith.constant 3.200000e+01 : f32
    %72 = vector.broadcast %cst_24 : f32 to vector<256x1xf32>
    %73 = arith.divf %71, %72 : vector<256x1xf32>
    %74 = vector.broadcast %73 : vector<256x1xf32> to vector<256x32xf32>
    %75 = arith.subf %67, %74 : vector<256x32xf32>
    %76 = arith.mulf %75, %75 : vector<256x32xf32>
    %cst_25 = arith.constant dense<0.000000e+00> : vector<256xf32>
    %77 = vector.multi_reduction <add>, %76, %cst_25 [1] : vector<256x32xf32> to vector<256xf32>
    %78 = vector.shape_cast %77 : vector<256xf32> to vector<256x1xf32>
    %cst_26 = arith.constant 3.200000e+01 : f32
    %79 = vector.broadcast %cst_26 : f32 to vector<256x1xf32>
    %80 = arith.divf %78, %79 : vector<256x1xf32>
    %81 = vector.broadcast %73 : vector<256x1xf32> to vector<256x32xf32>
    %82 = arith.subf %67, %81 : vector<256x32xf32>
    %cst_27 = arith.constant 9.99999974E-6 : f32
    %83 = vector.broadcast %cst_27 : f32 to vector<256x1xf32>
    %84 = arith.addf %80, %83 : vector<256x1xf32>
    %85 = math.rsqrt %84 : vector<256x1xf32>
    %86 = vector.broadcast %85 : vector<256x1xf32> to vector<256x32xf32>
    %87 = arith.mulf %82, %86 : vector<256x32xf32>
    %88 = vector.broadcast %68 : vector<1x32xf32> to vector<256x32xf32>
    %89 = arith.mulf %87, %88 : vector<256x32xf32>
    %90 = vector.broadcast %69 : vector<1x32xf32> to vector<256x32xf32>
    %91 = arith.addf %89, %90 : vector<256x32xf32>
    %c0_28 = arith.constant 0 : index
    %c0_29 = arith.constant 0 : index
    %92 = vector.load %arg6[%c0_28, %c0_29] : memref<32x192xf32, #tpu.memory_space<vmem>>, vector<32x192xf32>
    %93 = arith.truncf %91 : vector<256x32xf32> to vector<256x32xbf16>
    %94 = arith.truncf %92 : vector<32x192xf32> to vector<32x192xbf16>
    %cst_30 = arith.constant dense<0.000000e+00> : vector<256x192xf32>
    %95 = tpu.matmul %93, %94, %cst_30 {dimension_numbers = #tpu.dot_dimension_numbers<[1], [0], [0], [1], [0, 0, 1, 1], [], []>} : vector<256x32xbf16>, vector<32x192xbf16>, vector<256x192xf32> -> vector<256x192xf32>
    %c0_31 = arith.constant 0 : index
    %c0_32 = arith.constant 0 : index
    %96 = vector.load %arg13[%c0_31, %c0_32] : memref<256x192xf32, #tpu.memory_space<vmem>>, vector<256x192xf32>
    tpu.vector_store %arg13[%c0_31, %c0_32], %95 {strides = array<i32>} : memref<256x192xf32, #tpu.memory_space<vmem>>, vector<256x192xf32>,
    %c0_33 = arith.constant 0 : index
    %c0_34 = arith.constant 0 : index
    %c0_35 = arith.constant 0 : index
    %97 = vector.load %arg2[%c0_33, %c0_34, %c0_35] : memref<1x256x1xf32, #tpu.memory_space<vmem>>, vector<1x256x1xf32>
    %98 = vector.shape_cast %97 : vector<1x256x1xf32> to vector<256x1xf32>
    %99 = vector.shape_cast %98 : vector<256x1xf32> to vector<16x16x1xf32>
    %c0_36 = arith.constant 0 : index
    %c0_37 = arith.constant 0 : index
    %c0_38 = arith.constant 0 : index
    %100 = vector.load %arg3[%c0_36, %c0_37, %c0_38] : memref<1x16x32xf32, #tpu.memory_space<vmem>>, vector<1x16x32xf32>
    %101 = vector.shape_cast %100 : vector<1x16x32xf32> to vector<16x32xf32>
    %c0_39 = arith.constant 0 : index
    %c0_40 = arith.constant 0 : index
    %c0_41 = arith.constant 0 : index
    %102 = vector.load %arg11[%c0_39, %c0_40, %c0_41] : memref<3x8x32xf32, #tpu.memory_space<vmem>>, vector<1x8x32xf32>
    %103 = vector.shape_cast %102 : vector<1x8x32xf32> to vector<8x32xf32>
    %c0_42 = arith.constant 0 : index
    %c0_43 = arith.constant 0 : index
    %c0_44 = arith.constant 0 : index
    %104 = vector.load %arg10[%c0_42, %c0_43, %c0_44] : memref<3x2x160xf32, #tpu.memory_space<vmem>>, vector<1x2x160xf32>
    %105 = vector.shape_cast %104 : vector<1x2x160xf32> to vector<2x160xf32>
    %c0_45 = arith.constant 0 : index
    %c0_46 = arith.constant 0 : index
    %c0_47 = arith.constant 0 : index
    %106 = vector.load %arg7[%c0_45, %c0_46, %c0_47] : memref<3x32x224xf32, #tpu.memory_space<vmem>>, vector<1x32x224xf32>
    %107 = vector.shape_cast %106 : vector<1x32x224xf32> to vector<32x224xf32>
    %108 = vector.extract_strided_slice %103 {offsets = [3, 0], sizes = [1, 32], strides = [1, 1]} : vector<8x32xf32> to vector<1x32xf32>
    %109 = vector.extract_strided_slice %103 {offsets = [4, 0], sizes = [1, 32], strides = [1, 1]} : vector<8x32xf32> to vector<1x32xf32>
    %cst_48 = arith.constant dense<0.000000e+00> : vector<16xf32>
    %110 = vector.multi_reduction <add>, %101, %cst_48 [1] : vector<16x32xf32> to vector<16xf32>
    %111 = vector.shape_cast %110 : vector<16xf32> to vector<16x1xf32>
    %cst_49 = arith.constant 3.200000e+01 : f32
    %112 = vector.broadcast %cst_49 : f32 to vector<16x1xf32>
    %113 = arith.divf %111, %112 : vector<16x1xf32>
    %114 = vector.broadcast %113 : vector<16x1xf32> to vector<16x32xf32>
    %115 = arith.subf %101, %114 : vector<16x32xf32>
    %116 = arith.mulf %115, %115 : vector<16x32xf32>
    %cst_50 = arith.constant dense<0.000000e+00> : vector<16xf32>
    %117 = vector.multi_reduction <add>, %116, %cst_50 [1] : vector<16x32xf32> to vector<16xf32>
    %118 = vector.shape_cast %117 : vector<16xf32> to vector<16x1xf32>
    %cst_51 = arith.constant 3.200000e+01 : f32
    %119 = vector.broadcast %cst_51 : f32 to vector<16x1xf32>
    %120 = arith.divf %118, %119 : vector<16x1xf32>
    %121 = vector.broadcast %113 : vector<16x1xf32> to vector<16x32xf32>
    %122 = arith.subf %101, %121 : vector<16x32xf32>
    %cst_52 = arith.constant 9.99999974E-6 : f32
    %123 = vector.broadcast %cst_52 : f32 to vector<16x1xf32>
    %124 = arith.addf %120, %123 : vector<16x1xf32>
    %125 = math.rsqrt %124 : vector<16x1xf32>
    %126 = vector.broadcast %125 : vector<16x1xf32> to vector<16x32xf32>
    %127 = arith.mulf %122, %126 : vector<16x32xf32>
    %128 = vector.broadcast %108 : vector<1x32xf32> to vector<16x32xf32>
    %129 = arith.mulf %127, %128 : vector<16x32xf32>
    %130 = vector.broadcast %109 : vector<1x32xf32> to vector<16x32xf32>
    %131 = arith.addf %129, %130 : vector<16x32xf32>
    %132 = vector.extract_strided_slice %107 {offsets = [0, 0], sizes = [32, 160], strides = [1, 1]} : vector<32x224xf32> to vector<32x160xf32>
    %133 = arith.truncf %131 : vector<16x32xf32> to vector<16x32xbf16>
    %134 = arith.truncf %132 : vector<32x160xf32> to vector<32x160xbf16>
    %cst_53 = arith.constant dense<0.000000e+00> : vector<16x160xf32>
    %135 = tpu.matmul %133, %134, %cst_53 {dimension_numbers = #tpu.dot_dimension_numbers<[1], [0], [0], [1], [0, 0, 1, 1], [], []>} : vector<16x32xbf16>, vector<32x160xbf16>, vector<16x160xf32> -> vector<16x160xf32>
    %136 = vector.extract_strided_slice %105 {offsets = [0, 0], sizes = [1, 160], strides = [1, 1]} : vector<2x160xf32> to vector<1x160xf32>
    %137 = vector.broadcast %136 : vector<1x160xf32> to vector<16x160xf32>
    %138 = arith.addf %135, %137 : vector<16x160xf32>
    %139 = vector.extract_strided_slice %138 {offsets = [0, 0], sizes = [16, 32], strides = [1, 1]} : vector<16x160xf32> to vector<16x32xf32>
    %140 = vector.extract_strided_slice %138 {offsets = [0, 32], sizes = [16, 64], strides = [1, 1]} : vector<16x160xf32> to vector<16x64xf32>
    %141 = vector.extract_strided_slice %138 {offsets = [0, 96], sizes = [16, 32], strides = [1, 1]} : vector<16x160xf32> to vector<16x32xf32>
    %142 = vector.extract_strided_slice %138 {offsets = [0, 128], sizes = [16, 32], strides = [1, 1]} : vector<16x160xf32> to vector<16x32xf32>
    %c0_54 = arith.constant 0 : index
    %c0_55 = arith.constant 0 : index
    %143 = vector.load %arg13[%c0_54, %c0_55] : memref<256x192xf32, #tpu.memory_space<vmem>>, vector<256x64xf32>
    %144 = vector.shape_cast %143 : vector<256x64xf32> to vector<16x16x64xf32>
    %145 = vector.shape_cast %140 : vector<16x64xf32> to vector<1x16x64xf32>
    %146 = vector.broadcast %145 : vector<1x16x64xf32> to vector<16x16x64xf32>
    %147 = arith.addf %144, %146 : vector<16x16x64xf32>
    %148 = vector.extract_strided_slice %147 {offsets = [0, 0, 0], sizes = [16, 16, 32], strides = [1, 1, 1]} : vector<16x16x64xf32> to vector<16x16x32xf32>
    %149 = vector.extract_strided_slice %147 {offsets = [0, 0, 32], sizes = [16, 16, 32], strides = [1, 1, 1]} : vector<16x16x64xf32> to vector<16x16x32xf32>
    %150 = vector.shape_cast %139 : vector<16x32xf32> to vector<16x1x32xf32>
    %151 = vector.broadcast %150 : vector<16x1x32xf32> to vector<16x16x32xf32>
    %152 = arith.mulf %151, %148 : vector<16x16x32xf32>
    %153 = vector.shape_cast %152 : vector<16x16x32xf32> to vector<256x32xf32>
    %154 = arith.truncf %153 : vector<256x32xf32> to vector<256x32xbf16>
    %155 = arith.truncf %1 : vector<32x32xf32> to vector<32x32xbf16>
    %cst_56 = arith.constant dense<0.000000e+00> : vector<256x32xf32>
    %156 = tpu.matmul %154, %155, %cst_56 {dimension_numbers = #tpu.dot_dimension_numbers<[1], [0], [0], [1], [0, 0, 1, 1], [], []>} : vector<256x32xbf16>, vector<32x32xbf16>, vector<256x32xf32> -> vector<256x32xf32>
    %157 = vector.shape_cast %156 : vector<256x32xf32> to vector<16x16x32xf32>
    %cst_57 = arith.constant 0.000000e+00 : f32
    %158 = vector.broadcast %cst_57 : f32 to vector<16x16x1xf32>
    %159 = arith.cmpf ogt, %99, %158 : vector<16x16x1xf32>
    %cst_58 = arith.constant -1.000000e+30 : f32
    %160 = vector.shape_cast %159 : vector<16x16x1xi1> to vector<16x16x1xi1>
    %161 = vector.broadcast %160 : vector<16x16x1xi1> to vector<16x16x32xi1>
    %162 = vector.broadcast %cst_58 : f32 to vector<16x16x32xf32>
    %163 = arith.select %161, %157, %162 : vector<16x16x32xi1>, vector<16x16x32xf32>
    %cst_59 = arith.constant dense<0xFF800000> : vector<16x32xf32>
    %164 = vector.multi_reduction <maximumf>, %163, %cst_59 [1] : vector<16x16x32xf32> to vector<16x32xf32>
    %165 = vector.shape_cast %164 : vector<16x32xf32> to vector<16x1x32xf32>
    %166 = vector.broadcast %165 : vector<16x1x32xf32> to vector<16x16x32xf32>
    %167 = arith.subf %163, %166 : vector<16x16x32xf32>
    %168 = math.exp %167 : vector<16x16x32xf32>
    %169 = vector.broadcast %99 : vector<16x16x1xf32> to vector<16x16x32xf32>
    %170 = arith.mulf %168, %169 : vector<16x16x32xf32>
    %171 = arith.mulf %170, %149 : vector<16x16x32xf32>
    %cst_60 = arith.constant dense<0.000000e+00> : vector<16x32xf32>
    %172 = vector.multi_reduction <add>, %171, %cst_60 [1] : vector<16x16x32xf32> to vector<16x32xf32>
    %cst_61 = arith.constant dense<0.000000e+00> : vector<16x32xf32>
    %173 = vector.multi_reduction <add>, %170, %cst_61 [1] : vector<16x16x32xf32> to vector<16x32xf32>
    %cst_62 = arith.constant 9.99999968E-21 : f32
    %174 = vector.broadcast %cst_62 : f32 to vector<16x32xf32>
    %175 = arith.maximumf %173, %174 : vector<16x32xf32>
    %176 = arith.divf %172, %175 : vector<16x32xf32>
    %177 = vector.extract_strided_slice %107 {offsets = [0, 160], sizes = [32, 32], strides = [1, 1]} : vector<32x224xf32> to vector<32x32xf32>
    %178 = arith.truncf %176 : vector<16x32xf32> to vector<16x32xbf16>
    %179 = arith.truncf %177 : vector<32x32xf32> to vector<32x32xbf16>
    %cst_63 = arith.constant dense<0.000000e+00> : vector<16x32xf32>
    %180 = tpu.matmul %178, %179, %cst_63 {dimension_numbers = #tpu.dot_dimension_numbers<[1], [0], [0], [1], [0, 0, 1, 1], [], []>} : vector<16x32xbf16>, vector<32x32xbf16>, vector<16x32xf32> -> vector<16x32xf32>
    %181 = vector.extract_strided_slice %103 {offsets = [0, 0], sizes = [1, 32], strides = [1, 1]} : vector<8x32xf32> to vector<1x32xf32>
    %182 = vector.broadcast %181 : vector<1x32xf32> to vector<16x32xf32>
    %183 = arith.addf %180, %182 : vector<16x32xf32>
    %184 = arith.addf %183, %142 : vector<16x32xf32>
    %185 = arith.negf %184 : vector<16x32xf32>
    %186 = math.exp %185 : vector<16x32xf32>
    %cst_64 = arith.constant 1.000000e+00 : f32
    %187 = vector.broadcast %cst_64 : f32 to vector<16x32xf32>
    %188 = arith.addf %187, %186 : vector<16x32xf32>
    %189 = arith.divf %187, %188 : vector<16x32xf32>
    %190 = arith.subf %141, %176 : vector<16x32xf32>
    %191 = arith.mulf %189, %190 : vector<16x32xf32>
    %192 = arith.addf %176, %191 : vector<16x32xf32>
    %193 = vector.extract_strided_slice %107 {offsets = [0, 192], sizes = [32, 32], strides = [1, 1]} : vector<32x224xf32> to vector<32x32xf32>
    %194 = arith.truncf %192 : vector<16x32xf32> to vector<16x32xbf16>
    %195 = arith.truncf %193 : vector<32x32xf32> to vector<32x32xbf16>
    %cst_65 = arith.constant dense<0.000000e+00> : vector<16x32xf32>
    %196 = tpu.matmul %194, %195, %cst_65 {dimension_numbers = #tpu.dot_dimension_numbers<[1], [0], [0], [1], [0, 0, 1, 1], [], []>} : vector<16x32xbf16>, vector<32x32xbf16>, vector<16x32xf32> -> vector<16x32xf32>
    %197 = vector.extract_strided_slice %103 {offsets = [1, 0], sizes = [1, 32], strides = [1, 1]} : vector<8x32xf32> to vector<1x32xf32>
    %198 = vector.broadcast %197 : vector<1x32xf32> to vector<16x32xf32>
    %199 = arith.addf %196, %198 : vector<16x32xf32>
    %200 = arith.addf %101, %199 : vector<16x32xf32>
    %201 = vector.extract_strided_slice %103 {offsets = [5, 0], sizes = [1, 32], strides = [1, 1]} : vector<8x32xf32> to vector<1x32xf32>
    %202 = vector.extract_strided_slice %103 {offsets = [6, 0], sizes = [1, 32], strides = [1, 1]} : vector<8x32xf32> to vector<1x32xf32>
    %cst_66 = arith.constant dense<0.000000e+00> : vector<16xf32>
    %203 = vector.multi_reduction <add>, %200, %cst_66 [1] : vector<16x32xf32> to vector<16xf32>
    %204 = vector.shape_cast %203 : vector<16xf32> to vector<16x1xf32>
    %cst_67 = arith.constant 3.200000e+01 : f32
    %205 = vector.broadcast %cst_67 : f32 to vector<16x1xf32>
    %206 = arith.divf %204, %205 : vector<16x1xf32>
    %207 = vector.broadcast %206 : vector<16x1xf32> to vector<16x32xf32>
    %208 = arith.subf %200, %207 : vector<16x32xf32>
    %209 = arith.mulf %208, %208 : vector<16x32xf32>
    %cst_68 = arith.constant dense<0.000000e+00> : vector<16xf32>
    %210 = vector.multi_reduction <add>, %209, %cst_68 [1] : vector<16x32xf32> to vector<16xf32>
    %211 = vector.shape_cast %210 : vector<16xf32> to vector<16x1xf32>
    %cst_69 = arith.constant 3.200000e+01 : f32
    %212 = vector.broadcast %cst_69 : f32 to vector<16x1xf32>
    %213 = arith.divf %211, %212 : vector<16x1xf32>
    %214 = vector.broadcast %206 : vector<16x1xf32> to vector<16x32xf32>
    %215 = arith.subf %200, %214 : vector<16x32xf32>
    %cst_70 = arith.constant 9.99999974E-6 : f32
    %216 = vector.broadcast %cst_70 : f32 to vector<16x1xf32>
    %217 = arith.addf %213, %216 : vector<16x1xf32>
    %218 = math.rsqrt %217 : vector<16x1xf32>
    %219 = vector.broadcast %218 : vector<16x1xf32> to vector<16x32xf32>
    %220 = arith.mulf %215, %219 : vector<16x32xf32>
    %221 = vector.broadcast %201 : vector<1x32xf32> to vector<16x32xf32>
    %222 = arith.mulf %220, %221 : vector<16x32xf32>
    %223 = vector.broadcast %202 : vector<1x32xf32> to vector<16x32xf32>
    %224 = arith.addf %222, %223 : vector<16x32xf32>
    %c0_71 = arith.constant 0 : index
    %c0_72 = arith.constant 0 : index
    %c0_73 = arith.constant 0 : index
    %225 = vector.load %arg8[%c0_71, %c0_72, %c0_73] : memref<3x32x128xf32, #tpu.memory_space<vmem>>, vector<1x32x128xf32>
    %226 = vector.shape_cast %225 : vector<1x32x128xf32> to vector<32x128xf32>
    %227 = arith.truncf %224 : vector<16x32xf32> to vector<16x32xbf16>
    %228 = arith.truncf %226 : vector<32x128xf32> to vector<32x128xbf16>
    %cst_74 = arith.constant dense<0.000000e+00> : vector<16x128xf32>
    %229 = tpu.matmul %227, %228, %cst_74 {dimension_numbers = #tpu.dot_dimension_numbers<[1], [0], [0], [1], [0, 0, 1, 1], [], []>} : vector<16x32xbf16>, vector<32x128xbf16>, vector<16x128xf32> -> vector<16x128xf32>
    %230 = vector.extract_strided_slice %105 {offsets = [1, 0], sizes = [1, 128], strides = [1, 1]} : vector<2x160xf32> to vector<1x128xf32>
    %231 = vector.broadcast %230 : vector<1x128xf32> to vector<16x128xf32>
    %232 = arith.addf %229, %231 : vector<16x128xf32>
    %cst_75 = arith.constant 0.000000e+00 : f32
    %233 = vector.broadcast %cst_75 : f32 to vector<16x128xf32>
    %234 = arith.maximumf %232, %233 : vector<16x128xf32>
    %c0_76 = arith.constant 0 : index
    %c0_77 = arith.constant 0 : index
    %c0_78 = arith.constant 0 : index
    %235 = vector.load %arg9[%c0_76, %c0_77, %c0_78] : memref<3x128x32xf32, #tpu.memory_space<vmem>>, vector<1x128x32xf32>
    %236 = vector.shape_cast %235 : vector<1x128x32xf32> to vector<128x32xf32>
    %237 = arith.truncf %234 : vector<16x128xf32> to vector<16x128xbf16>
    %238 = arith.truncf %236 : vector<128x32xf32> to vector<128x32xbf16>
    %cst_79 = arith.constant dense<0.000000e+00> : vector<16x32xf32>
    %239 = tpu.matmul %237, %238, %cst_79 {dimension_numbers = #tpu.dot_dimension_numbers<[1], [0], [0], [1], [0, 0, 1, 1], [], []>} : vector<16x128xbf16>, vector<128x32xbf16>, vector<16x32xf32> -> vector<16x32xf32>
    %240 = arith.addf %200, %239 : vector<16x32xf32>
    %241 = vector.extract_strided_slice %103 {offsets = [2, 0], sizes = [1, 32], strides = [1, 1]} : vector<8x32xf32> to vector<1x32xf32>
    %242 = vector.broadcast %241 : vector<1x32xf32> to vector<16x32xf32>
    %243 = arith.addf %240, %242 : vector<16x32xf32>
    %c1 = arith.constant 1 : index
    %c0_80 = arith.constant 0 : index
    %c0_81 = arith.constant 0 : index
    %244 = vector.load %arg11[%c1, %c0_80, %c0_81] : memref<3x8x32xf32, #tpu.memory_space<vmem>>, vector<1x8x32xf32>
    %245 = vector.shape_cast %244 : vector<1x8x32xf32> to vector<8x32xf32>
    %c1_82 = arith.constant 1 : index
    %c0_83 = arith.constant 0 : index
    %c0_84 = arith.constant 0 : index
    %246 = vector.load %arg10[%c1_82, %c0_83, %c0_84] : memref<3x2x160xf32, #tpu.memory_space<vmem>>, vector<1x2x160xf32>
    %247 = vector.shape_cast %246 : vector<1x2x160xf32> to vector<2x160xf32>
    %c1_85 = arith.constant 1 : index
    %c0_86 = arith.constant 0 : index
    %c0_87 = arith.constant 0 : index
    %248 = vector.load %arg7[%c1_85, %c0_86, %c0_87] : memref<3x32x224xf32, #tpu.memory_space<vmem>>, vector<1x32x224xf32>
    %249 = vector.shape_cast %248 : vector<1x32x224xf32> to vector<32x224xf32>
    %250 = vector.extract_strided_slice %245 {offsets = [3, 0], sizes = [1, 32], strides = [1, 1]} : vector<8x32xf32> to vector<1x32xf32>
    %251 = vector.extract_strided_slice %245 {offsets = [4, 0], sizes = [1, 32], strides = [1, 1]} : vector<8x32xf32> to vector<1x32xf32>
    %cst_88 = arith.constant dense<0.000000e+00> : vector<16xf32>
    %252 = vector.multi_reduction <add>, %243, %cst_88 [1] : vector<16x32xf32> to vector<16xf32>
    %253 = vector.shape_cast %252 : vector<16xf32> to vector<16x1xf32>
    %cst_89 = arith.constant 3.200000e+01 : f32
    %254 = vector.broadcast %cst_89 : f32 to vector<16x1xf32>
    %255 = arith.divf %253, %254 : vector<16x1xf32>
    %256 = vector.broadcast %255 : vector<16x1xf32> to vector<16x32xf32>
    %257 = arith.subf %243, %256 : vector<16x32xf32>
    %258 = arith.mulf %257, %257 : vector<16x32xf32>
    %cst_90 = arith.constant dense<0.000000e+00> : vector<16xf32>
    %259 = vector.multi_reduction <add>, %258, %cst_90 [1] : vector<16x32xf32> to vector<16xf32>
    %260 = vector.shape_cast %259 : vector<16xf32> to vector<16x1xf32>
    %cst_91 = arith.constant 3.200000e+01 : f32
    %261 = vector.broadcast %cst_91 : f32 to vector<16x1xf32>
    %262 = arith.divf %260, %261 : vector<16x1xf32>
    %263 = vector.broadcast %255 : vector<16x1xf32> to vector<16x32xf32>
    %264 = arith.subf %243, %263 : vector<16x32xf32>
    %cst_92 = arith.constant 9.99999974E-6 : f32
    %265 = vector.broadcast %cst_92 : f32 to vector<16x1xf32>
    %266 = arith.addf %262, %265 : vector<16x1xf32>
    %267 = math.rsqrt %266 : vector<16x1xf32>
    %268 = vector.broadcast %267 : vector<16x1xf32> to vector<16x32xf32>
    %269 = arith.mulf %264, %268 : vector<16x32xf32>
    %270 = vector.broadcast %250 : vector<1x32xf32> to vector<16x32xf32>
    %271 = arith.mulf %269, %270 : vector<16x32xf32>
    %272 = vector.broadcast %251 : vector<1x32xf32> to vector<16x32xf32>
    %273 = arith.addf %271, %272 : vector<16x32xf32>
    %274 = vector.extract_strided_slice %249 {offsets = [0, 0], sizes = [32, 160], strides = [1, 1]} : vector<32x224xf32> to vector<32x160xf32>
    %275 = arith.truncf %273 : vector<16x32xf32> to vector<16x32xbf16>
    %276 = arith.truncf %274 : vector<32x160xf32> to vector<32x160xbf16>
    %cst_93 = arith.constant dense<0.000000e+00> : vector<16x160xf32>
    %277 = tpu.matmul %275, %276, %cst_93 {dimension_numbers = #tpu.dot_dimension_numbers<[1], [0], [0], [1], [0, 0, 1, 1], [], []>} : vector<16x32xbf16>, vector<32x160xbf16>, vector<16x160xf32> -> vector<16x160xf32>
    %278 = vector.extract_strided_slice %247 {offsets = [0, 0], sizes = [1, 160], strides = [1, 1]} : vector<2x160xf32> to vector<1x160xf32>
    %279 = vector.broadcast %278 : vector<1x160xf32> to vector<16x160xf32>
    %280 = arith.addf %277, %279 : vector<16x160xf32>
    %281 = vector.extract_strided_slice %280 {offsets = [0, 0], sizes = [16, 32], strides = [1, 1]} : vector<16x160xf32> to vector<16x32xf32>
    %282 = vector.extract_strided_slice %280 {offsets = [0, 32], sizes = [16, 64], strides = [1, 1]} : vector<16x160xf32> to vector<16x64xf32>
    %283 = vector.extract_strided_slice %280 {offsets = [0, 96], sizes = [16, 32], strides = [1, 1]} : vector<16x160xf32> to vector<16x32xf32>
    %284 = vector.extract_strided_slice %280 {offsets = [0, 128], sizes = [16, 32], strides = [1, 1]} : vector<16x160xf32> to vector<16x32xf32>
    %c0_94 = arith.constant 0 : index
    %c64_95 = arith.constant 64 : index
    %285 = vector.load %arg13[%c0_94, %c64_95] : memref<256x192xf32, #tpu.memory_space<vmem>>, vector<256x64xf32>
    %286 = vector.shape_cast %285 : vector<256x64xf32> to vector<16x16x64xf32>
    %287 = vector.shape_cast %282 : vector<16x64xf32> to vector<1x16x64xf32>
    %288 = vector.broadcast %287 : vector<1x16x64xf32> to vector<16x16x64xf32>
    %289 = arith.addf %286, %288 : vector<16x16x64xf32>
    %290 = vector.extract_strided_slice %289 {offsets = [0, 0, 0], sizes = [16, 16, 32], strides = [1, 1, 1]} : vector<16x16x64xf32> to vector<16x16x32xf32>
    %291 = vector.extract_strided_slice %289 {offsets = [0, 0, 32], sizes = [16, 16, 32], strides = [1, 1, 1]} : vector<16x16x64xf32> to vector<16x16x32xf32>
    %292 = vector.shape_cast %281 : vector<16x32xf32> to vector<16x1x32xf32>
    %293 = vector.broadcast %292 : vector<16x1x32xf32> to vector<16x16x32xf32>
    %294 = arith.mulf %293, %290 : vector<16x16x32xf32>
    %295 = vector.shape_cast %294 : vector<16x16x32xf32> to vector<256x32xf32>
    %296 = arith.truncf %295 : vector<256x32xf32> to vector<256x32xbf16>
    %297 = arith.truncf %1 : vector<32x32xf32> to vector<32x32xbf16>
    %cst_96 = arith.constant dense<0.000000e+00> : vector<256x32xf32>
    %298 = tpu.matmul %296, %297, %cst_96 {dimension_numbers = #tpu.dot_dimension_numbers<[1], [0], [0], [1], [0, 0, 1, 1], [], []>} : vector<256x32xbf16>, vector<32x32xbf16>, vector<256x32xf32> -> vector<256x32xf32>
    %299 = vector.shape_cast %298 : vector<256x32xf32> to vector<16x16x32xf32>
    %cst_97 = arith.constant 0.000000e+00 : f32
    %300 = vector.broadcast %cst_97 : f32 to vector<16x16x1xf32>
    %301 = arith.cmpf ogt, %99, %300 : vector<16x16x1xf32>
    %cst_98 = arith.constant -1.000000e+30 : f32
    %302 = vector.shape_cast %301 : vector<16x16x1xi1> to vector<16x16x1xi1>
    %303 = vector.broadcast %302 : vector<16x16x1xi1> to vector<16x16x32xi1>
    %304 = vector.broadcast %cst_98 : f32 to vector<16x16x32xf32>
    %305 = arith.select %303, %299, %304 : vector<16x16x32xi1>, vector<16x16x32xf32>
    %cst_99 = arith.constant dense<0xFF800000> : vector<16x32xf32>
    %306 = vector.multi_reduction <maximumf>, %305, %cst_99 [1] : vector<16x16x32xf32> to vector<16x32xf32>
    %307 = vector.shape_cast %306 : vector<16x32xf32> to vector<16x1x32xf32>
    %308 = vector.broadcast %307 : vector<16x1x32xf32> to vector<16x16x32xf32>
    %309 = arith.subf %305, %308 : vector<16x16x32xf32>
    %310 = math.exp %309 : vector<16x16x32xf32>
    %311 = vector.broadcast %99 : vector<16x16x1xf32> to vector<16x16x32xf32>
    %312 = arith.mulf %310, %311 : vector<16x16x32xf32>
    %313 = arith.mulf %312, %291 : vector<16x16x32xf32>
    %cst_100 = arith.constant dense<0.000000e+00> : vector<16x32xf32>
    %314 = vector.multi_reduction <add>, %313, %cst_100 [1] : vector<16x16x32xf32> to vector<16x32xf32>
    %cst_101 = arith.constant dense<0.000000e+00> : vector<16x32xf32>
    %315 = vector.multi_reduction <add>, %312, %cst_101 [1] : vector<16x16x32xf32> to vector<16x32xf32>
    %cst_102 = arith.constant 9.99999968E-21 : f32
    %316 = vector.broadcast %cst_102 : f32 to vector<16x32xf32>
    %317 = arith.maximumf %315, %316 : vector<16x32xf32>
    %318 = arith.divf %314, %317 : vector<16x32xf32>
    %319 = vector.extract_strided_slice %249 {offsets = [0, 160], sizes = [32, 32], strides = [1, 1]} : vector<32x224xf32> to vector<32x32xf32>
    %320 = arith.truncf %318 : vector<16x32xf32> to vector<16x32xbf16>
    %321 = arith.truncf %319 : vector<32x32xf32> to vector<32x32xbf16>
    %cst_103 = arith.constant dense<0.000000e+00> : vector<16x32xf32>
    %322 = tpu.matmul %320, %321, %cst_103 {dimension_numbers = #tpu.dot_dimension_numbers<[1], [0], [0], [1], [0, 0, 1, 1], [], []>} : vector<16x32xbf16>, vector<32x32xbf16>, vector<16x32xf32> -> vector<16x32xf32>
    %323 = vector.extract_strided_slice %245 {offsets = [0, 0], sizes = [1, 32], strides = [1, 1]} : vector<8x32xf32> to vector<1x32xf32>
    %324 = vector.broadcast %323 : vector<1x32xf32> to vector<16x32xf32>
    %325 = arith.addf %322, %324 : vector<16x32xf32>
    %326 = arith.addf %325, %284 : vector<16x32xf32>
    %327 = arith.negf %326 : vector<16x32xf32>
    %328 = math.exp %327 : vector<16x32xf32>
    %cst_104 = arith.constant 1.000000e+00 : f32
    %329 = vector.broadcast %cst_104 : f32 to vector<16x32xf32>
    %330 = arith.addf %329, %328 : vector<16x32xf32>
    %331 = arith.divf %329, %330 : vector<16x32xf32>
    %332 = arith.subf %283, %318 : vector<16x32xf32>
    %333 = arith.mulf %331, %332 : vector<16x32xf32>
    %334 = arith.addf %318, %333 : vector<16x32xf32>
    %335 = vector.extract_strided_slice %249 {offsets = [0, 192], sizes = [32, 32], strides = [1, 1]} : vector<32x224xf32> to vector<32x32xf32>
    %336 = arith.truncf %334 : vector<16x32xf32> to vector<16x32xbf16>
    %337 = arith.truncf %335 : vector<32x32xf32> to vector<32x32xbf16>
    %cst_105 = arith.constant dense<0.000000e+00> : vector<16x32xf32>
    %338 = tpu.matmul %336, %337, %cst_105 {dimension_numbers = #tpu.dot_dimension_numbers<[1], [0], [0], [1], [0, 0, 1, 1], [], []>} : vector<16x32xbf16>, vector<32x32xbf16>, vector<16x32xf32> -> vector<16x32xf32>
    %339 = vector.extract_strided_slice %245 {offsets = [1, 0], sizes = [1, 32], strides = [1, 1]} : vector<8x32xf32> to vector<1x32xf32>
    %340 = vector.broadcast %339 : vector<1x32xf32> to vector<16x32xf32>
    %341 = arith.addf %338, %340 : vector<16x32xf32>
    %342 = arith.addf %243, %341 : vector<16x32xf32>
    %343 = vector.extract_strided_slice %245 {offsets = [5, 0], sizes = [1, 32], strides = [1, 1]} : vector<8x32xf32> to vector<1x32xf32>
    %344 = vector.extract_strided_slice %245 {offsets = [6, 0], sizes = [1, 32], strides = [1, 1]} : vector<8x32xf32> to vector<1x32xf32>
    %cst_106 = arith.constant dense<0.000000e+00> : vector<16xf32>
    %345 = vector.multi_reduction <add>, %342, %cst_106 [1] : vector<16x32xf32> to vector<16xf32>
    %346 = vector.shape_cast %345 : vector<16xf32> to vector<16x1xf32>
    %cst_107 = arith.constant 3.200000e+01 : f32
    %347 = vector.broadcast %cst_107 : f32 to vector<16x1xf32>
    %348 = arith.divf %346, %347 : vector<16x1xf32>
    %349 = vector.broadcast %348 : vector<16x1xf32> to vector<16x32xf32>
    %350 = arith.subf %342, %349 : vector<16x32xf32>
    %351 = arith.mulf %350, %350 : vector<16x32xf32>
    %cst_108 = arith.constant dense<0.000000e+00> : vector<16xf32>
    %352 = vector.multi_reduction <add>, %351, %cst_108 [1] : vector<16x32xf32> to vector<16xf32>
    %353 = vector.shape_cast %352 : vector<16xf32> to vector<16x1xf32>
    %cst_109 = arith.constant 3.200000e+01 : f32
    %354 = vector.broadcast %cst_109 : f32 to vector<16x1xf32>
    %355 = arith.divf %353, %354 : vector<16x1xf32>
    %356 = vector.broadcast %348 : vector<16x1xf32> to vector<16x32xf32>
    %357 = arith.subf %342, %356 : vector<16x32xf32>
    %cst_110 = arith.constant 9.99999974E-6 : f32
    %358 = vector.broadcast %cst_110 : f32 to vector<16x1xf32>
    %359 = arith.addf %355, %358 : vector<16x1xf32>
    %360 = math.rsqrt %359 : vector<16x1xf32>
    %361 = vector.broadcast %360 : vector<16x1xf32> to vector<16x32xf32>
    %362 = arith.mulf %357, %361 : vector<16x32xf32>
    %363 = vector.broadcast %343 : vector<1x32xf32> to vector<16x32xf32>
    %364 = arith.mulf %362, %363 : vector<16x32xf32>
    %365 = vector.broadcast %344 : vector<1x32xf32> to vector<16x32xf32>
    %366 = arith.addf %364, %365 : vector<16x32xf32>
    %c1_111 = arith.constant 1 : index
    %c0_112 = arith.constant 0 : index
    %c0_113 = arith.constant 0 : index
    %367 = vector.load %arg8[%c1_111, %c0_112, %c0_113] : memref<3x32x128xf32, #tpu.memory_space<vmem>>, vector<1x32x128xf32>
    %368 = vector.shape_cast %367 : vector<1x32x128xf32> to vector<32x128xf32>
    %369 = arith.truncf %366 : vector<16x32xf32> to vector<16x32xbf16>
    %370 = arith.truncf %368 : vector<32x128xf32> to vector<32x128xbf16>
    %cst_114 = arith.constant dense<0.000000e+00> : vector<16x128xf32>
    %371 = tpu.matmul %369, %370, %cst_114 {dimension_numbers = #tpu.dot_dimension_numbers<[1], [0], [0], [1], [0, 0, 1, 1], [], []>} : vector<16x32xbf16>, vector<32x128xbf16>, vector<16x128xf32> -> vector<16x128xf32>
    %372 = vector.extract_strided_slice %247 {offsets = [1, 0], sizes = [1, 128], strides = [1, 1]} : vector<2x160xf32> to vector<1x128xf32>
    %373 = vector.broadcast %372 : vector<1x128xf32> to vector<16x128xf32>
    %374 = arith.addf %371, %373 : vector<16x128xf32>
    %cst_115 = arith.constant 0.000000e+00 : f32
    %375 = vector.broadcast %cst_115 : f32 to vector<16x128xf32>
    %376 = arith.maximumf %374, %375 : vector<16x128xf32>
    %c1_116 = arith.constant 1 : index
    %c0_117 = arith.constant 0 : index
    %c0_118 = arith.constant 0 : index
    %377 = vector.load %arg9[%c1_116, %c0_117, %c0_118] : memref<3x128x32xf32, #tpu.memory_space<vmem>>, vector<1x128x32xf32>
    %378 = vector.shape_cast %377 : vector<1x128x32xf32> to vector<128x32xf32>
    %379 = arith.truncf %376 : vector<16x128xf32> to vector<16x128xbf16>
    %380 = arith.truncf %378 : vector<128x32xf32> to vector<128x32xbf16>
    %cst_119 = arith.constant dense<0.000000e+00> : vector<16x32xf32>
    %381 = tpu.matmul %379, %380, %cst_119 {dimension_numbers = #tpu.dot_dimension_numbers<[1], [0], [0], [1], [0, 0, 1, 1], [], []>} : vector<16x128xbf16>, vector<128x32xbf16>, vector<16x32xf32> -> vector<16x32xf32>
    %382 = arith.addf %342, %381 : vector<16x32xf32>
    %383 = vector.extract_strided_slice %245 {offsets = [2, 0], sizes = [1, 32], strides = [1, 1]} : vector<8x32xf32> to vector<1x32xf32>
    %384 = vector.broadcast %383 : vector<1x32xf32> to vector<16x32xf32>
    %385 = arith.addf %382, %384 : vector<16x32xf32>
    %c2 = arith.constant 2 : index
    %c0_120 = arith.constant 0 : index
    %c0_121 = arith.constant 0 : index
    %386 = vector.load %arg11[%c2, %c0_120, %c0_121] : memref<3x8x32xf32, #tpu.memory_space<vmem>>, vector<1x8x32xf32>
    %387 = vector.shape_cast %386 : vector<1x8x32xf32> to vector<8x32xf32>
    %c2_122 = arith.constant 2 : index
    %c0_123 = arith.constant 0 : index
    %c0_124 = arith.constant 0 : index
    %388 = vector.load %arg10[%c2_122, %c0_123, %c0_124] : memref<3x2x160xf32, #tpu.memory_space<vmem>>, vector<1x2x160xf32>
    %389 = vector.shape_cast %388 : vector<1x2x160xf32> to vector<2x160xf32>
    %c2_125 = arith.constant 2 : index
    %c0_126 = arith.constant 0 : index
    %c0_127 = arith.constant 0 : index
    %390 = vector.load %arg7[%c2_125, %c0_126, %c0_127] : memref<3x32x224xf32, #tpu.memory_space<vmem>>, vector<1x32x224xf32>
    %391 = vector.shape_cast %390 : vector<1x32x224xf32> to vector<32x224xf32>
    %392 = vector.extract_strided_slice %387 {offsets = [3, 0], sizes = [1, 32], strides = [1, 1]} : vector<8x32xf32> to vector<1x32xf32>
    %393 = vector.extract_strided_slice %387 {offsets = [4, 0], sizes = [1, 32], strides = [1, 1]} : vector<8x32xf32> to vector<1x32xf32>
    %cst_128 = arith.constant dense<0.000000e+00> : vector<16xf32>
    %394 = vector.multi_reduction <add>, %385, %cst_128 [1] : vector<16x32xf32> to vector<16xf32>
    %395 = vector.shape_cast %394 : vector<16xf32> to vector<16x1xf32>
    %cst_129 = arith.constant 3.200000e+01 : f32
    %396 = vector.broadcast %cst_129 : f32 to vector<16x1xf32>
    %397 = arith.divf %395, %396 : vector<16x1xf32>
    %398 = vector.broadcast %397 : vector<16x1xf32> to vector<16x32xf32>
    %399 = arith.subf %385, %398 : vector<16x32xf32>
    %400 = arith.mulf %399, %399 : vector<16x32xf32>
    %cst_130 = arith.constant dense<0.000000e+00> : vector<16xf32>
    %401 = vector.multi_reduction <add>, %400, %cst_130 [1] : vector<16x32xf32> to vector<16xf32>
    %402 = vector.shape_cast %401 : vector<16xf32> to vector<16x1xf32>
    %cst_131 = arith.constant 3.200000e+01 : f32
    %403 = vector.broadcast %cst_131 : f32 to vector<16x1xf32>
    %404 = arith.divf %402, %403 : vector<16x1xf32>
    %405 = vector.broadcast %397 : vector<16x1xf32> to vector<16x32xf32>
    %406 = arith.subf %385, %405 : vector<16x32xf32>
    %cst_132 = arith.constant 9.99999974E-6 : f32
    %407 = vector.broadcast %cst_132 : f32 to vector<16x1xf32>
    %408 = arith.addf %404, %407 : vector<16x1xf32>
    %409 = math.rsqrt %408 : vector<16x1xf32>
    %410 = vector.broadcast %409 : vector<16x1xf32> to vector<16x32xf32>
    %411 = arith.mulf %406, %410 : vector<16x32xf32>
    %412 = vector.broadcast %392 : vector<1x32xf32> to vector<16x32xf32>
    %413 = arith.mulf %411, %412 : vector<16x32xf32>
    %414 = vector.broadcast %393 : vector<1x32xf32> to vector<16x32xf32>
    %415 = arith.addf %413, %414 : vector<16x32xf32>
    %416 = vector.extract_strided_slice %391 {offsets = [0, 0], sizes = [32, 160], strides = [1, 1]} : vector<32x224xf32> to vector<32x160xf32>
    %417 = arith.truncf %415 : vector<16x32xf32> to vector<16x32xbf16>
    %418 = arith.truncf %416 : vector<32x160xf32> to vector<32x160xbf16>
    %cst_133 = arith.constant dense<0.000000e+00> : vector<16x160xf32>
    %419 = tpu.matmul %417, %418, %cst_133 {dimension_numbers = #tpu.dot_dimension_numbers<[1], [0], [0], [1], [0, 0, 1, 1], [], []>} : vector<16x32xbf16>, vector<32x160xbf16>, vector<16x160xf32> -> vector<16x160xf32>
    %420 = vector.extract_strided_slice %389 {offsets = [0, 0], sizes = [1, 160], strides = [1, 1]} : vector<2x160xf32> to vector<1x160xf32>
    %421 = vector.broadcast %420 : vector<1x160xf32> to vector<16x160xf32>
    %422 = arith.addf %419, %421 : vector<16x160xf32>
    %423 = vector.extract_strided_slice %422 {offsets = [0, 0], sizes = [16, 32], strides = [1, 1]} : vector<16x160xf32> to vector<16x32xf32>
    %424 = vector.extract_strided_slice %422 {offsets = [0, 32], sizes = [16, 64], strides = [1, 1]} : vector<16x160xf32> to vector<16x64xf32>
    %425 = vector.extract_strided_slice %422 {offsets = [0, 96], sizes = [16, 32], strides = [1, 1]} : vector<16x160xf32> to vector<16x32xf32>
    %426 = vector.extract_strided_slice %422 {offsets = [0, 128], sizes = [16, 32], strides = [1, 1]} : vector<16x160xf32> to vector<16x32xf32>
    %c0_134 = arith.constant 0 : index
    %c128 = arith.constant 128 : index
    %427 = vector.load %arg13[%c0_134, %c128] : memref<256x192xf32, #tpu.memory_space<vmem>>, vector<256x64xf32>
    %428 = vector.shape_cast %427 : vector<256x64xf32> to vector<16x16x64xf32>
    %429 = vector.shape_cast %424 : vector<16x64xf32> to vector<1x16x64xf32>
    %430 = vector.broadcast %429 : vector<1x16x64xf32> to vector<16x16x64xf32>
    %431 = arith.addf %428, %430 : vector<16x16x64xf32>
    %432 = vector.extract_strided_slice %431 {offsets = [0, 0, 0], sizes = [16, 16, 32], strides = [1, 1, 1]} : vector<16x16x64xf32> to vector<16x16x32xf32>
    %433 = vector.extract_strided_slice %431 {offsets = [0, 0, 32], sizes = [16, 16, 32], strides = [1, 1, 1]} : vector<16x16x64xf32> to vector<16x16x32xf32>
    %434 = vector.shape_cast %423 : vector<16x32xf32> to vector<16x1x32xf32>
    %435 = vector.broadcast %434 : vector<16x1x32xf32> to vector<16x16x32xf32>
    %436 = arith.mulf %435, %432 : vector<16x16x32xf32>
    %437 = vector.shape_cast %436 : vector<16x16x32xf32> to vector<256x32xf32>
    %438 = arith.truncf %437 : vector<256x32xf32> to vector<256x32xbf16>
    %439 = arith.truncf %1 : vector<32x32xf32> to vector<32x32xbf16>
    %cst_135 = arith.constant dense<0.000000e+00> : vector<256x32xf32>
    %440 = tpu.matmul %438, %439, %cst_135 {dimension_numbers = #tpu.dot_dimension_numbers<[1], [0], [0], [1], [0, 0, 1, 1], [], []>} : vector<256x32xbf16>, vector<32x32xbf16>, vector<256x32xf32> -> vector<256x32xf32>
    %441 = vector.shape_cast %440 : vector<256x32xf32> to vector<16x16x32xf32>
    %cst_136 = arith.constant 0.000000e+00 : f32
    %442 = vector.broadcast %cst_136 : f32 to vector<16x16x1xf32>
    %443 = arith.cmpf ogt, %99, %442 : vector<16x16x1xf32>
    %cst_137 = arith.constant -1.000000e+30 : f32
    %444 = vector.shape_cast %443 : vector<16x16x1xi1> to vector<16x16x1xi1>
    %445 = vector.broadcast %444 : vector<16x16x1xi1> to vector<16x16x32xi1>
    %446 = vector.broadcast %cst_137 : f32 to vector<16x16x32xf32>
    %447 = arith.select %445, %441, %446 : vector<16x16x32xi1>, vector<16x16x32xf32>
    %cst_138 = arith.constant dense<0xFF800000> : vector<16x32xf32>
    %448 = vector.multi_reduction <maximumf>, %447, %cst_138 [1] : vector<16x16x32xf32> to vector<16x32xf32>
    %449 = vector.shape_cast %448 : vector<16x32xf32> to vector<16x1x32xf32>
    %450 = vector.broadcast %449 : vector<16x1x32xf32> to vector<16x16x32xf32>
    %451 = arith.subf %447, %450 : vector<16x16x32xf32>
    %452 = math.exp %451 : vector<16x16x32xf32>
    %453 = vector.broadcast %99 : vector<16x16x1xf32> to vector<16x16x32xf32>
    %454 = arith.mulf %452, %453 : vector<16x16x32xf32>
    %455 = arith.mulf %454, %433 : vector<16x16x32xf32>
    %cst_139 = arith.constant dense<0.000000e+00> : vector<16x32xf32>
    %456 = vector.multi_reduction <add>, %455, %cst_139 [1] : vector<16x16x32xf32> to vector<16x32xf32>
    %cst_140 = arith.constant dense<0.000000e+00> : vector<16x32xf32>
    %457 = vector.multi_reduction <add>, %454, %cst_140 [1] : vector<16x16x32xf32> to vector<16x32xf32>
    %cst_141 = arith.constant 9.99999968E-21 : f32
    %458 = vector.broadcast %cst_141 : f32 to vector<16x32xf32>
    %459 = arith.maximumf %457, %458 : vector<16x32xf32>
    %460 = arith.divf %456, %459 : vector<16x32xf32>
    %461 = vector.extract_strided_slice %391 {offsets = [0, 160], sizes = [32, 32], strides = [1, 1]} : vector<32x224xf32> to vector<32x32xf32>
    %462 = arith.truncf %460 : vector<16x32xf32> to vector<16x32xbf16>
    %463 = arith.truncf %461 : vector<32x32xf32> to vector<32x32xbf16>
    %cst_142 = arith.constant dense<0.000000e+00> : vector<16x32xf32>
    %464 = tpu.matmul %462, %463, %cst_142 {dimension_numbers = #tpu.dot_dimension_numbers<[1], [0], [0], [1], [0, 0, 1, 1], [], []>} : vector<16x32xbf16>, vector<32x32xbf16>, vector<16x32xf32> -> vector<16x32xf32>
    %465 = vector.extract_strided_slice %387 {offsets = [0, 0], sizes = [1, 32], strides = [1, 1]} : vector<8x32xf32> to vector<1x32xf32>
    %466 = vector.broadcast %465 : vector<1x32xf32> to vector<16x32xf32>
    %467 = arith.addf %464, %466 : vector<16x32xf32>
    %468 = arith.addf %467, %426 : vector<16x32xf32>
    %469 = arith.negf %468 : vector<16x32xf32>
    %470 = math.exp %469 : vector<16x32xf32>
    %cst_143 = arith.constant 1.000000e+00 : f32
    %471 = vector.broadcast %cst_143 : f32 to vector<16x32xf32>
    %472 = arith.addf %471, %470 : vector<16x32xf32>
    %473 = arith.divf %471, %472 : vector<16x32xf32>
    %474 = arith.subf %425, %460 : vector<16x32xf32>
    %475 = arith.mulf %473, %474 : vector<16x32xf32>
    %476 = arith.addf %460, %475 : vector<16x32xf32>
    %477 = vector.extract_strided_slice %391 {offsets = [0, 192], sizes = [32, 32], strides = [1, 1]} : vector<32x224xf32> to vector<32x32xf32>
    %478 = arith.truncf %476 : vector<16x32xf32> to vector<16x32xbf16>
    %479 = arith.truncf %477 : vector<32x32xf32> to vector<32x32xbf16>
    %cst_144 = arith.constant dense<0.000000e+00> : vector<16x32xf32>
    %480 = tpu.matmul %478, %479, %cst_144 {dimension_numbers = #tpu.dot_dimension_numbers<[1], [0], [0], [1], [0, 0, 1, 1], [], []>} : vector<16x32xbf16>, vector<32x32xbf16>, vector<16x32xf32> -> vector<16x32xf32>
    %481 = vector.extract_strided_slice %387 {offsets = [1, 0], sizes = [1, 32], strides = [1, 1]} : vector<8x32xf32> to vector<1x32xf32>
    %482 = vector.broadcast %481 : vector<1x32xf32> to vector<16x32xf32>
    %483 = arith.addf %480, %482 : vector<16x32xf32>
    %484 = arith.addf %385, %483 : vector<16x32xf32>
    %485 = vector.extract_strided_slice %387 {offsets = [5, 0], sizes = [1, 32], strides = [1, 1]} : vector<8x32xf32> to vector<1x32xf32>
    %486 = vector.extract_strided_slice %387 {offsets = [6, 0], sizes = [1, 32], strides = [1, 1]} : vector<8x32xf32> to vector<1x32xf32>
    %cst_145 = arith.constant dense<0.000000e+00> : vector<16xf32>
    %487 = vector.multi_reduction <add>, %484, %cst_145 [1] : vector<16x32xf32> to vector<16xf32>
    %488 = vector.shape_cast %487 : vector<16xf32> to vector<16x1xf32>
    %cst_146 = arith.constant 3.200000e+01 : f32
    %489 = vector.broadcast %cst_146 : f32 to vector<16x1xf32>
    %490 = arith.divf %488, %489 : vector<16x1xf32>
    %491 = vector.broadcast %490 : vector<16x1xf32> to vector<16x32xf32>
    %492 = arith.subf %484, %491 : vector<16x32xf32>
    %493 = arith.mulf %492, %492 : vector<16x32xf32>
    %cst_147 = arith.constant dense<0.000000e+00> : vector<16xf32>
    %494 = vector.multi_reduction <add>, %493, %cst_147 [1] : vector<16x32xf32> to vector<16xf32>
    %495 = vector.shape_cast %494 : vector<16xf32> to vector<16x1xf32>
    %cst_148 = arith.constant 3.200000e+01 : f32
    %496 = vector.broadcast %cst_148 : f32 to vector<16x1xf32>
    %497 = arith.divf %495, %496 : vector<16x1xf32>
    %498 = vector.broadcast %490 : vector<16x1xf32> to vector<16x32xf32>
    %499 = arith.subf %484, %498 : vector<16x32xf32>
    %cst_149 = arith.constant 9.99999974E-6 : f32
    %500 = vector.broadcast %cst_149 : f32 to vector<16x1xf32>
    %501 = arith.addf %497, %500 : vector<16x1xf32>
    %502 = math.rsqrt %501 : vector<16x1xf32>
    %503 = vector.broadcast %502 : vector<16x1xf32> to vector<16x32xf32>
    %504 = arith.mulf %499, %503 : vector<16x32xf32>
    %505 = vector.broadcast %485 : vector<1x32xf32> to vector<16x32xf32>
    %506 = arith.mulf %504, %505 : vector<16x32xf32>
    %507 = vector.broadcast %486 : vector<1x32xf32> to vector<16x32xf32>
    %508 = arith.addf %506, %507 : vector<16x32xf32>
    %c2_150 = arith.constant 2 : index
    %c0_151 = arith.constant 0 : index
    %c0_152 = arith.constant 0 : index
    %509 = vector.load %arg8[%c2_150, %c0_151, %c0_152] : memref<3x32x128xf32, #tpu.memory_space<vmem>>, vector<1x32x128xf32>
    %510 = vector.shape_cast %509 : vector<1x32x128xf32> to vector<32x128xf32>
    %511 = arith.truncf %508 : vector<16x32xf32> to vector<16x32xbf16>
    %512 = arith.truncf %510 : vector<32x128xf32> to vector<32x128xbf16>
    %cst_153 = arith.constant dense<0.000000e+00> : vector<16x128xf32>
    %513 = tpu.matmul %511, %512, %cst_153 {dimension_numbers = #tpu.dot_dimension_numbers<[1], [0], [0], [1], [0, 0, 1, 1], [], []>} : vector<16x32xbf16>, vector<32x128xbf16>, vector<16x128xf32> -> vector<16x128xf32>
    %514 = vector.extract_strided_slice %389 {offsets = [1, 0], sizes = [1, 128], strides = [1, 1]} : vector<2x160xf32> to vector<1x128xf32>
    %515 = vector.broadcast %514 : vector<1x128xf32> to vector<16x128xf32>
    %516 = arith.addf %513, %515 : vector<16x128xf32>
    %cst_154 = arith.constant 0.000000e+00 : f32
    %517 = vector.broadcast %cst_154 : f32 to vector<16x128xf32>
    %518 = arith.maximumf %516, %517 : vector<16x128xf32>
    %c2_155 = arith.constant 2 : index
    %c0_156 = arith.constant 0 : index
    %c0_157 = arith.constant 0 : index
    %519 = vector.load %arg9[%c2_155, %c0_156, %c0_157] : memref<3x128x32xf32, #tpu.memory_space<vmem>>, vector<1x128x32xf32>
    %520 = vector.shape_cast %519 : vector<1x128x32xf32> to vector<128x32xf32>
    %521 = arith.truncf %518 : vector<16x128xf32> to vector<16x128xbf16>
    %522 = arith.truncf %520 : vector<128x32xf32> to vector<128x32xbf16>
    %cst_158 = arith.constant dense<0.000000e+00> : vector<16x32xf32>
    %523 = tpu.matmul %521, %522, %cst_158 {dimension_numbers = #tpu.dot_dimension_numbers<[1], [0], [0], [1], [0, 0, 1, 1], [], []>} : vector<16x128xbf16>, vector<128x32xbf16>, vector<16x32xf32> -> vector<16x32xf32>
    %524 = arith.addf %484, %523 : vector<16x32xf32>
    %525 = vector.extract_strided_slice %387 {offsets = [2, 0], sizes = [1, 32], strides = [1, 1]} : vector<8x32xf32> to vector<1x32xf32>
    %526 = vector.broadcast %525 : vector<1x32xf32> to vector<16x32xf32>
    %527 = arith.addf %524, %526 : vector<16x32xf32>
    %c0_159 = arith.constant 0 : index
    %c0_160 = arith.constant 0 : index
    %c0_161 = arith.constant 0 : index
    %528 = vector.load %arg12[%c0_159, %c0_160, %c0_161] : memref<1x16x32xf32, #tpu.memory_space<vmem>>, vector<1x16x32xf32>
    %529 = vector.shape_cast %528 : vector<1x16x32xf32> to vector<16x32xf32>
    %530 = vector.shape_cast %527 : vector<16x32xf32> to vector<1x16x32xf32>
    tpu.vector_store %arg12[%c0_159, %c0_160, %c0_161], %530 {strides = array<i32>} : memref<1x16x32xf32, #tpu.memory_space<vmem>>, vector<1x16x32xf32>,
    return
  }
  func.func @transform_0(%arg0: i32) -> (i32, i32, i32) {
    %c0_i32 = arith.constant 0 : i32
    %c0_i32_0 = arith.constant 0 : i32
    %c0_i32_1 = arith.constant 0 : i32
    return %arg0, %c0_i32, %c0_i32_0 : i32, i32, i32
  }
  func.func @transform_1(%arg0: i32) -> (i32, i32, i32) {
    %c0_i32 = arith.constant 0 : i32
    %c0_i32_0 = arith.constant 0 : i32
    %c0_i32_1 = arith.constant 0 : i32
    return %arg0, %c0_i32, %c0_i32_0 : i32, i32, i32
  }
  func.func @transform_2(%arg0: i32) -> (i32, i32, i32) {
    %c0_i32 = arith.constant 0 : i32
    %c0_i32_0 = arith.constant 0 : i32
    %c0_i32_1 = arith.constant 0 : i32
    return %arg0, %c0_i32, %c0_i32_0 : i32, i32, i32
  }
  func.func @transform_3(%arg0: i32) -> (i32, i32) {
    %c0_i32 = arith.constant 0 : i32
    %c0_i32_0 = arith.constant 0 : i32
    %c0_i32_1 = arith.constant 0 : i32
    return %c0_i32, %c0_i32_0 : i32, i32
  }
  func.func @transform_4(%arg0: i32) -> (i32, i32) {
    %c0_i32 = arith.constant 0 : i32
    %c0_i32_0 = arith.constant 0 : i32
    %c0_i32_1 = arith.constant 0 : i32
    return %c0_i32, %c0_i32_0 : i32, i32
  }
  func.func @transform_5(%arg0: i32) -> (i32, i32) {
    %c0_i32 = arith.constant 0 : i32
    %c0_i32_0 = arith.constant 0 : i32
    %c0_i32_1 = arith.constant 0 : i32
    return %c0_i32, %c0_i32_0 : i32, i32
  }
  func.func @transform_6(%arg0: i32) -> (i32, i32, i32) {
    %c0_i32 = arith.constant 0 : i32
    %c0_i32_0 = arith.constant 0 : i32
    %c0_i32_1 = arith.constant 0 : i32
    %c0_i32_2 = arith.constant 0 : i32
    return %c0_i32, %c0_i32_0, %c0_i32_1 : i32, i32, i32
  }
  func.func @transform_7(%arg0: i32) -> (i32, i32, i32) {
    %c0_i32 = arith.constant 0 : i32
    %c0_i32_0 = arith.constant 0 : i32
    %c0_i32_1 = arith.constant 0 : i32
    %c0_i32_2 = arith.constant 0 : i32
    return %c0_i32, %c0_i32_0, %c0_i32_1 : i32, i32, i32
  }
  func.func @transform_8(%arg0: i32) -> (i32, i32, i32) {
    %c0_i32 = arith.constant 0 : i32
    %c0_i32_0 = arith.constant 0 : i32
    %c0_i32_1 = arith.constant 0 : i32
    %c0_i32_2 = arith.constant 0 : i32
    return %c0_i32, %c0_i32_0, %c0_i32_1 : i32, i32, i32
  }
  func.func @transform_9(%arg0: i32) -> (i32, i32, i32) {
    %c0_i32 = arith.constant 0 : i32
    %c0_i32_0 = arith.constant 0 : i32
    %c0_i32_1 = arith.constant 0 : i32
    %c0_i32_2 = arith.constant 0 : i32
    return %c0_i32, %c0_i32_0, %c0_i32_1 : i32, i32, i32
  }
  func.func @transform_10(%arg0: i32) -> (i32, i32, i32) {
    %c0_i32 = arith.constant 0 : i32
    %c0_i32_0 = arith.constant 0 : i32
    %c0_i32_1 = arith.constant 0 : i32
    %c0_i32_2 = arith.constant 0 : i32
    return %c0_i32, %c0_i32_0, %c0_i32_1 : i32, i32, i32
  }
  func.func @transform_11(%arg0: i32) -> (i32, i32, i32) {
    %c0_i32 = arith.constant 0 : i32
    %c0_i32_0 = arith.constant 0 : i32
    %c0_i32_1 = arith.constant 0 : i32
    return %arg0, %c0_i32, %c0_i32_0 : i32, i32, i32
  }
}

</mosaic_0001>

<llo_original>
// kernel: global_interactor_forward.1
$region0: #{global_interactor_forward.1}
  #allocation0 [shape = 'u32[]', space=smem, size = 0x4, offset = 0x4, fixed_abs, tag = 'smem constant byte address 0x4 - core index']
  #allocation1 [shape = 'u32[144,128]{1,0:T(1,128)}', space=vmem, size = 0x12000, scoped, tag = 'internal scratch']
  #allocation2 [shape = 'f32[256,192]{1,0:T(8,128)}', space=vmem, size = 0x40000, scoped, tag = 'scratch operand']
  %s0 = inlined_call_operand.vmem [shape: f32[2,256,4], index: 0, kind: input, shape index: {}]
  %s1 = inlined_call_operand.vmem [shape: f32[2,256,1], index: 1, kind: input, shape index: {}]
  %s2 = inlined_call_operand.vmem [shape: f32[2,16,32], index: 2, kind: input, shape index: {}]
  %s3 = inlined_call_operand.vmem [shape: f32[64,32], index: 3, kind: input, shape index: {}]
  %s4 = inlined_call_operand.vmem [shape: f32[81,32], index: 4, kind: input, shape index: {}]
  %s5 = inlined_call_operand.vmem [shape: f32[32,192], index: 5, kind: input, shape index: {}]
  %s6 = inlined_call_operand.vmem [shape: f32[3,32,224], index: 6, kind: input, shape index: {}]
  %s7 = inlined_call_operand.vmem [shape: f32[3,32,128], index: 7, kind: input, shape index: {}]
  %s8 = inlined_call_operand.vmem [shape: f32[3,128,32], index: 8, kind: input, shape index: {}]
  %s9 = inlined_call_operand.vmem [shape: f32[3,2,160], index: 9, kind: input, shape index: {}]
  %s10 = inlined_call_operand.vmem [shape: f32[3,8,32], index: 10, kind: input, shape index: {}]
  %s11 = inlined_call_operand.hbm [shape: f32[2,16,32], index: 11, kind: output, shape index: {}]
  %s12 = sld [smem:[#allocation0]]
  $region77: #{global_interactor_forward.1} parent=0
    _
  %s14 = ssub.s32 1, %s12
  %s15 = scalar_select 0, %s14, %s12
  $region1: #{global_interactor_forward.1} parent=0
    #allocation3 [shape = 'u8[16384]{0}', space=vmem, size = 0x4000, scoped, tag = 'output window, operand 0']
    #allocation4 [shape = 's32[2]{0}', space=sflag, size = 0x8, scoped, tag = 'scoped memory for global_interactor_forward.1']
    %16 = vsyncpa [#allocation4], 0
    %s17 = scalar_lea.sflag [#allocation4], 1
    %18 = vsyncpa %s17, 0
    loop: start=0, step=1, limit=4
    $region2: #{global_interactor_forward.1} parent=1 // loop_pre_header
      _
    $region3: #{global_interactor_forward.1} parent=1 // loop_header
      %s20 = sphi 0, %s24
      %p21 = scmp.ge.s32.totalorder %s20, 4
      %s30 = sphi 0, %s32
      %s33 = sphi 0, %s30
      %s34 = sphi 0, %s33
      %s50 = sphi 0, %s34
      %s56 = sphi 0, %s58
      %s59 = sphi 0, %s56
      %s60 = sphi 0, %s59
      %s76 = sphi 0, %s60
      %s82 = sphi 0, %s84
      %s85 = sphi 0, %s82
      %s86 = sphi 0, %s85
      %s102 = sphi 0, %s86
      %s106 = sphi 0, %s106
      %s108 = sphi 0, %s106
      %s109 = sphi 0, %s108
      %s123 = sphi 0, %s109
      %s127 = sphi 0, %s127
      %s129 = sphi 0, %s127
      %s130 = sphi 0, %s129
      %s144 = sphi 0, %s130
      %s148 = sphi 0, %s148
      %s150 = sphi 0, %s148
      %s151 = sphi 0, %s150
      %s165 = sphi 0, %s151
      %s169 = sphi 0, %s169
      %s171 = sphi 0, %s169
      %s172 = sphi 0, %s171
      %s186 = sphi 0, %s172
      %s190 = sphi 0, %s190
      %s192 = sphi 0, %s190
      %s193 = sphi 0, %s192
      %s207 = sphi 0, %s193
      %s211 = sphi 0, %s211
      %s213 = sphi 0, %s211
      %s214 = sphi 0, %s213
      %s228 = sphi 0, %s214
      %s232 = sphi 0, %s232
      %s234 = sphi 0, %s232
      %s235 = sphi 0, %s234
      %s249 = sphi 0, %s235
      %s253 = sphi 0, %s253
      %s255 = sphi 0, %s253
      %s256 = sphi 0, %s255
      %s270 = sphi 0, %s256
      %s276 = sphi 0, %s278
      %s279 = sphi 0, %s276
      %s280 = sphi 0, %s279
      %s296 = sphi 0, %s280
    $region4: #{global_interactor_forward.1} parent=1 // loop_header_branch
      %23 = sbr.rel (%p21) target = $region8
    $region5: #{global_interactor_forward.1} parent=1 // loop_body
      %s25 = ssub.s32 %s20, 1
      %s26 = ssub.s32 %s20, 2
      %s27 = sadd.s32 %s20, 1
      %s28 = ssub.s32 %s20, %s27
      %p29 = scmp.eq.s32.totalorder %s28, 0
      %s31 = sadd.s32 %s30, 1
      %s32 = scalar_select %p29, %s30, %s31
      %p35 = pneg %p29
      %p36 = scmp.eq.s32.totalorder %s20, 1
      %p37 = por %p35, %p36
      %p38 = scmp.ne.s32.totalorder %s30, %s33
      %p39 = scmp.eq.s32.totalorder %s20, 0
      %p40 = por %p38, %p39
      %p41 = scmp.ne.s32.totalorder %s30, %s33
      %p42 = scmp.eq.s32.totalorder %s25, 1
      %p43 = por %p41, %p42
      %p44 = scmp.ne.s32.totalorder %s33, %s34
      %p45 = scmp.eq.s32.totalorder %s25, 0
      %p46 = por %p44, %p45
      %p47 = scmp.ne.s32.totalorder %s33, %s34
      %p48 = scmp.eq.s32.totalorder %s26, 1
      %p49 = por %p47, %p48
      %p51 = scmp.ne.s32.totalorder %s34, %s50
      %p52 = scmp.eq.s32.totalorder %s26, 0
      %p53 = por %p51, %p52
      %s54 = ssub.s32 %s20, %s27
      %p55 = scmp.eq.s32.totalorder %s54, 0
      %s57 = sadd.s32 %s56, 1
      %s58 = scalar_select %p55, %s56, %s57
      %p61 = pneg %p55
      %p62 = scmp.eq.s32.totalorder %s20, 1
      %p63 = por %p61, %p62
      %p64 = scmp.ne.s32.totalorder %s56, %s59
      %p65 = scmp.eq.s32.totalorder %s20, 0
      %p66 = por %p64, %p65
      %p67 = scmp.ne.s32.totalorder %s56, %s59
      %p68 = scmp.eq.s32.totalorder %s25, 1
      %p69 = por %p67, %p68
      %p70 = scmp.ne.s32.totalorder %s59, %s60
      %p71 = scmp.eq.s32.totalorder %s25, 0
      %p72 = por %p70, %p71
      %p73 = scmp.ne.s32.totalorder %s59, %s60
      %p74 = scmp.eq.s32.totalorder %s26, 1
      %p75 = por %p73, %p74
      %p77 = scmp.ne.s32.totalorder %s60, %s76
      %p78 = scmp.eq.s32.totalorder %s26, 0
      %p79 = por %p77, %p78
      %s80 = ssub.s32 %s20, %s27
      %p81 = scmp.eq.s32.totalorder %s80, 0
      %s83 = sadd.s32 %s82, 1
      %s84 = scalar_select %p81, %s82, %s83
      %p87 = pneg %p81
      %p88 = scmp.eq.s32.totalorder %s20, 1
      %p89 = por %p87, %p88
      %p90 = scmp.ne.s32.totalorder %s82, %s85
      %p91 = scmp.eq.s32.totalorder %s20, 0
      %p92 = por %p90, %p91
      %p93 = scmp.ne.s32.totalorder %s82, %s85
      %p94 = scmp.eq.s32.totalorder %s25, 1
      %p95 = por %p93, %p94
      %p96 = scmp.ne.s32.totalorder %s85, %s86
      %p97 = scmp.eq.s32.totalorder %s25, 0
      %p98 = por %p96, %p97
      %p99 = scmp.ne.s32.totalorder %s85, %s86
      %p100 = scmp.eq.s32.totalorder %s26, 1
      %p101 = por %p99, %p100
      %p103 = scmp.ne.s32.totalorder %s86, %s102
      %p104 = scmp.eq.s32.totalorder %s26, 0
      %p105 = por %p103, %p104
      %s107 = sadd.s32 %s106, 1
      %p110 = scmp.eq.s32.totalorder %s20, 1
      %p111 = scmp.ne.s32.totalorder %s106, %s108
      %p112 = scmp.eq.s32.totalorder %s20, 0
      %p113 = por %p111, %p112
      %p114 = scmp.ne.s32.totalorder %s106, %s108
      %p115 = scmp.eq.s32.totalorder %s25, 1
      %p116 = por %p114, %p115
      %p117 = scmp.ne.s32.totalorder %s108, %s109
      %p118 = scmp.eq.s32.totalorder %s25, 0
      %p119 = por %p117, %p118
      %p120 = scmp.ne.s32.totalorder %s108, %s109
      %p121 = scmp.eq.s32.totalorder %s26, 1
      %p122 = por %p120, %p121
      %p124 = scmp.ne.s32.totalorder %s109, %s123
      %p125 = scmp.eq.s32.totalorder %s26, 0
      %p126 = por %p124, %p125
      %s128 = sadd.s32 %s127, 1
      %p131 = scmp.eq.s32.totalorder %s20, 1
      %p132 = scmp.ne.s32.totalorder %s127, %s129
      %p133 = scmp.eq.s32.totalorder %s20, 0
      %p134 = por %p132, %p133
      %p135 = scmp.ne.s32.totalorder %s127, %s129
      %p136 = scmp.eq.s32.totalorder %s25, 1
      %p137 = por %p135, %p136
      %p138 = scmp.ne.s32.totalorder %s129, %s130
      %p139 = scmp.eq.s32.totalorder %s25, 0
      %p140 = por %p138, %p139
      %p141 = scmp.ne.s32.totalorder %s129, %s130
      %p142 = scmp.eq.s32.totalorder %s26, 1
      %p143 = por %p141, %p142
      %p145 = scmp.ne.s32.totalorder %s130, %s144
      %p146 = scmp.eq.s32.totalorder %s26, 0
      %p147 = por %p145, %p146
      %s149 = sadd.s32 %s148, 1
      %p152 = scmp.eq.s32.totalorder %s20, 1
      %p153 = scmp.ne.s32.totalorder %s148, %s150
      %p154 = scmp.eq.s32.totalorder %s20, 0
      %p155 = por %p153, %p154
      %p156 = scmp.ne.s32.totalorder %s148, %s150
      %p157 = scmp.eq.s32.totalorder %s25, 1
      %p158 = por %p156, %p157
      %p159 = scmp.ne.s32.totalorder %s150, %s151
      %p160 = scmp.eq.s32.totalorder %s25, 0
      %p161 = por %p159, %p160
      %p162 = scmp.ne.s32.totalorder %s150, %s151
      %p163 = scmp.eq.s32.totalorder %s26, 1
      %p164 = por %p162, %p163
      %p166 = scmp.ne.s32.totalorder %s151, %s165
      %p167 = scmp.eq.s32.totalorder %s26, 0
      %p168 = por %p166, %p167
      %s170 = sadd.s32 %s169, 1
      %p173 = scmp.eq.s32.totalorder %s20, 1
      %p174 = scmp.ne.s32.totalorder %s169, %s171
      %p175 = scmp.eq.s32.totalorder %s20, 0
      %p176 = por %p174, %p175
      %p177 = scmp.ne.s32.totalorder %s169, %s171
      %p178 = scmp.eq.s32.totalorder %s25, 1
      %p179 = por %p177, %p178
      %p180 = scmp.ne.s32.totalorder %s171, %s172
      %p181 = scmp.eq.s32.totalorder %s25, 0
      %p182 = por %p180, %p181
      %p183 = scmp.ne.s32.totalorder %s171, %s172
      %p184 = scmp.eq.s32.totalorder %s26, 1
      %p185 = por %p183, %p184
      %p187 = scmp.ne.s32.totalorder %s172, %s186
      %p188 = scmp.eq.s32.totalorder %s26, 0
      %p189 = por %p187, %p188
      %s191 = sadd.s32 %s190, 1
      %p194 = scmp.eq.s32.totalorder %s20, 1
      %p195 = scmp.ne.s32.totalorder %s190, %s192
      %p196 = scmp.eq.s32.totalorder %s20, 0
      %p197 = por %p195, %p196
      %p198 = scmp.ne.s32.totalorder %s190, %s192
      %p199 = scmp.eq.s32.totalorder %s25, 1
      %p200 = por %p198, %p199
      %p201 = scmp.ne.s32.totalorder %s192, %s193
      %p202 = scmp.eq.s32.totalorder %s25, 0
      %p203 = por %p201, %p202
      %p204 = scmp.ne.s32.totalorder %s192, %s193
      %p205 = scmp.eq.s32.totalorder %s26, 1
      %p206 = por %p204, %p205
      %p208 = scmp.ne.s32.totalorder %s193, %s207
      %p209 = scmp.eq.s32.totalorder %s26, 0
      %p210 = por %p208, %p209
      %s212 = sadd.s32 %s211, 1
      %p215 = scmp.eq.s32.totalorder %s20, 1
      %p216 = scmp.ne.s32.totalorder %s211, %s213
      %p217 = scmp.eq.s32.totalorder %s20, 0
      %p218 = por %p216, %p217
      %p219 = scmp.ne.s32.totalorder %s211, %s213
      %p220 = scmp.eq.s32.totalorder %s25, 1
      %p221 = por %p219, %p220
      %p222 = scmp.ne.s32.totalorder %s213, %s214
      %p223 = scmp.eq.s32.totalorder %s25, 0
      %p224 = por %p222, %p223
      %p225 = scmp.ne.s32.totalorder %s213, %s214
      %p226 = scmp.eq.s32.totalorder %s26, 1
      %p227 = por %p225, %p226
      %p229 = scmp.ne.s32.totalorder %s214, %s228
      %p230 = scmp.eq.s32.totalorder %s26, 0
      %p231 = por %p229, %p230
      %s233 = sadd.s32 %s232, 1
      %p236 = scmp.eq.s32.totalorder %s20, 1
      %p237 = scmp.ne.s32.totalorder %s232, %s234
      %p238 = scmp.eq.s32.totalorder %s20, 0
      %p239 = por %p237, %p238
      %p240 = scmp.ne.s32.totalorder %s232, %s234
      %p241 = scmp.eq.s32.totalorder %s25, 1
      %p242 = por %p240, %p241
      %p243 = scmp.ne.s32.totalorder %s234, %s235
      %p244 = scmp.eq.s32.totalorder %s25, 0
      %p245 = por %p243, %p244
      %p246 = scmp.ne.s32.totalorder %s234, %s235
      %p247 = scmp.eq.s32.totalorder %s26, 1
      %p248 = por %p246, %p247
      %p250 = scmp.ne.s32.totalorder %s235, %s249
      %p251 = scmp.eq.s32.totalorder %s26, 0
      %p252 = por %p250, %p251
      %s254 = sadd.s32 %s253, 1
      %p257 = scmp.eq.s32.totalorder %s20, 1
      %p258 = scmp.ne.s32.totalorder %s253, %s255
      %p259 = scmp.eq.s32.totalorder %s20, 0
      %p260 = por %p258, %p259
      %p261 = scmp.ne.s32.totalorder %s253, %s255
      %p262 = scmp.eq.s32.totalorder %s25, 1
      %p263 = por %p261, %p262
      %p264 = scmp.ne.s32.totalorder %s255, %s256
      %p265 = scmp.eq.s32.totalorder %s25, 0
      %p266 = por %p264, %p265
      %p267 = scmp.ne.s32.totalorder %s255, %s256
      %p268 = scmp.eq.s32.totalorder %s26, 1
      %p269 = por %p267, %p268
      %p271 = scmp.ne.s32.totalorder %s256, %s270
      %p272 = scmp.eq.s32.totalorder %s26, 0
      %p273 = por %p271, %p272
      %s274 = ssub.s32 %s20, %s27
      %p275 = scmp.eq.s32.totalorder %s274, 0
      %s277 = sadd.s32 %s276, 1
      %s278 = scalar_select %p275, %s276, %s277
      %p281 = pneg %p275
      %p282 = scmp.eq.s32.totalorder %s20, 1
      %p283 = por %p281, %p282
      %p284 = scmp.ne.s32.totalorder %s276, %s279
      %p285 = scmp.eq.s32.totalorder %s20, 0
      %p286 = por %p284, %p285
      %p287 = scmp.ne.s32.totalorder %s276, %s279
      %p288 = scmp.eq.s32.totalorder %s25, 1
      %p289 = por %p287, %p288
      %p290 = scmp.ne.s32.totalorder %s279, %s280
      %p291 = scmp.eq.s32.totalorder %s25, 0
      %p292 = por %p290, %p291
      %p293 = scmp.ne.s32.totalorder %s279, %s280
      %p294 = scmp.eq.s32.totalorder %s26, 1
      %p295 = por %p293, %p294
      %p297 = scmp.ne.s32.totalorder %s280, %s296
      %p298 = scmp.eq.s32.totalorder %s26, 0
      %p299 = por %p297, %p298
      %p300 = scmp.le.s32.totalorder 1, %s20
      %p301 = scmp.lt.s32.totalorder %s20, 3
      %p302 = pnand %p300, %p301
      %p303 = pneg %p302
      // Predicated region
      $region9: #{global_interactor_forward.1} parent=5 // pred_check
        _
      $region10: #{global_interactor_forward.1} parent=5 // pred_check_branch
        %305 = sbr.rel (%p302) target = $region12
      $region11: #{global_interactor_forward.1} parent=5 // pred_region
        %s306 = ssub.s32 %s20, 1
        // Predicated region
        $region13: #{global_interactor_forward.1} parent=11 // pred_check
          %p307 = pneg %p119
        $region14: #{global_interactor_forward.1} parent=11 // pred_check_branch
          %309 = sbr.rel (%p307) target = $region16
        $region15: #{global_interactor_forward.1} parent=11 // pred_region
          _
        $region16: #{global_interactor_forward.1} parent=11 // pred_fallthru
          _
        // Predicated region
        $region17: #{global_interactor_forward.1} parent=11 // pred_check
          %p310 = pneg %p140
        $region18: #{global_interactor_forward.1} parent=11 // pred_check_branch
          %312 = sbr.rel (%p310) target = $region20
        $region19: #{global_interactor_forward.1} parent=11 // pred_region
          _
        $region20: #{global_interactor_forward.1} parent=11 // pred_fallthru
          _
        // Predicated region
        $region21: #{global_interactor_forward.1} parent=11 // pred_check
          %p313 = pneg %p161
        $region22: #{global_interactor_forward.1} parent=11 // pred_check_branch
          %315 = sbr.rel (%p313) target = $region24
        $region23: #{global_interactor_forward.1} parent=11 // pred_region
          _
        $region24: #{global_interactor_forward.1} parent=11 // pred_fallthru
          _
        // Predicated region
        $region25: #{global_interactor_forward.1} parent=11 // pred_check
          %p316 = pneg %p182
        $region26: #{global_interactor_forward.1} parent=11 // pred_check_branch
          %318 = sbr.rel (%p316) target = $region28
        $region27: #{global_interactor_forward.1} parent=11 // pred_region
          _
        $region28: #{global_interactor_forward.1} parent=11 // pred_fallthru
          _
        // Predicated region
        $region29: #{global_interactor_forward.1} parent=11 // pred_check
          %p319 = pneg %p203
        $region30: #{global_interactor_forward.1} parent=11 // pred_check_branch
          %321 = sbr.rel (%p319) target = $region32
        $region31: #{global_interactor_forward.1} parent=11 // pred_region
          _
        $region32: #{global_interactor_forward.1} parent=11 // pred_fallthru
          _
        // Predicated region
        $region33: #{global_interactor_forward.1} parent=11 // pred_check
          %p322 = pneg %p224
        $region34: #{global_interactor_forward.1} parent=11 // pred_check_branch
          %324 = sbr.rel (%p322) target = $region36
        $region35: #{global_interactor_forward.1} parent=11 // pred_region
          _
        $region36: #{global_interactor_forward.1} parent=11 // pred_fallthru
          _
        // Predicated region
        $region37: #{global_interactor_forward.1} parent=11 // pred_check
          %p325 = pneg %p245
        $region38: #{global_interactor_forward.1} parent=11 // pred_check_branch
          %327 = sbr.rel (%p325) target = $region40
        $region39: #{global_interactor_forward.1} parent=11 // pred_region
          _
        $region40: #{global_interactor_forward.1} parent=11 // pred_fallthru
          _
        // Predicated region
        $region41: #{global_interactor_forward.1} parent=11 // pred_check
          %p328 = pneg %p266
        $region42: #{global_interactor_forward.1} parent=11 // pred_check_branch
          %330 = sbr.rel (%p328) target = $region44
        $region43: #{global_interactor_forward.1} parent=11 // pred_region
          _
        $region44: #{global_interactor_forward.1} parent=11 // pred_fallthru
          _
      $region12: #{global_interactor_forward.1} parent=5 // pred_fallthru
        _
      %p331 = scmp.lt.s32.totalorder %s20, 2
      // Predicated region
      $region45: #{global_interactor_forward.1} parent=5 // pred_check
        %p332 = pneg %p331
      $region46: #{global_interactor_forward.1} parent=5 // pred_check_branch
        %334 = sbr.rel (%p332) target = $region48
      $region47: #{global_interactor_forward.1} parent=5 // pred_region
        // Predicated region
        $region49: #{global_interactor_forward.1} parent=47 // pred_check
          %p335 = pneg %p40
        $region50: #{global_interactor_forward.1} parent=47 // pred_check_branch
          %337 = sbr.rel (%p335) target = $region52
        $region51: #{global_interactor_forward.1} parent=47 // pred_region
          %p338 = scmp.lt.s32.totalorder %s20, 1
          %s339 = scalar_select %p338, %s20, 1
          %s340 = smul.addr %s339, 32
          %s341 = smul.addr %s340, 8
          %s342 = scalar_lea.vmem %s0, %s341
        $region52: #{global_interactor_forward.1} parent=47 // pred_fallthru
          _
        // Predicated region
        $region53: #{global_interactor_forward.1} parent=47 // pred_check
          %p343 = pneg %p66
        $region54: #{global_interactor_forward.1} parent=47 // pred_check_branch
          %345 = sbr.rel (%p343) target = $region56
        $region55: #{global_interactor_forward.1} parent=47 // pred_region
          %p346 = scmp.lt.s32.totalorder %s20, 1
          %s347 = scalar_select %p346, %s20, 1
          %s348 = smul.addr %s347, 32
          %s349 = smul.addr %s348, 8
          %s350 = scalar_lea.vmem %s1, %s349
        $region56: #{global_interactor_forward.1} parent=47 // pred_fallthru
          _
        // Predicated region
        $region57: #{global_interactor_forward.1} parent=47 // pred_check
          %p351 = pneg %p92
        $region58: #{global_interactor_forward.1} parent=47 // pred_check_branch
          %353 = sbr.rel (%p351) target = $region60
        $region59: #{global_interactor_forward.1} parent=47 // pred_region
          %p354 = scmp.lt.s32.totalorder %s20, 1
          %s355 = scalar_select %p354, %s20, 1
          %s356 = smul.addr %s355, 2
          %s357 = smul.addr %s356, 8
          %s358 = scalar_lea.vmem %s2, %s357
        $region60: #{global_interactor_forward.1} parent=47 // pred_fallthru
          _
      $region48: #{global_interactor_forward.1} parent=5 // pred_fallthru
        _
      %p359 = scmp.le.s32.totalorder 1, %s20
      %p360 = scmp.lt.s32.totalorder %s20, 3
      %p361 = pnand %p359, %p360
      %p362 = pneg %p361
      // Predicated region
      $region61: #{global_interactor_forward.1} parent=5 // pred_check
        _
      $region62: #{global_interactor_forward.1} parent=5 // pred_check_branch
        %364 = sbr.rel (%p361) target = $region64
      $region63: #{global_interactor_forward.1} parent=5 // pred_region
        %s365 = ssub.s32 %s20, 1
        %p366 = scmp.lt.s32.totalorder %s25, 1
        %s367 = scalar_select %p366, %s25, 1
        %s368 = smul.addr %s367, 32
        %s369 = smul.addr %s368, 8
        %s370 = scalar_lea.vmem %s0, %s369
        %p371 = pneg %p46
        %p372 = pneg %p43
        %p373 = scmp.lt.s32.totalorder %s25, 1
        %s374 = scalar_select %p373, %s25, 1
        %s375 = smul.addr %s374, 32
        %s376 = smul.addr %s375, 8
        %s377 = scalar_lea.vmem %s1, %s376
        %p378 = pneg %p72
        %p379 = pneg %p69
        %p380 = scmp.lt.s32.totalorder %s25, 1
        %s381 = scalar_select %p380, %s25, 1
        %s382 = smul.addr %s381, 2
        %s383 = smul.addr %s382, 8
        %s384 = scalar_lea.vmem %s2, %s383
        %p385 = pneg %p98
        %p386 = pneg %p95
        %p387 = pneg %p119
        %p388 = pneg %p116
        %p389 = pneg %p140
        %p390 = pneg %p137
        %p391 = pneg %p161
        %p392 = pneg %p158
        %p393 = pneg %p182
        %p394 = pneg %p179
        %p395 = pneg %p203
        %p396 = pneg %p200
        %p397 = pneg %p224
        %p398 = pneg %p221
        %p399 = pneg %p245
        %p400 = pneg %p242
        %p401 = pneg %p266
        %p402 = pneg %p263
        %p403 = pneg %p292
        %p404 = pneg %p289
        %s405 = sand.u32 %s279, 1
        %s406 = scalar_lea.sflag [#allocation4], %s405
        %s407 = sand.u32 %s279, 1
        %s408 = smul.addr %s407, 16
        %s409 = scalar_lea.vmem [#allocation3], %s408
        %p410 = scmp.lt.s32.totalorder %s25, 1
        %s411 = scalar_select %p410, %s25, 1
        %s412 = smul.addr %s411, 32
        %s413 = smul.addr %s412, 8
        %s414 = scalar_lea.vmem %s0, %s413
        %p415 = scmp.lt.s32.totalorder %s25, 1
        %s416 = scalar_select %p415, %s25, 1
        %s417 = smul.addr %s416, 32
        %s418 = smul.addr %s417, 8
        %s419 = scalar_lea.vmem %s1, %s418
        %p420 = scmp.lt.s32.totalorder %s25, 1
        %s421 = scalar_select %p420, %s25, 1
        %s422 = smul.addr %s421, 2
        %s423 = smul.addr %s422, 8
        %s424 = scalar_lea.vmem %s2, %s423
        %v426 = vld [vmem:[%s3] sm:$0xff]
        %v427 = vld [vmem:[%s3 + $0x8] sm:$0xff]
        %v428 = vld [vmem:[%s3 + $0x10] sm:$0xff]
        %v429 = vld [vmem:[%s3 + $0x18] sm:$0xff]
        %v430 = vld [vmem:[%s3 + $0x20] sm:$0xff]
        %v431 = vld [vmem:[%s3 + $0x28] sm:$0xff]
        %v432 = vld [vmem:[%s3 + $0x30] sm:$0xff]
        %v433 = vld [vmem:[%s3 + $0x38] sm:$0xff]
        %v434 = vld [vmem:[%s4] sm:$0xff]
        %v435 = vld [vmem:[%s4 + $0x8] sm:$0xff]
        %v436 = vld [vmem:[%s4 + $0x10] sm:$0xff]
        %v437 = vld [vmem:[%s4 + $0x18] sm:$0xff]
        %v438 = vld [vmem:[%s4 + $0x20] sm:$0xff]
        %v439 = vld [vmem:[%s4 + $0x28] sm:$0xff]
        %v440 = vld [vmem:[%s4 + $0x30] sm:$0xff]
        %v441 = vld [vmem:[%s4 + $0x38] sm:$0xff]
        %v442 = vld [vmem:[%s4 + $0x40] sm:$0xf]
        %v443 = vld [vmem:[%s4 + $0x48] sm:$0xff]
        %v444 = vld [vmem:[%s4 + $0x50] sm:$0x1]
        %v445 = vld [vmem:[%s414] sm:$0xff]
        %v446 = vld [vmem:[%s414 + $0x8] sm:$0xff]
        %v447 = vld [vmem:[%s414 + $0x10] sm:$0xff]
        %v448 = vld [vmem:[%s414 + $0x18] sm:$0xff]
        %v449 = vld [vmem:[%s414 + $0x20] sm:$0xff]
        %v450 = vld [vmem:[%s414 + $0x28] sm:$0xff]
        %v451 = vld [vmem:[%s414 + $0x30] sm:$0xff]
        %v452 = vld [vmem:[%s414 + $0x38] sm:$0xff]
        %v453 = vld [vmem:[%s414 + $0x40] sm:$0xff]
        %v454 = vld [vmem:[%s414 + $0x48] sm:$0xff]
        %v455 = vld [vmem:[%s414 + $0x50] sm:$0xff]
        %v456 = vld [vmem:[%s414 + $0x58] sm:$0xff]
        %v457 = vld [vmem:[%s414 + $0x60] sm:$0xff]
        %v458 = vld [vmem:[%s414 + $0x68] sm:$0xff]
        %v459 = vld [vmem:[%s414 + $0x70] sm:$0xff]
        %v460 = vld [vmem:[%s414 + $0x78] sm:$0xff]
        %v461 = vld [vmem:[%s414 + $0x80] sm:$0xff]
        %v462 = vld [vmem:[%s414 + $0x88] sm:$0xff]
        %v463 = vld [vmem:[%s414 + $0x90] sm:$0xff]
        %v464 = vld [vmem:[%s414 + $0x98] sm:$0xff]
        %v465 = vld [vmem:[%s414 + $0xa0] sm:$0xff]
        %v466 = vld [vmem:[%s414 + $0xa8] sm:$0xff]
        %v467 = vld [vmem:[%s414 + $0xb0] sm:$0xff]
        %v468 = vld [vmem:[%s414 + $0xb8] sm:$0xff]
        %v469 = vld [vmem:[%s414 + $0xc0] sm:$0xff]
        %v470 = vld [vmem:[%s414 + $0xc8] sm:$0xff]
        %v471 = vld [vmem:[%s414 + $0xd0] sm:$0xff]
        %v472 = vld [vmem:[%s414 + $0xd8] sm:$0xff]
        %v473 = vld [vmem:[%s414 + $0xe0] sm:$0xff]
        %v474 = vld [vmem:[%s414 + $0xe8] sm:$0xff]
        %v475 = vld [vmem:[%s414 + $0xf0] sm:$0xff]
        %v476 = vld [vmem:[%s414 + $0xf8] sm:$0xff]
        %v477 = vpack.c.bf16 %v446, %v445
        %v478 = vpack.c.bf16 %v448, %v447
        %v479 = vpack.c.bf16 %v450, %v449
        %v480 = vpack.c.bf16 %v452, %v451
        %v481 = vpack.c.bf16 %v454, %v453
        %v482 = vpack.c.bf16 %v456, %v455
        %v483 = vpack.c.bf16 %v458, %v457
        %v484 = vpack.c.bf16 %v460, %v459
        %v485 = vpack.c.bf16 %v462, %v461
        %v486 = vpack.c.bf16 %v464, %v463
        %v487 = vpack.c.bf16 %v466, %v465
        %v488 = vpack.c.bf16 %v468, %v467
        %v489 = vpack.c.bf16 %v470, %v469
        %v490 = vpack.c.bf16 %v472, %v471
        %v491 = vpack.c.bf16 %v474, %v473
        %v492 = vpack.c.bf16 %v476, %v475
        %v493 = vpack.c.bf16 %v442, %v442
        %v494 = vlaneseq
        %v495 = vshrl.u32 %v494, 7
        %v496 = vsub.s32 0, %v495
        %v497 = vrot.slane %v443, %v496
        %vm498 = vcmask 31744
        %v500 = vsel %vm498, %v477, 0
        %v503 = vsel %vm498, %v478, 0
        %v506 = vsel %vm498, %v479, 0
        %v509 = vsel %vm498, %v480, 0
        %v512 = vsel %vm498, %v481, 0
        %v515 = vsel %vm498, %v482, 0
        %v518 = vsel %vm498, %v483, 0
        %v521 = vsel %vm498, %v484, 0
        %v524 = vsel %vm498, %v485, 0
        %v527 = vsel %vm498, %v486, 0
        %v530 = vsel %vm498, %v487, 0
        %v533 = vsel %vm498, %v488, 0
        %v536 = vsel %vm498, %v489, 0
        %v539 = vsel %vm498, %v490, 0
        %v542 = vsel %vm498, %v491, 0
        %v545 = vsel %vm498, %v492, 0
        %vm547 = vcmask 1041408
        %v549 = vsel %vm547, %v493, 0
        %551 = vmatprep.subr.bf16.mxu0 0
        %552 = vmatpush1.bf16.msra.mxu0 %v549
        %553 = vmatprep.subr.bf16.mxu0 0
        %554 = vmatpush1.bf16.msra.mxu0 0
        %555 = vmatprep.subr.bf16.mxu0 0
        %556 = vmatpush1.bf16.msra.mxu0 0
        %557 = vmatprep.subr.bf16.mxu0 0
        %558 = vmatpush1.bf16.msra.mxu0 0
        %559 = vmatprep.subr.bf16.mxu0 0
        %560 = vmatpush1.bf16.msra.mxu0 0
        %561 = vmatprep.subr.bf16.mxu0 0
        %562 = vmatpush1.bf16.msra.mxu0 0
        %563 = vmatprep.subr.bf16.mxu0 0
        %564 = vmatpush1.bf16.msra.mxu0 0
        %565 = vmatprep.subr.bf16.mxu0 0
        %566 = vmatpush1.bf16.msra.mxu0 0
        %567 = vmatprep.subr.bf16.mxu0 0
        %568 = vmatpush1.bf16.msra.mxu0 0
        %569 = vmatprep.subr.bf16.mxu0 0
        %570 = vmatpush1.bf16.msra.mxu0 0
        %571 = vmatprep.subr.bf16.mxu0 0
        %572 = vmatpush1.bf16.msra.mxu0 0
        %573 = vmatprep.subr.bf16.mxu0 0
        %574 = vmatpush1.bf16.msra.mxu0 0
        %575 = vmatprep.subr.bf16.mxu0 0
        %576 = vmatpush1.bf16.msra.mxu0 0
        %577 = vmatprep.subr.bf16.mxu0 0
        %578 = vmatpush1.bf16.msra.mxu0 0
        %579 = vmatprep.subr.bf16.mxu0 0
        %580 = vmatpush1.bf16.msra.mxu0 0
        %581 = vmatprep.subr.bf16.mxu0 0
        %582 = vmatpush1.bf16.msra.mxu0 0
        %583 = vmatprep.mubr.bf16.mxu0 0
        %584 = vmatmul.mubr.bf16.gmra.mrb[0].mxu0 %v500
        %v585 = vpop.f32.mrb[0].mxu0
        %v586 = vadd.f32 %v497, %v585
        %v587 = vpop.f32.mrb[0].mxu0
        %v588 = vpop.f32.mrb[0].mxu0
        %v589 = vadd.f32 %v497, %v588
        %v590 = vpop.f32.mrb[0].mxu0
        %591 = vmatprep.mubr.bf16.mxu0 0
        %592 = vmatmul.mubr.bf16.gmra.mrb[0].mxu0 %v503
        %v593 = vpop.f32.mrb[0].mxu0
        %v594 = vadd.f32 %v497, %v593
        %v595 = vpop.f32.mrb[0].mxu0
        %v596 = vpop.f32.mrb[0].mxu0
        %v597 = vadd.f32 %v497, %v596
        %v598 = vpop.f32.mrb[0].mxu0
        %599 = vmatprep.mubr.bf16.mxu0 0
        %600 = vmatmul.mubr.bf16.gmra.mrb[0].mxu0 %v506
        %v601 = vpop.f32.mrb[0].mxu0
        %v602 = vadd.f32 %v497, %v601
        %v603 = vpop.f32.mrb[0].mxu0
        %v604 = vpop.f32.mrb[0].mxu0
        %v605 = vadd.f32 %v497, %v604
        %v606 = vpop.f32.mrb[0].mxu0
        %607 = vmatprep.mubr.bf16.mxu0 0
        %608 = vmatmul.mubr.bf16.gmra.mrb[0].mxu0 %v509
        %v609 = vpop.f32.mrb[0].mxu0
        %v610 = vadd.f32 %v497, %v609
        %v611 = vpop.f32.mrb[0].mxu0
        %v612 = vpop.f32.mrb[0].mxu0
        %v613 = vadd.f32 %v497, %v612
        %v614 = vpop.f32.mrb[0].mxu0
        %615 = vmatprep.mubr.bf16.mxu0 0
        %616 = vmatmul.mubr.bf16.gmra.mrb[0].mxu0 %v512
        %v617 = vpop.f32.mrb[0].mxu0
        %v618 = vadd.f32 %v497, %v617
        %v619 = vpop.f32.mrb[0].mxu0
        %v620 = vpop.f32.mrb[0].mxu0
        %v621 = vadd.f32 %v497, %v620
        %v622 = vpop.f32.mrb[0].mxu0
        %623 = vmatprep.mubr.bf16.mxu0 0
        %624 = vmatmul.mubr.bf16.gmra.mrb[0].mxu0 %v515
        %v625 = vpop.f32.mrb[0].mxu0
        %v626 = vadd.f32 %v497, %v625
        %v627 = vpop.f32.mrb[0].mxu0
        %v628 = vpop.f32.mrb[0].mxu0
        %v629 = vadd.f32 %v497, %v628
        %v630 = vpop.f32.mrb[0].mxu0
        %631 = vmatprep.mubr.bf16.mxu0 0
        %632 = vmatmul.mubr.bf16.gmra.mrb[0].mxu0 %v518
        %v633 = vpop.f32.mrb[0].mxu0
        %v634 = vadd.f32 %v497, %v633
        %v635 = vpop.f32.mrb[0].mxu0
        %v636 = vpop.f32.mrb[0].mxu0
        %v637 = vadd.f32 %v497, %v636
        %v638 = vpop.f32.mrb[0].mxu0
        %639 = vmatprep.mubr.bf16.mxu0 0
        %640 = vmatmul.mubr.bf16.gmra.mrb[0].mxu0 %v521
        %v641 = vpop.f32.mrb[0].mxu0
        %v642 = vadd.f32 %v497, %v641
        %v643 = vpop.f32.mrb[0].mxu0
        %v644 = vpop.f32.mrb[0].mxu0
        %v645 = vadd.f32 %v497, %v644
        %v646 = vpop.f32.mrb[0].mxu0
        %647 = vmatprep.mubr.bf16.mxu0 0
        %648 = vmatmul.mubr.bf16.gmra.mrb[0].mxu0 %v524
        %v649 = vpop.f32.mrb[0].mxu0
        %v650 = vadd.f32 %v497, %v649
        %v651 = vpop.f32.mrb[0].mxu0
        %v652 = vpop.f32.mrb[0].mxu0
        %v653 = vadd.f32 %v497, %v652
        %v654 = vpop.f32.mrb[0].mxu0
        %655 = vmatprep.mubr.bf16.mxu0 0
        %656 = vmatmul.mubr.bf16.gmra.mrb[0].mxu0 %v527
        %v657 = vpop.f32.mrb[0].mxu0
        %v658 = vadd.f32 %v497, %v657
        %v659 = vpop.f32.mrb[0].mxu0
        %v660 = vpop.f32.mrb[0].mxu0
        %v661 = vadd.f32 %v497, %v660
        %v662 = vpop.f32.mrb[0].mxu0
        %663 = vmatprep.mubr.bf16.mxu0 0
        %664 = vmatmul.mubr.bf16.gmra.mrb[0].mxu0 %v530
        %v665 = vpop.f32.mrb[0].mxu0
        %v666 = vadd.f32 %v497, %v665
        %v667 = vpop.f32.mrb[0].mxu0
        %v668 = vpop.f32.mrb[0].mxu0
        %v669 = vadd.f32 %v497, %v668
        %v670 = vpop.f32.mrb[0].mxu0
        %671 = vmatprep.mubr.bf16.mxu0 0
        %672 = vmatmul.mubr.bf16.gmra.mrb[0].mxu0 %v533
        %v673 = vpop.f32.mrb[0].mxu0
        %v674 = vadd.f32 %v497, %v673
        %v675 = vpop.f32.mrb[0].mxu0
        %v676 = vpop.f32.mrb[0].mxu0
        %v677 = vadd.f32 %v497, %v676
        %v678 = vpop.f32.mrb[0].mxu0
        %679 = vmatprep.mubr.bf16.mxu0 0
        %680 = vmatmul.mubr.bf16.gmra.mrb[0].mxu0 %v536
        %v681 = vpop.f32.mrb[0].mxu0
        %v682 = vadd.f32 %v497, %v681
        %v683 = vpop.f32.mrb[0].mxu0
        %v684 = vpop.f32.mrb[0].mxu0
        %v685 = vadd.f32 %v497, %v684
        %v686 = vpop.f32.mrb[0].mxu0
        %687 = vmatprep.mubr.bf16.mxu0 0
        %688 = vmatmul.mubr.bf16.gmra.mrb[0].mxu0 %v539
        %v689 = vpop.f32.mrb[0].mxu0
        %v690 = vadd.f32 %v497, %v689
        %v691 = vpop.f32.mrb[0].mxu0
        %v692 = vpop.f32.mrb[0].mxu0
        %v693 = vadd.f32 %v497, %v692
        %v694 = vpop.f32.mrb[0].mxu0
        %695 = vmatprep.mubr.bf16.mxu0 0
        %696 = vmatmul.mubr.bf16.gmra.mrb[0].mxu0 %v542
        %v697 = vpop.f32.mrb[0].mxu0
        %v698 = vadd.f32 %v497, %v697
        %v699 = vpop.f32.mrb[0].mxu0
        %v700 = vpop.f32.mrb[0].mxu0
        %v701 = vadd.f32 %v497, %v700
        %v702 = vpop.f32.mrb[0].mxu0
        %703 = vmatprep.mubr.bf16.mxu0 0
        %704 = vmatmul.mubr.bf16.gmra.mrb[0].mxu0 %v545
        %v705 = vpop.f32.mrb[0].mxu0
        %v706 = vadd.f32 %v497, %v705
        %v707 = vpop.f32.mrb[0].mxu0
        %v708 = vpop.f32.mrb[0].mxu0
        %v709 = vadd.f32 %v497, %v708
        %v710 = vpop.f32.mrb[0].mxu0
        %711 = vdwg.mxu0
        %vm712 = vcmask 261120
        %v714 = vsel %vm712, %v586, 0
        %v717 = vsel %vm712, %v589, 0
        %v720 = vsel %vm712, %v594, 0
        %v723 = vsel %vm712, %v597, 0
        %v726 = vsel %vm712, %v602, 0
        %v729 = vsel %vm712, %v605, 0
        %v732 = vsel %vm712, %v610, 0
        %v735 = vsel %vm712, %v613, 0
        %v738 = vsel %vm712, %v618, 0
        %v741 = vsel %vm712, %v621, 0
        %v744 = vsel %vm712, %v626, 0
        %v747 = vsel %vm712, %v629, 0
        %v750 = vsel %vm712, %v634, 0
        %v753 = vsel %vm712, %v637, 0
        %v756 = vsel %vm712, %v642, 0
        %v759 = vsel %vm712, %v645, 0
        %v762 = vsel %vm712, %v650, 0
        %v765 = vsel %vm712, %v653, 0
        %v768 = vsel %vm712, %v658, 0
        %v771 = vsel %vm712, %v661, 0
        %v774 = vsel %vm712, %v666, 0
        %v777 = vsel %vm712, %v669, 0
        %v780 = vsel %vm712, %v674, 0
        %v783 = vsel %vm712, %v677, 0
        %v786 = vsel %vm712, %v682, 0
        %v789 = vsel %vm712, %v685, 0
        %v792 = vsel %vm712, %v690, 0
        %v795 = vsel %vm712, %v693, 0
        %v798 = vsel %vm712, %v698, 0
        %v801 = vsel %vm712, %v701, 0
        %v804 = vsel %vm712, %v706, 0
        %v807 = vsel %vm712, %v709, 0
        %809 = vmatprep.subr.mxu0 0.0
        %810 = vmatpush1.msra.mxu0 %v426
        %811 = vmatprep.subr.mxu0 0.0
        %812 = vmatpush1.msra.mxu0 %v427
        %813 = vmatprep.subr.mxu0 0.0
        %814 = vmatpush1.msra.mxu0 %v428
        %815 = vmatprep.subr.mxu0 0.0
        %816 = vmatpush1.msra.mxu0 %v429
        %817 = vmatprep.subr.mxu0 0.0
        %818 = vmatpush1.msra.mxu0 0.0
        %819 = vmatprep.subr.mxu0 0.0
        %820 = vmatpush1.msra.mxu0 0.0
        %821 = vmatprep.subr.mxu0 0.0
        %822 = vmatpush1.msra.mxu0 0.0
        %823 = vmatprep.subr.mxu0 0.0
        %824 = vmatpush1.msra.mxu0 0.0
        %825 = vmatprep.subr.mxu0 0.0
        %826 = vmatpush1.msra.mxu0 0.0
        %827 = vmatprep.subr.mxu0 0.0
        %828 = vmatpush1.msra.mxu0 0.0
        %829 = vmatprep.subr.mxu0 0.0
        %830 = vmatpush1.msra.mxu0 0.0
        %831 = vmatprep.subr.mxu0 0.0
        %832 = vmatpush1.msra.mxu0 0.0
        %833 = vmatprep.subr.mxu0 0.0
        %834 = vmatpush1.msra.mxu0 0.0
        %835 = vmatprep.subr.mxu0 0.0
        %836 = vmatpush1.msra.mxu0 0.0
        %837 = vmatprep.subr.mxu0 0.0
        %838 = vmatpush1.msra.mxu0 0.0
        %839 = vmatprep.subr.mxu0 0.0
        %840 = vmatpush1.msra.mxu0 0.0
        %841 = vmatprep.subr.mxu0 0.0
        %842 = vmatpush1.msra.mxu0 0.0
        %843 = vmatprep.subr.mxu0 0.0
        %844 = vmatpush1.msra.mxu0 0.0
        %845 = vmatprep.subr.mxu0 0.0
        %846 = vmatpush1.msra.mxu0 0.0
        %847 = vmatprep.subr.mxu0 0.0
        %848 = vmatpush1.msra.mxu0 0.0
        %849 = vmatprep.subr.mxu0 0.0
        %850 = vmatpush1.msra.mxu0 0.0
        %851 = vmatprep.subr.mxu0 0.0
        %852 = vmatpush1.msra.mxu0 0.0
        %853 = vmatprep.subr.mxu0 0.0
        %854 = vmatpush1.msra.mxu0 0.0
        %855 = vmatprep.subr.mxu0 0.0
        %856 = vmatpush1.msra.mxu0 0.0
        %857 = vmatprep.subr.mxu0 0.0
        %858 = vmatpush1.msra.mxu0 0.0
        %859 = vmatprep.subr.mxu0 0.0
        %860 = vmatpush1.msra.mxu0 0.0
        %861 = vmatprep.subr.mxu0 0.0
        %862 = vmatpush1.msra.mxu0 0.0
        %863 = vmatprep.subr.mxu0 0.0
        %864 = vmatpush1.msra.mxu0 0.0
        %865 = vmatprep.subr.mxu0 0.0
        %866 = vmatpush1.msra.mxu0 0.0
        %867 = vmatprep.subr.mxu0 0.0
        %868 = vmatpush1.msra.mxu0 0.0
        %869 = vmatprep.subr.mxu0 0.0
        %870 = vmatpush1.msra.mxu0 0.0
        %871 = vmatprep.subr.mxu0 0.0
        %872 = vmatpush1.msra.mxu0 0.0
        %873 = vmatprep.mubr.f32.mxu0 0.0
        %874 = vmatmul.mubr.f32.gmra.mrb[0].mxu0 %v714
        %v875 = vpop.f32.mrb[0].mxu0
        %v876 = vadd.f32 0.0, %v875
        %v877 = vpop.f32.mrb[0].mxu0
        %878 = vmatprep.mubr.f32.mxu0 0.0
        %879 = vmatmul.mubr.f32.gmra.mrb[0].mxu0 %v717
        %v880 = vpop.f32.mrb[0].mxu0
        %v881 = vadd.f32 0.0, %v880
        %v882 = vpop.f32.mrb[0].mxu0
        %883 = vmatprep.mubr.f32.mxu0 0.0
        %884 = vmatmul.mubr.f32.gmra.mrb[0].mxu0 %v720
        %v885 = vpop.f32.mrb[0].mxu0
        %v886 = vadd.f32 0.0, %v885
        %v887 = vpop.f32.mrb[0].mxu0
        %888 = vmatprep.mubr.f32.mxu0 0.0
        %889 = vmatmul.mubr.f32.gmra.mrb[0].mxu0 %v723
        %v890 = vpop.f32.mrb[0].mxu0
        %v891 = vadd.f32 0.0, %v890
        %v892 = vpop.f32.mrb[0].mxu0
        %893 = vmatprep.mubr.f32.mxu0 0.0
        %894 = vmatmul.mubr.f32.gmra.mrb[0].mxu0 %v726
        %v895 = vpop.f32.mrb[0].mxu0
        %v896 = vadd.f32 0.0, %v895
        %v897 = vpop.f32.mrb[0].mxu0
        %898 = vmatprep.mubr.f32.mxu0 0.0
        %899 = vmatmul.mubr.f32.gmra.mrb[0].mxu0 %v729
        %v900 = vpop.f32.mrb[0].mxu0
        %v901 = vadd.f32 0.0, %v900
        %v902 = vpop.f32.mrb[0].mxu0
        %903 = vmatprep.mubr.f32.mxu0 0.0
        %904 = vmatmul.mubr.f32.gmra.mrb[0].mxu0 %v732
        %v905 = vpop.f32.mrb[0].mxu0
        %v906 = vadd.f32 0.0, %v905
        %v907 = vpop.f32.mrb[0].mxu0
        %908 = vmatprep.mubr.f32.mxu0 0.0
        %909 = vmatmul.mubr.f32.gmra.mrb[0].mxu0 %v735
        %v910 = vpop.f32.mrb[0].mxu0
        %v911 = vadd.f32 0.0, %v910
        %v912 = vpop.f32.mrb[0].mxu0
        %913 = vmatprep.mubr.f32.mxu0 0.0
        %914 = vmatmul.mubr.f32.gmra.mrb[0].mxu0 %v738
        %v915 = vpop.f32.mrb[0].mxu0
        %v916 = vadd.f32 0.0, %v915
        %v917 = vpop.f32.mrb[0].mxu0
        %918 = vmatprep.mubr.f32.mxu0 0.0
        %919 = vmatmul.mubr.f32.gmra.mrb[0].mxu0 %v741
        %v920 = vpop.f32.mrb[0].mxu0
        %v921 = vadd.f32 0.0, %v920
        %v922 = vpop.f32.mrb[0].mxu0
        %923 = vmatprep.mubr.f32.mxu0 0.0
        %924 = vmatmul.mubr.f32.gmra.mrb[0].mxu0 %v744
        %v925 = vpop.f32.mrb[0].mxu0
        %v926 = vadd.f32 0.0, %v925
        %v927 = vpop.f32.mrb[0].mxu0
        %928 = vmatprep.mubr.f32.mxu0 0.0
        %929 = vmatmul.mubr.f32.gmra.mrb[0].mxu0 %v747
        %v930 = vpop.f32.mrb[0].mxu0
        %v931 = vadd.f32 0.0, %v930
        %v932 = vpop.f32.mrb[0].mxu0
        %933 = vmatprep.mubr.f32.mxu0 0.0
        %934 = vmatmul.mubr.f32.gmra.mrb[0].mxu0 %v750
        %v935 = vpop.f32.mrb[0].mxu0
        %v936 = vadd.f32 0.0, %v935
        %v937 = vpop.f32.mrb[0].mxu0
        %938 = vmatprep.mubr.f32.mxu0 0.0
        %939 = vmatmul.mubr.f32.gmra.mrb[0].mxu0 %v753
        %v940 = vpop.f32.mrb[0].mxu0
        %v941 = vadd.f32 0.0, %v940
        %v942 = vpop.f32.mrb[0].mxu0
        %943 = vmatprep.mubr.f32.mxu0 0.0
        %944 = vmatmul.mubr.f32.gmra.mrb[0].mxu0 %v756
        %v945 = vpop.f32.mrb[0].mxu0
        %v946 = vadd.f32 0.0, %v945
        %v947 = vpop.f32.mrb[0].mxu0
        %948 = vmatprep.mubr.f32.mxu0 0.0
        %949 = vmatmul.mubr.f32.gmra.mrb[0].mxu0 %v759
        %v950 = vpop.f32.mrb[0].mxu0
        %v951 = vadd.f32 0.0, %v950
        %v952 = vpop.f32.mrb[0].mxu0
        %953 = vmatprep.mubr.f32.mxu0 0.0
        %954 = vmatmul.mubr.f32.gmra.mrb[0].mxu0 %v762
        %v955 = vpop.f32.mrb[0].mxu0
        %v956 = vadd.f32 0.0, %v955
        %v957 = vpop.f32.mrb[0].mxu0
        %958 = vmatprep.mubr.f32.mxu0 0.0
        %959 = vmatmul.mubr.f32.gmra.mrb[0].mxu0 %v765
        %v960 = vpop.f32.mrb[0].mxu0
        %v961 = vadd.f32 0.0, %v960
        %v962 = vpop.f32.mrb[0].mxu0
        %963 = vmatprep.mubr.f32.mxu0 0.0
        %964 = vmatmul.mubr.f32.gmra.mrb[0].mxu0 %v768
        %v965 = vpop.f32.mrb[0].mxu0
        %v966 = vadd.f32 0.0, %v965
        %v967 = vpop.f32.mrb[0].mxu0
        %968 = vmatprep.mubr.f32.mxu0 0.0
        %969 = vmatmul.mubr.f32.gmra.mrb[0].mxu0 %v771
        %v970 = vpop.f32.mrb[0].mxu0
        %v971 = vadd.f32 0.0, %v970
        %v972 = vpop.f32.mrb[0].mxu0
        %973 = vmatprep.mubr.f32.mxu0 0.0
        %974 = vmatmul.mubr.f32.gmra.mrb[0].mxu0 %v774
        %v975 = vpop.f32.mrb[0].mxu0
        %v976 = vadd.f32 0.0, %v975
        %v977 = vpop.f32.mrb[0].mxu0
        %978 = vmatprep.mubr.f32.mxu0 0.0
        %979 = vmatmul.mubr.f32.gmra.mrb[0].mxu0 %v777
        %v980 = vpop.f32.mrb[0].mxu0
        %v981 = vadd.f32 0.0, %v980
        %v982 = vpop.f32.mrb[0].mxu0
        %983 = vmatprep.mubr.f32.mxu0 0.0
        %984 = vmatmul.mubr.f32.gmra.mrb[0].mxu0 %v780
        %v985 = vpop.f32.mrb[0].mxu0
        %v986 = vadd.f32 0.0, %v985
        %v987 = vpop.f32.mrb[0].mxu0
        %988 = vmatprep.mubr.f32.mxu0 0.0
        %989 = vmatmul.mubr.f32.gmra.mrb[0].mxu0 %v783
        %v990 = vpop.f32.mrb[0].mxu0
        %v991 = vadd.f32 0.0, %v990
        %v992 = vpop.f32.mrb[0].mxu0
        %993 = vmatprep.mubr.f32.mxu0 0.0
        %994 = vmatmul.mubr.f32.gmra.mrb[0].mxu0 %v786
        %v995 = vpop.f32.mrb[0].mxu0
        %v996 = vadd.f32 0.0, %v995
        %v997 = vpop.f32.mrb[0].mxu0
        %998 = vmatprep.mubr.f32.mxu0 0.0
        %999 = vmatmul.mubr.f32.gmra.mrb[0].mxu0 %v789
        %v1000 = vpop.f32.mrb[0].mxu0
        %v1001 = vadd.f32 0.0, %v1000
        %v1002 = vpop.f32.mrb[0].mxu0
        %1003 = vmatprep.mubr.f32.mxu0 0.0
        %1004 = vmatmul.mubr.f32.gmra.mrb[0].mxu0 %v792
        %v1005 = vpop.f32.mrb[0].mxu0
        %v1006 = vadd.f32 0.0, %v1005
        %v1007 = vpop.f32.mrb[0].mxu0
        %1008 = vmatprep.mubr.f32.mxu0 0.0
        %1009 = vmatmul.mubr.f32.gmra.mrb[0].mxu0 %v795
        %v1010 = vpop.f32.mrb[0].mxu0
        %v1011 = vadd.f32 0.0, %v1010
        %v1012 = vpop.f32.mrb[0].mxu0
        %1013 = vmatprep.mubr.f32.mxu0 0.0
        %1014 = vmatmul.mubr.f32.gmra.mrb[0].mxu0 %v798
        %v1015 = vpop.f32.mrb[0].mxu0
        %v1016 = vadd.f32 0.0, %v1015
        %v1017 = vpop.f32.mrb[0].mxu0
        %1018 = vmatprep.mubr.f32.mxu0 0.0
        %1019 = vmatmul.mubr.f32.gmra.mrb[0].mxu0 %v801
        %v1020 = vpop.f32.mrb[0].mxu0
        %v1021 = vadd.f32 0.0, %v1020
        %v1022 = vpop.f32.mrb[0].mxu0
        %1023 = vmatprep.mubr.f32.mxu0 0.0
        %1024 = vmatmul.mubr.f32.gmra.mrb[0].mxu0 %v804
        %v1025 = vpop.f32.mrb[0].mxu0
        %v1026 = vadd.f32 0.0, %v1025
        %v1027 = vpop.f32.mrb[0].mxu0
        %1028 = vmatprep.mubr.f32.mxu0 0.0
        %1029 = vmatmul.mubr.f32.gmra.mrb[0].mxu0 %v807
        %v1030 = vpop.f32.mrb[0].mxu0
        %v1031 = vadd.f32 0.0, %v1030
        %v1032 = vpop.f32.mrb[0].mxu0
        %1033 = vdwg.mxu0
        %v1034 = vsub.f32 %v586, %v876
        %v1035 = vsub.f32 %v589, %v881
        %v1036 = vsub.f32 %v594, %v886
        %v1037 = vsub.f32 %v597, %v891
        %v1038 = vsub.f32 %v602, %v896
        %v1039 = vsub.f32 %v605, %v901
        %v1040 = vsub.f32 %v610, %v906
        %v1041 = vsub.f32 %v613, %v911
        %v1042 = vsub.f32 %v618, %v916
        %v1043 = vsub.f32 %v621, %v921
        %v1044 = vsub.f32 %v626, %v926
        %v1045 = vsub.f32 %v629, %v931
        %v1046 = vsub.f32 %v634, %v936
        %v1047 = vsub.f32 %v637, %v941
        %v1048 = vsub.f32 %v642, %v946
        %v1049 = vsub.f32 %v645, %v951
        %v1050 = vsub.f32 %v650, %v956
        %v1051 = vsub.f32 %v653, %v961
        %v1052 = vsub.f32 %v658, %v966
        %v1053 = vsub.f32 %v661, %v971
        %v1054 = vsub.f32 %v666, %v976
        %v1055 = vsub.f32 %v669, %v981
        %v1056 = vsub.f32 %v674, %v986
        %v1057 = vsub.f32 %v677, %v991
        %v1058 = vsub.f32 %v682, %v996
        %v1059 = vsub.f32 %v685, %v1001
        %v1060 = vsub.f32 %v690, %v1006
        %v1061 = vsub.f32 %v693, %v1011
        %v1062 = vsub.f32 %v698, %v1016
        %v1063 = vsub.f32 %v701, %v1021
        %v1064 = vsub.f32 %v706, %v1026
        %v1065 = vsub.f32 %v709, %v1031
        %v1066 = vmul.f32 %v1034, %v1034
        %v1067 = vmul.f32 %v1035, %v1035
        %v1068 = vmul.f32 %v1036, %v1036
        %v1069 = vmul.f32 %v1037, %v1037
        %v1070 = vmul.f32 %v1038, %v1038
        %v1071 = vmul.f32 %v1039, %v1039
        %v1072 = vmul.f32 %v1040, %v1040
        %v1073 = vmul.f32 %v1041, %v1041
        %v1074 = vmul.f32 %v1042, %v1042
        %v1075 = vmul.f32 %v1043, %v1043
        %v1076 = vmul.f32 %v1044, %v1044
        %v1077 = vmul.f32 %v1045, %v1045
        %v1078 = vmul.f32 %v1046, %v1046
        %v1079 = vmul.f32 %v1047, %v1047
        %v1080 = vmul.f32 %v1048, %v1048
        %v1081 = vmul.f32 %v1049, %v1049
        %v1082 = vmul.f32 %v1050, %v1050
        %v1083 = vmul.f32 %v1051, %v1051
        %v1084 = vmul.f32 %v1052, %v1052
        %v1085 = vmul.f32 %v1053, %v1053
        %v1086 = vmul.f32 %v1054, %v1054
        %v1087 = vmul.f32 %v1055, %v1055
        %v1088 = vmul.f32 %v1056, %v1056
        %v1089 = vmul.f32 %v1057, %v1057
        %v1090 = vmul.f32 %v1058, %v1058
        %v1091 = vmul.f32 %v1059, %v1059
        %v1092 = vmul.f32 %v1060, %v1060
        %v1093 = vmul.f32 %v1061, %v1061
        %v1094 = vmul.f32 %v1062, %v1062
        %v1095 = vmul.f32 %v1063, %v1063
        %v1096 = vmul.f32 %v1064, %v1064
        %v1097 = vmul.f32 %v1065, %v1065
        %v1099 = vsel %vm712, %v1066, 0
        %v1102 = vsel %vm712, %v1067, 0
        %v1105 = vsel %vm712, %v1068, 0
        %v1108 = vsel %vm712, %v1069, 0
        %v1111 = vsel %vm712, %v1070, 0
        %v1114 = vsel %vm712, %v1071, 0
        %v1117 = vsel %vm712, %v1072, 0
        %v1120 = vsel %vm712, %v1073, 0
        %v1123 = vsel %vm712, %v1074, 0
        %v1126 = vsel %vm712, %v1075, 0
        %v1129 = vsel %vm712, %v1076, 0
        %v1132 = vsel %vm712, %v1077, 0
        %v1135 = vsel %vm712, %v1078, 0
        %v1138 = vsel %vm712, %v1079, 0
        %v1141 = vsel %vm712, %v1080, 0
        %v1144 = vsel %vm712, %v1081, 0
        %v1147 = vsel %vm712, %v1082, 0
        %v1150 = vsel %vm712, %v1083, 0
        %v1153 = vsel %vm712, %v1084, 0
        %v1156 = vsel %vm712, %v1085, 0
        %v1159 = vsel %vm712, %v1086, 0
        %v1162 = vsel %vm712, %v1087, 0
        %v1165 = vsel %vm712, %v1088, 0
        %v1168 = vsel %vm712, %v1089, 0
        %v1171 = vsel %vm712, %v1090, 0
        %v1174 = vsel %vm712, %v1091, 0
        %v1177 = vsel %vm712, %v1092, 0
        %v1180 = vsel %vm712, %v1093, 0
        %v1183 = vsel %vm712, %v1094, 0
        %v1186 = vsel %vm712, %v1095, 0
        %v1189 = vsel %vm712, %v1096, 0
        %v1192 = vsel %vm712, %v1097, 0
        %1194 = vmatprep.subr.mxu0 0.0
        %1195 = vmatpush1.msra.mxu0 %v426
        %1196 = vmatprep.subr.mxu0 0.0
        %1197 = vmatpush1.msra.mxu0 %v427
        %1198 = vmatprep.subr.mxu0 0.0
        %1199 = vmatpush1.msra.mxu0 %v428
        %1200 = vmatprep.subr.mxu0 0.0
        %1201 = vmatpush1.msra.mxu0 %v429
        %1202 = vmatprep.subr.mxu0 0.0
        %1203 = vmatpush1.msra.mxu0 0.0
        %1204 = vmatprep.subr.mxu0 0.0
        %1205 = vmatpush1.msra.mxu0 0.0
        %1206 = vmatprep.subr.mxu0 0.0
        %1207 = vmatpush1.msra.mxu0 0.0
        %1208 = vmatprep.subr.mxu0 0.0
        %1209 = vmatpush1.msra.mxu0 0.0
        %1210 = vmatprep.subr.mxu0 0.0
        %1211 = vmatpush1.msra.mxu0 0.0
        %1212 = vmatprep.subr.mxu0 0.0
        %1213 = vmatpush1.msra.mxu0 0.0
        %1214 = vmatprep.subr.mxu0 0.0
        %1215 = vmatpush1.msra.mxu0 0.0
        %1216 = vmatprep.subr.mxu0 0.0
        %1217 = vmatpush1.msra.mxu0 0.0
        %1218 = vmatprep.subr.mxu0 0.0
        %1219 = vmatpush1.msra.mxu0 0.0
        %1220 = vmatprep.subr.mxu0 0.0
        %1221 = vmatpush1.msra.mxu0 0.0
        %1222 = vmatprep.subr.mxu0 0.0
        %1223 = vmatpush1.msra.mxu0 0.0
        %1224 = vmatprep.subr.mxu0 0.0
        %1225 = vmatpush1.msra.mxu0 0.0
        %1226 = vmatprep.subr.mxu0 0.0
        %1227 = vmatpush1.msra.mxu0 0.0
        %1228 = vmatprep.subr.mxu0 0.0
        %1229 = vmatpush1.msra.mxu0 0.0
        %1230 = vmatprep.subr.mxu0 0.0
        %1231 = vmatpush1.msra.mxu0 0.0
        %1232 = vmatprep.subr.mxu0 0.0
        %1233 = vmatpush1.msra.mxu0 0.0
        %1234 = vmatprep.subr.mxu0 0.0
        %1235 = vmatpush1.msra.mxu0 0.0
        %1236 = vmatprep.subr.mxu0 0.0
        %1237 = vmatpush1.msra.mxu0 0.0
        %1238 = vmatprep.subr.mxu0 0.0
        %1239 = vmatpush1.msra.mxu0 0.0
        %1240 = vmatprep.subr.mxu0 0.0
        %1241 = vmatpush1.msra.mxu0 0.0
        %1242 = vmatprep.subr.mxu0 0.0
        %1243 = vmatpush1.msra.mxu0 0.0
        %1244 = vmatprep.subr.mxu0 0.0
        %1245 = vmatpush1.msra.mxu0 0.0
        %1246 = vmatprep.subr.mxu0 0.0
        %1247 = vmatpush1.msra.mxu0 0.0
        %1248 = vmatprep.subr.mxu0 0.0
        %1249 = vmatpush1.msra.mxu0 0.0
        %1250 = vmatprep.subr.mxu0 0.0
        %1251 = vmatpush1.msra.mxu0 0.0
        %1252 = vmatprep.subr.mxu0 0.0
        %1253 = vmatpush1.msra.mxu0 0.0
        %1254 = vmatprep.subr.mxu0 0.0
        %1255 = vmatpush1.msra.mxu0 0.0
        %1256 = vmatprep.subr.mxu0 0.0
        %1257 = vmatpush1.msra.mxu0 0.0
        %1258 = vmatprep.mubr.f32.mxu0 0.0
        %1259 = vmatmul.mubr.f32.gmra.mrb[0].mxu0 %v1099
        %v1260 = vpop.f32.mrb[0].mxu0
        %v1261 = vadd.f32 1e-05, %v1260
        %v1262 = vpop.f32.mrb[0].mxu0
        %1263 = vmatprep.mubr.f32.mxu0 0.0
        %1264 = vmatmul.mubr.f32.gmra.mrb[0].mxu0 %v1102
        %v1265 = vpop.f32.mrb[0].mxu0
        %v1266 = vadd.f32 1e-05, %v1265
        %v1267 = vpop.f32.mrb[0].mxu0
        %1268 = vmatprep.mubr.f32.mxu0 0.0
        %1269 = vmatmul.mubr.f32.gmra.mrb[0].mxu0 %v1105
        %v1270 = vpop.f32.mrb[0].mxu0
        %v1271 = vadd.f32 1e-05, %v1270
        %v1272 = vpop.f32.mrb[0].mxu0
        %1273 = vmatprep.mubr.f32.mxu0 0.0
        %1274 = vmatmul.mubr.f32.gmra.mrb[0].mxu0 %v1108
        %v1275 = vpop.f32.mrb[0].mxu0
        %v1276 = vadd.f32 1e-05, %v1275
        %v1277 = vpop.f32.mrb[0].mxu0
        %1278 = vmatprep.mubr.f32.mxu0 0.0
        %1279 = vmatmul.mubr.f32.gmra.mrb[0].mxu0 %v1111
        %v1280 = vpop.f32.mrb[0].mxu0
        %v1281 = vadd.f32 1e-05, %v1280
        %v1282 = vpop.f32.mrb[0].mxu0
        %1283 = vmatprep.mubr.f32.mxu0 0.0
        %1284 = vmatmul.mubr.f32.gmra.mrb[0].mxu0 %v1114
        %v1285 = vpop.f32.mrb[0].mxu0
        %v1286 = vadd.f32 1e-05, %v1285
        %v1287 = vpop.f32.mrb[0].mxu0
        %1288 = vmatprep.mubr.f32.mxu0 0.0
        %1289 = vmatmul.mubr.f32.gmra.mrb[0].mxu0 %v1117
        %v1290 = vpop.f32.mrb[0].mxu0
        %v1291 = vadd.f32 1e-05, %v1290
        %v1292 = vpop.f32.mrb[0].mxu0
        %1293 = vmatprep.mubr.f32.mxu0 0.0
        %1294 = vmatmul.mubr.f32.gmra.mrb[0].mxu0 %v1120
        %v1295 = vpop.f32.mrb[0].mxu0
        %v1296 = vadd.f32 1e-05, %v1295
        %v1297 = vpop.f32.mrb[0].mxu0
        %1298 = vmatprep.mubr.f32.mxu0 0.0
        %1299 = vmatmul.mubr.f32.gmra.mrb[0].mxu0 %v1123
        %v1300 = vpop.f32.mrb[0].mxu0
        %v1301 = vadd.f32 1e-05, %v1300
        %v1302 = vpop.f32.mrb[0].mxu0
        %1303 = vmatprep.mubr.f32.mxu0 0.0
        %1304 = vmatmul.mubr.f32.gmra.mrb[0].mxu0 %v1126
        %v1305 = vpop.f32.mrb[0].mxu0
        %v1306 = vadd.f32 1e-05, %v1305
        %v1307 = vpop.f32.mrb[0].mxu0
        %1308 = vmatprep.mubr.f32.mxu0 0.0
        %1309 = vmatmul.mubr.f32.gmra.mrb[0].mxu0 %v1129
        %v1310 = vpop.f32.mrb[0].mxu0
        %v1311 = vadd.f32 1e-05, %v1310
        %v1312 = vpop.f32.mrb[0].mxu0
        %1313 = vmatprep.mubr.f32.mxu0 0.0
        %1314 = vmatmul.mubr.f32.gmra.mrb[0].mxu0 %v1132
        %v1315 = vpop.f32.mrb[0].mxu0
        %v1316 = vadd.f32 1e-05, %v1315
        %v1317 = vpop.f32.mrb[0].mxu0
        %1318 = vmatprep.mubr.f32.mxu0 0.0
        %1319 = vmatmul.mubr.f32.gmra.mrb[0].mxu0 %v1135
        %v1320 = vpop.f32.mrb[0].mxu0
        %v1321 = vadd.f32 1e-05, %v1320
        %v1322 = vpop.f32.mrb[0].mxu0
        %1323 = vmatprep.mubr.f32.mxu0 0.0
        %1324 = vmatmul.mubr.f32.gmra.mrb[0].mxu0 %v1138
        %v1325 = vpop.f32.mrb[0].mxu0
        %v1326 = vadd.f32 1e-05, %v1325
        %v1327 = vpop.f32.mrb[0].mxu0
        %1328 = vmatprep.mubr.f32.mxu0 0.0
        %1329 = vmatmul.mubr.f32.gmra.mrb[0].mxu0 %v1141
        %v1330 = vpop.f32.mrb[0].mxu0
        %v1331 = vadd.f32 1e-05, %v1330
        %v1332 = vpop.f32.mrb[0].mxu0
        %1333 = vmatprep.mubr.f32.mxu0 0.0
        %1334 = vmatmul.mubr.f32.gmra.mrb[0].mxu0 %v1144
        %v1335 = vpop.f32.mrb[0].mxu0
        %v1336 = vadd.f32 1e-05, %v1335
        %v1337 = vpop.f32.mrb[0].mxu0
        %1338 = vmatprep.mubr.f32.mxu0 0.0
        %1339 = vmatmul.mubr.f32.gmra.mrb[0].mxu0 %v1147
        %v1340 = vpop.f32.mrb[0].mxu0
        %v1341 = vadd.f32 1e-05, %v1340
        %v1342 = vpop.f32.mrb[0].mxu0
        %1343 = vmatprep.mubr.f32.mxu0 0.0
        %1344 = vmatmul.mubr.f32.gmra.mrb[0].mxu0 %v1150
        %v1345 = vpop.f32.mrb[0].mxu0
        %v1346 = vadd.f32 1e-05, %v1345
        %v1347 = vpop.f32.mrb[0].mxu0
        %1348 = vmatprep.mubr.f32.mxu0 0.0
        %1349 = vmatmul.mubr.f32.gmra.mrb[0].mxu0 %v1153
        %v1350 = vpop.f32.mrb[0].mxu0
        %v1351 = vadd.f32 1e-05, %v1350
        %v1352 = vpop.f32.mrb[0].mxu0
        %1353 = vmatprep.mubr.f32.mxu0 0.0
        %1354 = vmatmul.mubr.f32.gmra.mrb[0].mxu0 %v1156
        %v1355 = vpop.f32.mrb[0].mxu0
        %v1356 = vadd.f32 1e-05, %v1355
        %v1357 = vpop.f32.mrb[0].mxu0
        %1358 = vmatprep.mubr.f32.mxu0 0.0
        %1359 = vmatmul.mubr.f32.gmra.mrb[0].mxu0 %v1159
        %v1360 = vpop.f32.mrb[0].mxu0
        %v1361 = vadd.f32 1e-05, %v1360
        %v1362 = vpop.f32.mrb[0].mxu0
        %1363 = vmatprep.mubr.f32.mxu0 0.0
        %1364 = vmatmul.mubr.f32.gmra.mrb[0].mxu0 %v1162
        %v1365 = vpop.f32.mrb[0].mxu0
        %v1366 = vadd.f32 1e-05, %v1365
        %v1367 = vpop.f32.mrb[0].mxu0
        %1368 = vmatprep.mubr.f32.mxu0 0.0
        %1369 = vmatmul.mubr.f32.gmra.mrb[0].mxu0 %v1165
        %v1370 = vpop.f32.mrb[0].mxu0
        %v1371 = vadd.f32 1e-05, %v1370
        %v1372 = vpop.f32.mrb[0].mxu0
        %1373 = vmatprep.mubr.f32.mxu0 0.0
        %1374 = vmatmul.mubr.f32.gmra.mrb[0].mxu0 %v1168
        %v1375 = vpop.f32.mrb[0].mxu0
        %v1376 = vadd.f32 1e-05, %v1375
        %v1377 = vpop.f32.mrb[0].mxu0
        %1378 = vmatprep.mubr.f32.mxu0 0.0
        %1379 = vmatmul.mubr.f32.gmra.mrb[0].mxu0 %v1171
        %v1380 = vpop.f32.mrb[0].mxu0
        %v1381 = vadd.f32 1e-05, %v1380
        %v1382 = vpop.f32.mrb[0].mxu0
        %1383 = vmatprep.mubr.f32.mxu0 0.0
        %1384 = vmatmul.mubr.f32.gmra.mrb[0].mxu0 %v1174
        %v1385 = vpop.f32.mrb[0].mxu0
        %v1386 = vadd.f32 1e-05, %v1385
        %v1387 = vpop.f32.mrb[0].mxu0
        %1388 = vmatprep.mubr.f32.mxu0 0.0
        %1389 = vmatmul.mubr.f32.gmra.mrb[0].mxu0 %v1177
        %v1390 = vpop.f32.mrb[0].mxu0
        %v1391 = vadd.f32 1e-05, %v1390
        %v1392 = vpop.f32.mrb[0].mxu0
        %1393 = vmatprep.mubr.f32.mxu0 0.0
        %1394 = vmatmul.mubr.f32.gmra.mrb[0].mxu0 %v1180
        %v1395 = vpop.f32.mrb[0].mxu0
        %v1396 = vadd.f32 1e-05, %v1395
        %v1397 = vpop.f32.mrb[0].mxu0
        %1398 = vmatprep.mubr.f32.mxu0 0.0
        %1399 = vmatmul.mubr.f32.gmra.mrb[0].mxu0 %v1183
        %v1400 = vpop.f32.mrb[0].mxu0
        %v1401 = vadd.f32 1e-05, %v1400
        %v1402 = vpop.f32.mrb[0].mxu0
        %1403 = vmatprep.mubr.f32.mxu0 0.0
        %1404 = vmatmul.mubr.f32.gmra.mrb[0].mxu0 %v1186
        %v1405 = vpop.f32.mrb[0].mxu0
        %v1406 = vadd.f32 1e-05, %v1405
        %v1407 = vpop.f32.mrb[0].mxu0
        %1408 = vmatprep.mubr.f32.mxu0 0.0
        %1409 = vmatmul.mubr.f32.gmra.mrb[0].mxu0 %v1189
        %v1410 = vpop.f32.mrb[0].mxu0
        %v1411 = vadd.f32 1e-05, %v1410
        %v1412 = vpop.f32.mrb[0].mxu0
        %1413 = vmatprep.mubr.f32.mxu0 0.0
        %1414 = vmatmul.mubr.f32.gmra.mrb[0].mxu0 %v1192
        %v1415 = vpop.f32.mrb[0].mxu0
        %v1416 = vadd.f32 1e-05, %v1415
        %v1417 = vpop.f32.mrb[0].mxu0
        %1418 = vdwg.mxu0
        %v1419 = vrsqrt.pop %v1261
        %v1420 = vrsqrt.pop %v1266
        %v1421 = vrsqrt.pop %v1271
        %v1422 = vrsqrt.pop %v1276
        %v1423 = vrsqrt.pop %v1281
        %v1424 = vrsqrt.pop %v1286
        %v1425 = vrsqrt.pop %v1291
        %v1426 = vrsqrt.pop %v1296
        %v1427 = vrsqrt.pop %v1301
        %v1428 = vrsqrt.pop %v1306
        %v1429 = vrsqrt.pop %v1311
        %v1430 = vrsqrt.pop %v1316
        %v1431 = vrsqrt.pop %v1321
        %v1432 = vrsqrt.pop %v1326
        %v1433 = vrsqrt.pop %v1331
        %v1434 = vrsqrt.pop %v1336
        %v1435 = vrsqrt.pop %v1341
        %v1436 = vrsqrt.pop %v1346
        %v1437 = vrsqrt.pop %v1351
        %v1438 = vrsqrt.pop %v1356
        %v1439 = vrsqrt.pop %v1361
        %v1440 = vrsqrt.pop %v1366
        %v1441 = vrsqrt.pop %v1371
        %v1442 = vrsqrt.pop %v1376
        %v1443 = vrsqrt.pop %v1381
        %v1444 = vrsqrt.pop %v1386
        %v1445 = vrsqrt.pop %v1391
        %v1446 = vrsqrt.pop %v1396
        %v1447 = vrsqrt.pop %v1401
        %v1448 = vrsqrt.pop %v1406
        %v1449 = vrsqrt.pop %v1411
        %v1450 = vrsqrt.pop %v1416
        %v1451 = vmul.f32 %v1034, %v1419
        %v1452 = vmul.f32 %v1035, %v1420
        %v1453 = vmul.f32 %v1036, %v1421
        %v1454 = vmul.f32 %v1037, %v1422
        %v1455 = vmul.f32 %v1038, %v1423
        %v1456 = vmul.f32 %v1039, %v1424
        %v1457 = vmul.f32 %v1040, %v1425
        %v1458 = vmul.f32 %v1041, %v1426
        %v1459 = vmul.f32 %v1042, %v1427
        %v1460 = vmul.f32 %v1043, %v1428
        %v1461 = vmul.f32 %v1044, %v1429
        %v1462 = vmul.f32 %v1045, %v1430
        %v1463 = vmul.f32 %v1046, %v1431
        %v1464 = vmul.f32 %v1047, %v1432
        %v1465 = vmul.f32 %v1048, %v1433
        %v1466 = vmul.f32 %v1049, %v1434
        %v1467 = vmul.f32 %v1050, %v1435
        %v1468 = vmul.f32 %v1051, %v1436
        %v1469 = vmul.f32 %v1052, %v1437
        %v1470 = vmul.f32 %v1053, %v1438
        %v1471 = vmul.f32 %v1054, %v1439
        %v1472 = vmul.f32 %v1055, %v1440
        %v1473 = vmul.f32 %v1056, %v1441
        %v1474 = vmul.f32 %v1057, %v1442
        %v1475 = vmul.f32 %v1058, %v1443
        %v1476 = vmul.f32 %v1059, %v1444
        %v1477 = vmul.f32 %v1060, %v1445
        %v1478 = vmul.f32 %v1061, %v1446
        %v1479 = vmul.f32 %v1062, %v1447
        %v1480 = vmul.f32 %v1063, %v1448
        %v1481 = vmul.f32 %v1064, %v1449
        %v1482 = vmul.f32 %v1065, %v1450
        %v1483 = vlaneseq
        %v1484 = vshrl.u32 %v1483, 7
        %v1485 = vsub.s32 1, %v1484
        %v1486 = vrot.slane %v443, %v1485
        %v1487 = vmul.f32 %v1451, %v1486
        %v1488 = vmul.f32 %v1452, %v1486
        %v1489 = vmul.f32 %v1453, %v1486
        %v1490 = vmul.f32 %v1454, %v1486
        %v1491 = vmul.f32 %v1455, %v1486
        %v1492 = vmul.f32 %v1456, %v1486
        %v1493 = vmul.f32 %v1457, %v1486
        %v1494 = vmul.f32 %v1458, %v1486
        %v1495 = vmul.f32 %v1459, %v1486
        %v1496 = vmul.f32 %v1460, %v1486
        %v1497 = vmul.f32 %v1461, %v1486
        %v1498 = vmul.f32 %v1462, %v1486
        %v1499 = vmul.f32 %v1463, %v1486
        %v1500 = vmul.f32 %v1464, %v1486
        %v1501 = vmul.f32 %v1465, %v1486
        %v1502 = vmul.f32 %v1466, %v1486
        %v1503 = vmul.f32 %v1467, %v1486
        %v1504 = vmul.f32 %v1468, %v1486
        %v1505 = vmul.f32 %v1469, %v1486
        %v1506 = vmul.f32 %v1470, %v1486
        %v1507 = vmul.f32 %v1471, %v1486
        %v1508 = vmul.f32 %v1472, %v1486
        %v1509 = vmul.f32 %v1473, %v1486
        %v1510 = vmul.f32 %v1474, %v1486
        %v1511 = vmul.f32 %v1475, %v1486
        %v1512 = vmul.f32 %v1476, %v1486
        %v1513 = vmul.f32 %v1477, %v1486
        %v1514 = vmul.f32 %v1478, %v1486
        %v1515 = vmul.f32 %v1479, %v1486
        %v1516 = vmul.f32 %v1480, %v1486
        %v1517 = vmul.f32 %v1481, %v1486
        %v1518 = vmul.f32 %v1482, %v1486
        %v1519 = vlaneseq
        %v1520 = vshrl.u32 %v1519, 7
        %v1521 = vsub.s32 2, %v1520
        %v1522 = vrot.slane %v443, %v1521
        %v1523 = vadd.f32 %v1487, %v1522
        %v1524 = vadd.f32 %v1488, %v1522
        %v1525 = vadd.f32 %v1489, %v1522
        %v1526 = vadd.f32 %v1490, %v1522
        %v1527 = vadd.f32 %v1491, %v1522
        %v1528 = vadd.f32 %v1492, %v1522
        %v1529 = vadd.f32 %v1493, %v1522
        %v1530 = vadd.f32 %v1494, %v1522
        %v1531 = vadd.f32 %v1495, %v1522
        %v1532 = vadd.f32 %v1496, %v1522
        %v1533 = vadd.f32 %v1497, %v1522
        %v1534 = vadd.f32 %v1498, %v1522
        %v1535 = vadd.f32 %v1499, %v1522
        %v1536 = vadd.f32 %v1500, %v1522
        %v1537 = vadd.f32 %v1501, %v1522
        %v1538 = vadd.f32 %v1502, %v1522
        %v1539 = vadd.f32 %v1503, %v1522
        %v1540 = vadd.f32 %v1504, %v1522
        %v1541 = vadd.f32 %v1505, %v1522
        %v1542 = vadd.f32 %v1506, %v1522
        %v1543 = vadd.f32 %v1507, %v1522
        %v1544 = vadd.f32 %v1508, %v1522
        %v1545 = vadd.f32 %v1509, %v1522
        %v1546 = vadd.f32 %v1510, %v1522
        %v1547 = vadd.f32 %v1511, %v1522
        %v1548 = vadd.f32 %v1512, %v1522
        %v1549 = vadd.f32 %v1513, %v1522
        %v1550 = vadd.f32 %v1514, %v1522
        %v1551 = vadd.f32 %v1515, %v1522
        %v1552 = vadd.f32 %v1516, %v1522
        %v1553 = vadd.f32 %v1517, %v1522
        %v1554 = vadd.f32 %v1518, %v1522
        %v1555 = vmax.f32 %v1523, 0.0
        %v1556 = vmax.f32 %v1524, 0.0
        %v1557 = vmax.f32 %v1525, 0.0
        %v1558 = vmax.f32 %v1526, 0.0
        %v1559 = vmax.f32 %v1527, 0.0
        %v1560 = vmax.f32 %v1528, 0.0
        %v1561 = vmax.f32 %v1529, 0.0
        %v1562 = vmax.f32 %v1530, 0.0
        %v1563 = vmax.f32 %v1531, 0.0
        %v1564 = vmax.f32 %v1532, 0.0
        %v1565 = vmax.f32 %v1533, 0.0
        %v1566 = vmax.f32 %v1534, 0.0
        %v1567 = vmax.f32 %v1535, 0.0
        %v1568 = vmax.f32 %v1536, 0.0
        %v1569 = vmax.f32 %v1537, 0.0
        %v1570 = vmax.f32 %v1538, 0.0
        %v1571 = vmax.f32 %v1539, 0.0
        %v1572 = vmax.f32 %v1540, 0.0
        %v1573 = vmax.f32 %v1541, 0.0
        %v1574 = vmax.f32 %v1542, 0.0
        %v1575 = vmax.f32 %v1543, 0.0
        %v1576 = vmax.f32 %v1544, 0.0
        %v1577 = vmax.f32 %v1545, 0.0
        %v1578 = vmax.f32 %v1546, 0.0
        %v1579 = vmax.f32 %v1547, 0.0
        %v1580 = vmax.f32 %v1548, 0.0
        %v1581 = vmax.f32 %v1549, 0.0
        %v1582 = vmax.f32 %v1550, 0.0
        %v1583 = vmax.f32 %v1551, 0.0
        %v1584 = vmax.f32 %v1552, 0.0
        %v1585 = vmax.f32 %v1553, 0.0
        %v1586 = vmax.f32 %v1554, 0.0
        %v1587 = vpack.c.bf16 %v1556, %v1555
        %v1588 = vpack.c.bf16 %v1558, %v1557
        %v1589 = vpack.c.bf16 %v1560, %v1559
        %v1590 = vpack.c.bf16 %v1562, %v1561
        %v1591 = vpack.c.bf16 %v1564, %v1563
        %v1592 = vpack.c.bf16 %v1566, %v1565
        %v1593 = vpack.c.bf16 %v1568, %v1567
        %v1594 = vpack.c.bf16 %v1570, %v1569
        %v1595 = vpack.c.bf16 %v1572, %v1571
        %v1596 = vpack.c.bf16 %v1574, %v1573
        %v1597 = vpack.c.bf16 %v1576, %v1575
        %v1598 = vpack.c.bf16 %v1578, %v1577
        %v1599 = vpack.c.bf16 %v1580, %v1579
        %v1600 = vpack.c.bf16 %v1582, %v1581
        %v1601 = vpack.c.bf16 %v1584, %v1583
        %v1602 = vpack.c.bf16 %v1586, %v1585
        %v1603 = vpack.c.bf16 %v435, %v434
        %v1604 = vpack.c.bf16 %v437, %v436
        %v1605 = vlaneseq
        %v1606 = vshrl.u32 %v1605, 7
        %v1607 = vsub.s32 3, %v1606
        %v1608 = vrot.slane %v443, %v1607
        %v1610 = vsel %vm712, %v1587, 0
        %v1613 = vsel %vm712, %v1588, 0
        %v1616 = vsel %vm712, %v1589, 0
        %v1619 = vsel %vm712, %v1590, 0
        %v1622 = vsel %vm712, %v1591, 0
        %v1625 = vsel %vm712, %v1592, 0
        %v1628 = vsel %vm712, %v1593, 0
        %v1631 = vsel %vm712, %v1594, 0
        %v1634 = vsel %vm712, %v1595, 0
        %v1637 = vsel %vm712, %v1596, 0
        %v1640 = vsel %vm712, %v1597, 0
        %v1643 = vsel %vm712, %v1598, 0
        %v1646 = vsel %vm712, %v1599, 0
        %v1649 = vsel %vm712, %v1600, 0
        %v1652 = vsel %vm712, %v1601, 0
        %v1655 = vsel %vm712, %v1602, 0
        %1657 = vmatprep.subr.bf16.mxu0 0
        %1658 = vmatpush1.bf16.msra.mxu0 %v1603
        %1659 = vmatprep.subr.bf16.mxu0 0
        %1660 = vmatpush1.bf16.msra.mxu0 %v1604
        %1661 = vmatprep.subr.bf16.mxu0 0
        %1662 = vmatpush1.bf16.msra.mxu0 0
        %1663 = vmatprep.subr.bf16.mxu0 0
        %1664 = vmatpush1.bf16.msra.mxu0 0
        %1665 = vmatprep.subr.bf16.mxu0 0
        %1666 = vmatpush1.bf16.msra.mxu0 0
        %1667 = vmatprep.subr.bf16.mxu0 0
        %1668 = vmatpush1.bf16.msra.mxu0 0
        %1669 = vmatprep.subr.bf16.mxu0 0
        %1670 = vmatpush1.bf16.msra.mxu0 0
        %1671 = vmatprep.subr.bf16.mxu0 0
        %1672 = vmatpush1.bf16.msra.mxu0 0
        %1673 = vmatprep.subr.bf16.mxu0 0
        %1674 = vmatpush1.bf16.msra.mxu0 0
        %1675 = vmatprep.subr.bf16.mxu0 0
        %1676 = vmatpush1.bf16.msra.mxu0 0
        %1677 = vmatprep.subr.bf16.mxu0 0
        %1678 = vmatpush1.bf16.msra.mxu0 0
        %1679 = vmatprep.subr.bf16.mxu0 0
        %1680 = vmatpush1.bf16.msra.mxu0 0
        %1681 = vmatprep.subr.bf16.mxu0 0
        %1682 = vmatpush1.bf16.msra.mxu0 0
        %1683 = vmatprep.subr.bf16.mxu0 0
        %1684 = vmatpush1.bf16.msra.mxu0 0
        %1685 = vmatprep.subr.bf16.mxu0 0
        %1686 = vmatpush1.bf16.msra.mxu0 0
        %1687 = vmatprep.subr.bf16.mxu0 0
        %1688 = vmatpush1.bf16.msra.mxu0 0
        %1689 = vmatprep.mubr.bf16.mxu0 0
        %1690 = vmatmul.mubr.bf16.gmra.mrb[0].mxu0 %v1610
        %v1691 = vpop.f32.mrb[0].mxu0
        %v1692 = vadd.f32 %v1608, %v1691
        %v1693 = vpop.f32.mrb[0].mxu0
        %v1694 = vpop.f32.mrb[0].mxu0
        %v1695 = vadd.f32 %v1608, %v1694
        %v1696 = vpop.f32.mrb[0].mxu0
        %1697 = vmatprep.mubr.bf16.mxu0 0
        %1698 = vmatmul.mubr.bf16.gmra.mrb[0].mxu0 %v1613
        %v1699 = vpop.f32.mrb[0].mxu0
        %v1700 = vadd.f32 %v1608, %v1699
        %v1701 = vpop.f32.mrb[0].mxu0
        %v1702 = vpop.f32.mrb[0].mxu0
        %v1703 = vadd.f32 %v1608, %v1702
        %v1704 = vpop.f32.mrb[0].mxu0
        %1705 = vmatprep.mubr.bf16.mxu0 0
        %1706 = vmatmul.mubr.bf16.gmra.mrb[0].mxu0 %v1616
        %v1707 = vpop.f32.mrb[0].mxu0
        %v1708 = vadd.f32 %v1608, %v1707
        %v1709 = vpop.f32.mrb[0].mxu0
        %v1710 = vpop.f32.mrb[0].mxu0
        %v1711 = vadd.f32 %v1608, %v1710
        %v1712 = vpop.f32.mrb[0].mxu0
        %1713 = vmatprep.mubr.bf16.mxu0 0
        %1714 = vmatmul.mubr.bf16.gmra.mrb[0].mxu0 %v1619
        %v1715 = vpop.f32.mrb[0].mxu0
        %v1716 = vadd.f32 %v1608, %v1715
        %v1717 = vpop.f32.mrb[0].mxu0
        %v1718 = vpop.f32.mrb[0].mxu0
        %v1719 = vadd.f32 %v1608, %v1718
        %v1720 = vpop.f32.mrb[0].mxu0
        %1721 = vmatprep.mubr.bf16.mxu0 0
        %1722 = vmatmul.mubr.bf16.gmra.mrb[0].mxu0 %v1622
        %v1723 = vpop.f32.mrb[0].mxu0
        %v1724 = vadd.f32 %v1608, %v1723
        %v1725 = vpop.f32.mrb[0].mxu0
        %v1726 = vpop.f32.mrb[0].mxu0
        %v1727 = vadd.f32 %v1608, %v1726
        %v1728 = vpop.f32.mrb[0].mxu0
        %1729 = vmatprep.mubr.bf16.mxu0 0
        %1730 = vmatmul.mubr.bf16.gmra.mrb[0].mxu0 %v1625
        %v1731 = vpop.f32.mrb[0].mxu0
        %v1732 = vadd.f32 %v1608, %v1731
        %v1733 = vpop.f32.mrb[0].mxu0
        %v1734 = vpop.f32.mrb[0].mxu0
        %v1735 = vadd.f32 %v1608, %v1734
        %v1736 = vpop.f32.mrb[0].mxu0
        %1737 = vmatprep.mubr.bf16.mxu0 0
        %1738 = vmatmul.mubr.bf16.gmra.mrb[0].mxu0 %v1628
        %v1739 = vpop.f32.mrb[0].mxu0
        %v1740 = vadd.f32 %v1608, %v1739
        %v1741 = vpop.f32.mrb[0].mxu0
        %v1742 = vpop.f32.mrb[0].mxu0
        %v1743 = vadd.f32 %v1608, %v1742
        %v1744 = vpop.f32.mrb[0].mxu0
        %1745 = vmatprep.mubr.bf16.mxu0 0
        %1746 = vmatmul.mubr.bf16.gmra.mrb[0].mxu0 %v1631
        %v1747 = vpop.f32.mrb[0].mxu0
        %v1748 = vadd.f32 %v1608, %v1747
        %v1749 = vpop.f32.mrb[0].mxu0
        %v1750 = vpop.f32.mrb[0].mxu0
        %v1751 = vadd.f32 %v1608, %v1750
        %v1752 = vpop.f32.mrb[0].mxu0
        %1753 = vmatprep.mubr.bf16.mxu0 0
        %1754 = vmatmul.mubr.bf16.gmra.mrb[0].mxu0 %v1634
        %v1755 = vpop.f32.mrb[0].mxu0
        %v1756 = vadd.f32 %v1608, %v1755
        %v1757 = vpop.f32.mrb[0].mxu0
        %v1758 = vpop.f32.mrb[0].mxu0
        %v1759 = vadd.f32 %v1608, %v1758
        %v1760 = vpop.f32.mrb[0].mxu0
        %1761 = vmatprep.mubr.bf16.mxu0 0
        %1762 = vmatmul.mubr.bf16.gmra.mrb[0].mxu0 %v1637
        %v1763 = vpop.f32.mrb[0].mxu0
        %v1764 = vadd.f32 %v1608, %v1763
        %v1765 = vpop.f32.mrb[0].mxu0
        %v1766 = vpop.f32.mrb[0].mxu0
        %v1767 = vadd.f32 %v1608, %v1766
        %v1768 = vpop.f32.mrb[0].mxu0
        %1769 = vmatprep.mubr.bf16.mxu0 0
        %1770 = vmatmul.mubr.bf16.gmra.mrb[0].mxu0 %v1640
        %v1771 = vpop.f32.mrb[0].mxu0
        %v1772 = vadd.f32 %v1608, %v1771
        %v1773 = vpop.f32.mrb[0].mxu0
        %v1774 = vpop.f32.mrb[0].mxu0
        %v1775 = vadd.f32 %v1608, %v1774
        %v1776 = vpop.f32.mrb[0].mxu0
        %1777 = vmatprep.mubr.bf16.mxu0 0
        %1778 = vmatmul.mubr.bf16.gmra.mrb[0].mxu0 %v1643
        %v1779 = vpop.f32.mrb[0].mxu0
        %v1780 = vadd.f32 %v1608, %v1779
        %v1781 = vpop.f32.mrb[0].mxu0
        %v1782 = vpop.f32.mrb[0].mxu0
        %v1783 = vadd.f32 %v1608, %v1782
        %v1784 = vpop.f32.mrb[0].mxu0
        %1785 = vmatprep.mubr.bf16.mxu0 0
        %1786 = vmatmul.mubr.bf16.gmra.mrb[0].mxu0 %v1646
        %v1787 = vpop.f32.mrb[0].mxu0
        %v1788 = vadd.f32 %v1608, %v1787
        %v1789 = vpop.f32.mrb[0].mxu0
        %v1790 = vpop.f32.mrb[0].mxu0
        %v1791 = vadd.f32 %v1608, %v1790
        %v1792 = vpop.f32.mrb[0].mxu0
        %1793 = vmatprep.mubr.bf16.mxu0 0
        %1794 = vmatmul.mubr.bf16.gmra.mrb[0].mxu0 %v1649
        %v1795 = vpop.f32.mrb[0].mxu0
        %v1796 = vadd.f32 %v1608, %v1795
        %v1797 = vpop.f32.mrb[0].mxu0
        %v1798 = vpop.f32.mrb[0].mxu0
        %v1799 = vadd.f32 %v1608, %v1798
        %v1800 = vpop.f32.mrb[0].mxu0
        %1801 = vmatprep.mubr.bf16.mxu0 0
        %1802 = vmatmul.mubr.bf16.gmra.mrb[0].mxu0 %v1652
        %v1803 = vpop.f32.mrb[0].mxu0
        %v1804 = vadd.f32 %v1608, %v1803
        %v1805 = vpop.f32.mrb[0].mxu0
        %v1806 = vpop.f32.mrb[0].mxu0
        %v1807 = vadd.f32 %v1608, %v1806
        %v1808 = vpop.f32.mrb[0].mxu0
        %1809 = vmatprep.mubr.bf16.mxu0 0
        %1810 = vmatmul.mubr.bf16.gmra.mrb[0].mxu0 %v1655
        %v1811 = vpop.f32.mrb[0].mxu0
        %v1812 = vadd.f32 %v1608, %v1811
        %v1813 = vpop.f32.mrb[0].mxu0
        %v1814 = vpop.f32.mrb[0].mxu0
        %v1815 = vadd.f32 %v1608, %v1814
        %v1816 = vpop.f32.mrb[0].mxu0
        %1817 = vdwg.mxu0
        %v1818 = vsel %vm712, %v1692, 0.0
        %1819 = vadd.xlane.f32.xlu0 %v1818
        %v1820 = vpop.xlane.xlu0 %1819
        %v1821 = vsel %vm712, %v1695, 0.0
        %1822 = vadd.xlane.f32.xlu0 %v1821
        %v1823 = vpop.xlane.xlu0 %1822
        %v1824 = vsel %vm712, %v1700, 0.0
        %1825 = vadd.xlane.f32.xlu0 %v1824
        %v1826 = vpop.xlane.xlu0 %1825
        %v1827 = vsel %vm712, %v1703, 0.0
        %1828 = vadd.xlane.f32.xlu0 %v1827
        %v1829 = vpop.xlane.xlu0 %1828
        %v1830 = vsel %vm712, %v1708, 0.0
        %1831 = vadd.xlane.f32.xlu0 %v1830
        %v1832 = vpop.xlane.xlu0 %1831
        %v1833 = vsel %vm712, %v1711, 0.0
        %1834 = vadd.xlane.f32.xlu0 %v1833
        %v1835 = vpop.xlane.xlu0 %1834
        %v1836 = vsel %vm712, %v1716, 0.0
        %1837 = vadd.xlane.f32.xlu0 %v1836
        %v1838 = vpop.xlane.xlu0 %1837
        %v1839 = vsel %vm712, %v1719, 0.0
        %1840 = vadd.xlane.f32.xlu0 %v1839
        %v1841 = vpop.xlane.xlu0 %1840
        %v1842 = vsel %vm712, %v1724, 0.0
        %1843 = vadd.xlane.f32.xlu0 %v1842
        %v1844 = vpop.xlane.xlu0 %1843
        %v1845 = vsel %vm712, %v1727, 0.0
        %1846 = vadd.xlane.f32.xlu0 %v1845
        %v1847 = vpop.xlane.xlu0 %1846
        %v1848 = vsel %vm712, %v1732, 0.0
        %1849 = vadd.xlane.f32.xlu0 %v1848
        %v1850 = vpop.xlane.xlu0 %1849
        %v1851 = vsel %vm712, %v1735, 0.0
        %1852 = vadd.xlane.f32.xlu0 %v1851
        %v1853 = vpop.xlane.xlu0 %1852
        %v1854 = vsel %vm712, %v1740, 0.0
        %1855 = vadd.xlane.f32.xlu0 %v1854
        %v1856 = vpop.xlane.xlu0 %1855
        %v1857 = vsel %vm712, %v1743, 0.0
        %1858 = vadd.xlane.f32.xlu0 %v1857
        %v1859 = vpop.xlane.xlu0 %1858
        %v1860 = vsel %vm712, %v1748, 0.0
        %1861 = vadd.xlane.f32.xlu0 %v1860
        %v1862 = vpop.xlane.xlu0 %1861
        %v1863 = vsel %vm712, %v1751, 0.0
        %1864 = vadd.xlane.f32.xlu0 %v1863
        %v1865 = vpop.xlane.xlu0 %1864
        %v1866 = vsel %vm712, %v1756, 0.0
        %1867 = vadd.xlane.f32.xlu0 %v1866
        %v1868 = vpop.xlane.xlu0 %1867
        %v1869 = vsel %vm712, %v1759, 0.0
        %1870 = vadd.xlane.f32.xlu0 %v1869
        %v1871 = vpop.xlane.xlu0 %1870
        %v1872 = vsel %vm712, %v1764, 0.0
        %1873 = vadd.xlane.f32.xlu0 %v1872
        %v1874 = vpop.xlane.xlu0 %1873
        %v1875 = vsel %vm712, %v1767, 0.0
        %1876 = vadd.xlane.f32.xlu0 %v1875
        %v1877 = vpop.xlane.xlu0 %1876
        %v1878 = vsel %vm712, %v1772, 0.0
        %1879 = vadd.xlane.f32.xlu0 %v1878
        %v1880 = vpop.xlane.xlu0 %1879
        %v1881 = vsel %vm712, %v1775, 0.0
        %1882 = vadd.xlane.f32.xlu0 %v1881
        %v1883 = vpop.xlane.xlu0 %1882
        %v1884 = vsel %vm712, %v1780, 0.0
        %1885 = vadd.xlane.f32.xlu0 %v1884
        %v1886 = vpop.xlane.xlu0 %1885
        %v1887 = vsel %vm712, %v1783, 0.0
        %1888 = vadd.xlane.f32.xlu0 %v1887
        %v1889 = vpop.xlane.xlu0 %1888
        %v1890 = vsel %vm712, %v1788, 0.0
        %1891 = vadd.xlane.f32.xlu0 %v1890
        %v1892 = vpop.xlane.xlu0 %1891
        %v1893 = vsel %vm712, %v1791, 0.0
        %1894 = vadd.xlane.f32.xlu0 %v1893
        %v1895 = vpop.xlane.xlu0 %1894
        %v1896 = vsel %vm712, %v1796, 0.0
        %1897 = vadd.xlane.f32.xlu0 %v1896
        %v1898 = vpop.xlane.xlu0 %1897
        %v1899 = vsel %vm712, %v1799, 0.0
        %1900 = vadd.xlane.f32.xlu0 %v1899
        %v1901 = vpop.xlane.xlu0 %1900
        %v1902 = vsel %vm712, %v1804, 0.0
        %1903 = vadd.xlane.f32.xlu0 %v1902
        %v1904 = vpop.xlane.xlu0 %1903
        %v1905 = vsel %vm712, %v1807, 0.0
        %1906 = vadd.xlane.f32.xlu0 %v1905
        %v1907 = vpop.xlane.xlu0 %1906
        %v1908 = vsel %vm712, %v1812, 0.0
        %1909 = vadd.xlane.f32.xlu0 %v1908
        %v1910 = vpop.xlane.xlu0 %1909
        %v1911 = vsel %vm712, %v1815, 0.0
        %1912 = vadd.xlane.f32.xlu0 %v1911
        %v1913 = vpop.xlane.xlu0 %1912
        %v1914 = vrcp.pop 32.0
        %v1915 = vmul.f32 %v1820, %v1914
        %v1916 = vmul.f32 %v1823, %v1914
        %v1917 = vmul.f32 %v1826, %v1914
        %v1918 = vmul.f32 %v1829, %v1914
        %v1919 = vmul.f32 %v1832, %v1914
        %v1920 = vmul.f32 %v1835, %v1914
        %v1921 = vmul.f32 %v1838, %v1914
        %v1922 = vmul.f32 %v1841, %v1914
        %v1923 = vmul.f32 %v1844, %v1914
        %v1924 = vmul.f32 %v1847, %v1914
        %v1925 = vmul.f32 %v1850, %v1914
        %v1926 = vmul.f32 %v1853, %v1914
        %v1927 = vmul.f32 %v1856, %v1914
        %v1928 = vmul.f32 %v1859, %v1914
        %v1929 = vmul.f32 %v1862, %v1914
        %v1930 = vmul.f32 %v1865, %v1914
        %v1931 = vmul.f32 %v1868, %v1914
        %v1932 = vmul.f32 %v1871, %v1914
        %v1933 = vmul.f32 %v1874, %v1914
        %v1934 = vmul.f32 %v1877, %v1914
        %v1935 = vmul.f32 %v1880, %v1914
        %v1936 = vmul.f32 %v1883, %v1914
        %v1937 = vmul.f32 %v1886, %v1914
        %v1938 = vmul.f32 %v1889, %v1914
        %v1939 = vmul.f32 %v1892, %v1914
        %v1940 = vmul.f32 %v1895, %v1914
        %v1941 = vmul.f32 %v1898, %v1914
        %v1942 = vmul.f32 %v1901, %v1914
        %v1943 = vmul.f32 %v1904, %v1914
        %v1944 = vmul.f32 %v1907, %v1914
        %v1945 = vmul.f32 %v1910, %v1914
        %v1946 = vmul.f32 %v1913, %v1914
        %v1947 = vsub.f32 %v1692, %v1915
        %v1948 = vsub.f32 %v1695, %v1916
        %v1949 = vsub.f32 %v1700, %v1917
        %v1950 = vsub.f32 %v1703, %v1918
        %v1951 = vsub.f32 %v1708, %v1919
        %v1952 = vsub.f32 %v1711, %v1920
        %v1953 = vsub.f32 %v1716, %v1921
        %v1954 = vsub.f32 %v1719, %v1922
        %v1955 = vsub.f32 %v1724, %v1923
        %v1956 = vsub.f32 %v1727, %v1924
        %v1957 = vsub.f32 %v1732, %v1925
        %v1958 = vsub.f32 %v1735, %v1926
        %v1959 = vsub.f32 %v1740, %v1927
        %v1960 = vsub.f32 %v1743, %v1928
        %v1961 = vsub.f32 %v1748, %v1929
        %v1962 = vsub.f32 %v1751, %v1930
        %v1963 = vsub.f32 %v1756, %v1931
        %v1964 = vsub.f32 %v1759, %v1932
        %v1965 = vsub.f32 %v1764, %v1933
        %v1966 = vsub.f32 %v1767, %v1934
        %v1967 = vsub.f32 %v1772, %v1935
        %v1968 = vsub.f32 %v1775, %v1936
        %v1969 = vsub.f32 %v1780, %v1937
        %v1970 = vsub.f32 %v1783, %v1938
        %v1971 = vsub.f32 %v1788, %v1939
        %v1972 = vsub.f32 %v1791, %v1940
        %v1973 = vsub.f32 %v1796, %v1941
        %v1974 = vsub.f32 %v1799, %v1942
        %v1975 = vsub.f32 %v1804, %v1943
        %v1976 = vsub.f32 %v1807, %v1944
        %v1977 = vsub.f32 %v1812, %v1945
        %v1978 = vsub.f32 %v1815, %v1946
        %v1979 = vmul.f32 %v1947, %v1947
        %v1980 = vmul.f32 %v1948, %v1948
        %v1981 = vmul.f32 %v1949, %v1949
        %v1982 = vmul.f32 %v1950, %v1950
        %v1983 = vmul.f32 %v1951, %v1951
        %v1984 = vmul.f32 %v1952, %v1952
        %v1985 = vmul.f32 %v1953, %v1953
        %v1986 = vmul.f32 %v1954, %v1954
        %v1987 = vmul.f32 %v1955, %v1955
        %v1988 = vmul.f32 %v1956, %v1956
        %v1989 = vmul.f32 %v1957, %v1957
        %v1990 = vmul.f32 %v1958, %v1958
        %v1991 = vmul.f32 %v1959, %v1959
        %v1992 = vmul.f32 %v1960, %v1960
        %v1993 = vmul.f32 %v1961, %v1961
        %v1994 = vmul.f32 %v1962, %v1962
        %v1995 = vmul.f32 %v1963, %v1963
        %v1996 = vmul.f32 %v1964, %v1964
        %v1997 = vmul.f32 %v1965, %v1965
        %v1998 = vmul.f32 %v1966, %v1966
        %v1999 = vmul.f32 %v1967, %v1967
        %v2000 = vmul.f32 %v1968, %v1968
        %v2001 = vmul.f32 %v1969, %v1969
        %v2002 = vmul.f32 %v1970, %v1970
        %v2003 = vmul.f32 %v1971, %v1971
        %v2004 = vmul.f32 %v1972, %v1972
        %v2005 = vmul.f32 %v1973, %v1973
        %v2006 = vmul.f32 %v1974, %v1974
        %v2007 = vmul.f32 %v1975, %v1975
        %v2008 = vmul.f32 %v1976, %v1976
        %v2009 = vmul.f32 %v1977, %v1977
        %v2010 = vmul.f32 %v1978, %v1978
        %v2011 = vsel %vm712, %v1979, 0.0
        %2012 = vadd.xlane.f32.xlu0 %v2011
        %v2013 = vpop.xlane.xlu0 %2012
        %v2014 = vsel %vm712, %v1980, 0.0
        %2015 = vadd.xlane.f32.xlu0 %v2014
        %v2016 = vpop.xlane.xlu0 %2015
        %v2017 = vsel %vm712, %v1981, 0.0
        %2018 = vadd.xlane.f32.xlu0 %v2017
        %v2019 = vpop.xlane.xlu0 %2018
        %v2020 = vsel %vm712, %v1982, 0.0
        %2021 = vadd.xlane.f32.xlu0 %v2020
        %v2022 = vpop.xlane.xlu0 %2021
        %v2023 = vsel %vm712, %v1983, 0.0
        %2024 = vadd.xlane.f32.xlu0 %v2023
        %v2025 = vpop.xlane.xlu0 %2024
        %v2026 = vsel %vm712, %v1984, 0.0
        %2027 = vadd.xlane.f32.xlu0 %v2026
        %v2028 = vpop.xlane.xlu0 %2027
        %v2029 = vsel %vm712, %v1985, 0.0
        %2030 = vadd.xlane.f32.xlu0 %v2029
        %v2031 = vpop.xlane.xlu0 %2030
        %v2032 = vsel %vm712, %v1986, 0.0
        %2033 = vadd.xlane.f32.xlu0 %v2032
        %v2034 = vpop.xlane.xlu0 %2033
        %v2035 = vsel %vm712, %v1987, 0.0
        %2036 = vadd.xlane.f32.xlu0 %v2035
        %v2037 = vpop.xlane.xlu0 %2036
        %v2038 = vsel %vm712, %v1988, 0.0
        %2039 = vadd.xlane.f32.xlu0 %v2038
        %v2040 = vpop.xlane.xlu0 %2039
        %v2041 = vsel %vm712, %v1989, 0.0
        %2042 = vadd.xlane.f32.xlu0 %v2041
        %v2043 = vpop.xlane.xlu0 %2042
        %v2044 = vsel %vm712, %v1990, 0.0
        %2045 = vadd.xlane.f32.xlu0 %v2044
        %v2046 = vpop.xlane.xlu0 %2045
        %v2047 = vsel %vm712, %v1991, 0.0
        %2048 = vadd.xlane.f32.xlu0 %v2047
        %v2049 = vpop.xlane.xlu0 %2048
        %v2050 = vsel %vm712, %v1992, 0.0
        %2051 = vadd.xlane.f32.xlu0 %v2050
        %v2052 = vpop.xlane.xlu0 %2051
        %v2053 = vsel %vm712, %v1993, 0.0
        %2054 = vadd.xlane.f32.xlu0 %v2053
        %v2055 = vpop.xlane.xlu0 %2054
        %v2056 = vsel %vm712, %v1994, 0.0
        %2057 = vadd.xlane.f32.xlu0 %v2056
        %v2058 = vpop.xlane.xlu0 %2057
        %v2059 = vsel %vm712, %v1995, 0.0
        %2060 = vadd.xlane.f32.xlu0 %v2059
        %v2061 = vpop.xlane.xlu0 %2060
        %v2062 = vsel %vm712, %v1996, 0.0
        %2063 = vadd.xlane.f32.xlu0 %v2062
        %v2064 = vpop.xlane.xlu0 %2063
        %v2065 = vsel %vm712, %v1997, 0.0
        %2066 = vadd.xlane.f32.xlu0 %v2065
        %v2067 = vpop.xlane.xlu0 %2066
        %v2068 = vsel %vm712, %v1998, 0.0
        %2069 = vadd.xlane.f32.xlu0 %v2068
        %v2070 = vpop.xlane.xlu0 %2069
        %v2071 = vsel %vm712, %v1999, 0.0
        %2072 = vadd.xlane.f32.xlu0 %v2071
        %v2073 = vpop.xlane.xlu0 %2072
        %v2074 = vsel %vm712, %v2000, 0.0
        %2075 = vadd.xlane.f32.xlu0 %v2074
        %v2076 = vpop.xlane.xlu0 %2075
        %v2077 = vsel %vm712, %v2001, 0.0
        %2078 = vadd.xlane.f32.xlu0 %v2077
        %v2079 = vpop.xlane.xlu0 %2078
        %v2080 = vsel %vm712, %v2002, 0.0
        %2081 = vadd.xlane.f32.xlu0 %v2080
        %v2082 = vpop.xlane.xlu0 %2081
        %v2083 = vsel %vm712, %v2003, 0.0
        %2084 = vadd.xlane.f32.xlu0 %v2083
        %v2085 = vpop.xlane.xlu0 %2084
        %v2086 = vsel %vm712, %v2004, 0.0
        %2087 = vadd.xlane.f32.xlu0 %v2086
        %v2088 = vpop.xlane.xlu0 %2087
        %v2089 = vsel %vm712, %v2005, 0.0
        %2090 = vadd.xlane.f32.xlu0 %v2089
        %v2091 = vpop.xlane.xlu0 %2090
        %v2092 = vsel %vm712, %v2006, 0.0
        %2093 = vadd.xlane.f32.xlu0 %v2092
        %v2094 = vpop.xlane.xlu0 %2093
        %v2095 = vsel %vm712, %v2007, 0.0
        %2096 = vadd.xlane.f32.xlu0 %v2095
        %v2097 = vpop.xlane.xlu0 %2096
        %v2098 = vsel %vm712, %v2008, 0.0
        %2099 = vadd.xlane.f32.xlu0 %v2098
        %v2100 = vpop.xlane.xlu0 %2099
        %v2101 = vsel %vm712, %v2009, 0.0
        %2102 = vadd.xlane.f32.xlu0 %v2101
        %v2103 = vpop.xlane.xlu0 %2102
        %v2104 = vsel %vm712, %v2010, 0.0
        %2105 = vadd.xlane.f32.xlu0 %v2104
        %v2106 = vpop.xlane.xlu0 %2105
        %v2107 = vmul.f32 %v2013, %v1914
        %v2108 = vmul.f32 %v2016, %v1914
        %v2109 = vmul.f32 %v2019, %v1914
        %v2110 = vmul.f32 %v2022, %v1914
        %v2111 = vmul.f32 %v2025, %v1914
        %v2112 = vmul.f32 %v2028, %v1914
        %v2113 = vmul.f32 %v2031, %v1914
        %v2114 = vmul.f32 %v2034, %v1914
        %v2115 = vmul.f32 %v2037, %v1914
        %v2116 = vmul.f32 %v2040, %v1914
        %v2117 = vmul.f32 %v2043, %v1914
        %v2118 = vmul.f32 %v2046, %v1914
        %v2119 = vmul.f32 %v2049, %v1914
        %v2120 = vmul.f32 %v2052, %v1914
        %v2121 = vmul.f32 %v2055, %v1914
        %v2122 = vmul.f32 %v2058, %v1914
        %v2123 = vmul.f32 %v2061, %v1914
        %v2124 = vmul.f32 %v2064, %v1914
        %v2125 = vmul.f32 %v2067, %v1914
        %v2126 = vmul.f32 %v2070, %v1914
        %v2127 = vmul.f32 %v2073, %v1914
        %v2128 = vmul.f32 %v2076, %v1914
        %v2129 = vmul.f32 %v2079, %v1914
        %v2130 = vmul.f32 %v2082, %v1914
        %v2131 = vmul.f32 %v2085, %v1914
        %v2132 = vmul.f32 %v2088, %v1914
        %v2133 = vmul.f32 %v2091, %v1914
        %v2134 = vmul.f32 %v2094, %v1914
        %v2135 = vmul.f32 %v2097, %v1914
        %v2136 = vmul.f32 %v2100, %v1914
        %v2137 = vmul.f32 %v2103, %v1914
        %v2138 = vmul.f32 %v2106, %v1914
        %v2139 = vadd.f32 %v2107, 1e-05
        %v2140 = vadd.f32 %v2108, 1e-05
        %v2141 = vadd.f32 %v2109, 1e-05
        %v2142 = vadd.f32 %v2110, 1e-05
        %v2143 = vadd.f32 %v2111, 1e-05
        %v2144 = vadd.f32 %v2112, 1e-05
        %v2145 = vadd.f32 %v2113, 1e-05
        %v2146 = vadd.f32 %v2114, 1e-05
        %v2147 = vadd.f32 %v2115, 1e-05
        %v2148 = vadd.f32 %v2116, 1e-05
        %v2149 = vadd.f32 %v2117, 1e-05
        %v2150 = vadd.f32 %v2118, 1e-05
        %v2151 = vadd.f32 %v2119, 1e-05
        %v2152 = vadd.f32 %v2120, 1e-05
        %v2153 = vadd.f32 %v2121, 1e-05
        %v2154 = vadd.f32 %v2122, 1e-05
        %v2155 = vadd.f32 %v2123, 1e-05
        %v2156 = vadd.f32 %v2124, 1e-05
        %v2157 = vadd.f32 %v2125, 1e-05
        %v2158 = vadd.f32 %v2126, 1e-05
        %v2159 = vadd.f32 %v2127, 1e-05
        %v2160 = vadd.f32 %v2128, 1e-05
        %v2161 = vadd.f32 %v2129, 1e-05
        %v2162 = vadd.f32 %v2130, 1e-05
        %v2163 = vadd.f32 %v2131, 1e-05
        %v2164 = vadd.f32 %v2132, 1e-05
        %v2165 = vadd.f32 %v2133, 1e-05
        %v2166 = vadd.f32 %v2134, 1e-05
        %v2167 = vadd.f32 %v2135, 1e-05
        %v2168 = vadd.f32 %v2136, 1e-05
        %v2169 = vadd.f32 %v2137, 1e-05
        %v2170 = vadd.f32 %v2138, 1e-05
        %v2171 = vrsqrt.pop %v2139
        %v2172 = vrsqrt.pop %v2140
        %v2173 = vrsqrt.pop %v2141
        %v2174 = vrsqrt.pop %v2142
        %v2175 = vrsqrt.pop %v2143
        %v2176 = vrsqrt.pop %v2144
        %v2177 = vrsqrt.pop %v2145
        %v2178 = vrsqrt.pop %v2146
        %v2179 = vrsqrt.pop %v2147
        %v2180 = vrsqrt.pop %v2148
        %v2181 = vrsqrt.pop %v2149
        %v2182 = vrsqrt.pop %v2150
        %v2183 = vrsqrt.pop %v2151
        %v2184 = vrsqrt.pop %v2152
        %v2185 = vrsqrt.pop %v2153
        %v2186 = vrsqrt.pop %v2154
        %v2187 = vrsqrt.pop %v2155
        %v2188 = vrsqrt.pop %v2156
        %v2189 = vrsqrt.pop %v2157
        %v2190 = vrsqrt.pop %v2158
        %v2191 = vrsqrt.pop %v2159
        %v2192 = vrsqrt.pop %v2160
        %v2193 = vrsqrt.pop %v2161
        %v2194 = vrsqrt.pop %v2162
        %v2195 = vrsqrt.pop %v2163
        %v2196 = vrsqrt.pop %v2164
        %v2197 = vrsqrt.pop %v2165
        %v2198 = vrsqrt.pop %v2166
        %v2199 = vrsqrt.pop %v2167
        %v2200 = vrsqrt.pop %v2168
        %v2201 = vrsqrt.pop %v2169
        %v2202 = vrsqrt.pop %v2170
        %v2203 = vmul.f32 %v1947, %v2171
        %v2204 = vmul.f32 %v1948, %v2172
        %v2205 = vmul.f32 %v1949, %v2173
        %v2206 = vmul.f32 %v1950, %v2174
        %v2207 = vmul.f32 %v1951, %v2175
        %v2208 = vmul.f32 %v1952, %v2176
        %v2209 = vmul.f32 %v1953, %v2177
        %v2210 = vmul.f32 %v1954, %v2178
        %v2211 = vmul.f32 %v1955, %v2179
        %v2212 = vmul.f32 %v1956, %v2180
        %v2213 = vmul.f32 %v1957, %v2181
        %v2214 = vmul.f32 %v1958, %v2182
        %v2215 = vmul.f32 %v1959, %v2183
        %v2216 = vmul.f32 %v1960, %v2184
        %v2217 = vmul.f32 %v1961, %v2185
        %v2218 = vmul.f32 %v1962, %v2186
        %v2219 = vmul.f32 %v1963, %v2187
        %v2220 = vmul.f32 %v1964, %v2188
        %v2221 = vmul.f32 %v1965, %v2189
        %v2222 = vmul.f32 %v1966, %v2190
        %v2223 = vmul.f32 %v1967, %v2191
        %v2224 = vmul.f32 %v1968, %v2192
        %v2225 = vmul.f32 %v1969, %v2193
        %v2226 = vmul.f32 %v1970, %v2194
        %v2227 = vmul.f32 %v1971, %v2195
        %v2228 = vmul.f32 %v1972, %v2196
        %v2229 = vmul.f32 %v1973, %v2197
        %v2230 = vmul.f32 %v1974, %v2198
        %v2231 = vmul.f32 %v1975, %v2199
        %v2232 = vmul.f32 %v1976, %v2200
        %v2233 = vmul.f32 %v1977, %v2201
        %v2234 = vmul.f32 %v1978, %v2202
        %v2235 = vlaneseq
        %v2236 = vshrl.u32 %v2235, 7
        %v2237 = vsub.s32 4, %v2236
        %v2238 = vrot.slane %v443, %v2237
        %v2239 = vmul.f32 %v2203, %v2238
        %v2240 = vmul.f32 %v2204, %v2238
        %v2241 = vmul.f32 %v2205, %v2238
        %v2242 = vmul.f32 %v2206, %v2238
        %v2243 = vmul.f32 %v2207, %v2238
        %v2244 = vmul.f32 %v2208, %v2238
        %v2245 = vmul.f32 %v2209, %v2238
        %v2246 = vmul.f32 %v2210, %v2238
        %v2247 = vmul.f32 %v2211, %v2238
        %v2248 = vmul.f32 %v2212, %v2238
        %v2249 = vmul.f32 %v2213, %v2238
        %v2250 = vmul.f32 %v2214, %v2238
        %v2251 = vmul.f32 %v2215, %v2238
        %v2252 = vmul.f32 %v2216, %v2238
        %v2253 = vmul.f32 %v2217, %v2238
        %v2254 = vmul.f32 %v2218, %v2238
        %v2255 = vmul.f32 %v2219, %v2238
        %v2256 = vmul.f32 %v2220, %v2238
        %v2257 = vmul.f32 %v2221, %v2238
        %v2258 = vmul.f32 %v2222, %v2238
        %v2259 = vmul.f32 %v2223, %v2238
        %v2260 = vmul.f32 %v2224, %v2238
        %v2261 = vmul.f32 %v2225, %v2238
        %v2262 = vmul.f32 %v2226, %v2238
        %v2263 = vmul.f32 %v2227, %v2238
        %v2264 = vmul.f32 %v2228, %v2238
        %v2265 = vmul.f32 %v2229, %v2238
        %v2266 = vmul.f32 %v2230, %v2238
        %v2267 = vmul.f32 %v2231, %v2238
        %v2268 = vmul.f32 %v2232, %v2238
        %v2269 = vmul.f32 %v2233, %v2238
        %v2270 = vmul.f32 %v2234, %v2238
        %v2271 = vlaneseq
        %v2272 = vshrl.u32 %v2271, 7
        %v2273 = vsub.s32 5, %v2272
        %v2274 = vrot.slane %v443, %v2273
        %v2275 = vadd.f32 %v2239, %v2274
        %v2276 = vadd.f32 %v2240, %v2274
        %v2277 = vadd.f32 %v2241, %v2274
        %v2278 = vadd.f32 %v2242, %v2274
        %v2279 = vadd.f32 %v2243, %v2274
        %v2280 = vadd.f32 %v2244, %v2274
        %v2281 = vadd.f32 %v2245, %v2274
        %v2282 = vadd.f32 %v2246, %v2274
        %v2283 = vadd.f32 %v2247, %v2274
        %v2284 = vadd.f32 %v2248, %v2274
        %v2285 = vadd.f32 %v2249, %v2274
        %v2286 = vadd.f32 %v2250, %v2274
        %v2287 = vadd.f32 %v2251, %v2274
        %v2288 = vadd.f32 %v2252, %v2274
        %v2289 = vadd.f32 %v2253, %v2274
        %v2290 = vadd.f32 %v2254, %v2274
        %v2291 = vadd.f32 %v2255, %v2274
        %v2292 = vadd.f32 %v2256, %v2274
        %v2293 = vadd.f32 %v2257, %v2274
        %v2294 = vadd.f32 %v2258, %v2274
        %v2295 = vadd.f32 %v2259, %v2274
        %v2296 = vadd.f32 %v2260, %v2274
        %v2297 = vadd.f32 %v2261, %v2274
        %v2298 = vadd.f32 %v2262, %v2274
        %v2299 = vadd.f32 %v2263, %v2274
        %v2300 = vadd.f32 %v2264, %v2274
        %v2301 = vadd.f32 %v2265, %v2274
        %v2302 = vadd.f32 %v2266, %v2274
        %v2303 = vadd.f32 %v2267, %v2274
        %v2304 = vadd.f32 %v2268, %v2274
        %v2305 = vadd.f32 %v2269, %v2274
        %v2306 = vadd.f32 %v2270, %v2274
        %v2307 = vmax.f32 %v2275, 0.0
        %v2308 = vmax.f32 %v2276, 0.0
        %v2309 = vmax.f32 %v2277, 0.0
        %v2310 = vmax.f32 %v2278, 0.0
        %v2311 = vmax.f32 %v2279, 0.0
        %v2312 = vmax.f32 %v2280, 0.0
        %v2313 = vmax.f32 %v2281, 0.0
        %v2314 = vmax.f32 %v2282, 0.0
        %v2315 = vmax.f32 %v2283, 0.0
        %v2316 = vmax.f32 %v2284, 0.0
        %v2317 = vmax.f32 %v2285, 0.0
        %v2318 = vmax.f32 %v2286, 0.0
        %v2319 = vmax.f32 %v2287, 0.0
        %v2320 = vmax.f32 %v2288, 0.0
        %v2321 = vmax.f32 %v2289, 0.0
        %v2322 = vmax.f32 %v2290, 0.0
        %v2323 = vmax.f32 %v2291, 0.0
        %v2324 = vmax.f32 %v2292, 0.0
        %v2325 = vmax.f32 %v2293, 0.0
        %v2326 = vmax.f32 %v2294, 0.0
        %v2327 = vmax.f32 %v2295, 0.0
        %v2328 = vmax.f32 %v2296, 0.0
        %v2329 = vmax.f32 %v2297, 0.0
        %v2330 = vmax.f32 %v2298, 0.0
        %v2331 = vmax.f32 %v2299, 0.0
        %v2332 = vmax.f32 %v2300, 0.0
        %v2333 = vmax.f32 %v2301, 0.0
        %v2334 = vmax.f32 %v2302, 0.0
        %v2335 = vmax.f32 %v2303, 0.0
        %v2336 = vmax.f32 %v2304, 0.0
        %v2337 = vmax.f32 %v2305, 0.0
        %v2338 = vmax.f32 %v2306, 0.0
        %v2339 = vpack.c.bf16 %v2308, %v2307
        %v2340 = vpack.c.bf16 %v2310, %v2309
        %v2341 = vpack.c.bf16 %v2312, %v2311
        %v2342 = vpack.c.bf16 %v2314, %v2313
        %v2343 = vpack.c.bf16 %v2316, %v2315
        %v2344 = vpack.c.bf16 %v2318, %v2317
        %v2345 = vpack.c.bf16 %v2320, %v2319
        %v2346 = vpack.c.bf16 %v2322, %v2321
        %v2347 = vpack.c.bf16 %v2324, %v2323
        %v2348 = vpack.c.bf16 %v2326, %v2325
        %v2349 = vpack.c.bf16 %v2328, %v2327
        %v2350 = vpack.c.bf16 %v2330, %v2329
        %v2351 = vpack.c.bf16 %v2332, %v2331
        %v2352 = vpack.c.bf16 %v2334, %v2333
        %v2353 = vpack.c.bf16 %v2336, %v2335
        %v2354 = vpack.c.bf16 %v2338, %v2337
        %v2355 = vpack.c.bf16 %v439, %v438
        %v2356 = vpack.c.bf16 %v441, %v440
        %v2357 = vlaneseq
        %v2358 = vshrl.u32 %v2357, 7
        %v2359 = vsub.s32 6, %v2358
        %v2360 = vrot.slane %v443, %v2359
        %v2362 = vsel %vm712, %v2339, 0
        %v2365 = vsel %vm712, %v2340, 0
        %v2368 = vsel %vm712, %v2341, 0
        %v2371 = vsel %vm712, %v2342, 0
        %v2374 = vsel %vm712, %v2343, 0
        %v2377 = vsel %vm712, %v2344, 0
        %v2380 = vsel %vm712, %v2345, 0
        %v2383 = vsel %vm712, %v2346, 0
        %v2386 = vsel %vm712, %v2347, 0
        %v2389 = vsel %vm712, %v2348, 0
        %v2392 = vsel %vm712, %v2349, 0
        %v2395 = vsel %vm712, %v2350, 0
        %v2398 = vsel %vm712, %v2351, 0
        %v2401 = vsel %vm712, %v2352, 0
        %v2404 = vsel %vm712, %v2353, 0
        %v2407 = vsel %vm712, %v2354, 0
        %2409 = vmatprep.subr.bf16.mxu0 0
        %2410 = vmatpush1.bf16.msra.mxu0 %v2355
        %2411 = vmatprep.subr.bf16.mxu0 0
        %2412 = vmatpush1.bf16.msra.mxu0 %v2356
        %2413 = vmatprep.subr.bf16.mxu0 0
        %2414 = vmatpush1.bf16.msra.mxu0 0
        %2415 = vmatprep.subr.bf16.mxu0 0
        %2416 = vmatpush1.bf16.msra.mxu0 0
        %2417 = vmatprep.subr.bf16.mxu0 0
        %2418 = vmatpush1.bf16.msra.mxu0 0
        %2419 = vmatprep.subr.bf16.mxu0 0
        %2420 = vmatpush1.bf16.msra.mxu0 0
        %2421 = vmatprep.subr.bf16.mxu0 0
        %2422 = vmatpush1.bf16.msra.mxu0 0
        %2423 = vmatprep.subr.bf16.mxu0 0
        %2424 = vmatpush1.bf16.msra.mxu0 0
        %2425 = vmatprep.subr.bf16.mxu0 0
        %2426 = vmatpush1.bf16.msra.mxu0 0
        %2427 = vmatprep.subr.bf16.mxu0 0
        %2428 = vmatpush1.bf16.msra.mxu0 0
        %2429 = vmatprep.subr.bf16.mxu0 0
        %2430 = vmatpush1.bf16.msra.mxu0 0
        %2431 = vmatprep.subr.bf16.mxu0 0
        %2432 = vmatpush1.bf16.msra.mxu0 0
        %2433 = vmatprep.subr.bf16.mxu0 0
        %2434 = vmatpush1.bf16.msra.mxu0 0
        %2435 = vmatprep.subr.bf16.mxu0 0
        %2436 = vmatpush1.bf16.msra.mxu0 0
        %2437 = vmatprep.subr.bf16.mxu0 0
        %2438 = vmatpush1.bf16.msra.mxu0 0
        %2439 = vmatprep.subr.bf16.mxu0 0
        %2440 = vmatpush1.bf16.msra.mxu0 0
        %2441 = vmatprep.mubr.bf16.mxu0 0
        %2442 = vmatmul.mubr.bf16.gmra.mrb[0].mxu0 %v2362
        %v2443 = vpop.f32.mrb[0].mxu0
        %v2444 = vadd.f32 %v2360, %v2443
        %v2445 = vpop.f32.mrb[0].mxu0
        %v2446 = vpop.f32.mrb[0].mxu0
        %v2447 = vadd.f32 %v2360, %v2446
        %v2448 = vpop.f32.mrb[0].mxu0
        %2449 = vmatprep.mubr.bf16.mxu0 0
        %2450 = vmatmul.mubr.bf16.gmra.mrb[0].mxu0 %v2365
        %v2451 = vpop.f32.mrb[0].mxu0
        %v2452 = vadd.f32 %v2360, %v2451
        %v2453 = vpop.f32.mrb[0].mxu0
        %v2454 = vpop.f32.mrb[0].mxu0
        %v2455 = vadd.f32 %v2360, %v2454
        %v2456 = vpop.f32.mrb[0].mxu0
        %2457 = vmatprep.mubr.bf16.mxu0 0
        %2458 = vmatmul.mubr.bf16.gmra.mrb[0].mxu0 %v2368
        %v2459 = vpop.f32.mrb[0].mxu0
        %v2460 = vadd.f32 %v2360, %v2459
        %v2461 = vpop.f32.mrb[0].mxu0
        %v2462 = vpop.f32.mrb[0].mxu0
        %v2463 = vadd.f32 %v2360, %v2462
        %v2464 = vpop.f32.mrb[0].mxu0
        %2465 = vmatprep.mubr.bf16.mxu0 0
        %2466 = vmatmul.mubr.bf16.gmra.mrb[0].mxu0 %v2371
        %v2467 = vpop.f32.mrb[0].mxu0
        %v2468 = vadd.f32 %v2360, %v2467
        %v2469 = vpop.f32.mrb[0].mxu0
        %v2470 = vpop.f32.mrb[0].mxu0
        %v2471 = vadd.f32 %v2360, %v2470
        %v2472 = vpop.f32.mrb[0].mxu0
        %2473 = vmatprep.mubr.bf16.mxu0 0
        %2474 = vmatmul.mubr.bf16.gmra.mrb[0].mxu0 %v2374
        %v2475 = vpop.f32.mrb[0].mxu0
        %v2476 = vadd.f32 %v2360, %v2475
        %v2477 = vpop.f32.mrb[0].mxu0
        %v2478 = vpop.f32.mrb[0].mxu0
        %v2479 = vadd.f32 %v2360, %v2478
        %v2480 = vpop.f32.mrb[0].mxu0
        %2481 = vmatprep.mubr.bf16.mxu0 0
        %2482 = vmatmul.mubr.bf16.gmra.mrb[0].mxu0 %v2377
        %v2483 = vpop.f32.mrb[0].mxu0
        %v2484 = vadd.f32 %v2360, %v2483
        %v2485 = vpop.f32.mrb[0].mxu0
        %v2486 = vpop.f32.mrb[0].mxu0
        %v2487 = vadd.f32 %v2360, %v2486
        %v2488 = vpop.f32.mrb[0].mxu0
        %2489 = vmatprep.mubr.bf16.mxu0 0
        %2490 = vmatmul.mubr.bf16.gmra.mrb[0].mxu0 %v2380
        %v2491 = vpop.f32.mrb[0].mxu0
        %v2492 = vadd.f32 %v2360, %v2491
        %v2493 = vpop.f32.mrb[0].mxu0
        %v2494 = vpop.f32.mrb[0].mxu0
        %v2495 = vadd.f32 %v2360, %v2494
        %v2496 = vpop.f32.mrb[0].mxu0
        %2497 = vmatprep.mubr.bf16.mxu0 0
        %2498 = vmatmul.mubr.bf16.gmra.mrb[0].mxu0 %v2383
        %v2499 = vpop.f32.mrb[0].mxu0
        %v2500 = vadd.f32 %v2360, %v2499
        %v2501 = vpop.f32.mrb[0].mxu0
        %v2502 = vpop.f32.mrb[0].mxu0
        %v2503 = vadd.f32 %v2360, %v2502
        %v2504 = vpop.f32.mrb[0].mxu0
        %2505 = vmatprep.mubr.bf16.mxu0 0
        %2506 = vmatmul.mubr.bf16.gmra.mrb[0].mxu0 %v2386
        %v2507 = vpop.f32.mrb[0].mxu0
        %v2508 = vadd.f32 %v2360, %v2507
        %v2509 = vpop.f32.mrb[0].mxu0
        %v2510 = vpop.f32.mrb[0].mxu0
        %v2511 = vadd.f32 %v2360, %v2510
        %v2512 = vpop.f32.mrb[0].mxu0
        %2513 = vmatprep.mubr.bf16.mxu0 0
        %2514 = vmatmul.mubr.bf16.gmra.mrb[0].mxu0 %v2389
        %v2515 = vpop.f32.mrb[0].mxu0
        %v2516 = vadd.f32 %v2360, %v2515
        %v2517 = vpop.f32.mrb[0].mxu0
        %v2518 = vpop.f32.mrb[0].mxu0
        %v2519 = vadd.f32 %v2360, %v2518
        %v2520 = vpop.f32.mrb[0].mxu0
        %2521 = vmatprep.mubr.bf16.mxu0 0
        %2522 = vmatmul.mubr.bf16.gmra.mrb[0].mxu0 %v2392
        %v2523 = vpop.f32.mrb[0].mxu0
        %v2524 = vadd.f32 %v2360, %v2523
        %v2525 = vpop.f32.mrb[0].mxu0
        %v2526 = vpop.f32.mrb[0].mxu0
        %v2527 = vadd.f32 %v2360, %v2526
        %v2528 = vpop.f32.mrb[0].mxu0
        %2529 = vmatprep.mubr.bf16.mxu0 0
        %2530 = vmatmul.mubr.bf16.gmra.mrb[0].mxu0 %v2395
        %v2531 = vpop.f32.mrb[0].mxu0
        %v2532 = vadd.f32 %v2360, %v2531
        %v2533 = vpop.f32.mrb[0].mxu0
        %v2534 = vpop.f32.mrb[0].mxu0
        %v2535 = vadd.f32 %v2360, %v2534
        %v2536 = vpop.f32.mrb[0].mxu0
        %2537 = vmatprep.mubr.bf16.mxu0 0
        %2538 = vmatmul.mubr.bf16.gmra.mrb[0].mxu0 %v2398
        %v2539 = vpop.f32.mrb[0].mxu0
        %v2540 = vadd.f32 %v2360, %v2539
        %v2541 = vpop.f32.mrb[0].mxu0
        %v2542 = vpop.f32.mrb[0].mxu0
        %v2543 = vadd.f32 %v2360, %v2542
        %v2544 = vpop.f32.mrb[0].mxu0
        %2545 = vmatprep.mubr.bf16.mxu0 0
        %2546 = vmatmul.mubr.bf16.gmra.mrb[0].mxu0 %v2401
        %v2547 = vpop.f32.mrb[0].mxu0
        %v2548 = vadd.f32 %v2360, %v2547
        %v2549 = vpop.f32.mrb[0].mxu0
        %v2550 = vpop.f32.mrb[0].mxu0
        %v2551 = vadd.f32 %v2360, %v2550
        %v2552 = vpop.f32.mrb[0].mxu0
        %2553 = vmatprep.mubr.bf16.mxu0 0
        %2554 = vmatmul.mubr.bf16.gmra.mrb[0].mxu0 %v2404
        %v2555 = vpop.f32.mrb[0].mxu0
        %v2556 = vadd.f32 %v2360, %v2555
        %v2557 = vpop.f32.mrb[0].mxu0
        %v2558 = vpop.f32.mrb[0].mxu0
        %v2559 = vadd.f32 %v2360, %v2558
        %v2560 = vpop.f32.mrb[0].mxu0
        %2561 = vmatprep.mubr.bf16.mxu0 0
        %2562 = vmatmul.mubr.bf16.gmra.mrb[0].mxu0 %v2407
        %v2563 = vpop.f32.mrb[0].mxu0
        %v2564 = vadd.f32 %v2360, %v2563
        %v2565 = vpop.f32.mrb[0].mxu0
        %v2566 = vpop.f32.mrb[0].mxu0
        %v2567 = vadd.f32 %v2360, %v2566
        %v2568 = vpop.f32.mrb[0].mxu0
        %2569 = vdwg.mxu0
        %v2570 = vsel %vm712, %v2444, 0.0
        %2571 = vadd.xlane.f32.xlu0 %v2570
        %v2572 = vpop.xlane.xlu0 %2571
        %v2573 = vsel %vm712, %v2447, 0.0
        %2574 = vadd.xlane.f32.xlu0 %v2573
        %v2575 = vpop.xlane.xlu0 %2574
        %v2576 = vsel %vm712, %v2452, 0.0
        %2577 = vadd.xlane.f32.xlu0 %v2576
        %v2578 = vpop.xlane.xlu0 %2577
        %v2579 = vsel %vm712, %v2455, 0.0
        %2580 = vadd.xlane.f32.xlu0 %v2579
        %v2581 = vpop.xlane.xlu0 %2580
        %v2582 = vsel %vm712, %v2460, 0.0
        %2583 = vadd.xlane.f32.xlu0 %v2582
        %v2584 = vpop.xlane.xlu0 %2583
        %v2585 = vsel %vm712, %v2463, 0.0
        %2586 = vadd.xlane.f32.xlu0 %v2585
        %v2587 = vpop.xlane.xlu0 %2586
        %v2588 = vsel %vm712, %v2468, 0.0
        %2589 = vadd.xlane.f32.xlu0 %v2588
        %v2590 = vpop.xlane.xlu0 %2589
        %v2591 = vsel %vm712, %v2471, 0.0
        %2592 = vadd.xlane.f32.xlu0 %v2591
        %v2593 = vpop.xlane.xlu0 %2592
        %v2594 = vsel %vm712, %v2476, 0.0
        %2595 = vadd.xlane.f32.xlu0 %v2594
        %v2596 = vpop.xlane.xlu0 %2595
        %v2597 = vsel %vm712, %v2479, 0.0
        %2598 = vadd.xlane.f32.xlu0 %v2597
        %v2599 = vpop.xlane.xlu0 %2598
        %v2600 = vsel %vm712, %v2484, 0.0
        %2601 = vadd.xlane.f32.xlu0 %v2600
        %v2602 = vpop.xlane.xlu0 %2601
        %v2603 = vsel %vm712, %v2487, 0.0
        %2604 = vadd.xlane.f32.xlu0 %v2603
        %v2605 = vpop.xlane.xlu0 %2604
        %v2606 = vsel %vm712, %v2492, 0.0
        %2607 = vadd.xlane.f32.xlu0 %v2606
        %v2608 = vpop.xlane.xlu0 %2607
        %v2609 = vsel %vm712, %v2495, 0.0
        %2610 = vadd.xlane.f32.xlu0 %v2609
        %v2611 = vpop.xlane.xlu0 %2610
        %v2612 = vsel %vm712, %v2500, 0.0
        %2613 = vadd.xlane.f32.xlu0 %v2612
        %v2614 = vpop.xlane.xlu0 %2613
        %v2615 = vsel %vm712, %v2503, 0.0
        %2616 = vadd.xlane.f32.xlu0 %v2615
        %v2617 = vpop.xlane.xlu0 %2616
        %v2618 = vsel %vm712, %v2508, 0.0
        %2619 = vadd.xlane.f32.xlu0 %v2618
        %v2620 = vpop.xlane.xlu0 %2619
        %v2621 = vsel %vm712, %v2511, 0.0
        %2622 = vadd.xlane.f32.xlu0 %v2621
        %v2623 = vpop.xlane.xlu0 %2622
        %v2624 = vsel %vm712, %v2516, 0.0
        %2625 = vadd.xlane.f32.xlu0 %v2624
        %v2626 = vpop.xlane.xlu0 %2625
        %v2627 = vsel %vm712, %v2519, 0.0
        %2628 = vadd.xlane.f32.xlu0 %v2627
        %v2629 = vpop.xlane.xlu0 %2628
        %v2630 = vsel %vm712, %v2524, 0.0
        %2631 = vadd.xlane.f32.xlu0 %v2630
        %v2632 = vpop.xlane.xlu0 %2631
        %v2633 = vsel %vm712, %v2527, 0.0
        %2634 = vadd.xlane.f32.xlu0 %v2633
        %v2635 = vpop.xlane.xlu0 %2634
        %v2636 = vsel %vm712, %v2532, 0.0
        %2637 = vadd.xlane.f32.xlu0 %v2636
        %v2638 = vpop.xlane.xlu0 %2637
        %v2639 = vsel %vm712, %v2535, 0.0
        %2640 = vadd.xlane.f32.xlu0 %v2639
        %v2641 = vpop.xlane.xlu0 %2640
        %v2642 = vsel %vm712, %v2540, 0.0
        %2643 = vadd.xlane.f32.xlu0 %v2642
        %v2644 = vpop.xlane.xlu0 %2643
        %v2645 = vsel %vm712, %v2543, 0.0
        %2646 = vadd.xlane.f32.xlu0 %v2645
        %v2647 = vpop.xlane.xlu0 %2646
        %v2648 = vsel %vm712, %v2548, 0.0
        %2649 = vadd.xlane.f32.xlu0 %v2648
        %v2650 = vpop.xlane.xlu0 %2649
        %v2651 = vsel %vm712, %v2551, 0.0
        %2652 = vadd.xlane.f32.xlu0 %v2651
        %v2653 = vpop.xlane.xlu0 %2652
        %v2654 = vsel %vm712, %v2556, 0.0
        %2655 = vadd.xlane.f32.xlu0 %v2654
        %v2656 = vpop.xlane.xlu0 %2655
        %v2657 = vsel %vm712, %v2559, 0.0
        %2658 = vadd.xlane.f32.xlu0 %v2657
        %v2659 = vpop.xlane.xlu0 %2658
        %v2660 = vsel %vm712, %v2564, 0.0
        %2661 = vadd.xlane.f32.xlu0 %v2660
        %v2662 = vpop.xlane.xlu0 %2661
        %v2663 = vsel %vm712, %v2567, 0.0
        %2664 = vadd.xlane.f32.xlu0 %v2663
        %v2665 = vpop.xlane.xlu0 %2664
        %v2666 = vmul.f32 %v2572, %v1914
        %v2667 = vmul.f32 %v2575, %v1914
        %v2668 = vmul.f32 %v2578, %v1914
        %v2669 = vmul.f32 %v2581, %v1914
        %v2670 = vmul.f32 %v2584, %v1914
        %v2671 = vmul.f32 %v2587, %v1914
        %v2672 = vmul.f32 %v2590, %v1914
        %v2673 = vmul.f32 %v2593, %v1914
        %v2674 = vmul.f32 %v2596, %v1914
        %v2675 = vmul.f32 %v2599, %v1914
        %v2676 = vmul.f32 %v2602, %v1914
        %v2677 = vmul.f32 %v2605, %v1914
        %v2678 = vmul.f32 %v2608, %v1914
        %v2679 = vmul.f32 %v2611, %v1914
        %v2680 = vmul.f32 %v2614, %v1914
        %v2681 = vmul.f32 %v2617, %v1914
        %v2682 = vmul.f32 %v2620, %v1914
        %v2683 = vmul.f32 %v2623, %v1914
        %v2684 = vmul.f32 %v2626, %v1914
        %v2685 = vmul.f32 %v2629, %v1914
        %v2686 = vmul.f32 %v2632, %v1914
        %v2687 = vmul.f32 %v2635, %v1914
        %v2688 = vmul.f32 %v2638, %v1914
        %v2689 = vmul.f32 %v2641, %v1914
        %v2690 = vmul.f32 %v2644, %v1914
        %v2691 = vmul.f32 %v2647, %v1914
        %v2692 = vmul.f32 %v2650, %v1914
        %v2693 = vmul.f32 %v2653, %v1914
        %v2694 = vmul.f32 %v2656, %v1914
        %v2695 = vmul.f32 %v2659, %v1914
        %v2696 = vmul.f32 %v2662, %v1914
        %v2697 = vmul.f32 %v2665, %v1914
        %v2698 = vsub.f32 %v2444, %v2666
        %v2699 = vsub.f32 %v2447, %v2667
        %v2700 = vsub.f32 %v2452, %v2668
        %v2701 = vsub.f32 %v2455, %v2669
        %v2702 = vsub.f32 %v2460, %v2670
        %v2703 = vsub.f32 %v2463, %v2671
        %v2704 = vsub.f32 %v2468, %v2672
        %v2705 = vsub.f32 %v2471, %v2673
        %v2706 = vsub.f32 %v2476, %v2674
        %v2707 = vsub.f32 %v2479, %v2675
        %v2708 = vsub.f32 %v2484, %v2676
        %v2709 = vsub.f32 %v2487, %v2677
        %v2710 = vsub.f32 %v2492, %v2678
        %v2711 = vsub.f32 %v2495, %v2679
        %v2712 = vsub.f32 %v2500, %v2680
        %v2713 = vsub.f32 %v2503, %v2681
        %v2714 = vsub.f32 %v2508, %v2682
        %v2715 = vsub.f32 %v2511, %v2683
        %v2716 = vsub.f32 %v2516, %v2684
        %v2717 = vsub.f32 %v2519, %v2685
        %v2718 = vsub.f32 %v2524, %v2686
        %v2719 = vsub.f32 %v2527, %v2687
        %v2720 = vsub.f32 %v2532, %v2688
        %v2721 = vsub.f32 %v2535, %v2689
        %v2722 = vsub.f32 %v2540, %v2690
        %v2723 = vsub.f32 %v2543, %v2691
        %v2724 = vsub.f32 %v2548, %v2692
        %v2725 = vsub.f32 %v2551, %v2693
        %v2726 = vsub.f32 %v2556, %v2694
        %v2727 = vsub.f32 %v2559, %v2695
        %v2728 = vsub.f32 %v2564, %v2696
        %v2729 = vsub.f32 %v2567, %v2697
        %v2730 = vmul.f32 %v2698, %v2698
        %v2731 = vmul.f32 %v2699, %v2699
        %v2732 = vmul.f32 %v2700, %v2700
        %v2733 = vmul.f32 %v2701, %v2701
        %v2734 = vmul.f32 %v2702, %v2702
        %v2735 = vmul.f32 %v2703, %v2703
        %v2736 = vmul.f32 %v2704, %v2704
        %v2737 = vmul.f32 %v2705, %v2705
        %v2738 = vmul.f32 %v2706, %v2706
        %v2739 = vmul.f32 %v2707, %v2707
        %v2740 = vmul.f32 %v2708, %v2708
        %v2741 = vmul.f32 %v2709, %v2709
        %v2742 = vmul.f32 %v2710, %v2710
        %v2743 = vmul.f32 %v2711, %v2711
        %v2744 = vmul.f32 %v2712, %v2712
        %v2745 = vmul.f32 %v2713, %v2713
        %v2746 = vmul.f32 %v2714, %v2714
        %v2747 = vmul.f32 %v2715, %v2715
        %v2748 = vmul.f32 %v2716, %v2716
        %v2749 = vmul.f32 %v2717, %v2717
        %v2750 = vmul.f32 %v2718, %v2718
        %v2751 = vmul.f32 %v2719, %v2719
        %v2752 = vmul.f32 %v2720, %v2720
        %v2753 = vmul.f32 %v2721, %v2721
        %v2754 = vmul.f32 %v2722, %v2722
        %v2755 = vmul.f32 %v2723, %v2723
        %v2756 = vmul.f32 %v2724, %v2724
        %v2757 = vmul.f32 %v2725, %v2725
        %v2758 = vmul.f32 %v2726, %v2726
        %v2759 = vmul.f32 %v2727, %v2727
        %v2760 = vmul.f32 %v2728, %v2728
        %v2761 = vmul.f32 %v2729, %v2729
        %v2762 = vsel %vm712, %v2730, 0.0
        %2763 = vadd.xlane.f32.xlu0 %v2762
        %v2764 = vpop.xlane.xlu0 %2763
        %v2765 = vsel %vm712, %v2731, 0.0
        %2766 = vadd.xlane.f32.xlu0 %v2765
        %v2767 = vpop.xlane.xlu0 %2766
        %v2768 = vsel %vm712, %v2732, 0.0
        %2769 = vadd.xlane.f32.xlu0 %v2768
        %v2770 = vpop.xlane.xlu0 %2769
        %v2771 = vsel %vm712, %v2733, 0.0
        %2772 = vadd.xlane.f32.xlu0 %v2771
        %v2773 = vpop.xlane.xlu0 %2772
        %v2774 = vsel %vm712, %v2734, 0.0
        %2775 = vadd.xlane.f32.xlu0 %v2774
        %v2776 = vpop.xlane.xlu0 %2775
        %v2777 = vsel %vm712, %v2735, 0.0
        %2778 = vadd.xlane.f32.xlu0 %v2777
        %v2779 = vpop.xlane.xlu0 %2778
        %v2780 = vsel %vm712, %v2736, 0.0
        %2781 = vadd.xlane.f32.xlu0 %v2780
        %v2782 = vpop.xlane.xlu0 %2781
        %v2783 = vsel %vm712, %v2737, 0.0
        %2784 = vadd.xlane.f32.xlu0 %v2783
        %v2785 = vpop.xlane.xlu0 %2784
        %v2786 = vsel %vm712, %v2738, 0.0
        %2787 = vadd.xlane.f32.xlu0 %v2786
        %v2788 = vpop.xlane.xlu0 %2787
        %v2789 = vsel %vm712, %v2739, 0.0
        %2790 = vadd.xlane.f32.xlu0 %v2789
        %v2791 = vpop.xlane.xlu0 %2790
        %v2792 = vsel %vm712, %v2740, 0.0
        %2793 = vadd.xlane.f32.xlu0 %v2792
        %v2794 = vpop.xlane.xlu0 %2793
        %v2795 = vsel %vm712, %v2741, 0.0
        %2796 = vadd.xlane.f32.xlu0 %v2795
        %v2797 = vpop.xlane.xlu0 %2796
        %v2798 = vsel %vm712, %v2742, 0.0
        %2799 = vadd.xlane.f32.xlu0 %v2798
        %v2800 = vpop.xlane.xlu0 %2799
        %v2801 = vsel %vm712, %v2743, 0.0
        %2802 = vadd.xlane.f32.xlu0 %v2801
        %v2803 = vpop.xlane.xlu0 %2802
        %v2804 = vsel %vm712, %v2744, 0.0
        %2805 = vadd.xlane.f32.xlu0 %v2804
        %v2806 = vpop.xlane.xlu0 %2805
        %v2807 = vsel %vm712, %v2745, 0.0
        %2808 = vadd.xlane.f32.xlu0 %v2807
        %v2809 = vpop.xlane.xlu0 %2808
        %v2810 = vsel %vm712, %v2746, 0.0
        %2811 = vadd.xlane.f32.xlu0 %v2810
        %v2812 = vpop.xlane.xlu0 %2811
        %v2813 = vsel %vm712, %v2747, 0.0
        %2814 = vadd.xlane.f32.xlu0 %v2813
        %v2815 = vpop.xlane.xlu0 %2814
        %v2816 = vsel %vm712, %v2748, 0.0
        %2817 = vadd.xlane.f32.xlu0 %v2816
        %v2818 = vpop.xlane.xlu0 %2817
        %v2819 = vsel %vm712, %v2749, 0.0
        %2820 = vadd.xlane.f32.xlu0 %v2819
        %v2821 = vpop.xlane.xlu0 %2820
        %v2822 = vsel %vm712, %v2750, 0.0
        %2823 = vadd.xlane.f32.xlu0 %v2822
        %v2824 = vpop.xlane.xlu0 %2823
        %v2825 = vsel %vm712, %v2751, 0.0
        %2826 = vadd.xlane.f32.xlu0 %v2825
        %v2827 = vpop.xlane.xlu0 %2826
        %v2828 = vsel %vm712, %v2752, 0.0
        %2829 = vadd.xlane.f32.xlu0 %v2828
        %v2830 = vpop.xlane.xlu0 %2829
        %v2831 = vsel %vm712, %v2753, 0.0
        %2832 = vadd.xlane.f32.xlu0 %v2831
        %v2833 = vpop.xlane.xlu0 %2832
        %v2834 = vsel %vm712, %v2754, 0.0
        %2835 = vadd.xlane.f32.xlu0 %v2834
        %v2836 = vpop.xlane.xlu0 %2835
        %v2837 = vsel %vm712, %v2755, 0.0
        %2838 = vadd.xlane.f32.xlu0 %v2837
        %v2839 = vpop.xlane.xlu0 %2838
        %v2840 = vsel %vm712, %v2756, 0.0
        %2841 = vadd.xlane.f32.xlu0 %v2840
        %v2842 = vpop.xlane.xlu0 %2841
        %v2843 = vsel %vm712, %v2757, 0.0
        %2844 = vadd.xlane.f32.xlu0 %v2843
        %v2845 = vpop.xlane.xlu0 %2844
        %v2846 = vsel %vm712, %v2758, 0.0
        %2847 = vadd.xlane.f32.xlu0 %v2846
        %v2848 = vpop.xlane.xlu0 %2847
        %v2849 = vsel %vm712, %v2759, 0.0
        %2850 = vadd.xlane.f32.xlu0 %v2849
        %v2851 = vpop.xlane.xlu0 %2850
        %v2852 = vsel %vm712, %v2760, 0.0
        %2853 = vadd.xlane.f32.xlu0 %v2852
        %v2854 = vpop.xlane.xlu0 %2853
        %v2855 = vsel %vm712, %v2761, 0.0
        %2856 = vadd.xlane.f32.xlu0 %v2855
        %v2857 = vpop.xlane.xlu0 %2856
        %v2858 = vmul.f32 %v2764, %v1914
        %v2859 = vmul.f32 %v2767, %v1914
        %v2860 = vmul.f32 %v2770, %v1914
        %v2861 = vmul.f32 %v2773, %v1914
        %v2862 = vmul.f32 %v2776, %v1914
        %v2863 = vmul.f32 %v2779, %v1914
        %v2864 = vmul.f32 %v2782, %v1914
        %v2865 = vmul.f32 %v2785, %v1914
        %v2866 = vmul.f32 %v2788, %v1914
        %v2867 = vmul.f32 %v2791, %v1914
        %v2868 = vmul.f32 %v2794, %v1914
        %v2869 = vmul.f32 %v2797, %v1914
        %v2870 = vmul.f32 %v2800, %v1914
        %v2871 = vmul.f32 %v2803, %v1914
        %v2872 = vmul.f32 %v2806, %v1914
        %v2873 = vmul.f32 %v2809, %v1914
        %v2874 = vmul.f32 %v2812, %v1914
        %v2875 = vmul.f32 %v2815, %v1914
        %v2876 = vmul.f32 %v2818, %v1914
        %v2877 = vmul.f32 %v2821, %v1914
        %v2878 = vmul.f32 %v2824, %v1914
        %v2879 = vmul.f32 %v2827, %v1914
        %v2880 = vmul.f32 %v2830, %v1914
        %v2881 = vmul.f32 %v2833, %v1914
        %v2882 = vmul.f32 %v2836, %v1914
        %v2883 = vmul.f32 %v2839, %v1914
        %v2884 = vmul.f32 %v2842, %v1914
        %v2885 = vmul.f32 %v2845, %v1914
        %v2886 = vmul.f32 %v2848, %v1914
        %v2887 = vmul.f32 %v2851, %v1914
        %v2888 = vmul.f32 %v2854, %v1914
        %v2889 = vmul.f32 %v2857, %v1914
        %v2890 = vadd.f32 %v2858, 1e-05
        %v2891 = vadd.f32 %v2859, 1e-05
        %v2892 = vadd.f32 %v2860, 1e-05
        %v2893 = vadd.f32 %v2861, 1e-05
        %v2894 = vadd.f32 %v2862, 1e-05
        %v2895 = vadd.f32 %v2863, 1e-05
        %v2896 = vadd.f32 %v2864, 1e-05
        %v2897 = vadd.f32 %v2865, 1e-05
        %v2898 = vadd.f32 %v2866, 1e-05
        %v2899 = vadd.f32 %v2867, 1e-05
        %v2900 = vadd.f32 %v2868, 1e-05
        %v2901 = vadd.f32 %v2869, 1e-05
        %v2902 = vadd.f32 %v2870, 1e-05
        %v2903 = vadd.f32 %v2871, 1e-05
        %v2904 = vadd.f32 %v2872, 1e-05
        %v2905 = vadd.f32 %v2873, 1e-05
        %v2906 = vadd.f32 %v2874, 1e-05
        %v2907 = vadd.f32 %v2875, 1e-05
        %v2908 = vadd.f32 %v2876, 1e-05
        %v2909 = vadd.f32 %v2877, 1e-05
        %v2910 = vadd.f32 %v2878, 1e-05
        %v2911 = vadd.f32 %v2879, 1e-05
        %v2912 = vadd.f32 %v2880, 1e-05
        %v2913 = vadd.f32 %v2881, 1e-05
        %v2914 = vadd.f32 %v2882, 1e-05
        %v2915 = vadd.f32 %v2883, 1e-05
        %v2916 = vadd.f32 %v2884, 1e-05
        %v2917 = vadd.f32 %v2885, 1e-05
        %v2918 = vadd.f32 %v2886, 1e-05
        %v2919 = vadd.f32 %v2887, 1e-05
        %v2920 = vadd.f32 %v2888, 1e-05
        %v2921 = vadd.f32 %v2889, 1e-05
        %v2922 = vrsqrt.pop %v2890
        %v2923 = vrsqrt.pop %v2891
        %v2924 = vrsqrt.pop %v2892
        %v2925 = vrsqrt.pop %v2893
        %v2926 = vrsqrt.pop %v2894
        %v2927 = vrsqrt.pop %v2895
        %v2928 = vrsqrt.pop %v2896
        %v2929 = vrsqrt.pop %v2897
        %v2930 = vrsqrt.pop %v2898
        %v2931 = vrsqrt.pop %v2899
        %v2932 = vrsqrt.pop %v2900
        %v2933 = vrsqrt.pop %v2901
        %v2934 = vrsqrt.pop %v2902
        %v2935 = vrsqrt.pop %v2903
        %v2936 = vrsqrt.pop %v2904
        %v2937 = vrsqrt.pop %v2905
        %v2938 = vrsqrt.pop %v2906
        %v2939 = vrsqrt.pop %v2907
        %v2940 = vrsqrt.pop %v2908
        %v2941 = vrsqrt.pop %v2909
        %v2942 = vrsqrt.pop %v2910
        %v2943 = vrsqrt.pop %v2911
        %v2944 = vrsqrt.pop %v2912
        %v2945 = vrsqrt.pop %v2913
        %v2946 = vrsqrt.pop %v2914
        %v2947 = vrsqrt.pop %v2915
        %v2948 = vrsqrt.pop %v2916
        %v2949 = vrsqrt.pop %v2917
        %v2950 = vrsqrt.pop %v2918
        %v2951 = vrsqrt.pop %v2919
        %v2952 = vrsqrt.pop %v2920
        %v2953 = vrsqrt.pop %v2921
        %v2954 = vmul.f32 %v2698, %v2922
        %v2955 = vmul.f32 %v2699, %v2923
        %v2956 = vmul.f32 %v2700, %v2924
        %v2957 = vmul.f32 %v2701, %v2925
        %v2958 = vmul.f32 %v2702, %v2926
        %v2959 = vmul.f32 %v2703, %v2927
        %v2960 = vmul.f32 %v2704, %v2928
        %v2961 = vmul.f32 %v2705, %v2929
        %v2962 = vmul.f32 %v2706, %v2930
        %v2963 = vmul.f32 %v2707, %v2931
        %v2964 = vmul.f32 %v2708, %v2932
        %v2965 = vmul.f32 %v2709, %v2933
        %v2966 = vmul.f32 %v2710, %v2934
        %v2967 = vmul.f32 %v2711, %v2935
        %v2968 = vmul.f32 %v2712, %v2936
        %v2969 = vmul.f32 %v2713, %v2937
        %v2970 = vmul.f32 %v2714, %v2938
        %v2971 = vmul.f32 %v2715, %v2939
        %v2972 = vmul.f32 %v2716, %v2940
        %v2973 = vmul.f32 %v2717, %v2941
        %v2974 = vmul.f32 %v2718, %v2942
        %v2975 = vmul.f32 %v2719, %v2943
        %v2976 = vmul.f32 %v2720, %v2944
        %v2977 = vmul.f32 %v2721, %v2945
        %v2978 = vmul.f32 %v2722, %v2946
        %v2979 = vmul.f32 %v2723, %v2947
        %v2980 = vmul.f32 %v2724, %v2948
        %v2981 = vmul.f32 %v2725, %v2949
        %v2982 = vmul.f32 %v2726, %v2950
        %v2983 = vmul.f32 %v2727, %v2951
        %v2984 = vmul.f32 %v2728, %v2952
        %v2985 = vmul.f32 %v2729, %v2953
        %v2986 = vlaneseq
        %v2987 = vshrl.u32 %v2986, 7
        %v2988 = vsub.s32 7, %v2987
        %v2989 = vrot.slane %v443, %v2988
        %v2990 = vmul.f32 %v2954, %v2989
        %v2991 = vmul.f32 %v2955, %v2989
        %v2992 = vmul.f32 %v2956, %v2989
        %v2993 = vmul.f32 %v2957, %v2989
        %v2994 = vmul.f32 %v2958, %v2989
        %v2995 = vmul.f32 %v2959, %v2989
        %v2996 = vmul.f32 %v2960, %v2989
        %v2997 = vmul.f32 %v2961, %v2989
        %v2998 = vmul.f32 %v2962, %v2989
        %v2999 = vmul.f32 %v2963, %v2989
        %v3000 = vmul.f32 %v2964, %v2989
        %v3001 = vmul.f32 %v2965, %v2989
        %v3002 = vmul.f32 %v2966, %v2989
        %v3003 = vmul.f32 %v2967, %v2989
        %v3004 = vmul.f32 %v2968, %v2989
        %v3005 = vmul.f32 %v2969, %v2989
        %v3006 = vmul.f32 %v2970, %v2989
        %v3007 = vmul.f32 %v2971, %v2989
        %v3008 = vmul.f32 %v2972, %v2989
        %v3009 = vmul.f32 %v2973, %v2989
        %v3010 = vmul.f32 %v2974, %v2989
        %v3011 = vmul.f32 %v2975, %v2989
        %v3012 = vmul.f32 %v2976, %v2989
        %v3013 = vmul.f32 %v2977, %v2989
        %v3014 = vmul.f32 %v2978, %v2989
        %v3015 = vmul.f32 %v2979, %v2989
        %v3016 = vmul.f32 %v2980, %v2989
        %v3017 = vmul.f32 %v2981, %v2989
        %v3018 = vmul.f32 %v2982, %v2989
        %v3019 = vmul.f32 %v2983, %v2989
        %v3020 = vmul.f32 %v2984, %v2989
        %v3021 = vmul.f32 %v2985, %v2989
        %v3022 = vlaneseq
        %v3023 = vshrl.u32 %v3022, 7
        %v3024 = vsub.s32 0, %v3023
        %v3025 = vrot.slane %v444, %v3024
        %v3026 = vadd.f32 %v2990, %v3025
        %v3027 = vadd.f32 %v2991, %v3025
        %v3028 = vadd.f32 %v2992, %v3025
        %v3029 = vadd.f32 %v2993, %v3025
        %v3030 = vadd.f32 %v2994, %v3025
        %v3031 = vadd.f32 %v2995, %v3025
        %v3032 = vadd.f32 %v2996, %v3025
        %v3033 = vadd.f32 %v2997, %v3025
        %v3034 = vadd.f32 %v2998, %v3025
        %v3035 = vadd.f32 %v2999, %v3025
        %v3036 = vadd.f32 %v3000, %v3025
        %v3037 = vadd.f32 %v3001, %v3025
        %v3038 = vadd.f32 %v3002, %v3025
        %v3039 = vadd.f32 %v3003, %v3025
        %v3040 = vadd.f32 %v3004, %v3025
        %v3041 = vadd.f32 %v3005, %v3025
        %v3042 = vadd.f32 %v3006, %v3025
        %v3043 = vadd.f32 %v3007, %v3025
        %v3044 = vadd.f32 %v3008, %v3025
        %v3045 = vadd.f32 %v3009, %v3025
        %v3046 = vadd.f32 %v3010, %v3025
        %v3047 = vadd.f32 %v3011, %v3025
        %v3048 = vadd.f32 %v3012, %v3025
        %v3049 = vadd.f32 %v3013, %v3025
        %v3050 = vadd.f32 %v3014, %v3025
        %v3051 = vadd.f32 %v3015, %v3025
        %v3052 = vadd.f32 %v3016, %v3025
        %v3053 = vadd.f32 %v3017, %v3025
        %v3054 = vadd.f32 %v3018, %v3025
        %v3055 = vadd.f32 %v3019, %v3025
        %v3056 = vadd.f32 %v3020, %v3025
        %v3057 = vadd.f32 %v3021, %v3025
        %v3058 = vld [vmem:[%s5] sm:$0xff]
        %v3059 = vld [vmem:[%s5 + $0x8] sm:$0xff]
        %v3060 = vld [vmem:[%s5 + $0x10] sm:$0xff]
        %v3061 = vld [vmem:[%s5 + $0x18] sm:$0xff]
        %v3062 = vld [vmem:[%s5 + $0x20] sm:$0xff]
        %v3063 = vld [vmem:[%s5 + $0x28] sm:$0xff]
        %v3064 = vld [vmem:[%s5 + $0x30] sm:$0xff]
        %v3065 = vld [vmem:[%s5 + $0x38] sm:$0xff]
        %v3066 = vpack.c.bf16 %v3027, %v3026
        %v3067 = vpack.c.bf16 %v3029, %v3028
        %v3068 = vpack.c.bf16 %v3031, %v3030
        %v3069 = vpack.c.bf16 %v3033, %v3032
        %v3070 = vpack.c.bf16 %v3035, %v3034
        %v3071 = vpack.c.bf16 %v3037, %v3036
        %v3072 = vpack.c.bf16 %v3039, %v3038
        %v3073 = vpack.c.bf16 %v3041, %v3040
        %v3074 = vpack.c.bf16 %v3043, %v3042
        %v3075 = vpack.c.bf16 %v3045, %v3044
        %v3076 = vpack.c.bf16 %v3047, %v3046
        %v3077 = vpack.c.bf16 %v3049, %v3048
        %v3078 = vpack.c.bf16 %v3051, %v3050
        %v3079 = vpack.c.bf16 %v3053, %v3052
        %v3080 = vpack.c.bf16 %v3055, %v3054
        %v3081 = vpack.c.bf16 %v3057, %v3056
        %v3082 = vpack.c.bf16 %v3060, %v3058
        %v3083 = vpack.c.bf16 %v3061, %v3059
        %v3084 = vpack.c.bf16 %v3064, %v3062
        %v3085 = vpack.c.bf16 %v3065, %v3063
        %v3087 = vsel %vm712, %v3066, 0
        %v3090 = vsel %vm712, %v3067, 0
        %v3093 = vsel %vm712, %v3068, 0
        %v3096 = vsel %vm712, %v3069, 0
        %v3099 = vsel %vm712, %v3070, 0
        %v3102 = vsel %vm712, %v3071, 0
        %v3105 = vsel %vm712, %v3072, 0
        %v3108 = vsel %vm712, %v3073, 0
        %v3111 = vsel %vm712, %v3074, 0
        %v3114 = vsel %vm712, %v3075, 0
        %v3117 = vsel %vm712, %v3076, 0
        %v3120 = vsel %vm712, %v3077, 0
        %v3123 = vsel %vm712, %v3078, 0
        %v3126 = vsel %vm712, %v3079, 0
        %v3129 = vsel %vm712, %v3080, 0
        %v3132 = vsel %vm712, %v3081, 0
        %3134 = vmatprep.subr.bf16.mxu0 %v3083
        %3135 = vmatpush1.bf16.msra.mxu0 %v3082
        %3136 = vmatprep.subr.bf16.mxu0 %v3085
        %3137 = vmatpush1.bf16.msra.mxu0 %v3084
        %3138 = vmatprep.subr.bf16.mxu0 0
        %3139 = vmatpush1.bf16.msra.mxu0 0
        %3140 = vmatprep.subr.bf16.mxu0 0
        %3141 = vmatpush1.bf16.msra.mxu0 0
        %3142 = vmatprep.subr.bf16.mxu0 0
        %3143 = vmatpush1.bf16.msra.mxu0 0
        %3144 = vmatprep.subr.bf16.mxu0 0
        %3145 = vmatpush1.bf16.msra.mxu0 0
        %3146 = vmatprep.subr.bf16.mxu0 0
        %3147 = vmatpush1.bf16.msra.mxu0 0
        %3148 = vmatprep.subr.bf16.mxu0 0
        %3149 = vmatpush1.bf16.msra.mxu0 0
        %3150 = vmatprep.subr.bf16.mxu0 0
        %3151 = vmatpush1.bf16.msra.mxu0 0
        %3152 = vmatprep.subr.bf16.mxu0 0
        %3153 = vmatpush1.bf16.msra.mxu0 0
        %3154 = vmatprep.subr.bf16.mxu0 0
        %3155 = vmatpush1.bf16.msra.mxu0 0
        %3156 = vmatprep.subr.bf16.mxu0 0
        %3157 = vmatpush1.bf16.msra.mxu0 0
        %3158 = vmatprep.subr.bf16.mxu0 0
        %3159 = vmatpush1.bf16.msra.mxu0 0
        %3160 = vmatprep.subr.bf16.mxu0 0
        %3161 = vmatpush1.bf16.msra.mxu0 0
        %3162 = vmatprep.subr.bf16.mxu0 0
        %3163 = vmatpush1.bf16.msra.mxu0 0
        %3164 = vmatprep.subr.bf16.mxu0 0
        %3165 = vmatpush1.bf16.msra.mxu0 0
        %3166 = vmatprep.mubr.bf16.mxu0 0
        %3167 = vmatmul.mubr.bf16.gmra.mrb[0].mxu0 %v3087
        %v3168 = vpop.f32.mrb[0].mxu0
        %v3169 = vadd.f32 0.0, %v3168
        %v3170 = vpop.f32.mrb[0].mxu0
        %v3171 = vadd.f32 0.0, %v3170
        %v3172 = vpop.f32.mrb[0].mxu0
        %v3173 = vadd.f32 0.0, %v3172
        %v3174 = vpop.f32.mrb[0].mxu0
        %v3175 = vadd.f32 0.0, %v3174
        %3176 = vmatprep.mubr.bf16.mxu0 0
        %3177 = vmatmul.mubr.bf16.gmra.mrb[0].mxu0 %v3090
        %v3178 = vpop.f32.mrb[0].mxu0
        %v3179 = vadd.f32 0.0, %v3178
        %v3180 = vpop.f32.mrb[0].mxu0
        %v3181 = vadd.f32 0.0, %v3180
        %v3182 = vpop.f32.mrb[0].mxu0
        %v3183 = vadd.f32 0.0, %v3182
        %v3184 = vpop.f32.mrb[0].mxu0
        %v3185 = vadd.f32 0.0, %v3184
        %3186 = vmatprep.mubr.bf16.mxu0 0
        %3187 = vmatmul.mubr.bf16.gmra.mrb[0].mxu0 %v3093
        %v3188 = vpop.f32.mrb[0].mxu0
        %v3189 = vadd.f32 0.0, %v3188
        %v3190 = vpop.f32.mrb[0].mxu0
        %v3191 = vadd.f32 0.0, %v3190
        %v3192 = vpop.f32.mrb[0].mxu0
        %v3193 = vadd.f32 0.0, %v3192
        %v3194 = vpop.f32.mrb[0].mxu0
        %v3195 = vadd.f32 0.0, %v3194
        %3196 = vmatprep.mubr.bf16.mxu0 0
        %3197 = vmatmul.mubr.bf16.gmra.mrb[0].mxu0 %v3096
        %v3198 = vpop.f32.mrb[0].mxu0
        %v3199 = vadd.f32 0.0, %v3198
        %v3200 = vpop.f32.mrb[0].mxu0
        %v3201 = vadd.f32 0.0, %v3200
        %v3202 = vpop.f32.mrb[0].mxu0
        %v3203 = vadd.f32 0.0, %v3202
        %v3204 = vpop.f32.mrb[0].mxu0
        %v3205 = vadd.f32 0.0, %v3204
        %3206 = vmatprep.mubr.bf16.mxu0 0
        %3207 = vmatmul.mubr.bf16.gmra.mrb[0].mxu0 %v3099
        %v3208 = vpop.f32.mrb[0].mxu0
        %v3209 = vadd.f32 0.0, %v3208
        %v3210 = vpop.f32.mrb[0].mxu0
        %v3211 = vadd.f32 0.0, %v3210
        %v3212 = vpop.f32.mrb[0].mxu0
        %v3213 = vadd.f32 0.0, %v3212
        %v3214 = vpop.f32.mrb[0].mxu0
        %v3215 = vadd.f32 0.0, %v3214
        %3216 = vmatprep.mubr.bf16.mxu0 0
        %3217 = vmatmul.mubr.bf16.gmra.mrb[0].mxu0 %v3102
        %v3218 = vpop.f32.mrb[0].mxu0
        %v3219 = vadd.f32 0.0, %v3218
        %v3220 = vpop.f32.mrb[0].mxu0
        %v3221 = vadd.f32 0.0, %v3220
        %v3222 = vpop.f32.mrb[0].mxu0
        %v3223 = vadd.f32 0.0, %v3222
        %v3224 = vpop.f32.mrb[0].mxu0
        %v3225 = vadd.f32 0.0, %v3224
        %3226 = vmatprep.mubr.bf16.mxu0 0
        %3227 = vmatmul.mubr.bf16.gmra.mrb[0].mxu0 %v3105
        %v3228 = vpop.f32.mrb[0].mxu0
        %v3229 = vadd.f32 0.0, %v3228
        %v3230 = vpop.f32.mrb[0].mxu0
        %v3231 = vadd.f32 0.0, %v3230
        %v3232 = vpop.f32.mrb[0].mxu0
        %v3233 = vadd.f32 0.0, %v3232
        %v3234 = vpop.f32.mrb[0].mxu0
        %v3235 = vadd.f32 0.0, %v3234
        %3236 = vmatprep.mubr.bf16.mxu0 0
        %3237 = vmatmul.mubr.bf16.gmra.mrb[0].mxu0 %v3108
        %v3238 = vpop.f32.mrb[0].mxu0
        %v3239 = vadd.f32 0.0, %v3238
        %v3240 = vpop.f32.mrb[0].mxu0
        %v3241 = vadd.f32 0.0, %v3240
        %v3242 = vpop.f32.mrb[0].mxu0
        %v3243 = vadd.f32 0.0, %v3242
        %v3244 = vpop.f32.mrb[0].mxu0
        %v3245 = vadd.f32 0.0, %v3244
        %3246 = vmatprep.mubr.bf16.mxu0 0
        %3247 = vmatmul.mubr.bf16.gmra.mrb[0].mxu0 %v3111
        %v3248 = vpop.f32.mrb[0].mxu0
        %v3249 = vadd.f32 0.0, %v3248
        %v3250 = vpop.f32.mrb[0].mxu0
        %v3251 = vadd.f32 0.0, %v3250
        %v3252 = vpop.f32.mrb[0].mxu0
        %v3253 = vadd.f32 0.0, %v3252
        %v3254 = vpop.f32.mrb[0].mxu0
        %v3255 = vadd.f32 0.0, %v3254
        %3256 = vmatprep.mubr.bf16.mxu0 0
        %3257 = vmatmul.mubr.bf16.gmra.mrb[0].mxu0 %v3114
        %v3258 = vpop.f32.mrb[0].mxu0
        %v3259 = vadd.f32 0.0, %v3258
        %v3260 = vpop.f32.mrb[0].mxu0
        %v3261 = vadd.f32 0.0, %v3260
        %v3262 = vpop.f32.mrb[0].mxu0
        %v3263 = vadd.f32 0.0, %v3262
        %v3264 = vpop.f32.mrb[0].mxu0
        %v3265 = vadd.f32 0.0, %v3264
        %3266 = vmatprep.mubr.bf16.mxu0 0
        %3267 = vmatmul.mubr.bf16.gmra.mrb[0].mxu0 %v3117
        %v3268 = vpop.f32.mrb[0].mxu0
        %v3269 = vadd.f32 0.0, %v3268
        %v3270 = vpop.f32.mrb[0].mxu0
        %v3271 = vadd.f32 0.0, %v3270
        %v3272 = vpop.f32.mrb[0].mxu0
        %v3273 = vadd.f32 0.0, %v3272
        %v3274 = vpop.f32.mrb[0].mxu0
        %v3275 = vadd.f32 0.0, %v3274
        %3276 = vmatprep.mubr.bf16.mxu0 0
        %3277 = vmatmul.mubr.bf16.gmra.mrb[0].mxu0 %v3120
        %v3278 = vpop.f32.mrb[0].mxu0
        %v3279 = vadd.f32 0.0, %v3278
        %v3280 = vpop.f32.mrb[0].mxu0
        %v3281 = vadd.f32 0.0, %v3280
        %v3282 = vpop.f32.mrb[0].mxu0
        %v3283 = vadd.f32 0.0, %v3282
        %v3284 = vpop.f32.mrb[0].mxu0
        %v3285 = vadd.f32 0.0, %v3284
        %3286 = vmatprep.mubr.bf16.mxu0 0
        %3287 = vmatmul.mubr.bf16.gmra.mrb[0].mxu0 %v3123
        %v3288 = vpop.f32.mrb[0].mxu0
        %v3289 = vadd.f32 0.0, %v3288
        %v3290 = vpop.f32.mrb[0].mxu0
        %v3291 = vadd.f32 0.0, %v3290
        %v3292 = vpop.f32.mrb[0].mxu0
        %v3293 = vadd.f32 0.0, %v3292
        %v3294 = vpop.f32.mrb[0].mxu0
        %v3295 = vadd.f32 0.0, %v3294
        %3296 = vmatprep.mubr.bf16.mxu0 0
        %3297 = vmatmul.mubr.bf16.gmra.mrb[0].mxu0 %v3126
        %v3298 = vpop.f32.mrb[0].mxu0
        %v3299 = vadd.f32 0.0, %v3298
        %v3300 = vpop.f32.mrb[0].mxu0
        %v3301 = vadd.f32 0.0, %v3300
        %v3302 = vpop.f32.mrb[0].mxu0
        %v3303 = vadd.f32 0.0, %v3302
        %v3304 = vpop.f32.mrb[0].mxu0
        %v3305 = vadd.f32 0.0, %v3304
        %3306 = vmatprep.mubr.bf16.mxu0 0
        %3307 = vmatmul.mubr.bf16.gmra.mrb[0].mxu0 %v3129
        %v3308 = vpop.f32.mrb[0].mxu0
        %v3309 = vadd.f32 0.0, %v3308
        %v3310 = vpop.f32.mrb[0].mxu0
        %v3311 = vadd.f32 0.0, %v3310
        %v3312 = vpop.f32.mrb[0].mxu0
        %v3313 = vadd.f32 0.0, %v3312
        %v3314 = vpop.f32.mrb[0].mxu0
        %v3315 = vadd.f32 0.0, %v3314
        %3316 = vmatprep.mubr.bf16.mxu0 0
        %3317 = vmatmul.mubr.bf16.gmra.mrb[0].mxu0 %v3132
        %v3318 = vpop.f32.mrb[0].mxu0
        %v3319 = vadd.f32 0.0, %v3318
        %v3320 = vpop.f32.mrb[0].mxu0
        %v3321 = vadd.f32 0.0, %v3320
        %v3322 = vpop.f32.mrb[0].mxu0
        %v3323 = vadd.f32 0.0, %v3322
        %v3324 = vpop.f32.mrb[0].mxu0
        %v3325 = vadd.f32 0.0, %v3324
        %3326 = vdwg.mxu0
        %3327 = vst [vmem:[#allocation2] sm:$0xff] %v3169
        %vm3328 = vcmask 523264
        %3329 = vst.msk [vmem:[#allocation2 + $0x8] sm:$0xff] %vm3328, %v3171
        %3330 = vst [vmem:[#allocation2 + $0x10] sm:$0xff] %v3173
        %3331 = vst.msk [vmem:[#allocation2 + $0x18] sm:$0xff] %vm3328, %v3175
        %3332 = vst [vmem:[#allocation2 + $0x20] sm:$0xff] %v3179
        %3333 = vst.msk [vmem:[#allocation2 + $0x28] sm:$0xff] %vm3328, %v3181
        %3334 = vst [vmem:[#allocation2 + $0x30] sm:$0xff] %v3183
        %3335 = vst.msk [vmem:[#allocation2 + $0x38] sm:$0xff] %vm3328, %v3185
        %3336 = vst [vmem:[#allocation2 + $0x40] sm:$0xff] %v3189
        %3337 = vst.msk [vmem:[#allocation2 + $0x48] sm:$0xff] %vm3328, %v3191
        %3338 = vst [vmem:[#allocation2 + $0x50] sm:$0xff] %v3193
        %3339 = vst.msk [vmem:[#allocation2 + $0x58] sm:$0xff] %vm3328, %v3195
        %3340 = vst [vmem:[#allocation2 + $0x60] sm:$0xff] %v3199
        %3341 = vst.msk [vmem:[#allocation2 + $0x68] sm:$0xff] %vm3328, %v3201
        %3342 = vst [vmem:[#allocation2 + $0x70] sm:$0xff] %v3203
        %3343 = vst.msk [vmem:[#allocation2 + $0x78] sm:$0xff] %vm3328, %v3205
        %3344 = vst [vmem:[#allocation2 + $0x80] sm:$0xff] %v3209
        %3345 = vst.msk [vmem:[#allocation2 + $0x88] sm:$0xff] %vm3328, %v3211
        %3346 = vst [vmem:[#allocation2 + $0x90] sm:$0xff] %v3213
        %3347 = vst.msk [vmem:[#allocation2 + $0x98] sm:$0xff] %vm3328, %v3215
        %3348 = vst [vmem:[#allocation2 + $0xa0] sm:$0xff] %v3219
        %3349 = vst.msk [vmem:[#allocation2 + $0xa8] sm:$0xff] %vm3328, %v3221
        %3350 = vst [vmem:[#allocation2 + $0xb0] sm:$0xff] %v3223
        %3351 = vst.msk [vmem:[#allocation2 + $0xb8] sm:$0xff] %vm3328, %v3225
        %3352 = vst [vmem:[#allocation2 + $0xc0] sm:$0xff] %v3229
        %3353 = vst.msk [vmem:[#allocation2 + $0xc8] sm:$0xff] %vm3328, %v3231
        %3354 = vst [vmem:[#allocation2 + $0xd0] sm:$0xff] %v3233
        %3355 = vst.msk [vmem:[#allocation2 + $0xd8] sm:$0xff] %vm3328, %v3235
        %3356 = vst [vmem:[#allocation2 + $0xe0] sm:$0xff] %v3239
        %3357 = vst.msk [vmem:[#allocation2 + $0xe8] sm:$0xff] %vm3328, %v3241
        %3358 = vst [vmem:[#allocation2 + $0xf0] sm:$0xff] %v3243
        %3359 = vst.msk [vmem:[#allocation2 + $0xf8] sm:$0xff] %vm3328, %v3245
        %3360 = vst [vmem:[#allocation2 + $0x100] sm:$0xff] %v3249
        %3361 = vst.msk [vmem:[#allocation2 + $0x108] sm:$0xff] %vm3328, %v3251
        %3362 = vst [vmem:[#allocation2 + $0x110] sm:$0xff] %v3253
        %3363 = vst.msk [vmem:[#allocation2 + $0x118] sm:$0xff] %vm3328, %v3255
        %3364 = vst [vmem:[#allocation2 + $0x120] sm:$0xff] %v3259
        %3365 = vst.msk [vmem:[#allocation2 + $0x128] sm:$0xff] %vm3328, %v3261
        %3366 = vst [vmem:[#allocation2 + $0x130] sm:$0xff] %v3263
        %3367 = vst.msk [vmem:[#allocation2 + $0x138] sm:$0xff] %vm3328, %v3265
        %3368 = vst [vmem:[#allocation2 + $0x140] sm:$0xff] %v3269
        %3369 = vst.msk [vmem:[#allocation2 + $0x148] sm:$0xff] %vm3328, %v3271
        %3370 = vst [vmem:[#allocation2 + $0x150] sm:$0xff] %v3273
        %3371 = vst.msk [vmem:[#allocation2 + $0x158] sm:$0xff] %vm3328, %v3275
        %3372 = vst [vmem:[#allocation2 + $0x160] sm:$0xff] %v3279
        %3373 = vst.msk [vmem:[#allocation2 + $0x168] sm:$0xff] %vm3328, %v3281
        %3374 = vst [vmem:[#allocation2 + $0x170] sm:$0xff] %v3283
        %3375 = vst.msk [vmem:[#allocation2 + $0x178] sm:$0xff] %vm3328, %v3285
        %3376 = vst [vmem:[#allocation2 + $0x180] sm:$0xff] %v3289
        %3377 = vst.msk [vmem:[#allocation2 + $0x188] sm:$0xff] %vm3328, %v3291
        %3378 = vst [vmem:[#allocation2 + $0x190] sm:$0xff] %v3293
        %3379 = vst.msk [vmem:[#allocation2 + $0x198] sm:$0xff] %vm3328, %v3295
        %3380 = vst [vmem:[#allocation2 + $0x1a0] sm:$0xff] %v3299
        %3381 = vst.msk [vmem:[#allocation2 + $0x1a8] sm:$0xff] %vm3328, %v3301
        %3382 = vst [vmem:[#allocation2 + $0x1b0] sm:$0xff] %v3303
        %3383 = vst.msk [vmem:[#allocation2 + $0x1b8] sm:$0xff] %vm3328, %v3305
        %3384 = vst [vmem:[#allocation2 + $0x1c0] sm:$0xff] %v3309
        %3385 = vst.msk [vmem:[#allocation2 + $0x1c8] sm:$0xff] %vm3328, %v3311
        %3386 = vst [vmem:[#allocation2 + $0x1d0] sm:$0xff] %v3313
        %3387 = vst.msk [vmem:[#allocation2 + $0x1d8] sm:$0xff] %vm3328, %v3315
        %3388 = vst [vmem:[#allocation2 + $0x1e0] sm:$0xff] %v3319
        %3389 = vst.msk [vmem:[#allocation2 + $0x1e8] sm:$0xff] %vm3328, %v3321
        %3390 = vst [vmem:[#allocation2 + $0x1f0] sm:$0xff] %v3323
        %3391 = vst.msk [vmem:[#allocation2 + $0x1f8] sm:$0xff] %vm3328, %v3325
        %v3392 = vld [vmem:[%s419] sm:$0xff]
        %v3393 = vld [vmem:[%s419 + $0x8] sm:$0xff]
        %v3394 = vld [vmem:[%s419 + $0x10] sm:$0xff]
        %v3395 = vld [vmem:[%s419 + $0x18] sm:$0xff]
        %v3396 = vld [vmem:[%s419 + $0x20] sm:$0xff]
        %v3397 = vld [vmem:[%s419 + $0x28] sm:$0xff]
        %v3398 = vld [vmem:[%s419 + $0x30] sm:$0xff]
        %v3399 = vld [vmem:[%s419 + $0x38] sm:$0xff]
        %v3400 = vld [vmem:[%s419 + $0x40] sm:$0xff]
        %v3401 = vld [vmem:[%s419 + $0x48] sm:$0xff]
        %v3402 = vld [vmem:[%s419 + $0x50] sm:$0xff]
        %v3403 = vld [vmem:[%s419 + $0x58] sm:$0xff]
        %v3404 = vld [vmem:[%s419 + $0x60] sm:$0xff]
        %v3405 = vld [vmem:[%s419 + $0x68] sm:$0xff]
        %v3406 = vld [vmem:[%s419 + $0x70] sm:$0xff]
        %v3407 = vld [vmem:[%s419 + $0x78] sm:$0xff]
        %v3408 = vld [vmem:[%s419 + $0x80] sm:$0xff]
        %v3409 = vld [vmem:[%s419 + $0x88] sm:$0xff]
        %v3410 = vld [vmem:[%s419 + $0x90] sm:$0xff]
        %v3411 = vld [vmem:[%s419 + $0x98] sm:$0xff]
        %v3412 = vld [vmem:[%s419 + $0xa0] sm:$0xff]
        %v3413 = vld [vmem:[%s419 + $0xa8] sm:$0xff]
        %v3414 = vld [vmem:[%s419 + $0xb0] sm:$0xff]
        %v3415 = vld [vmem:[%s419 + $0xb8] sm:$0xff]
        %v3416 = vld [vmem:[%s419 + $0xc0] sm:$0xff]
        %v3417 = vld [vmem:[%s419 + $0xc8] sm:$0xff]
        %v3418 = vld [vmem:[%s419 + $0xd0] sm:$0xff]
        %v3419 = vld [vmem:[%s419 + $0xd8] sm:$0xff]
        %v3420 = vld [vmem:[%s419 + $0xe0] sm:$0xff]
        %v3421 = vld [vmem:[%s419 + $0xe8] sm:$0xff]
        %v3422 = vld [vmem:[%s419 + $0xf0] sm:$0xff]
        %v3423 = vld [vmem:[%s419 + $0xf8] sm:$0xff]
        %v3424 = vld [vmem:[%s424] sm:$0xff]
        %v3425 = vld [vmem:[%s424 + $0x8] sm:$0xff]
        %v3426 = vld [vmem:[%s10] sm:$0xff]
        %v3427 = vld [vmem:[%s9] sm:$0xf]
        %v3428 = vld [vmem:[%s6] sm:$0xff]
        %v3429 = vld [vmem:[%s6 + $0x8] sm:$0xff]
        %v3430 = vld [vmem:[%s6 + $0x10] sm:$0xff]
        %v3431 = vld [vmem:[%s6 + $0x18] sm:$0xff]
        %v3432 = vld [vmem:[%s6 + $0x20] sm:$0xff]
        %v3433 = vld [vmem:[%s6 + $0x28] sm:$0xff]
        %v3434 = vld [vmem:[%s6 + $0x30] sm:$0xff]
        %v3435 = vld [vmem:[%s6 + $0x38] sm:$0xff]
        %v3436 = vsel %vm712, %v3424, 0.0
        %3437 = vadd.xlane.f32.xlu0 %v3436
        %v3438 = vpop.xlane.xlu0 %3437
        %v3439 = vsel %vm712, %v3425, 0.0
        %3440 = vadd.xlane.f32.xlu0 %v3439
        %v3441 = vpop.xlane.xlu0 %3440
        %v3442 = vmul.f32 %v3438, %v1914
        %v3443 = vmul.f32 %v3441, %v1914
        %v3444 = vsub.f32 %v3424, %v3442
        %v3445 = vsub.f32 %v3425, %v3443
        %v3446 = vmul.f32 %v3444, %v3444
        %v3447 = vmul.f32 %v3445, %v3445
        %v3448 = vsel %vm712, %v3446, 0.0
        %3449 = vadd.xlane.f32.xlu0 %v3448
        %v3450 = vpop.xlane.xlu0 %3449
        %v3451 = vsel %vm712, %v3447, 0.0
        %3452 = vadd.xlane.f32.xlu0 %v3451
        %v3453 = vpop.xlane.xlu0 %3452
        %v3454 = vmul.f32 %v3450, %v1914
        %v3455 = vmul.f32 %v3453, %v1914
        %v3456 = vadd.f32 %v3454, 1e-05
        %v3457 = vadd.f32 %v3455, 1e-05
        %v3458 = vrsqrt.pop %v3456
        %v3459 = vrsqrt.pop %v3457
        %v3460 = vmul.f32 %v3444, %v3458
        %v3461 = vmul.f32 %v3445, %v3459
        %v3462 = vlaneseq
        %v3463 = vshrl.u32 %v3462, 7
        %v3464 = vsub.s32 3, %v3463
        %v3465 = vrot.slane %v3426, %v3464
        %v3466 = vmul.f32 %v3460, %v3465
        %v3467 = vmul.f32 %v3461, %v3465
        %v3468 = vlaneseq
        %v3469 = vshrl.u32 %v3468, 7
        %v3470 = vsub.s32 4, %v3469
        %v3471 = vrot.slane %v3426, %v3470
        %v3472 = vadd.f32 %v3466, %v3471
        %v3473 = vadd.f32 %v3467, %v3471
        %v3474 = vpack.c.bf16 %v3473, %v3472
        %v3475 = vpack.c.bf16 %v3430, %v3428
        %v3476 = vpack.c.bf16 %v3431, %v3429
        %v3477 = vpack.c.bf16 %v3434, %v3432
        %v3478 = vpack.c.bf16 %v3435, %v3433
        %v3480 = vlaneseq
        %v3481 = vshrl.u32 %v3480, 7
        %v3482 = vsub.s32 0, %v3481
        %v3483 = vrot.slane %v3427, %v3482
        %v3484 = vlaneseq
        %v3485 = vshrl.u32 %v3484, 7
        %v3486 = vsub.s32 2, %v3485
        %v3487 = vrot.slane %v3427, %v3486
        %v3490 = vlaneseq
        %v3491 = vshrl.u32 %v3490, 7
        %v3492 = vsub.s32 0, %v3491
        %v3493 = vrot.slane %v3483, %v3492
        %v3494 = vlaneseq
        %v3495 = vshrl.u32 %v3494, 7
        %v3496 = vsub.s32 0, %v3495
        %v3497 = vrot.slane %v3487, %v3496
        %v3499 = vsel %vm712, %v3474, 0
        %3501 = vmatprep.subr.bf16.mxu0 %v3476
        %3502 = vmatpush1.bf16.msra.mxu0 %v3475
        %3503 = vmatprep.subr.bf16.mxu0 %v3478
        %3504 = vmatpush1.bf16.msra.mxu0 %v3477
        %3505 = vmatprep.subr.bf16.mxu0 0
        %3506 = vmatpush1.bf16.msra.mxu0 0
        %3507 = vmatprep.subr.bf16.mxu0 0
        %3508 = vmatpush1.bf16.msra.mxu0 0
        %3509 = vmatprep.subr.bf16.mxu0 0
        %3510 = vmatpush1.bf16.msra.mxu0 0
        %3511 = vmatprep.subr.bf16.mxu0 0
        %3512 = vmatpush1.bf16.msra.mxu0 0
        %3513 = vmatprep.subr.bf16.mxu0 0
        %3514 = vmatpush1.bf16.msra.mxu0 0
        %3515 = vmatprep.subr.bf16.mxu0 0
        %3516 = vmatpush1.bf16.msra.mxu0 0
        %3517 = vmatprep.subr.bf16.mxu0 0
        %3518 = vmatpush1.bf16.msra.mxu0 0
        %3519 = vmatprep.subr.bf16.mxu0 0
        %3520 = vmatpush1.bf16.msra.mxu0 0
        %3521 = vmatprep.subr.bf16.mxu0 0
        %3522 = vmatpush1.bf16.msra.mxu0 0
        %3523 = vmatprep.subr.bf16.mxu0 0
        %3524 = vmatpush1.bf16.msra.mxu0 0
        %3525 = vmatprep.subr.bf16.mxu0 0
        %3526 = vmatpush1.bf16.msra.mxu0 0
        %3527 = vmatprep.subr.bf16.mxu0 0
        %3528 = vmatpush1.bf16.msra.mxu0 0
        %3529 = vmatprep.subr.bf16.mxu0 0
        %3530 = vmatpush1.bf16.msra.mxu0 0
        %3531 = vmatprep.subr.bf16.mxu0 0
        %3532 = vmatpush1.bf16.msra.mxu0 0
        %3533 = vmatprep.mubr.bf16.mxu0 0
        %3534 = vmatmul.mubr.bf16.gmra.mrb[0].mxu0 %v3499
        %v3535 = vpop.f32.mrb[0].mxu0
        %v3536 = vadd.f32 %v3493, %v3535
        %v3537 = vpop.f32.mrb[0].mxu0
        %v3538 = vadd.f32 %v3497, %v3537
        %v3539 = vpop.f32.mrb[0].mxu0
        %v3540 = vadd.f32 %v3493, %v3539
        %v3541 = vpop.f32.mrb[0].mxu0
        %v3542 = vadd.f32 %v3497, %v3541
        %3543 = vdwg.mxu0
        %v3544 = vld [vmem:[#allocation2] sm:$0xff]
        %v3545 = vld [vmem:[#allocation2 + $0x10] sm:$0xff]
        %v3546 = vld [vmem:[#allocation2 + $0x20] sm:$0xff]
        %v3547 = vld [vmem:[#allocation2 + $0x30] sm:$0xff]
        %v3548 = vld [vmem:[#allocation2 + $0x40] sm:$0xff]
        %v3549 = vld [vmem:[#allocation2 + $0x50] sm:$0xff]
        %v3550 = vld [vmem:[#allocation2 + $0x60] sm:$0xff]
        %v3551 = vld [vmem:[#allocation2 + $0x70] sm:$0xff]
        %v3552 = vld [vmem:[#allocation2 + $0x80] sm:$0xff]
        %v3553 = vld [vmem:[#allocation2 + $0x90] sm:$0xff]
        %v3554 = vld [vmem:[#allocation2 + $0xa0] sm:$0xff]
        %v3555 = vld [vmem:[#allocation2 + $0xb0] sm:$0xff]
        %v3556 = vld [vmem:[#allocation2 + $0xc0] sm:$0xff]
        %v3557 = vld [vmem:[#allocation2 + $0xd0] sm:$0xff]
        %v3558 = vld [vmem:[#allocation2 + $0xe0] sm:$0xff]
        %v3559 = vld [vmem:[#allocation2 + $0xf0] sm:$0xff]
        %v3560 = vld [vmem:[#allocation2 + $0x100] sm:$0xff]
        %v3561 = vld [vmem:[#allocation2 + $0x110] sm:$0xff]
        %v3562 = vld [vmem:[#allocation2 + $0x120] sm:$0xff]
        %v3563 = vld [vmem:[#allocation2 + $0x130] sm:$0xff]
        %v3564 = vld [vmem:[#allocation2 + $0x140] sm:$0xff]
        %v3565 = vld [vmem:[#allocation2 + $0x150] sm:$0xff]
        %v3566 = vld [vmem:[#allocation2 + $0x160] sm:$0xff]
        %v3567 = vld [vmem:[#allocation2 + $0x170] sm:$0xff]
        %v3568 = vld [vmem:[#allocation2 + $0x180] sm:$0xff]
        %v3569 = vld [vmem:[#allocation2 + $0x190] sm:$0xff]
        %v3570 = vld [vmem:[#allocation2 + $0x1a0] sm:$0xff]
        %v3571 = vld [vmem:[#allocation2 + $0x1b0] sm:$0xff]
        %v3572 = vld [vmem:[#allocation2 + $0x1c0] sm:$0xff]
        %v3573 = vld [vmem:[#allocation2 + $0x1d0] sm:$0xff]
        %v3574 = vld [vmem:[#allocation2 + $0x1e0] sm:$0xff]
        %v3575 = vld [vmem:[#allocation2 + $0x1f0] sm:$0xff]
        %3578 = vrot.lane.b32.xlu0 %v3536, 96
        %v3579 = vpop.permute.xlu0 %3578
        %3580 = vrot.lane.b32.xlu0 %v3540, 96
        %v3581 = vpop.permute.xlu0 %3580
        %v3584 = vadd.f32 %v3544, %v3579
        %v3585 = vadd.f32 %v3545, %v3581
        %v3586 = vadd.f32 %v3546, %v3579
        %v3587 = vadd.f32 %v3547, %v3581
        %v3588 = vadd.f32 %v3548, %v3579
        %v3589 = vadd.f32 %v3549, %v3581
        %v3590 = vadd.f32 %v3550, %v3579
        %v3591 = vadd.f32 %v3551, %v3581
        %v3592 = vadd.f32 %v3552, %v3579
        %v3593 = vadd.f32 %v3553, %v3581
        %v3594 = vadd.f32 %v3554, %v3579
        %v3595 = vadd.f32 %v3555, %v3581
        %v3596 = vadd.f32 %v3556, %v3579
        %v3597 = vadd.f32 %v3557, %v3581
        %v3598 = vadd.f32 %v3558, %v3579
        %v3599 = vadd.f32 %v3559, %v3581
        %v3600 = vadd.f32 %v3560, %v3579
        %v3601 = vadd.f32 %v3561, %v3581
        %v3602 = vadd.f32 %v3562, %v3579
        %v3603 = vadd.f32 %v3563, %v3581
        %v3604 = vadd.f32 %v3564, %v3579
        %v3605 = vadd.f32 %v3565, %v3581
        %v3606 = vadd.f32 %v3566, %v3579
        %v3607 = vadd.f32 %v3567, %v3581
        %v3608 = vadd.f32 %v3568, %v3579
        %v3609 = vadd.f32 %v3569, %v3581
        %v3610 = vadd.f32 %v3570, %v3579
        %v3611 = vadd.f32 %v3571, %v3581
        %v3612 = vadd.f32 %v3572, %v3579
        %v3613 = vadd.f32 %v3573, %v3581
        %v3614 = vadd.f32 %v3574, %v3579
        %v3615 = vadd.f32 %v3575, %v3581
        %v3616 = vcombine.high %v3536, %v3536
        %v3618 = vunpack.c.l.s4 1966171168
        %v3619 = vunpack.c.0.s8 %v3618
        %v3620 = vlaneseq
        %v3621 = vshrl.u32 %v3620, 7
        %v3622 = vsub.s32 %v3619, %v3621
        %v3623 = vrot.slane %v3536, %v3622
        %v3625 = vunpack.c.l.s4 1966171168
        %v3626 = vunpack.c.0.s8 %v3625
        %v3627 = vlaneseq
        %v3628 = vshrl.u32 %v3627, 7
        %v3629 = vsub.s32 %v3626, %v3628
        %v3630 = vrot.slane %v3616, %v3629
        %v3631 = vcombine.high %v3623, %v3623
        %v3632 = vcombine.high %v3630, %v3630
        %v3634 = vunpack.c.l.s4 1966171168
        %v3635 = vunpack.c.0.s8 %v3634
        %v3636 = vlaneseq
        %v3637 = vshrl.u32 %v3636, 7
        %v3638 = vsub.s32 %v3635, %v3637
        %v3639 = vrot.slane %v3623, %v3638
        %v3641 = vunpack.c.l.s4 1966171168
        %v3642 = vunpack.c.0.s8 %v3641
        %v3643 = vlaneseq
        %v3644 = vshrl.u32 %v3643, 7
        %v3645 = vsub.s32 %v3642, %v3644
        %v3646 = vrot.slane %v3630, %v3645
        %v3648 = vunpack.c.l.s4 1966171168
        %v3649 = vunpack.c.0.s8 %v3648
        %v3650 = vlaneseq
        %v3651 = vshrl.u32 %v3650, 7
        %v3652 = vsub.s32 %v3649, %v3651
        %v3653 = vrot.slane %v3631, %v3652
        %v3655 = vunpack.c.l.s4 1966171168
        %v3656 = vunpack.c.0.s8 %v3655
        %v3657 = vlaneseq
        %v3658 = vshrl.u32 %v3657, 7
        %v3659 = vsub.s32 %v3656, %v3658
        %v3660 = vrot.slane %v3632, %v3659
        %v3661 = vcombine.high %v3639, %v3639
        %v3662 = vcombine.high %v3646, %v3646
        %v3663 = vcombine.high %v3653, %v3653
        %v3664 = vcombine.high %v3660, %v3660
        %v3665 = vcombine.high %v3540, %v3540
        %v3667 = vunpack.c.l.s4 1966171168
        %v3668 = vunpack.c.0.s8 %v3667
        %v3669 = vlaneseq
        %v3670 = vshrl.u32 %v3669, 7
        %v3671 = vsub.s32 %v3668, %v3670
        %v3672 = vrot.slane %v3540, %v3671
        %v3674 = vunpack.c.l.s4 1966171168
        %v3675 = vunpack.c.0.s8 %v3674
        %v3676 = vlaneseq
        %v3677 = vshrl.u32 %v3676, 7
        %v3678 = vsub.s32 %v3675, %v3677
        %v3679 = vrot.slane %v3665, %v3678
        %v3680 = vcombine.high %v3672, %v3672
        %v3681 = vcombine.high %v3679, %v3679
        %v3683 = vunpack.c.l.s4 1966171168
        %v3684 = vunpack.c.0.s8 %v3683
        %v3685 = vlaneseq
        %v3686 = vshrl.u32 %v3685, 7
        %v3687 = vsub.s32 %v3684, %v3686
        %v3688 = vrot.slane %v3672, %v3687
        %v3690 = vunpack.c.l.s4 1966171168
        %v3691 = vunpack.c.0.s8 %v3690
        %v3692 = vlaneseq
        %v3693 = vshrl.u32 %v3692, 7
        %v3694 = vsub.s32 %v3691, %v3693
        %v3695 = vrot.slane %v3679, %v3694
        %v3697 = vunpack.c.l.s4 1966171168
        %v3698 = vunpack.c.0.s8 %v3697
        %v3699 = vlaneseq
        %v3700 = vshrl.u32 %v3699, 7
        %v3701 = vsub.s32 %v3698, %v3700
        %v3702 = vrot.slane %v3680, %v3701
        %v3704 = vunpack.c.l.s4 1966171168
        %v3705 = vunpack.c.0.s8 %v3704
        %v3706 = vlaneseq
        %v3707 = vshrl.u32 %v3706, 7
        %v3708 = vsub.s32 %v3705, %v3707
        %v3709 = vrot.slane %v3681, %v3708
        %v3710 = vcombine.high %v3688, %v3688
        %v3711 = vcombine.high %v3695, %v3695
        %v3712 = vcombine.high %v3702, %v3702
        %v3713 = vcombine.high %v3709, %v3709
        %v3714 = vlaneseq
        %v3715 = vshrl.u32 %v3714, 7
        %v3716 = vsub.s32 0, %v3715
        %v3717 = vrot.slane %v3639, %v3716
        %v3718 = vlaneseq
        %v3719 = vshrl.u32 %v3718, 7
        %v3720 = vsub.s32 0, %v3719
        %v3721 = vrot.slane %v3653, %v3720
        %v3722 = vlaneseq
        %v3723 = vshrl.u32 %v3722, 7
        %v3724 = vsub.s32 0, %v3723
        %v3725 = vrot.slane %v3661, %v3724
        %v3726 = vlaneseq
        %v3727 = vshrl.u32 %v3726, 7
        %v3728 = vsub.s32 0, %v3727
        %v3729 = vrot.slane %v3663, %v3728
        %v3730 = vlaneseq
        %v3731 = vshrl.u32 %v3730, 7
        %v3732 = vsub.s32 0, %v3731
        %v3733 = vrot.slane %v3646, %v3732
        %v3734 = vlaneseq
        %v3735 = vshrl.u32 %v3734, 7
        %v3736 = vsub.s32 0, %v3735
        %v3737 = vrot.slane %v3660, %v3736
        %v3738 = vlaneseq
        %v3739 = vshrl.u32 %v3738, 7
        %v3740 = vsub.s32 0, %v3739
        %v3741 = vrot.slane %v3662, %v3740
        %v3742 = vlaneseq
        %v3743 = vshrl.u32 %v3742, 7
        %v3744 = vsub.s32 0, %v3743
        %v3745 = vrot.slane %v3664, %v3744
        %v3746 = vlaneseq
        %v3747 = vshrl.u32 %v3746, 7
        %v3748 = vsub.s32 0, %v3747
        %v3749 = vrot.slane %v3688, %v3748
        %v3750 = vlaneseq
        %v3751 = vshrl.u32 %v3750, 7
        %v3752 = vsub.s32 0, %v3751
        %v3753 = vrot.slane %v3702, %v3752
        %v3754 = vlaneseq
        %v3755 = vshrl.u32 %v3754, 7
        %v3756 = vsub.s32 0, %v3755
        %v3757 = vrot.slane %v3710, %v3756
        %v3758 = vlaneseq
        %v3759 = vshrl.u32 %v3758, 7
        %v3760 = vsub.s32 0, %v3759
        %v3761 = vrot.slane %v3712, %v3760
        %v3762 = vlaneseq
        %v3763 = vshrl.u32 %v3762, 7
        %v3764 = vsub.s32 0, %v3763
        %v3765 = vrot.slane %v3695, %v3764
        %v3766 = vlaneseq
        %v3767 = vshrl.u32 %v3766, 7
        %v3768 = vsub.s32 0, %v3767
        %v3769 = vrot.slane %v3709, %v3768
        %v3770 = vlaneseq
        %v3771 = vshrl.u32 %v3770, 7
        %v3772 = vsub.s32 0, %v3771
        %v3773 = vrot.slane %v3711, %v3772
        %v3774 = vlaneseq
        %v3775 = vshrl.u32 %v3774, 7
        %v3776 = vsub.s32 0, %v3775
        %v3777 = vrot.slane %v3713, %v3776
        %v3794 = vmul.f32 %v3717, %v3584
        %v3795 = vmul.f32 %v3717, %v3585
        %v3796 = vmul.f32 %v3721, %v3586
        %v3797 = vmul.f32 %v3721, %v3587
        %v3798 = vmul.f32 %v3725, %v3588
        %v3799 = vmul.f32 %v3725, %v3589
        %v3800 = vmul.f32 %v3729, %v3590
        %v3801 = vmul.f32 %v3729, %v3591
        %v3802 = vmul.f32 %v3733, %v3592
        %v3803 = vmul.f32 %v3733, %v3593
        %v3804 = vmul.f32 %v3737, %v3594
        %v3805 = vmul.f32 %v3737, %v3595
        %v3806 = vmul.f32 %v3741, %v3596
        %v3807 = vmul.f32 %v3741, %v3597
        %v3808 = vmul.f32 %v3745, %v3598
        %v3809 = vmul.f32 %v3745, %v3599
        %v3810 = vmul.f32 %v3749, %v3600
        %v3811 = vmul.f32 %v3749, %v3601
        %v3812 = vmul.f32 %v3753, %v3602
        %v3813 = vmul.f32 %v3753, %v3603
        %v3814 = vmul.f32 %v3757, %v3604
        %v3815 = vmul.f32 %v3757, %v3605
        %v3816 = vmul.f32 %v3761, %v3606
        %v3817 = vmul.f32 %v3761, %v3607
        %v3818 = vmul.f32 %v3765, %v3608
        %v3819 = vmul.f32 %v3765, %v3609
        %v3820 = vmul.f32 %v3769, %v3610
        %v3821 = vmul.f32 %v3769, %v3611
        %v3822 = vmul.f32 %v3773, %v3612
        %v3823 = vmul.f32 %v3773, %v3613
        %v3824 = vmul.f32 %v3777, %v3614
        %v3825 = vmul.f32 %v3777, %v3615
        %v3826 = vpack.c.bf16 %v3795, %v3794
        %v3827 = vpack.c.bf16 %v3797, %v3796
        %v3828 = vpack.c.bf16 %v3799, %v3798
        %v3829 = vpack.c.bf16 %v3801, %v3800
        %v3830 = vpack.c.bf16 %v3803, %v3802
        %v3831 = vpack.c.bf16 %v3805, %v3804
        %v3832 = vpack.c.bf16 %v3807, %v3806
        %v3833 = vpack.c.bf16 %v3809, %v3808
        %v3834 = vpack.c.bf16 %v3811, %v3810
        %v3835 = vpack.c.bf16 %v3813, %v3812
        %v3836 = vpack.c.bf16 %v3815, %v3814
        %v3837 = vpack.c.bf16 %v3817, %v3816
        %v3838 = vpack.c.bf16 %v3819, %v3818
        %v3839 = vpack.c.bf16 %v3821, %v3820
        %v3840 = vpack.c.bf16 %v3823, %v3822
        %v3841 = vpack.c.bf16 %v3825, %v3824
        %v3842 = vpack.c.bf16 %v431, %v430
        %v3843 = vpack.c.bf16 %v433, %v432
        %v3845 = vsel %vm712, %v3826, 0
        %v3848 = vsel %vm712, %v3827, 0
        %v3851 = vsel %vm712, %v3828, 0
        %v3854 = vsel %vm712, %v3829, 0
        %v3857 = vsel %vm712, %v3830, 0
        %v3860 = vsel %vm712, %v3831, 0
        %v3863 = vsel %vm712, %v3832, 0
        %v3866 = vsel %vm712, %v3833, 0
        %v3869 = vsel %vm712, %v3834, 0
        %v3872 = vsel %vm712, %v3835, 0
        %v3875 = vsel %vm712, %v3836, 0
        %v3878 = vsel %vm712, %v3837, 0
        %v3881 = vsel %vm712, %v3838, 0
        %v3884 = vsel %vm712, %v3839, 0
        %v3887 = vsel %vm712, %v3840, 0
        %v3890 = vsel %vm712, %v3841, 0
        %3892 = vmatprep.subr.bf16.mxu0 0
        %3893 = vmatpush1.bf16.msra.mxu0 %v3842
        %3894 = vmatprep.subr.bf16.mxu0 0
        %3895 = vmatpush1.bf16.msra.mxu0 %v3843
        %3896 = vmatprep.subr.bf16.mxu0 0
        %3897 = vmatpush1.bf16.msra.mxu0 0
        %3898 = vmatprep.subr.bf16.mxu0 0
        %3899 = vmatpush1.bf16.msra.mxu0 0
        %3900 = vmatprep.subr.bf16.mxu0 0
        %3901 = vmatpush1.bf16.msra.mxu0 0
        %3902 = vmatprep.subr.bf16.mxu0 0
        %3903 = vmatpush1.bf16.msra.mxu0 0
        %3904 = vmatprep.subr.bf16.mxu0 0
        %3905 = vmatpush1.bf16.msra.mxu0 0
        %3906 = vmatprep.subr.bf16.mxu0 0
        %3907 = vmatpush1.bf16.msra.mxu0 0
        %3908 = vmatprep.subr.bf16.mxu0 0
        %3909 = vmatpush1.bf16.msra.mxu0 0
        %3910 = vmatprep.subr.bf16.mxu0 0
        %3911 = vmatpush1.bf16.msra.mxu0 0
        %3912 = vmatprep.subr.bf16.mxu0 0
        %3913 = vmatpush1.bf16.msra.mxu0 0
        %3914 = vmatprep.subr.bf16.mxu0 0
        %3915 = vmatpush1.bf16.msra.mxu0 0
        %3916 = vmatprep.subr.bf16.mxu0 0
        %3917 = vmatpush1.bf16.msra.mxu0 0
        %3918 = vmatprep.subr.bf16.mxu0 0
        %3919 = vmatpush1.bf16.msra.mxu0 0
        %3920 = vmatprep.subr.bf16.mxu0 0
        %3921 = vmatpush1.bf16.msra.mxu0 0
        %3922 = vmatprep.subr.bf16.mxu0 0
        %3923 = vmatpush1.bf16.msra.mxu0 0
        %3924 = vmatprep.mubr.bf16.mxu0 0
        %3925 = vmatmul.mubr.bf16.gmra.mrb[0].mxu0 %v3845
        %v3926 = vpop.f32.mrb[0].mxu0
        %v3927 = vadd.f32 0.0, %v3926
        %v3928 = vpop.f32.mrb[0].mxu0
        %v3929 = vpop.f32.mrb[0].mxu0
        %v3930 = vadd.f32 0.0, %v3929
        %v3931 = vpop.f32.mrb[0].mxu0
        %3932 = vmatprep.mubr.bf16.mxu0 0
        %3933 = vmatmul.mubr.bf16.gmra.mrb[0].mxu0 %v3848
        %v3934 = vpop.f32.mrb[0].mxu0
        %v3935 = vadd.f32 0.0, %v3934
        %v3936 = vpop.f32.mrb[0].mxu0
        %v3937 = vpop.f32.mrb[0].mxu0
        %v3938 = vadd.f32 0.0, %v3937
        %v3939 = vpop.f32.mrb[0].mxu0
        %3940 = vmatprep.mubr.bf16.mxu0 0
        %3941 = vmatmul.mubr.bf16.gmra.mrb[0].mxu0 %v3851
        %v3942 = vpop.f32.mrb[0].mxu0
        %v3943 = vadd.f32 0.0, %v3942
        %v3944 = vpop.f32.mrb[0].mxu0
        %v3945 = vpop.f32.mrb[0].mxu0
        %v3946 = vadd.f32 0.0, %v3945
        %v3947 = vpop.f32.mrb[0].mxu0
        %3948 = vmatprep.mubr.bf16.mxu0 0
        %3949 = vmatmul.mubr.bf16.gmra.mrb[0].mxu0 %v3854
        %v3950 = vpop.f32.mrb[0].mxu0
        %v3951 = vadd.f32 0.0, %v3950
        %v3952 = vpop.f32.mrb[0].mxu0
        %v3953 = vpop.f32.mrb[0].mxu0
        %v3954 = vadd.f32 0.0, %v3953
        %v3955 = vpop.f32.mrb[0].mxu0
        %3956 = vmatprep.mubr.bf16.mxu0 0
        %3957 = vmatmul.mubr.bf16.gmra.mrb[0].mxu0 %v3857
        %v3958 = vpop.f32.mrb[0].mxu0
        %v3959 = vadd.f32 0.0, %v3958
        %v3960 = vpop.f32.mrb[0].mxu0
        %v3961 = vpop.f32.mrb[0].mxu0
        %v3962 = vadd.f32 0.0, %v3961
        %v3963 = vpop.f32.mrb[0].mxu0
        %3964 = vmatprep.mubr.bf16.mxu0 0
        %3965 = vmatmul.mubr.bf16.gmra.mrb[0].mxu0 %v3860
        %v3966 = vpop.f32.mrb[0].mxu0
        %v3967 = vadd.f32 0.0, %v3966
        %v3968 = vpop.f32.mrb[0].mxu0
        %v3969 = vpop.f32.mrb[0].mxu0
        %v3970 = vadd.f32 0.0, %v3969
        %v3971 = vpop.f32.mrb[0].mxu0
        %3972 = vmatprep.mubr.bf16.mxu0 0
        %3973 = vmatmul.mubr.bf16.gmra.mrb[0].mxu0 %v3863
        %v3974 = vpop.f32.mrb[0].mxu0
        %v3975 = vadd.f32 0.0, %v3974
        %v3976 = vpop.f32.mrb[0].mxu0
        %v3977 = vpop.f32.mrb[0].mxu0
        %v3978 = vadd.f32 0.0, %v3977
        %v3979 = vpop.f32.mrb[0].mxu0
        %3980 = vmatprep.mubr.bf16.mxu0 0
        %3981 = vmatmul.mubr.bf16.gmra.mrb[0].mxu0 %v3866
        %v3982 = vpop.f32.mrb[0].mxu0
        %v3983 = vadd.f32 0.0, %v3982
        %v3984 = vpop.f32.mrb[0].mxu0
        %v3985 = vpop.f32.mrb[0].mxu0
        %v3986 = vadd.f32 0.0, %v3985
        %v3987 = vpop.f32.mrb[0].mxu0
        %3988 = vmatprep.mubr.bf16.mxu0 0
        %3989 = vmatmul.mubr.bf16.gmra.mrb[0].mxu0 %v3869
        %v3990 = vpop.f32.mrb[0].mxu0
        %v3991 = vadd.f32 0.0, %v3990
        %v3992 = vpop.f32.mrb[0].mxu0
        %v3993 = vpop.f32.mrb[0].mxu0
        %v3994 = vadd.f32 0.0, %v3993
        %v3995 = vpop.f32.mrb[0].mxu0
        %3996 = vmatprep.mubr.bf16.mxu0 0
        %3997 = vmatmul.mubr.bf16.gmra.mrb[0].mxu0 %v3872
        %v3998 = vpop.f32.mrb[0].mxu0
        %v3999 = vadd.f32 0.0, %v3998
        %v4000 = vpop.f32.mrb[0].mxu0
        %v4001 = vpop.f32.mrb[0].mxu0
        %v4002 = vadd.f32 0.0, %v4001
        %v4003 = vpop.f32.mrb[0].mxu0
        %4004 = vmatprep.mubr.bf16.mxu0 0
        %4005 = vmatmul.mubr.bf16.gmra.mrb[0].mxu0 %v3875
        %v4006 = vpop.f32.mrb[0].mxu0
        %v4007 = vadd.f32 0.0, %v4006
        %v4008 = vpop.f32.mrb[0].mxu0
        %v4009 = vpop.f32.mrb[0].mxu0
        %v4010 = vadd.f32 0.0, %v4009
        %v4011 = vpop.f32.mrb[0].mxu0
        %4012 = vmatprep.mubr.bf16.mxu0 0
        %4013 = vmatmul.mubr.bf16.gmra.mrb[0].mxu0 %v3878
        %v4014 = vpop.f32.mrb[0].mxu0
        %v4015 = vadd.f32 0.0, %v4014
        %v4016 = vpop.f32.mrb[0].mxu0
        %v4017 = vpop.f32.mrb[0].mxu0
        %v4018 = vadd.f32 0.0, %v4017
        %v4019 = vpop.f32.mrb[0].mxu0
        %4020 = vmatprep.mubr.bf16.mxu0 0
        %4021 = vmatmul.mubr.bf16.gmra.mrb[0].mxu0 %v3881
        %v4022 = vpop.f32.mrb[0].mxu0
        %v4023 = vadd.f32 0.0, %v4022
        %v4024 = vpop.f32.mrb[0].mxu0
        %v4025 = vpop.f32.mrb[0].mxu0
        %v4026 = vadd.f32 0.0, %v4025
        %v4027 = vpop.f32.mrb[0].mxu0
        %4028 = vmatprep.mubr.bf16.mxu0 0
        %4029 = vmatmul.mubr.bf16.gmra.mrb[0].mxu0 %v3884
        %v4030 = vpop.f32.mrb[0].mxu0
        %v4031 = vadd.f32 0.0, %v4030
        %v4032 = vpop.f32.mrb[0].mxu0
        %v4033 = vpop.f32.mrb[0].mxu0
        %v4034 = vadd.f32 0.0, %v4033
        %v4035 = vpop.f32.mrb[0].mxu0
        %4036 = vmatprep.mubr.bf16.mxu0 0
        %4037 = vmatmul.mubr.bf16.gmra.mrb[0].mxu0 %v3887
        %v4038 = vpop.f32.mrb[0].mxu0
        %v4039 = vadd.f32 0.0, %v4038
        %v4040 = vpop.f32.mrb[0].mxu0
        %v4041 = vpop.f32.mrb[0].mxu0
        %v4042 = vadd.f32 0.0, %v4041
        %v4043 = vpop.f32.mrb[0].mxu0
        %4044 = vmatprep.mubr.bf16.mxu0 0
        %4045 = vmatmul.mubr.bf16.gmra.mrb[0].mxu0 %v3890
        %v4046 = vpop.f32.mrb[0].mxu0
        %v4047 = vadd.f32 0.0, %v4046
        %v4048 = vpop.f32.mrb[0].mxu0
        %v4049 = vpop.f32.mrb[0].mxu0
        %v4050 = vadd.f32 0.0, %v4049
        %v4051 = vpop.f32.mrb[0].mxu0
        %4052 = vdwg.mxu0
        %vm4053 = vcmp.gt.f32.partialorder %v3392, 0.0
        %vm4054 = vcmp.gt.f32.partialorder %v3393, 0.0
        %vm4055 = vcmp.gt.f32.partialorder %v3394, 0.0
        %vm4056 = vcmp.gt.f32.partialorder %v3395, 0.0
        %vm4057 = vcmp.gt.f32.partialorder %v3396, 0.0
        %vm4058 = vcmp.gt.f32.partialorder %v3397, 0.0
        %vm4059 = vcmp.gt.f32.partialorder %v3398, 0.0
        %vm4060 = vcmp.gt.f32.partialorder %v3399, 0.0
        %vm4061 = vcmp.gt.f32.partialorder %v3400, 0.0
        %vm4062 = vcmp.gt.f32.partialorder %v3401, 0.0
        %vm4063 = vcmp.gt.f32.partialorder %v3402, 0.0
        %vm4064 = vcmp.gt.f32.partialorder %v3403, 0.0
        %vm4065 = vcmp.gt.f32.partialorder %v3404, 0.0
        %vm4066 = vcmp.gt.f32.partialorder %v3405, 0.0
        %vm4067 = vcmp.gt.f32.partialorder %v3406, 0.0
        %vm4068 = vcmp.gt.f32.partialorder %v3407, 0.0
        %vm4069 = vcmp.gt.f32.partialorder %v3408, 0.0
        %vm4070 = vcmp.gt.f32.partialorder %v3409, 0.0
        %vm4071 = vcmp.gt.f32.partialorder %v3410, 0.0
        %vm4072 = vcmp.gt.f32.partialorder %v3411, 0.0
        %vm4073 = vcmp.gt.f32.partialorder %v3412, 0.0
        %vm4074 = vcmp.gt.f32.partialorder %v3413, 0.0
        %vm4075 = vcmp.gt.f32.partialorder %v3414, 0.0
        %vm4076 = vcmp.gt.f32.partialorder %v3415, 0.0
        %vm4077 = vcmp.gt.f32.partialorder %v3416, 0.0
        %vm4078 = vcmp.gt.f32.partialorder %v3417, 0.0
        %vm4079 = vcmp.gt.f32.partialorder %v3418, 0.0
        %vm4080 = vcmp.gt.f32.partialorder %v3419, 0.0
        %vm4081 = vcmp.gt.f32.partialorder %v3420, 0.0
        %vm4082 = vcmp.gt.f32.partialorder %v3421, 0.0
        %vm4083 = vcmp.gt.f32.partialorder %v3422, 0.0
        %vm4084 = vcmp.gt.f32.partialorder %v3423, 0.0
        %v4085 = vsel %vm4053, 1, 0
        %v4086 = vsel %vm4054, 1, 0
        %v4087 = vsel %vm4055, 1, 0
        %v4088 = vsel %vm4056, 1, 0
        %v4089 = vsel %vm4057, 1, 0
        %v4090 = vsel %vm4058, 1, 0
        %v4091 = vsel %vm4059, 1, 0
        %v4092 = vsel %vm4060, 1, 0
        %v4093 = vsel %vm4061, 1, 0
        %v4094 = vsel %vm4062, 1, 0
        %v4095 = vsel %vm4063, 1, 0
        %v4096 = vsel %vm4064, 1, 0
        %v4097 = vsel %vm4065, 1, 0
        %v4098 = vsel %vm4066, 1, 0
        %v4099 = vsel %vm4067, 1, 0
        %v4100 = vsel %vm4068, 1, 0
        %v4101 = vsel %vm4069, 1, 0
        %v4102 = vsel %vm4070, 1, 0
        %v4103 = vsel %vm4071, 1, 0
        %v4104 = vsel %vm4072, 1, 0
        %v4105 = vsel %vm4073, 1, 0
        %v4106 = vsel %vm4074, 1, 0
        %v4107 = vsel %vm4075, 1, 0
        %v4108 = vsel %vm4076, 1, 0
        %v4109 = vsel %vm4077, 1, 0
        %v4110 = vsel %vm4078, 1, 0
        %v4111 = vsel %vm4079, 1, 0
        %v4112 = vsel %vm4080, 1, 0
        %v4113 = vsel %vm4081, 1, 0
        %v4114 = vsel %vm4082, 1, 0
        %v4115 = vsel %vm4083, 1, 0
        %v4116 = vsel %vm4084, 1, 0
        %4117 = vset.pattern.permute.xlu0 0
        %4118 = vperm.xlu0 %4117, %v4085
        %v4119 = vpop.permute.xlu0 %4118
        %4120 = vset.pattern.permute.xlu0 0
        %4121 = vperm.xlu0 %4120, %v4086
        %v4122 = vpop.permute.xlu0 %4121
        %4123 = vset.pattern.permute.xlu0 0
        %4124 = vperm.xlu0 %4123, %v4087
        %v4125 = vpop.permute.xlu0 %4124
        %4126 = vset.pattern.permute.xlu0 0
        %4127 = vperm.xlu0 %4126, %v4088
        %v4128 = vpop.permute.xlu0 %4127
        %4129 = vset.pattern.permute.xlu0 0
        %4130 = vperm.xlu0 %4129, %v4089
        %v4131 = vpop.permute.xlu0 %4130
        %4132 = vset.pattern.permute.xlu0 0
        %4133 = vperm.xlu0 %4132, %v4090
        %v4134 = vpop.permute.xlu0 %4133
        %4135 = vset.pattern.permute.xlu0 0
        %4136 = vperm.xlu0 %4135, %v4091
        %v4137 = vpop.permute.xlu0 %4136
        %4138 = vset.pattern.permute.xlu0 0
        %4139 = vperm.xlu0 %4138, %v4092
        %v4140 = vpop.permute.xlu0 %4139
        %4141 = vset.pattern.permute.xlu0 0
        %4142 = vperm.xlu0 %4141, %v4093
        %v4143 = vpop.permute.xlu0 %4142
        %4144 = vset.pattern.permute.xlu0 0
        %4145 = vperm.xlu0 %4144, %v4094
        %v4146 = vpop.permute.xlu0 %4145
        %4147 = vset.pattern.permute.xlu0 0
        %4148 = vperm.xlu0 %4147, %v4095
        %v4149 = vpop.permute.xlu0 %4148
        %4150 = vset.pattern.permute.xlu0 0
        %4151 = vperm.xlu0 %4150, %v4096
        %v4152 = vpop.permute.xlu0 %4151
        %4153 = vset.pattern.permute.xlu0 0
        %4154 = vperm.xlu0 %4153, %v4097
        %v4155 = vpop.permute.xlu0 %4154
        %4156 = vset.pattern.permute.xlu0 0
        %4157 = vperm.xlu0 %4156, %v4098
        %v4158 = vpop.permute.xlu0 %4157
        %4159 = vset.pattern.permute.xlu0 0
        %4160 = vperm.xlu0 %4159, %v4099
        %v4161 = vpop.permute.xlu0 %4160
        %4162 = vset.pattern.permute.xlu0 0
        %4163 = vperm.xlu0 %4162, %v4100
        %v4164 = vpop.permute.xlu0 %4163
        %4165 = vset.pattern.permute.xlu0 0
        %4166 = vperm.xlu0 %4165, %v4101
        %v4167 = vpop.permute.xlu0 %4166
        %4168 = vset.pattern.permute.xlu0 0
        %4169 = vperm.xlu0 %4168, %v4102
        %v4170 = vpop.permute.xlu0 %4169
        %4171 = vset.pattern.permute.xlu0 0
        %4172 = vperm.xlu0 %4171, %v4103
        %v4173 = vpop.permute.xlu0 %4172
        %4174 = vset.pattern.permute.xlu0 0
        %4175 = vperm.xlu0 %4174, %v4104
        %v4176 = vpop.permute.xlu0 %4175
        %4177 = vset.pattern.permute.xlu0 0
        %4178 = vperm.xlu0 %4177, %v4105
        %v4179 = vpop.permute.xlu0 %4178
        %4180 = vset.pattern.permute.xlu0 0
        %4181 = vperm.xlu0 %4180, %v4106
        %v4182 = vpop.permute.xlu0 %4181
        %4183 = vset.pattern.permute.xlu0 0
        %4184 = vperm.xlu0 %4183, %v4107
        %v4185 = vpop.permute.xlu0 %4184
        %4186 = vset.pattern.permute.xlu0 0
        %4187 = vperm.xlu0 %4186, %v4108
        %v4188 = vpop.permute.xlu0 %4187
        %4189 = vset.pattern.permute.xlu0 0
        %4190 = vperm.xlu0 %4189, %v4109
        %v4191 = vpop.permute.xlu0 %4190
        %4192 = vset.pattern.permute.xlu0 0
        %4193 = vperm.xlu0 %4192, %v4110
        %v4194 = vpop.permute.xlu0 %4193
        %4195 = vset.pattern.permute.xlu0 0
        %4196 = vperm.xlu0 %4195, %v4111
        %v4197 = vpop.permute.xlu0 %4196
        %4198 = vset.pattern.permute.xlu0 0
        %4199 = vperm.xlu0 %4198, %v4112
        %v4200 = vpop.permute.xlu0 %4199
        %4201 = vset.pattern.permute.xlu0 0
        %4202 = vperm.xlu0 %4201, %v4113
        %v4203 = vpop.permute.xlu0 %4202
        %4204 = vset.pattern.permute.xlu0 0
        %4205 = vperm.xlu0 %4204, %v4114
        %v4206 = vpop.permute.xlu0 %4205
        %4207 = vset.pattern.permute.xlu0 0
        %4208 = vperm.xlu0 %4207, %v4115
        %v4209 = vpop.permute.xlu0 %4208
        %4210 = vset.pattern.permute.xlu0 0
        %4211 = vperm.xlu0 %4210, %v4116
        %v4212 = vpop.permute.xlu0 %4211
        %vm4213 = vcmp.eq.s32.totalorder %v4119, 1
        %vm4214 = vcmp.eq.s32.totalorder %v4122, 1
        %vm4215 = vcmp.eq.s32.totalorder %v4125, 1
        %vm4216 = vcmp.eq.s32.totalorder %v4128, 1
        %vm4217 = vcmp.eq.s32.totalorder %v4131, 1
        %vm4218 = vcmp.eq.s32.totalorder %v4134, 1
        %vm4219 = vcmp.eq.s32.totalorder %v4137, 1
        %vm4220 = vcmp.eq.s32.totalorder %v4140, 1
        %vm4221 = vcmp.eq.s32.totalorder %v4143, 1
        %vm4222 = vcmp.eq.s32.totalorder %v4146, 1
        %vm4223 = vcmp.eq.s32.totalorder %v4149, 1
        %vm4224 = vcmp.eq.s32.totalorder %v4152, 1
        %vm4225 = vcmp.eq.s32.totalorder %v4155, 1
        %vm4226 = vcmp.eq.s32.totalorder %v4158, 1
        %vm4227 = vcmp.eq.s32.totalorder %v4161, 1
        %vm4228 = vcmp.eq.s32.totalorder %v4164, 1
        %vm4229 = vcmp.eq.s32.totalorder %v4167, 1
        %vm4230 = vcmp.eq.s32.totalorder %v4170, 1
        %vm4231 = vcmp.eq.s32.totalorder %v4173, 1
        %vm4232 = vcmp.eq.s32.totalorder %v4176, 1
        %vm4233 = vcmp.eq.s32.totalorder %v4179, 1
        %vm4234 = vcmp.eq.s32.totalorder %v4182, 1
        %vm4235 = vcmp.eq.s32.totalorder %v4185, 1
        %vm4236 = vcmp.eq.s32.totalorder %v4188, 1
        %vm4237 = vcmp.eq.s32.totalorder %v4191, 1
        %vm4238 = vcmp.eq.s32.totalorder %v4194, 1
        %vm4239 = vcmp.eq.s32.totalorder %v4197, 1
        %vm4240 = vcmp.eq.s32.totalorder %v4200, 1
        %vm4241 = vcmp.eq.s32.totalorder %v4203, 1
        %vm4242 = vcmp.eq.s32.totalorder %v4206, 1
        %vm4243 = vcmp.eq.s32.totalorder %v4209, 1
        %vm4244 = vcmp.eq.s32.totalorder %v4212, 1
        %v4245 = vsel %vm4213, %v3927, -1e+30
        %v4246 = vsel %vm4214, %v3930, -1e+30
        %v4247 = vsel %vm4215, %v3935, -1e+30
        %v4248 = vsel %vm4216, %v3938, -1e+30
        %v4249 = vsel %vm4217, %v3943, -1e+30
        %v4250 = vsel %vm4218, %v3946, -1e+30
        %v4251 = vsel %vm4219, %v3951, -1e+30
        %v4252 = vsel %vm4220, %v3954, -1e+30
        %v4253 = vsel %vm4221, %v3959, -1e+30
        %v4254 = vsel %vm4222, %v3962, -1e+30
        %v4255 = vsel %vm4223, %v3967, -1e+30
        %v4256 = vsel %vm4224, %v3970, -1e+30
        %v4257 = vsel %vm4225, %v3975, -1e+30
        %v4258 = vsel %vm4226, %v3978, -1e+30
        %v4259 = vsel %vm4227, %v3983, -1e+30
        %v4260 = vsel %vm4228, %v3986, -1e+30
        %v4261 = vsel %vm4229, %v3991, -1e+30
        %v4262 = vsel %vm4230, %v3994, -1e+30
        %v4263 = vsel %vm4231, %v3999, -1e+30
        %v4264 = vsel %vm4232, %v4002, -1e+30
        %v4265 = vsel %vm4233, %v4007, -1e+30
        %v4266 = vsel %vm4234, %v4010, -1e+30
        %v4267 = vsel %vm4235, %v4015, -1e+30
        %v4268 = vsel %vm4236, %v4018, -1e+30
        %v4269 = vsel %vm4237, %v4023, -1e+30
        %v4270 = vsel %vm4238, %v4026, -1e+30
        %v4271 = vsel %vm4239, %v4031, -1e+30
        %v4272 = vsel %vm4240, %v4034, -1e+30
        %v4273 = vsel %vm4241, %v4039, -1e+30
        %v4274 = vsel %vm4242, %v4042, -1e+30
        %v4275 = vsel %vm4243, %v4047, -1e+30
        %v4276 = vsel %vm4244, %v4050, -1e+30
        %v4277 = vsel %vm712, %v4245, -inf
        %v4278 = vsel %vm712, %v4246, -inf
        %v4279 = vmax.f32 %v4277, %v4278
        %v4280 = vrot.slane %v4279, 4
        %v4281 = vmax.f32 %v4279, %v4280
        %v4282 = vrot.slane %v4281, 2
        %v4283 = vmax.f32 %v4281, %v4282
        %v4284 = vrot.slane %v4283, 1
        %v4285 = vmax.f32 %v4283, %v4284
        %v4286 = vsel %vm712, %v4247, -inf
        %v4287 = vsel %vm712, %v4248, -inf
        %v4288 = vmax.f32 %v4286, %v4287
        %v4289 = vrot.slane %v4288, 4
        %v4290 = vmax.f32 %v4288, %v4289
        %v4291 = vrot.slane %v4290, 2
        %v4292 = vmax.f32 %v4290, %v4291
        %v4293 = vrot.slane %v4292, 1
        %v4294 = vmax.f32 %v4292, %v4293
        %v4295 = vsel %vm712, %v4249, -inf
        %v4296 = vsel %vm712, %v4250, -inf
        %v4297 = vmax.f32 %v4295, %v4296
        %v4298 = vrot.slane %v4297, 4
        %v4299 = vmax.f32 %v4297, %v4298
        %v4300 = vrot.slane %v4299, 2
        %v4301 = vmax.f32 %v4299, %v4300
        %v4302 = vrot.slane %v4301, 1
        %v4303 = vmax.f32 %v4301, %v4302
        %v4304 = vsel %vm712, %v4251, -inf
        %v4305 = vsel %vm712, %v4252, -inf
        %v4306 = vmax.f32 %v4304, %v4305
        %v4307 = vrot.slane %v4306, 4
        %v4308 = vmax.f32 %v4306, %v4307
        %v4309 = vrot.slane %v4308, 2
        %v4310 = vmax.f32 %v4308, %v4309
        %v4311 = vrot.slane %v4310, 1
        %v4312 = vmax.f32 %v4310, %v4311
        %v4313 = vsel %vm712, %v4253, -inf
        %v4314 = vsel %vm712, %v4254, -inf
        %v4315 = vmax.f32 %v4313, %v4314
        %v4316 = vrot.slane %v4315, 4
        %v4317 = vmax.f32 %v4315, %v4316
        %v4318 = vrot.slane %v4317, 2
        %v4319 = vmax.f32 %v4317, %v4318
        %v4320 = vrot.slane %v4319, 1
        %v4321 = vmax.f32 %v4319, %v4320
        %v4322 = vsel %vm712, %v4255, -inf
        %v4323 = vsel %vm712, %v4256, -inf
        %v4324 = vmax.f32 %v4322, %v4323
        %v4325 = vrot.slane %v4324, 4
        %v4326 = vmax.f32 %v4324, %v4325
        %v4327 = vrot.slane %v4326, 2
        %v4328 = vmax.f32 %v4326, %v4327
        %v4329 = vrot.slane %v4328, 1
        %v4330 = vmax.f32 %v4328, %v4329
        %v4331 = vsel %vm712, %v4257, -inf
        %v4332 = vsel %vm712, %v4258, -inf
        %v4333 = vmax.f32 %v4331, %v4332
        %v4334 = vrot.slane %v4333, 4
        %v4335 = vmax.f32 %v4333, %v4334
        %v4336 = vrot.slane %v4335, 2
        %v4337 = vmax.f32 %v4335, %v4336
        %v4338 = vrot.slane %v4337, 1
        %v4339 = vmax.f32 %v4337, %v4338
        %v4340 = vsel %vm712, %v4259, -inf
        %v4341 = vsel %vm712, %v4260, -inf
        %v4342 = vmax.f32 %v4340, %v4341
        %v4343 = vrot.slane %v4342, 4
        %v4344 = vmax.f32 %v4342, %v4343
        %v4345 = vrot.slane %v4344, 2
        %v4346 = vmax.f32 %v4344, %v4345
        %v4347 = vrot.slane %v4346, 1
        %v4348 = vmax.f32 %v4346, %v4347
        %v4349 = vsel %vm712, %v4261, -inf
        %v4350 = vsel %vm712, %v4262, -inf
        %v4351 = vmax.f32 %v4349, %v4350
        %v4352 = vrot.slane %v4351, 4
        %v4353 = vmax.f32 %v4351, %v4352
        %v4354 = vrot.slane %v4353, 2
        %v4355 = vmax.f32 %v4353, %v4354
        %v4356 = vrot.slane %v4355, 1
        %v4357 = vmax.f32 %v4355, %v4356
        %v4358 = vsel %vm712, %v4263, -inf
        %v4359 = vsel %vm712, %v4264, -inf
        %v4360 = vmax.f32 %v4358, %v4359
        %v4361 = vrot.slane %v4360, 4
        %v4362 = vmax.f32 %v4360, %v4361
        %v4363 = vrot.slane %v4362, 2
        %v4364 = vmax.f32 %v4362, %v4363
        %v4365 = vrot.slane %v4364, 1
        %v4366 = vmax.f32 %v4364, %v4365
        %v4367 = vsel %vm712, %v4265, -inf
        %v4368 = vsel %vm712, %v4266, -inf
        %v4369 = vmax.f32 %v4367, %v4368
        %v4370 = vrot.slane %v4369, 4
        %v4371 = vmax.f32 %v4369, %v4370
        %v4372 = vrot.slane %v4371, 2
        %v4373 = vmax.f32 %v4371, %v4372
        %v4374 = vrot.slane %v4373, 1
        %v4375 = vmax.f32 %v4373, %v4374
        %v4376 = vsel %vm712, %v4267, -inf
        %v4377 = vsel %vm712, %v4268, -inf
        %v4378 = vmax.f32 %v4376, %v4377
        %v4379 = vrot.slane %v4378, 4
        %v4380 = vmax.f32 %v4378, %v4379
        %v4381 = vrot.slane %v4380, 2
        %v4382 = vmax.f32 %v4380, %v4381
        %v4383 = vrot.slane %v4382, 1
        %v4384 = vmax.f32 %v4382, %v4383
        %v4385 = vsel %vm712, %v4269, -inf
        %v4386 = vsel %vm712, %v4270, -inf
        %v4387 = vmax.f32 %v4385, %v4386
        %v4388 = vrot.slane %v4387, 4
        %v4389 = vmax.f32 %v4387, %v4388
        %v4390 = vrot.slane %v4389, 2
        %v4391 = vmax.f32 %v4389, %v4390
        %v4392 = vrot.slane %v4391, 1
        %v4393 = vmax.f32 %v4391, %v4392
        %v4394 = vsel %vm712, %v4271, -inf
        %v4395 = vsel %vm712, %v4272, -inf
        %v4396 = vmax.f32 %v4394, %v4395
        %v4397 = vrot.slane %v4396, 4
        %v4398 = vmax.f32 %v4396, %v4397
        %v4399 = vrot.slane %v4398, 2
        %v4400 = vmax.f32 %v4398, %v4399
        %v4401 = vrot.slane %v4400, 1
        %v4402 = vmax.f32 %v4400, %v4401
        %v4403 = vsel %vm712, %v4273, -inf
        %v4404 = vsel %vm712, %v4274, -inf
        %v4405 = vmax.f32 %v4403, %v4404
        %v4406 = vrot.slane %v4405, 4
        %v4407 = vmax.f32 %v4405, %v4406
        %v4408 = vrot.slane %v4407, 2
        %v4409 = vmax.f32 %v4407, %v4408
        %v4410 = vrot.slane %v4409, 1
        %v4411 = vmax.f32 %v4409, %v4410
        %v4412 = vsel %vm712, %v4275, -inf
        %v4413 = vsel %vm712, %v4276, -inf
        %v4414 = vmax.f32 %v4412, %v4413
        %v4415 = vrot.slane %v4414, 4
        %v4416 = vmax.f32 %v4414, %v4415
        %v4417 = vrot.slane %v4416, 2
        %v4418 = vmax.f32 %v4416, %v4417
        %v4419 = vrot.slane %v4418, 1
        %v4420 = vmax.f32 %v4418, %v4419
        %v4421 = vsub.f32 %v4245, %v4285
        %v4422 = vsub.f32 %v4246, %v4285
        %v4423 = vsub.f32 %v4247, %v4294
        %v4424 = vsub.f32 %v4248, %v4294
        %v4425 = vsub.f32 %v4249, %v4303
        %v4426 = vsub.f32 %v4250, %v4303
        %v4427 = vsub.f32 %v4251, %v4312
        %v4428 = vsub.f32 %v4252, %v4312
        %v4429 = vsub.f32 %v4253, %v4321
        %v4430 = vsub.f32 %v4254, %v4321
        %v4431 = vsub.f32 %v4255, %v4330
        %v4432 = vsub.f32 %v4256, %v4330
        %v4433 = vsub.f32 %v4257, %v4339
        %v4434 = vsub.f32 %v4258, %v4339
        %v4435 = vsub.f32 %v4259, %v4348
        %v4436 = vsub.f32 %v4260, %v4348
        %v4437 = vsub.f32 %v4261, %v4357
        %v4438 = vsub.f32 %v4262, %v4357
        %v4439 = vsub.f32 %v4263, %v4366
        %v4440 = vsub.f32 %v4264, %v4366
        %v4441 = vsub.f32 %v4265, %v4375
        %v4442 = vsub.f32 %v4266, %v4375
        %v4443 = vsub.f32 %v4267, %v4384
        %v4444 = vsub.f32 %v4268, %v4384
        %v4445 = vsub.f32 %v4269, %v4393
        %v4446 = vsub.f32 %v4270, %v4393
        %v4447 = vsub.f32 %v4271, %v4402
        %v4448 = vsub.f32 %v4272, %v4402
        %v4449 = vsub.f32 %v4273, %v4411
        %v4450 = vsub.f32 %v4274, %v4411
        %v4451 = vsub.f32 %v4275, %v4420
        %v4452 = vsub.f32 %v4276, %v4420
        %v4453 = vmul.f32 %v4421, 1.442695
        %v4454 = vpow.pop %v4453
        %v4455 = vmul.f32 %v4422, 1.442695
        %v4456 = vpow.pop %v4455
        %v4457 = vmul.f32 %v4423, 1.442695
        %v4458 = vpow.pop %v4457
        %v4459 = vmul.f32 %v4424, 1.442695
        %v4460 = vpow.pop %v4459
        %v4461 = vmul.f32 %v4425, 1.442695
        %v4462 = vpow.pop %v4461
        %v4463 = vmul.f32 %v4426, 1.442695
        %v4464 = vpow.pop %v4463
        %v4465 = vmul.f32 %v4427, 1.442695
        %v4466 = vpow.pop %v4465
        %v4467 = vmul.f32 %v4428, 1.442695
        %v4468 = vpow.pop %v4467
        %v4469 = vmul.f32 %v4429, 1.442695
        %v4470 = vpow.pop %v4469
        %v4471 = vmul.f32 %v4430, 1.442695
        %v4472 = vpow.pop %v4471
        %v4473 = vmul.f32 %v4431, 1.442695
        %v4474 = vpow.pop %v4473
        %v4475 = vmul.f32 %v4432, 1.442695
        %v4476 = vpow.pop %v4475
        %v4477 = vmul.f32 %v4433, 1.442695
        %v4478 = vpow.pop %v4477
        %v4479 = vmul.f32 %v4434, 1.442695
        %v4480 = vpow.pop %v4479
        %v4481 = vmul.f32 %v4435, 1.442695
        %v4482 = vpow.pop %v4481
        %v4483 = vmul.f32 %v4436, 1.442695
        %v4484 = vpow.pop %v4483
        %v4485 = vmul.f32 %v4437, 1.442695
        %v4486 = vpow.pop %v4485
        %v4487 = vmul.f32 %v4438, 1.442695
        %v4488 = vpow.pop %v4487
        %v4489 = vmul.f32 %v4439, 1.442695
        %v4490 = vpow.pop %v4489
        %v4491 = vmul.f32 %v4440, 1.442695
        %v4492 = vpow.pop %v4491
        %v4493 = vmul.f32 %v4441, 1.442695
        %v4494 = vpow.pop %v4493
        %v4495 = vmul.f32 %v4442, 1.442695
        %v4496 = vpow.pop %v4495
        %v4497 = vmul.f32 %v4443, 1.442695
        %v4498 = vpow.pop %v4497
        %v4499 = vmul.f32 %v4444, 1.442695
        %v4500 = vpow.pop %v4499
        %v4501 = vmul.f32 %v4445, 1.442695
        %v4502 = vpow.pop %v4501
        %v4503 = vmul.f32 %v4446, 1.442695
        %v4504 = vpow.pop %v4503
        %v4505 = vmul.f32 %v4447, 1.442695
        %v4506 = vpow.pop %v4505
        %v4507 = vmul.f32 %v4448, 1.442695
        %v4508 = vpow.pop %v4507
        %v4509 = vmul.f32 %v4449, 1.442695
        %v4510 = vpow.pop %v4509
        %v4511 = vmul.f32 %v4450, 1.442695
        %v4512 = vpow.pop %v4511
        %v4513 = vmul.f32 %v4451, 1.442695
        %v4514 = vpow.pop %v4513
        %v4515 = vmul.f32 %v4452, 1.442695
        %v4516 = vpow.pop %v4515
        %4518 = vset.pattern.permute.xlu0 0
        %4519 = vperm.xlu0 %4518, %v3392
        %v4520 = vpop.permute.xlu0 %4519
        %4523 = vset.pattern.permute.xlu0 0
        %4524 = vperm.xlu0 %4523, %v3393
        %v4525 = vpop.permute.xlu0 %4524
        %4528 = vset.pattern.permute.xlu0 0
        %4529 = vperm.xlu0 %4528, %v3394
        %v4530 = vpop.permute.xlu0 %4529
        %4533 = vset.pattern.permute.xlu0 0
        %4534 = vperm.xlu0 %4533, %v3395
        %v4535 = vpop.permute.xlu0 %4534
        %4538 = vset.pattern.permute.xlu0 0
        %4539 = vperm.xlu0 %4538, %v3396
        %v4540 = vpop.permute.xlu0 %4539
        %4543 = vset.pattern.permute.xlu0 0
        %4544 = vperm.xlu0 %4543, %v3397
        %v4545 = vpop.permute.xlu0 %4544
        %4548 = vset.pattern.permute.xlu0 0
        %4549 = vperm.xlu0 %4548, %v3398
        %v4550 = vpop.permute.xlu0 %4549
        %4553 = vset.pattern.permute.xlu0 0
        %4554 = vperm.xlu0 %4553, %v3399
        %v4555 = vpop.permute.xlu0 %4554
        %4558 = vset.pattern.permute.xlu0 0
        %4559 = vperm.xlu0 %4558, %v3400
        %v4560 = vpop.permute.xlu0 %4559
        %4563 = vset.pattern.permute.xlu0 0
        %4564 = vperm.xlu0 %4563, %v3401
        %v4565 = vpop.permute.xlu0 %4564
        %4568 = vset.pattern.permute.xlu0 0
        %4569 = vperm.xlu0 %4568, %v3402
        %v4570 = vpop.permute.xlu0 %4569
        %4573 = vset.pattern.permute.xlu0 0
        %4574 = vperm.xlu0 %4573, %v3403
        %v4575 = vpop.permute.xlu0 %4574
        %4578 = vset.pattern.permute.xlu0 0
        %4579 = vperm.xlu0 %4578, %v3404
        %v4580 = vpop.permute.xlu0 %4579
        %4583 = vset.pattern.permute.xlu0 0
        %4584 = vperm.xlu0 %4583, %v3405
        %v4585 = vpop.permute.xlu0 %4584
        %4588 = vset.pattern.permute.xlu0 0
        %4589 = vperm.xlu0 %4588, %v3406
        %v4590 = vpop.permute.xlu0 %4589
        %4593 = vset.pattern.permute.xlu0 0
        %4594 = vperm.xlu0 %4593, %v3407
        %v4595 = vpop.permute.xlu0 %4594
        %4598 = vset.pattern.permute.xlu0 0
        %4599 = vperm.xlu0 %4598, %v3408
        %v4600 = vpop.permute.xlu0 %4599
        %4603 = vset.pattern.permute.xlu0 0
        %4604 = vperm.xlu0 %4603, %v3409
        %v4605 = vpop.permute.xlu0 %4604
        %4608 = vset.pattern.permute.xlu0 0
        %4609 = vperm.xlu0 %4608, %v3410
        %v4610 = vpop.permute.xlu0 %4609
        %4613 = vset.pattern.permute.xlu0 0
        %4614 = vperm.xlu0 %4613, %v3411
        %v4615 = vpop.permute.xlu0 %4614
        %4618 = vset.pattern.permute.xlu0 0
        %4619 = vperm.xlu0 %4618, %v3412
        %v4620 = vpop.permute.xlu0 %4619
        %4623 = vset.pattern.permute.xlu0 0
        %4624 = vperm.xlu0 %4623, %v3413
        %v4625 = vpop.permute.xlu0 %4624
        %4628 = vset.pattern.permute.xlu0 0
        %4629 = vperm.xlu0 %4628, %v3414
        %v4630 = vpop.permute.xlu0 %4629
        %4633 = vset.pattern.permute.xlu0 0
        %4634 = vperm.xlu0 %4633, %v3415
        %v4635 = vpop.permute.xlu0 %4634
        %4638 = vset.pattern.permute.xlu0 0
        %4639 = vperm.xlu0 %4638, %v3416
        %v4640 = vpop.permute.xlu0 %4639
        %4643 = vset.pattern.permute.xlu0 0
        %4644 = vperm.xlu0 %4643, %v3417
        %v4645 = vpop.permute.xlu0 %4644
        %4648 = vset.pattern.permute.xlu0 0
        %4649 = vperm.xlu0 %4648, %v3418
        %v4650 = vpop.permute.xlu0 %4649
        %4653 = vset.pattern.permute.xlu0 0
        %4654 = vperm.xlu0 %4653, %v3419
        %v4655 = vpop.permute.xlu0 %4654
        %4658 = vset.pattern.permute.xlu0 0
        %4659 = vperm.xlu0 %4658, %v3420
        %v4660 = vpop.permute.xlu0 %4659
        %4663 = vset.pattern.permute.xlu0 0
        %4664 = vperm.xlu0 %4663, %v3421
        %v4665 = vpop.permute.xlu0 %4664
        %4668 = vset.pattern.permute.xlu0 0
        %4669 = vperm.xlu0 %4668, %v3422
        %v4670 = vpop.permute.xlu0 %4669
        %4673 = vset.pattern.permute.xlu0 0
        %4674 = vperm.xlu0 %4673, %v3423
        %v4675 = vpop.permute.xlu0 %4674
        %v4677 = vmul.f32 %v4454, %v4520
        %v4678 = vmul.f32 %v4456, %v4525
        %v4679 = vmul.f32 %v4458, %v4530
        %v4680 = vmul.f32 %v4460, %v4535
        %v4681 = vmul.f32 %v4462, %v4540
        %v4682 = vmul.f32 %v4464, %v4545
        %v4683 = vmul.f32 %v4466, %v4550
        %v4684 = vmul.f32 %v4468, %v4555
        %v4685 = vmul.f32 %v4470, %v4560
        %v4686 = vmul.f32 %v4472, %v4565
        %v4687 = vmul.f32 %v4474, %v4570
        %v4688 = vmul.f32 %v4476, %v4575
        %v4689 = vmul.f32 %v4478, %v4580
        %v4690 = vmul.f32 %v4480, %v4585
        %v4691 = vmul.f32 %v4482, %v4590
        %v4692 = vmul.f32 %v4484, %v4595
        %v4693 = vmul.f32 %v4486, %v4600
        %v4694 = vmul.f32 %v4488, %v4605
        %v4695 = vmul.f32 %v4490, %v4610
        %v4696 = vmul.f32 %v4492, %v4615
        %v4697 = vmul.f32 %v4494, %v4620
        %v4698 = vmul.f32 %v4496, %v4625
        %v4699 = vmul.f32 %v4498, %v4630
        %v4700 = vmul.f32 %v4500, %v4635
        %v4701 = vmul.f32 %v4502, %v4640
        %v4702 = vmul.f32 %v4504, %v4645
        %v4703 = vmul.f32 %v4506, %v4650
        %v4704 = vmul.f32 %v4508, %v4655
        %v4705 = vmul.f32 %v4510, %v4660
        %v4706 = vmul.f32 %v4512, %v4665
        %v4707 = vmul.f32 %v4514, %v4670
        %v4708 = vmul.f32 %v4516, %v4675
        %4741 = vrot.lane.b32.xlu0 %v3584, 96
        %v4742 = vpop.permute.xlu0 %4741
        %4743 = vrot.lane.b32.xlu0 %v3585, 96
        %v4744 = vpop.permute.xlu0 %4743
        %4745 = vrot.lane.b32.xlu0 %v3586, 96
        %v4746 = vpop.permute.xlu0 %4745
        %4747 = vrot.lane.b32.xlu0 %v3587, 96
        %v4748 = vpop.permute.xlu0 %4747
        %4749 = vrot.lane.b32.xlu0 %v3588, 96
        %v4750 = vpop.permute.xlu0 %4749
        %4751 = vrot.lane.b32.xlu0 %v3589, 96
        %v4752 = vpop.permute.xlu0 %4751
        %4753 = vrot.lane.b32.xlu0 %v3590, 96
        %v4754 = vpop.permute.xlu0 %4753
        %4755 = vrot.lane.b32.xlu0 %v3591, 96
        %v4756 = vpop.permute.xlu0 %4755
        %4757 = vrot.lane.b32.xlu0 %v3592, 96
        %v4758 = vpop.permute.xlu0 %4757
        %4759 = vrot.lane.b32.xlu0 %v3593, 96
        %v4760 = vpop.permute.xlu0 %4759
        %4761 = vrot.lane.b32.xlu0 %v3594, 96
        %v4762 = vpop.permute.xlu0 %4761
        %4763 = vrot.lane.b32.xlu0 %v3595, 96
        %v4764 = vpop.permute.xlu0 %4763
        %4765 = vrot.lane.b32.xlu0 %v3596, 96
        %v4766 = vpop.permute.xlu0 %4765
        %4767 = vrot.lane.b32.xlu0 %v3597, 96
        %v4768 = vpop.permute.xlu0 %4767
        %4769 = vrot.lane.b32.xlu0 %v3598, 96
        %v4770 = vpop.permute.xlu0 %4769
        %4771 = vrot.lane.b32.xlu0 %v3599, 96
        %v4772 = vpop.permute.xlu0 %4771
        %4773 = vrot.lane.b32.xlu0 %v3600, 96
        %v4774 = vpop.permute.xlu0 %4773
        %4775 = vrot.lane.b32.xlu0 %v3601, 96
        %v4776 = vpop.permute.xlu0 %4775
        %4777 = vrot.lane.b32.xlu0 %v3602, 96
        %v4778 = vpop.permute.xlu0 %4777
        %4779 = vrot.lane.b32.xlu0 %v3603, 96
        %v4780 = vpop.permute.xlu0 %4779
        %4781 = vrot.lane.b32.xlu0 %v3604, 96
        %v4782 = vpop.permute.xlu0 %4781
        %4783 = vrot.lane.b32.xlu0 %v3605, 96
        %v4784 = vpop.permute.xlu0 %4783
        %4785 = vrot.lane.b32.xlu0 %v3606, 96
        %v4786 = vpop.permute.xlu0 %4785
        %4787 = vrot.lane.b32.xlu0 %v3607, 96
        %v4788 = vpop.permute.xlu0 %4787
        %4789 = vrot.lane.b32.xlu0 %v3608, 96
        %v4790 = vpop.permute.xlu0 %4789
        %4791 = vrot.lane.b32.xlu0 %v3609, 96
        %v4792 = vpop.permute.xlu0 %4791
        %4793 = vrot.lane.b32.xlu0 %v3610, 96
        %v4794 = vpop.permute.xlu0 %4793
        %4795 = vrot.lane.b32.xlu0 %v3611, 96
        %v4796 = vpop.permute.xlu0 %4795
        %4797 = vrot.lane.b32.xlu0 %v3612, 96
        %v4798 = vpop.permute.xlu0 %4797
        %4799 = vrot.lane.b32.xlu0 %v3613, 96
        %v4800 = vpop.permute.xlu0 %4799
        %4801 = vrot.lane.b32.xlu0 %v3614, 96
        %v4802 = vpop.permute.xlu0 %4801
        %4803 = vrot.lane.b32.xlu0 %v3615, 96
        %v4804 = vpop.permute.xlu0 %4803
        %v4837 = vmul.f32 %v4677, %v4742
        %v4838 = vmul.f32 %v4678, %v4744
        %v4839 = vmul.f32 %v4679, %v4746
        %v4840 = vmul.f32 %v4680, %v4748
        %v4841 = vmul.f32 %v4681, %v4750
        %v4842 = vmul.f32 %v4682, %v4752
        %v4843 = vmul.f32 %v4683, %v4754
        %v4844 = vmul.f32 %v4684, %v4756
        %v4845 = vmul.f32 %v4685, %v4758
        %v4846 = vmul.f32 %v4686, %v4760
        %v4847 = vmul.f32 %v4687, %v4762
        %v4848 = vmul.f32 %v4688, %v4764
        %v4849 = vmul.f32 %v4689, %v4766
        %v4850 = vmul.f32 %v4690, %v4768
        %v4851 = vmul.f32 %v4691, %v4770
        %v4852 = vmul.f32 %v4692, %v4772
        %v4853 = vmul.f32 %v4693, %v4774
        %v4854 = vmul.f32 %v4694, %v4776
        %v4855 = vmul.f32 %v4695, %v4778
        %v4856 = vmul.f32 %v4696, %v4780
        %v4857 = vmul.f32 %v4697, %v4782
        %v4858 = vmul.f32 %v4698, %v4784
        %v4859 = vmul.f32 %v4699, %v4786
        %v4860 = vmul.f32 %v4700, %v4788
        %v4861 = vmul.f32 %v4701, %v4790
        %v4862 = vmul.f32 %v4702, %v4792
        %v4863 = vmul.f32 %v4703, %v4794
        %v4864 = vmul.f32 %v4704, %v4796
        %v4865 = vmul.f32 %v4705, %v4798
        %v4866 = vmul.f32 %v4706, %v4800
        %v4867 = vmul.f32 %v4707, %v4802
        %v4868 = vmul.f32 %v4708, %v4804
        %v4869 = vsel %vm712, %v4837, 0.0
        %v4870 = vsel %vm712, %v4838, 0.0
        %v4871 = vadd.f32 %v4869, %v4870
        %v4872 = vrot.slane %v4871, 4
        %v4873 = vadd.f32 %v4871, %v4872
        %v4874 = vrot.slane %v4873, 2
        %v4875 = vadd.f32 %v4873, %v4874
        %v4876 = vrot.slane %v4875, 1
        %v4877 = vadd.f32 %v4875, %v4876
        %v4878 = vsel %vm712, %v4839, 0.0
        %v4879 = vsel %vm712, %v4840, 0.0
        %v4880 = vadd.f32 %v4878, %v4879
        %v4881 = vrot.slane %v4880, 4
        %v4882 = vadd.f32 %v4880, %v4881
        %v4883 = vrot.slane %v4882, 2
        %v4884 = vadd.f32 %v4882, %v4883
        %v4885 = vrot.slane %v4884, 1
        %v4886 = vadd.f32 %v4884, %v4885
        %v4887 = vsel %vm712, %v4841, 0.0
        %v4888 = vsel %vm712, %v4842, 0.0
        %v4889 = vadd.f32 %v4887, %v4888
        %v4890 = vrot.slane %v4889, 4
        %v4891 = vadd.f32 %v4889, %v4890
        %v4892 = vrot.slane %v4891, 2
        %v4893 = vadd.f32 %v4891, %v4892
        %v4894 = vrot.slane %v4893, 1
        %v4895 = vadd.f32 %v4893, %v4894
        %v4896 = vsel %vm712, %v4843, 0.0
        %v4897 = vsel %vm712, %v4844, 0.0
        %v4898 = vadd.f32 %v4896, %v4897
        %v4899 = vrot.slane %v4898, 4
        %v4900 = vadd.f32 %v4898, %v4899
        %v4901 = vrot.slane %v4900, 2
        %v4902 = vadd.f32 %v4900, %v4901
        %v4903 = vrot.slane %v4902, 1
        %v4904 = vadd.f32 %v4902, %v4903
        %v4905 = vsel %vm712, %v4845, 0.0
        %v4906 = vsel %vm712, %v4846, 0.0
        %v4907 = vadd.f32 %v4905, %v4906
        %v4908 = vrot.slane %v4907, 4
        %v4909 = vadd.f32 %v4907, %v4908
        %v4910 = vrot.slane %v4909, 2
        %v4911 = vadd.f32 %v4909, %v4910
        %v4912 = vrot.slane %v4911, 1
        %v4913 = vadd.f32 %v4911, %v4912
        %v4914 = vsel %vm712, %v4847, 0.0
        %v4915 = vsel %vm712, %v4848, 0.0
        %v4916 = vadd.f32 %v4914, %v4915
        %v4917 = vrot.slane %v4916, 4
        %v4918 = vadd.f32 %v4916, %v4917
        %v4919 = vrot.slane %v4918, 2
        %v4920 = vadd.f32 %v4918, %v4919
        %v4921 = vrot.slane %v4920, 1
        %v4922 = vadd.f32 %v4920, %v4921
        %v4923 = vsel %vm712, %v4849, 0.0
        %v4924 = vsel %vm712, %v4850, 0.0
        %v4925 = vadd.f32 %v4923, %v4924
        %v4926 = vrot.slane %v4925, 4
        %v4927 = vadd.f32 %v4925, %v4926
        %v4928 = vrot.slane %v4927, 2
        %v4929 = vadd.f32 %v4927, %v4928
        %v4930 = vrot.slane %v4929, 1
        %v4931 = vadd.f32 %v4929, %v4930
        %v4932 = vsel %vm712, %v4851, 0.0
        %v4933 = vsel %vm712, %v4852, 0.0
        %v4934 = vadd.f32 %v4932, %v4933
        %v4935 = vrot.slane %v4934, 4
        %v4936 = vadd.f32 %v4934, %v4935
        %v4937 = vrot.slane %v4936, 2
        %v4938 = vadd.f32 %v4936, %v4937
        %v4939 = vrot.slane %v4938, 1
        %v4940 = vadd.f32 %v4938, %v4939
        %v4941 = vsel %vm712, %v4853, 0.0
        %v4942 = vsel %vm712, %v4854, 0.0
        %v4943 = vadd.f32 %v4941, %v4942
        %v4944 = vrot.slane %v4943, 4
        %v4945 = vadd.f32 %v4943, %v4944
        %v4946 = vrot.slane %v4945, 2
        %v4947 = vadd.f32 %v4945, %v4946
        %v4948 = vrot.slane %v4947, 1
        %v4949 = vadd.f32 %v4947, %v4948
        %v4950 = vsel %vm712, %v4855, 0.0
        %v4951 = vsel %vm712, %v4856, 0.0
        %v4952 = vadd.f32 %v4950, %v4951
        %v4953 = vrot.slane %v4952, 4
        %v4954 = vadd.f32 %v4952, %v4953
        %v4955 = vrot.slane %v4954, 2
        %v4956 = vadd.f32 %v4954, %v4955
        %v4957 = vrot.slane %v4956, 1
        %v4958 = vadd.f32 %v4956, %v4957
        %v4959 = vsel %vm712, %v4857, 0.0
        %v4960 = vsel %vm712, %v4858, 0.0
        %v4961 = vadd.f32 %v4959, %v4960
        %v4962 = vrot.slane %v4961, 4
        %v4963 = vadd.f32 %v4961, %v4962
        %v4964 = vrot.slane %v4963, 2
        %v4965 = vadd.f32 %v4963, %v4964
        %v4966 = vrot.slane %v4965, 1
        %v4967 = vadd.f32 %v4965, %v4966
        %v4968 = vsel %vm712, %v4859, 0.0
        %v4969 = vsel %vm712, %v4860, 0.0
        %v4970 = vadd.f32 %v4968, %v4969
        %v4971 = vrot.slane %v4970, 4
        %v4972 = vadd.f32 %v4970, %v4971
        %v4973 = vrot.slane %v4972, 2
        %v4974 = vadd.f32 %v4972, %v4973
        %v4975 = vrot.slane %v4974, 1
        %v4976 = vadd.f32 %v4974, %v4975
        %v4977 = vsel %vm712, %v4861, 0.0
        %v4978 = vsel %vm712, %v4862, 0.0
        %v4979 = vadd.f32 %v4977, %v4978
        %v4980 = vrot.slane %v4979, 4
        %v4981 = vadd.f32 %v4979, %v4980
        %v4982 = vrot.slane %v4981, 2
        %v4983 = vadd.f32 %v4981, %v4982
        %v4984 = vrot.slane %v4983, 1
        %v4985 = vadd.f32 %v4983, %v4984
        %v4986 = vsel %vm712, %v4863, 0.0
        %v4987 = vsel %vm712, %v4864, 0.0
        %v4988 = vadd.f32 %v4986, %v4987
        %v4989 = vrot.slane %v4988, 4
        %v4990 = vadd.f32 %v4988, %v4989
        %v4991 = vrot.slane %v4990, 2
        %v4992 = vadd.f32 %v4990, %v4991
        %v4993 = vrot.slane %v4992, 1
        %v4994 = vadd.f32 %v4992, %v4993
        %v4995 = vsel %vm712, %v4865, 0.0
        %v4996 = vsel %vm712, %v4866, 0.0
        %v4997 = vadd.f32 %v4995, %v4996
        %v4998 = vrot.slane %v4997, 4
        %v4999 = vadd.f32 %v4997, %v4998
        %v5000 = vrot.slane %v4999, 2
        %v5001 = vadd.f32 %v4999, %v5000
        %v5002 = vrot.slane %v5001, 1
        %v5003 = vadd.f32 %v5001, %v5002
        %v5004 = vsel %vm712, %v4867, 0.0
        %v5005 = vsel %vm712, %v4868, 0.0
        %v5006 = vadd.f32 %v5004, %v5005
        %v5007 = vrot.slane %v5006, 4
        %v5008 = vadd.f32 %v5006, %v5007
        %v5009 = vrot.slane %v5008, 2
        %v5010 = vadd.f32 %v5008, %v5009
        %v5011 = vrot.slane %v5010, 1
        %v5012 = vadd.f32 %v5010, %v5011
        %v5013 = vsel %vm712, %v4677, 0.0
        %v5014 = vsel %vm712, %v4678, 0.0
        %v5015 = vadd.f32 %v5013, %v5014
        %v5016 = vrot.slane %v5015, 4
        %v5017 = vadd.f32 %v5015, %v5016
        %v5018 = vrot.slane %v5017, 2
        %v5019 = vadd.f32 %v5017, %v5018
        %v5020 = vrot.slane %v5019, 1
        %v5021 = vadd.f32 %v5019, %v5020
        %v5022 = vsel %vm712, %v4679, 0.0
        %v5023 = vsel %vm712, %v4680, 0.0
        %v5024 = vadd.f32 %v5022, %v5023
        %v5025 = vrot.slane %v5024, 4
        %v5026 = vadd.f32 %v5024, %v5025
        %v5027 = vrot.slane %v5026, 2
        %v5028 = vadd.f32 %v5026, %v5027
        %v5029 = vrot.slane %v5028, 1
        %v5030 = vadd.f32 %v5028, %v5029
        %v5031 = vsel %vm712, %v4681, 0.0
        %v5032 = vsel %vm712, %v4682, 0.0
        %v5033 = vadd.f32 %v5031, %v5032
        %v5034 = vrot.slane %v5033, 4
        %v5035 = vadd.f32 %v5033, %v5034
        %v5036 = vrot.slane %v5035, 2
        %v5037 = vadd.f32 %v5035, %v5036
        %v5038 = vrot.slane %v5037, 1
        %v5039 = vadd.f32 %v5037, %v5038
        %v5040 = vsel %vm712, %v4683, 0.0
        %v5041 = vsel %vm712, %v4684, 0.0
        %v5042 = vadd.f32 %v5040, %v5041
        %v5043 = vrot.slane %v5042, 4
        %v5044 = vadd.f32 %v5042, %v5043
        %v5045 = vrot.slane %v5044, 2
        %v5046 = vadd.f32 %v5044, %v5045
        %v5047 = vrot.slane %v5046, 1
        %v5048 = vadd.f32 %v5046, %v5047
        %v5049 = vsel %vm712, %v4685, 0.0
        %v5050 = vsel %vm712, %v4686, 0.0
        %v5051 = vadd.f32 %v5049, %v5050
        %v5052 = vrot.slane %v5051, 4
        %v5053 = vadd.f32 %v5051, %v5052
        %v5054 = vrot.slane %v5053, 2
        %v5055 = vadd.f32 %v5053, %v5054
        %v5056 = vrot.slane %v5055, 1
        %v5057 = vadd.f32 %v5055, %v5056
        %v5058 = vsel %vm712, %v4687, 0.0
        %v5059 = vsel %vm712, %v4688, 0.0
        %v5060 = vadd.f32 %v5058, %v5059
        %v5061 = vrot.slane %v5060, 4
        %v5062 = vadd.f32 %v5060, %v5061
        %v5063 = vrot.slane %v5062, 2
        %v5064 = vadd.f32 %v5062, %v5063
        %v5065 = vrot.slane %v5064, 1
        %v5066 = vadd.f32 %v5064, %v5065
        %v5067 = vsel %vm712, %v4689, 0.0
        %v5068 = vsel %vm712, %v4690, 0.0
        %v5069 = vadd.f32 %v5067, %v5068
        %v5070 = vrot.slane %v5069, 4
        %v5071 = vadd.f32 %v5069, %v5070
        %v5072 = vrot.slane %v5071, 2
        %v5073 = vadd.f32 %v5071, %v5072
        %v5074 = vrot.slane %v5073, 1
        %v5075 = vadd.f32 %v5073, %v5074
        %v5076 = vsel %vm712, %v4691, 0.0
        %v5077 = vsel %vm712, %v4692, 0.0
        %v5078 = vadd.f32 %v5076, %v5077
        %v5079 = vrot.slane %v5078, 4
        %v5080 = vadd.f32 %v5078, %v5079
        %v5081 = vrot.slane %v5080, 2
        %v5082 = vadd.f32 %v5080, %v5081
        %v5083 = vrot.slane %v5082, 1
        %v5084 = vadd.f32 %v5082, %v5083
        %v5085 = vsel %vm712, %v4693, 0.0
        %v5086 = vsel %vm712, %v4694, 0.0
        %v5087 = vadd.f32 %v5085, %v5086
        %v5088 = vrot.slane %v5087, 4
        %v5089 = vadd.f32 %v5087, %v5088
        %v5090 = vrot.slane %v5089, 2
        %v5091 = vadd.f32 %v5089, %v5090
        %v5092 = vrot.slane %v5091, 1
        %v5093 = vadd.f32 %v5091, %v5092
        %v5094 = vsel %vm712, %v4695, 0.0
        %v5095 = vsel %vm712, %v4696, 0.0
        %v5096 = vadd.f32 %v5094, %v5095
        %v5097 = vrot.slane %v5096, 4
        %v5098 = vadd.f32 %v5096, %v5097
        %v5099 = vrot.slane %v5098, 2
        %v5100 = vadd.f32 %v5098, %v5099
        %v5101 = vrot.slane %v5100, 1
        %v5102 = vadd.f32 %v5100, %v5101
        %v5103 = vsel %vm712, %v4697, 0.0
        %v5104 = vsel %vm712, %v4698, 0.0
        %v5105 = vadd.f32 %v5103, %v5104
        %v5106 = vrot.slane %v5105, 4
        %v5107 = vadd.f32 %v5105, %v5106
        %v5108 = vrot.slane %v5107, 2
        %v5109 = vadd.f32 %v5107, %v5108
        %v5110 = vrot.slane %v5109, 1
        %v5111 = vadd.f32 %v5109, %v5110
        %v5112 = vsel %vm712, %v4699, 0.0
        %v5113 = vsel %vm712, %v4700, 0.0
        %v5114 = vadd.f32 %v5112, %v5113
        %v5115 = vrot.slane %v5114, 4
        %v5116 = vadd.f32 %v5114, %v5115
        %v5117 = vrot.slane %v5116, 2
        %v5118 = vadd.f32 %v5116, %v5117
        %v5119 = vrot.slane %v5118, 1
        %v5120 = vadd.f32 %v5118, %v5119
        %v5121 = vsel %vm712, %v4701, 0.0
        %v5122 = vsel %vm712, %v4702, 0.0
        %v5123 = vadd.f32 %v5121, %v5122
        %v5124 = vrot.slane %v5123, 4
        %v5125 = vadd.f32 %v5123, %v5124
        %v5126 = vrot.slane %v5125, 2
        %v5127 = vadd.f32 %v5125, %v5126
        %v5128 = vrot.slane %v5127, 1
        %v5129 = vadd.f32 %v5127, %v5128
        %v5130 = vsel %vm712, %v4703, 0.0
        %v5131 = vsel %vm712, %v4704, 0.0
        %v5132 = vadd.f32 %v5130, %v5131
        %v5133 = vrot.slane %v5132, 4
        %v5134 = vadd.f32 %v5132, %v5133
        %v5135 = vrot.slane %v5134, 2
        %v5136 = vadd.f32 %v5134, %v5135
        %v5137 = vrot.slane %v5136, 1
        %v5138 = vadd.f32 %v5136, %v5137
        %v5139 = vsel %vm712, %v4705, 0.0
        %v5140 = vsel %vm712, %v4706, 0.0
        %v5141 = vadd.f32 %v5139, %v5140
        %v5142 = vrot.slane %v5141, 4
        %v5143 = vadd.f32 %v5141, %v5142
        %v5144 = vrot.slane %v5143, 2
        %v5145 = vadd.f32 %v5143, %v5144
        %v5146 = vrot.slane %v5145, 1
        %v5147 = vadd.f32 %v5145, %v5146
        %v5148 = vsel %vm712, %v4707, 0.0
        %v5149 = vsel %vm712, %v4708, 0.0
        %v5150 = vadd.f32 %v5148, %v5149
        %v5151 = vrot.slane %v5150, 4
        %v5152 = vadd.f32 %v5150, %v5151
        %v5153 = vrot.slane %v5152, 2
        %v5154 = vadd.f32 %v5152, %v5153
        %v5155 = vrot.slane %v5154, 1
        %v5156 = vadd.f32 %v5154, %v5155
        %v5157 = vmax.f32 %v5021, 1e-20
        %v5158 = vmax.f32 %v5030, 1e-20
        %v5159 = vmax.f32 %v5039, 1e-20
        %v5160 = vmax.f32 %v5048, 1e-20
        %v5161 = vmax.f32 %v5057, 1e-20
        %v5162 = vmax.f32 %v5066, 1e-20
        %v5163 = vmax.f32 %v5075, 1e-20
        %v5164 = vmax.f32 %v5084, 1e-20
        %v5165 = vmax.f32 %v5093, 1e-20
        %v5166 = vmax.f32 %v5102, 1e-20
        %v5167 = vmax.f32 %v5111, 1e-20
        %v5168 = vmax.f32 %v5120, 1e-20
        %v5169 = vmax.f32 %v5129, 1e-20
        %v5170 = vmax.f32 %v5138, 1e-20
        %v5171 = vmax.f32 %v5147, 1e-20
        %v5172 = vmax.f32 %v5156, 1e-20
        %v5173 = vrcp.pop %v5157
        %v5174 = vmul.f32 %v4877, %v5173
        %v5175 = vrcp.pop %v5158
        %v5176 = vmul.f32 %v4886, %v5175
        %v5177 = vrcp.pop %v5159
        %v5178 = vmul.f32 %v4895, %v5177
        %v5179 = vrcp.pop %v5160
        %v5180 = vmul.f32 %v4904, %v5179
        %v5181 = vrcp.pop %v5161
        %v5182 = vmul.f32 %v4913, %v5181
        %v5183 = vrcp.pop %v5162
        %v5184 = vmul.f32 %v4922, %v5183
        %v5185 = vrcp.pop %v5163
        %v5186 = vmul.f32 %v4931, %v5185
        %v5187 = vrcp.pop %v5164
        %v5188 = vmul.f32 %v4940, %v5187
        %v5189 = vrcp.pop %v5165
        %v5190 = vmul.f32 %v4949, %v5189
        %v5191 = vrcp.pop %v5166
        %v5192 = vmul.f32 %v4958, %v5191
        %v5193 = vrcp.pop %v5167
        %v5194 = vmul.f32 %v4967, %v5193
        %v5195 = vrcp.pop %v5168
        %v5196 = vmul.f32 %v4976, %v5195
        %v5197 = vrcp.pop %v5169
        %v5198 = vmul.f32 %v4985, %v5197
        %v5199 = vrcp.pop %v5170
        %v5200 = vmul.f32 %v4994, %v5199
        %v5201 = vrcp.pop %v5171
        %v5202 = vmul.f32 %v5003, %v5201
        %v5203 = vrcp.pop %v5172
        %v5204 = vmul.f32 %v5012, %v5203
        %v5205 = vpack.c.bf16 %v5174, %v5174
        %v5206 = vpack.c.bf16 %v5176, %v5176
        %v5207 = vpack.c.bf16 %v5178, %v5178
        %v5208 = vpack.c.bf16 %v5180, %v5180
        %v5209 = vpack.c.bf16 %v5182, %v5182
        %v5210 = vpack.c.bf16 %v5184, %v5184
        %v5211 = vpack.c.bf16 %v5186, %v5186
        %v5212 = vpack.c.bf16 %v5188, %v5188
        %v5213 = vpack.c.bf16 %v5190, %v5190
        %v5214 = vpack.c.bf16 %v5192, %v5192
        %v5215 = vpack.c.bf16 %v5194, %v5194
        %v5216 = vpack.c.bf16 %v5196, %v5196
        %v5217 = vpack.c.bf16 %v5198, %v5198
        %v5218 = vpack.c.bf16 %v5200, %v5200
        %v5219 = vpack.c.bf16 %v5202, %v5202
        %v5220 = vpack.c.bf16 %v5204, %v5204
        %v5221 = vlaneseq
        %v5222 = vshrl.u32 %v5221, 7
        %v5223 = vsub.s32 0, %v5222
        %v5224 = vrot.slane %v3426, %v5223
        %v5241 = vunpack.c.l.b16 %v5205
        %v5242 = vunpack.c.l.b16 %v5206
        %v5243 = vunpack.c.l.b16 %v5207
        %v5244 = vunpack.c.l.b16 %v5208
        %v5245 = vunpack.c.l.b16 %v5209
        %v5246 = vunpack.c.l.b16 %v5210
        %v5247 = vunpack.c.l.b16 %v5211
        %v5248 = vunpack.c.l.b16 %v5212
        %v5249 = vunpack.c.l.b16 %v5213
        %v5250 = vunpack.c.l.b16 %v5214
        %v5251 = vunpack.c.l.b16 %v5215
        %v5252 = vunpack.c.l.b16 %v5216
        %v5253 = vunpack.c.l.b16 %v5217
        %v5254 = vunpack.c.l.b16 %v5218
        %v5255 = vunpack.c.l.b16 %v5219
        %v5256 = vunpack.c.l.b16 %v5220
        %vm5257 = vcmask 1041409
        %v5258 = vsel %vm5257, %v5242, %v5241
        %vm5259 = vcmask 1042434
        %v5260 = vsel %vm5259, %v5243, %v5258
        %vm5261 = vcmask 1043459
        %v5262 = vsel %vm5261, %v5244, %v5260
        %vm5263 = vcmask 1044484
        %v5264 = vsel %vm5263, %v5245, %v5262
        %vm5265 = vcmask 1045509
        %v5266 = vsel %vm5265, %v5246, %v5264
        %vm5267 = vcmask 1046534
        %v5268 = vsel %vm5267, %v5247, %v5266
        %vm5269 = vcmask 1047559
        %v5270 = vsel %vm5269, %v5248, %v5268
        %v5271 = vsel %vm5257, %v5250, %v5249
        %v5272 = vsel %vm5259, %v5251, %v5271
        %v5273 = vsel %vm5261, %v5252, %v5272
        %v5274 = vsel %vm5263, %v5253, %v5273
        %v5275 = vsel %vm5265, %v5254, %v5274
        %v5276 = vsel %vm5267, %v5255, %v5275
        %v5277 = vsel %vm5269, %v5256, %v5276
        %v5278 = vpack.c.b16 %v5277, %v5270
        %5281 = vrot.lane.b32.xlu0 %v3476, 96
        %v5282 = vpop.permute.xlu0 %5281
        %5283 = vrot.lane.b32.xlu0 %v3478, 96
        %v5284 = vpop.permute.xlu0 %5283
        %v5288 = vsel %vm712, %v5278, 0
        %5290 = vmatprep.subr.bf16.mxu0 0
        %5291 = vmatpush1.bf16.msra.mxu0 %v5282
        %5292 = vmatprep.subr.bf16.mxu0 0
        %5293 = vmatpush1.bf16.msra.mxu0 %v5284
        %5294 = vmatprep.subr.bf16.mxu0 0
        %5295 = vmatpush1.bf16.msra.mxu0 0
        %5296 = vmatprep.subr.bf16.mxu0 0
        %5297 = vmatpush1.bf16.msra.mxu0 0
        %5298 = vmatprep.subr.bf16.mxu0 0
        %5299 = vmatpush1.bf16.msra.mxu0 0
        %5300 = vmatprep.subr.bf16.mxu0 0
        %5301 = vmatpush1.bf16.msra.mxu0 0
        %5302 = vmatprep.subr.bf16.mxu0 0
        %5303 = vmatpush1.bf16.msra.mxu0 0
        %5304 = vmatprep.subr.bf16.mxu0 0
        %5305 = vmatpush1.bf16.msra.mxu0 0
        %5306 = vmatprep.subr.bf16.mxu0 0
        %5307 = vmatpush1.bf16.msra.mxu0 0
        %5308 = vmatprep.subr.bf16.mxu0 0
        %5309 = vmatpush1.bf16.msra.mxu0 0
        %5310 = vmatprep.subr.bf16.mxu0 0
        %5311 = vmatpush1.bf16.msra.mxu0 0
        %5312 = vmatprep.subr.bf16.mxu0 0
        %5313 = vmatpush1.bf16.msra.mxu0 0
        %5314 = vmatprep.subr.bf16.mxu0 0
        %5315 = vmatpush1.bf16.msra.mxu0 0
        %5316 = vmatprep.subr.bf16.mxu0 0
        %5317 = vmatpush1.bf16.msra.mxu0 0
        %5318 = vmatprep.subr.bf16.mxu0 0
        %5319 = vmatpush1.bf16.msra.mxu0 0
        %5320 = vmatprep.subr.bf16.mxu0 0
        %5321 = vmatpush1.bf16.msra.mxu0 0
        %5322 = vmatprep.mubr.bf16.mxu0 0
        %5323 = vmatmul.mubr.bf16.gmra.mrb[0].mxu0 %v5288
        %v5324 = vpop.f32.mrb[0].mxu0
        %v5325 = vadd.f32 %v5224, %v5324
        %v5326 = vpop.f32.mrb[0].mxu0
        %v5327 = vpop.f32.mrb[0].mxu0
        %v5328 = vadd.f32 %v5224, %v5327
        %v5329 = vpop.f32.mrb[0].mxu0
        %5330 = vdwg.mxu0
        %v5331 = vadd.f32 %v5325, %v3538
        %v5332 = vadd.f32 %v5328, %v3542
        %v5333 = vxor.u32 %v5331, 2147483648
        %v5334 = vxor.u32 %v5332, 2147483648
        %v5335 = vmul.f32 %v5333, 1.442695
        %v5336 = vpow.pop %v5335
        %v5337 = vmul.f32 %v5334, 1.442695
        %v5338 = vpow.pop %v5337
        %v5339 = vadd.f32 %v5336, 1.0
        %v5340 = vadd.f32 %v5338, 1.0
        %v5341 = vrcp.pop %v5339
        %v5342 = vmul.f32 1.0, %v5341
        %v5343 = vrcp.pop %v5340
        %v5344 = vmul.f32 1.0, %v5343
        %v5361 = vsel %vm5257, %v5176, %v5174
        %v5362 = vsel %vm5259, %v5178, %v5361
        %v5363 = vsel %vm5261, %v5180, %v5362
        %v5364 = vsel %vm5263, %v5182, %v5363
        %v5365 = vsel %vm5265, %v5184, %v5364
        %v5366 = vsel %vm5267, %v5186, %v5365
        %v5367 = vsel %vm5269, %v5188, %v5366
        %v5368 = vsel %vm5257, %v5192, %v5190
        %v5369 = vsel %vm5259, %v5194, %v5368
        %v5370 = vsel %vm5261, %v5196, %v5369
        %v5371 = vsel %vm5263, %v5198, %v5370
        %v5372 = vsel %vm5265, %v5200, %v5371
        %v5373 = vsel %vm5267, %v5202, %v5372
        %v5374 = vsel %vm5269, %v5204, %v5373
        %5375 = vrot.lane.b32.xlu0 %v5367, 96
        %v5376 = vpop.permute.xlu0 %5375
        %5377 = vrot.lane.b32.xlu0 %v5374, 96
        %v5378 = vpop.permute.xlu0 %5377
        %v5381 = vsub.f32 %v3536, %v5376
        %v5382 = vsub.f32 %v3540, %v5378
        %5385 = vrot.lane.b32.xlu0 %v5381, 32
        %v5386 = vpop.permute.xlu0 %5385
        %5387 = vrot.lane.b32.xlu0 %v5382, 32
        %v5388 = vpop.permute.xlu0 %5387
        %v5391 = vmul.f32 %v5342, %v5386
        %v5392 = vmul.f32 %v5344, %v5388
        %v5395 = vrot.slane %v5391, 1
        %v5396 = vrot.slane %v5391, 2
        %v5397 = vrot.slane %v5391, 3
        %v5398 = vrot.slane %v5391, 4
        %v5399 = vrot.slane %v5391, 5
        %v5400 = vrot.slane %v5391, 6
        %v5401 = vrot.slane %v5391, 7
        %v5402 = vrot.slane %v5392, 1
        %v5403 = vrot.slane %v5392, 2
        %v5404 = vrot.slane %v5392, 3
        %v5405 = vrot.slane %v5392, 4
        %v5406 = vrot.slane %v5392, 5
        %v5407 = vrot.slane %v5392, 6
        %v5408 = vrot.slane %v5392, 7
        %v5425 = vadd.f32 %v5174, %v5391
        %v5426 = vadd.f32 %v5176, %v5395
        %v5427 = vadd.f32 %v5178, %v5396
        %v5428 = vadd.f32 %v5180, %v5397
        %v5429 = vadd.f32 %v5182, %v5398
        %v5430 = vadd.f32 %v5184, %v5399
        %v5431 = vadd.f32 %v5186, %v5400
        %v5432 = vadd.f32 %v5188, %v5401
        %v5433 = vadd.f32 %v5190, %v5392
        %v5434 = vadd.f32 %v5192, %v5402
        %v5435 = vadd.f32 %v5194, %v5403
        %v5436 = vadd.f32 %v5196, %v5404
        %v5437 = vadd.f32 %v5198, %v5405
        %v5438 = vadd.f32 %v5200, %v5406
        %v5439 = vadd.f32 %v5202, %v5407
        %v5440 = vadd.f32 %v5204, %v5408
        %v5441 = vpack.c.bf16 %v5425, %v5425
        %v5442 = vpack.c.bf16 %v5426, %v5426
        %v5443 = vpack.c.bf16 %v5427, %v5427
        %v5444 = vpack.c.bf16 %v5428, %v5428
        %v5445 = vpack.c.bf16 %v5429, %v5429
        %v5446 = vpack.c.bf16 %v5430, %v5430
        %v5447 = vpack.c.bf16 %v5431, %v5431
        %v5448 = vpack.c.bf16 %v5432, %v5432
        %v5449 = vpack.c.bf16 %v5433, %v5433
        %v5450 = vpack.c.bf16 %v5434, %v5434
        %v5451 = vpack.c.bf16 %v5435, %v5435
        %v5452 = vpack.c.bf16 %v5436, %v5436
        %v5453 = vpack.c.bf16 %v5437, %v5437
        %v5454 = vpack.c.bf16 %v5438, %v5438
        %v5455 = vpack.c.bf16 %v5439, %v5439
        %v5456 = vpack.c.bf16 %v5440, %v5440
        %v5457 = vlaneseq
        %v5458 = vshrl.u32 %v5457, 7
        %v5459 = vsub.s32 1, %v5458
        %v5460 = vrot.slane %v3426, %v5459
        %v5477 = vunpack.c.l.b16 %v5441
        %v5478 = vunpack.c.l.b16 %v5442
        %v5479 = vunpack.c.l.b16 %v5443
        %v5480 = vunpack.c.l.b16 %v5444
        %v5481 = vunpack.c.l.b16 %v5445
        %v5482 = vunpack.c.l.b16 %v5446
        %v5483 = vunpack.c.l.b16 %v5447
        %v5484 = vunpack.c.l.b16 %v5448
        %v5485 = vunpack.c.l.b16 %v5449
        %v5486 = vunpack.c.l.b16 %v5450
        %v5487 = vunpack.c.l.b16 %v5451
        %v5488 = vunpack.c.l.b16 %v5452
        %v5489 = vunpack.c.l.b16 %v5453
        %v5490 = vunpack.c.l.b16 %v5454
        %v5491 = vunpack.c.l.b16 %v5455
        %v5492 = vunpack.c.l.b16 %v5456
        %v5493 = vrot.slane %v5478, 7
        %v5494 = vsel %vm5257, %v5493, %v5477
        %v5495 = vrot.slane %v5479, 6
        %v5496 = vsel %vm5259, %v5495, %v5494
        %v5497 = vrot.slane %v5480, 5
        %v5498 = vsel %vm5261, %v5497, %v5496
        %v5499 = vrot.slane %v5481, 4
        %v5500 = vsel %vm5263, %v5499, %v5498
        %v5501 = vrot.slane %v5482, 3
        %v5502 = vsel %vm5265, %v5501, %v5500
        %v5503 = vrot.slane %v5483, 2
        %v5504 = vsel %vm5267, %v5503, %v5502
        %v5505 = vrot.slane %v5484, 1
        %v5506 = vsel %vm5269, %v5505, %v5504
        %v5507 = vrot.slane %v5486, 7
        %v5508 = vsel %vm5257, %v5507, %v5485
        %v5509 = vrot.slane %v5487, 6
        %v5510 = vsel %vm5259, %v5509, %v5508
        %v5511 = vrot.slane %v5488, 5
        %v5512 = vsel %vm5261, %v5511, %v5510
        %v5513 = vrot.slane %v5489, 4
        %v5514 = vsel %vm5263, %v5513, %v5512
        %v5515 = vrot.slane %v5490, 3
        %v5516 = vsel %vm5265, %v5515, %v5514
        %v5517 = vrot.slane %v5491, 2
        %v5518 = vsel %vm5267, %v5517, %v5516
        %v5519 = vrot.slane %v5492, 1
        %v5520 = vsel %vm5269, %v5519, %v5518
        %v5521 = vpack.c.b16 %v5520, %v5506
        %5522 = vrot.lane.b32.xlu0 %v3476, 64
        %v5523 = vpop.permute.xlu0 %5522
        %5524 = vrot.lane.b32.xlu0 %v3478, 64
        %v5525 = vpop.permute.xlu0 %5524
        %v5529 = vsel %vm712, %v5521, 0
        %5531 = vmatprep.subr.bf16.mxu0 0
        %5532 = vmatpush1.bf16.msra.mxu0 %v5523
        %5533 = vmatprep.subr.bf16.mxu0 0
        %5534 = vmatpush1.bf16.msra.mxu0 %v5525
        %5535 = vmatprep.subr.bf16.mxu0 0
        %5536 = vmatpush1.bf16.msra.mxu0 0
        %5537 = vmatprep.subr.bf16.mxu0 0
        %5538 = vmatpush1.bf16.msra.mxu0 0
        %5539 = vmatprep.subr.bf16.mxu0 0
        %5540 = vmatpush1.bf16.msra.mxu0 0
        %5541 = vmatprep.subr.bf16.mxu0 0
        %5542 = vmatpush1.bf16.msra.mxu0 0
        %5543 = vmatprep.subr.bf16.mxu0 0
        %5544 = vmatpush1.bf16.msra.mxu0 0
        %5545 = vmatprep.subr.bf16.mxu0 0
        %5546 = vmatpush1.bf16.msra.mxu0 0
        %5547 = vmatprep.subr.bf16.mxu0 0
        %5548 = vmatpush1.bf16.msra.mxu0 0
        %5549 = vmatprep.subr.bf16.mxu0 0
        %5550 = vmatpush1.bf16.msra.mxu0 0
        %5551 = vmatprep.subr.bf16.mxu0 0
        %5552 = vmatpush1.bf16.msra.mxu0 0
        %5553 = vmatprep.subr.bf16.mxu0 0
        %5554 = vmatpush1.bf16.msra.mxu0 0
        %5555 = vmatprep.subr.bf16.mxu0 0
        %5556 = vmatpush1.bf16.msra.mxu0 0
        %5557 = vmatprep.subr.bf16.mxu0 0
        %5558 = vmatpush1.bf16.msra.mxu0 0
        %5559 = vmatprep.subr.bf16.mxu0 0
        %5560 = vmatpush1.bf16.msra.mxu0 0
        %5561 = vmatprep.subr.bf16.mxu0 0
        %5562 = vmatpush1.bf16.msra.mxu0 0
        %5563 = vmatprep.mubr.bf16.mxu0 0
        %5564 = vmatmul.mubr.bf16.gmra.mrb[0].mxu0 %v5529
        %v5565 = vpop.f32.mrb[0].mxu0
        %v5566 = vadd.f32 %v5460, %v5565
        %v5567 = vpop.f32.mrb[0].mxu0
        %v5568 = vpop.f32.mrb[0].mxu0
        %v5569 = vadd.f32 %v5460, %v5568
        %v5570 = vpop.f32.mrb[0].mxu0
        %5571 = vdwg.mxu0
        %v5572 = vadd.f32 %v3424, %v5566
        %v5573 = vadd.f32 %v3425, %v5569
        %v5574 = vsel %vm712, %v5572, 0.0
        %5575 = vadd.xlane.f32.xlu0 %v5574
        %v5576 = vpop.xlane.xlu0 %5575
        %v5577 = vsel %vm712, %v5573, 0.0
        %5578 = vadd.xlane.f32.xlu0 %v5577
        %v5579 = vpop.xlane.xlu0 %5578
        %v5580 = vmul.f32 %v5576, %v1914
        %v5581 = vmul.f32 %v5579, %v1914
        %v5582 = vsub.f32 %v5572, %v5580
        %v5583 = vsub.f32 %v5573, %v5581
        %v5584 = vmul.f32 %v5582, %v5582
        %v5585 = vmul.f32 %v5583, %v5583
        %v5586 = vsel %vm712, %v5584, 0.0
        %5587 = vadd.xlane.f32.xlu0 %v5586
        %v5588 = vpop.xlane.xlu0 %5587
        %v5589 = vsel %vm712, %v5585, 0.0
        %5590 = vadd.xlane.f32.xlu0 %v5589
        %v5591 = vpop.xlane.xlu0 %5590
        %v5592 = vmul.f32 %v5588, %v1914
        %v5593 = vmul.f32 %v5591, %v1914
        %v5594 = vadd.f32 %v5592, 1e-05
        %v5595 = vadd.f32 %v5593, 1e-05
        %v5596 = vrsqrt.pop %v5594
        %v5597 = vrsqrt.pop %v5595
        %v5598 = vmul.f32 %v5582, %v5596
        %v5599 = vmul.f32 %v5583, %v5597
        %v5600 = vlaneseq
        %v5601 = vshrl.u32 %v5600, 7
        %v5602 = vsub.s32 5, %v5601
        %v5603 = vrot.slane %v3426, %v5602
        %v5604 = vmul.f32 %v5598, %v5603
        %v5605 = vmul.f32 %v5599, %v5603
        %v5606 = vlaneseq
        %v5607 = vshrl.u32 %v5606, 7
        %v5608 = vsub.s32 6, %v5607
        %v5609 = vrot.slane %v3426, %v5608
        %v5610 = vadd.f32 %v5604, %v5609
        %v5611 = vadd.f32 %v5605, %v5609
        %v5612 = vld [vmem:[%s7] sm:$0xff]
        %v5613 = vld [vmem:[%s7 + $0x8] sm:$0xff]
        %v5614 = vld [vmem:[%s7 + $0x10] sm:$0xff]
        %v5615 = vld [vmem:[%s7 + $0x18] sm:$0xff]
        %v5616 = vpack.c.bf16 %v5611, %v5610
        %v5617 = vpack.c.bf16 %v5613, %v5612
        %v5618 = vpack.c.bf16 %v5615, %v5614
        %v5619 = vlaneseq
        %v5620 = vshrl.u32 %v5619, 7
        %v5621 = vsub.s32 1, %v5620
        %v5622 = vrot.slane %v3427, %v5621
        %v5624 = vsel %vm712, %v5616, 0
        %5626 = vmatprep.subr.bf16.mxu0 0
        %5627 = vmatpush1.bf16.msra.mxu0 %v5617
        %5628 = vmatprep.subr.bf16.mxu0 0
        %5629 = vmatpush1.bf16.msra.mxu0 %v5618
        %5630 = vmatprep.subr.bf16.mxu0 0
        %5631 = vmatpush1.bf16.msra.mxu0 0
        %5632 = vmatprep.subr.bf16.mxu0 0
        %5633 = vmatpush1.bf16.msra.mxu0 0
        %5634 = vmatprep.subr.bf16.mxu0 0
        %5635 = vmatpush1.bf16.msra.mxu0 0
        %5636 = vmatprep.subr.bf16.mxu0 0
        %5637 = vmatpush1.bf16.msra.mxu0 0
        %5638 = vmatprep.subr.bf16.mxu0 0
        %5639 = vmatpush1.bf16.msra.mxu0 0
        %5640 = vmatprep.subr.bf16.mxu0 0
        %5641 = vmatpush1.bf16.msra.mxu0 0
        %5642 = vmatprep.subr.bf16.mxu0 0
        %5643 = vmatpush1.bf16.msra.mxu0 0
        %5644 = vmatprep.subr.bf16.mxu0 0
        %5645 = vmatpush1.bf16.msra.mxu0 0
        %5646 = vmatprep.subr.bf16.mxu0 0
        %5647 = vmatpush1.bf16.msra.mxu0 0
        %5648 = vmatprep.subr.bf16.mxu0 0
        %5649 = vmatpush1.bf16.msra.mxu0 0
        %5650 = vmatprep.subr.bf16.mxu0 0
        %5651 = vmatpush1.bf16.msra.mxu0 0
        %5652 = vmatprep.subr.bf16.mxu0 0
        %5653 = vmatpush1.bf16.msra.mxu0 0
        %5654 = vmatprep.subr.bf16.mxu0 0
        %5655 = vmatpush1.bf16.msra.mxu0 0
        %5656 = vmatprep.subr.bf16.mxu0 0
        %5657 = vmatpush1.bf16.msra.mxu0 0
        %5658 = vmatprep.mubr.bf16.mxu0 0
        %5659 = vmatmul.mubr.bf16.gmra.mrb[0].mxu0 %v5624
        %v5660 = vpop.f32.mrb[0].mxu0
        %v5661 = vadd.f32 %v5622, %v5660
        %v5662 = vpop.f32.mrb[0].mxu0
        %v5663 = vpop.f32.mrb[0].mxu0
        %v5664 = vadd.f32 %v5622, %v5663
        %v5665 = vpop.f32.mrb[0].mxu0
        %5666 = vdwg.mxu0
        %v5667 = vmax.f32 %v5661, 0.0
        %v5668 = vmax.f32 %v5664, 0.0
        %v5669 = vld [vmem:[%s8] sm:$0xff]
        %v5670 = vld [vmem:[%s8 + $0x8] sm:$0xff]
        %v5671 = vld [vmem:[%s8 + $0x10] sm:$0xff]
        %v5672 = vld [vmem:[%s8 + $0x18] sm:$0xff]
        %v5673 = vld [vmem:[%s8 + $0x20] sm:$0xff]
        %v5674 = vld [vmem:[%s8 + $0x28] sm:$0xff]
        %v5675 = vld [vmem:[%s8 + $0x30] sm:$0xff]
        %v5676 = vld [vmem:[%s8 + $0x38] sm:$0xff]
        %v5677 = vld [vmem:[%s8 + $0x40] sm:$0xff]
        %v5678 = vld [vmem:[%s8 + $0x48] sm:$0xff]
        %v5679 = vld [vmem:[%s8 + $0x50] sm:$0xff]
        %v5680 = vld [vmem:[%s8 + $0x58] sm:$0xff]
        %v5681 = vld [vmem:[%s8 + $0x60] sm:$0xff]
        %v5682 = vld [vmem:[%s8 + $0x68] sm:$0xff]
        %v5683 = vld [vmem:[%s8 + $0x70] sm:$0xff]
        %v5684 = vld [vmem:[%s8 + $0x78] sm:$0xff]
        %v5685 = vpack.c.bf16 %v5668, %v5667
        %v5686 = vpack.c.bf16 %v5670, %v5669
        %v5687 = vpack.c.bf16 %v5672, %v5671
        %v5688 = vpack.c.bf16 %v5674, %v5673
        %v5689 = vpack.c.bf16 %v5676, %v5675
        %v5690 = vpack.c.bf16 %v5678, %v5677
        %v5691 = vpack.c.bf16 %v5680, %v5679
        %v5692 = vpack.c.bf16 %v5682, %v5681
        %v5693 = vpack.c.bf16 %v5684, %v5683
        %5694 = vmatprep.subr.bf16.mxu0 0
        %5695 = vmatpush1.bf16.msra.mxu0 %v5686
        %5696 = vmatprep.subr.bf16.mxu0 0
        %5697 = vmatpush1.bf16.msra.mxu0 %v5687
        %5698 = vmatprep.subr.bf16.mxu0 0
        %5699 = vmatpush1.bf16.msra.mxu0 %v5688
        %5700 = vmatprep.subr.bf16.mxu0 0
        %5701 = vmatpush1.bf16.msra.mxu0 %v5689
        %5702 = vmatprep.subr.bf16.mxu0 0
        %5703 = vmatpush1.bf16.msra.mxu0 %v5690
        %5704 = vmatprep.subr.bf16.mxu0 0
        %5705 = vmatpush1.bf16.msra.mxu0 %v5691
        %5706 = vmatprep.subr.bf16.mxu0 0
        %5707 = vmatpush1.bf16.msra.mxu0 %v5692
        %5708 = vmatprep.subr.bf16.mxu0 0
        %5709 = vmatpush1.bf16.msra.mxu0 %v5693
        %5710 = vmatprep.subr.bf16.mxu0 0
        %5711 = vmatpush1.bf16.msra.mxu0 0
        %5712 = vmatprep.subr.bf16.mxu0 0
        %5713 = vmatpush1.bf16.msra.mxu0 0
        %5714 = vmatprep.subr.bf16.mxu0 0
        %5715 = vmatpush1.bf16.msra.mxu0 0
        %5716 = vmatprep.subr.bf16.mxu0 0
        %5717 = vmatpush1.bf16.msra.mxu0 0
        %5718 = vmatprep.subr.bf16.mxu0 0
        %5719 = vmatpush1.bf16.msra.mxu0 0
        %5720 = vmatprep.subr.bf16.mxu0 0
        %5721 = vmatpush1.bf16.msra.mxu0 0
        %5722 = vmatprep.subr.bf16.mxu0 0
        %5723 = vmatpush1.bf16.msra.mxu0 0
        %5724 = vmatprep.subr.bf16.mxu0 0
        %5725 = vmatpush1.bf16.msra.mxu0 0
        %5726 = vmatprep.mubr.bf16.mxu0 0
        %5727 = vmatmul.mubr.bf16.gmra.mrb[0].mxu0 %v5685
        %v5728 = vpop.f32.mrb[0].mxu0
        %v5729 = vadd.f32 0.0, %v5728
        %v5730 = vpop.f32.mrb[0].mxu0
        %v5731 = vpop.f32.mrb[0].mxu0
        %v5732 = vadd.f32 0.0, %v5731
        %v5733 = vpop.f32.mrb[0].mxu0
        %5734 = vdwg.mxu0
        %v5735 = vadd.f32 %v5572, %v5729
        %v5736 = vadd.f32 %v5573, %v5732
        %v5737 = vlaneseq
        %v5738 = vshrl.u32 %v5737, 7
        %v5739 = vsub.s32 2, %v5738
        %v5740 = vrot.slane %v3426, %v5739
        %v5741 = vadd.f32 %v5735, %v5740
        %v5742 = vadd.f32 %v5736, %v5740
        %s5743 = scalar_lea.vmem %s10, 8
        %v5744 = vld [vmem:[%s5743] sm:$0xff]
        %s5745 = scalar_lea.vmem %s9, 4
        %v5746 = vld [vmem:[%s5745] sm:$0xf]
        %s5747 = scalar_lea.vmem %s6, 64
        %v5748 = vld [vmem:[%s5747] sm:$0xff]
        %v5749 = vld [vmem:[%s5747 + $0x8] sm:$0xff]
        %v5750 = vld [vmem:[%s5747 + $0x10] sm:$0xff]
        %v5751 = vld [vmem:[%s5747 + $0x18] sm:$0xff]
        %v5752 = vld [vmem:[%s5747 + $0x20] sm:$0xff]
        %v5753 = vld [vmem:[%s5747 + $0x28] sm:$0xff]
        %v5754 = vld [vmem:[%s5747 + $0x30] sm:$0xff]
        %v5755 = vld [vmem:[%s5747 + $0x38] sm:$0xff]
        %v5756 = vsel %vm712, %v5741, 0.0
        %5757 = vadd.xlane.f32.xlu0 %v5756
        %v5758 = vpop.xlane.xlu0 %5757
        %v5759 = vsel %vm712, %v5742, 0.0
        %5760 = vadd.xlane.f32.xlu0 %v5759
        %v5761 = vpop.xlane.xlu0 %5760
        %v5762 = vmul.f32 %v5758, %v1914
        %v5763 = vmul.f32 %v5761, %v1914
        %v5764 = vsub.f32 %v5741, %v5762
        %v5765 = vsub.f32 %v5742, %v5763
        %v5766 = vmul.f32 %v5764, %v5764
        %v5767 = vmul.f32 %v5765, %v5765
        %v5768 = vsel %vm712, %v5766, 0.0
        %5769 = vadd.xlane.f32.xlu0 %v5768
        %v5770 = vpop.xlane.xlu0 %5769
        %v5771 = vsel %vm712, %v5767, 0.0
        %5772 = vadd.xlane.f32.xlu0 %v5771
        %v5773 = vpop.xlane.xlu0 %5772
        %v5774 = vmul.f32 %v5770, %v1914
        %v5775 = vmul.f32 %v5773, %v1914
        %v5776 = vadd.f32 %v5774, 1e-05
        %v5777 = vadd.f32 %v5775, 1e-05
        %v5778 = vrsqrt.pop %v5776
        %v5779 = vrsqrt.pop %v5777
        %v5780 = vmul.f32 %v5764, %v5778
        %v5781 = vmul.f32 %v5765, %v5779
        %v5782 = vlaneseq
        %v5783 = vshrl.u32 %v5782, 7
        %v5784 = vsub.s32 3, %v5783
        %v5785 = vrot.slane %v5744, %v5784
        %v5786 = vmul.f32 %v5780, %v5785
        %v5787 = vmul.f32 %v5781, %v5785
        %v5788 = vlaneseq
        %v5789 = vshrl.u32 %v5788, 7
        %v5790 = vsub.s32 4, %v5789
        %v5791 = vrot.slane %v5744, %v5790
        %v5792 = vadd.f32 %v5786, %v5791
        %v5793 = vadd.f32 %v5787, %v5791
        %v5794 = vpack.c.bf16 %v5793, %v5792
        %v5795 = vpack.c.bf16 %v5750, %v5748
        %v5796 = vpack.c.bf16 %v5751, %v5749
        %v5797 = vpack.c.bf16 %v5754, %v5752
        %v5798 = vpack.c.bf16 %v5755, %v5753
        %v5800 = vlaneseq
        %v5801 = vshrl.u32 %v5800, 7
        %v5802 = vsub.s32 0, %v5801
        %v5803 = vrot.slane %v5746, %v5802
        %v5804 = vlaneseq
        %v5805 = vshrl.u32 %v5804, 7
        %v5806 = vsub.s32 2, %v5805
        %v5807 = vrot.slane %v5746, %v5806
        %v5810 = vlaneseq
        %v5811 = vshrl.u32 %v5810, 7
        %v5812 = vsub.s32 0, %v5811
        %v5813 = vrot.slane %v5803, %v5812
        %v5814 = vlaneseq
        %v5815 = vshrl.u32 %v5814, 7
        %v5816 = vsub.s32 0, %v5815
        %v5817 = vrot.slane %v5807, %v5816
        %v5819 = vsel %vm712, %v5794, 0
        %5821 = vmatprep.subr.bf16.mxu0 %v5796
        %5822 = vmatpush1.bf16.msra.mxu0 %v5795
        %5823 = vmatprep.subr.bf16.mxu0 %v5798
        %5824 = vmatpush1.bf16.msra.mxu0 %v5797
        %5825 = vmatprep.subr.bf16.mxu0 0
        %5826 = vmatpush1.bf16.msra.mxu0 0
        %5827 = vmatprep.subr.bf16.mxu0 0
        %5828 = vmatpush1.bf16.msra.mxu0 0
        %5829 = vmatprep.subr.bf16.mxu0 0
        %5830 = vmatpush1.bf16.msra.mxu0 0
        %5831 = vmatprep.subr.bf16.mxu0 0
        %5832 = vmatpush1.bf16.msra.mxu0 0
        %5833 = vmatprep.subr.bf16.mxu0 0
        %5834 = vmatpush1.bf16.msra.mxu0 0
        %5835 = vmatprep.subr.bf16.mxu0 0
        %5836 = vmatpush1.bf16.msra.mxu0 0
        %5837 = vmatprep.subr.bf16.mxu0 0
        %5838 = vmatpush1.bf16.msra.mxu0 0
        %5839 = vmatprep.subr.bf16.mxu0 0
        %5840 = vmatpush1.bf16.msra.mxu0 0
        %5841 = vmatprep.subr.bf16.mxu0 0
        %5842 = vmatpush1.bf16.msra.mxu0 0
        %5843 = vmatprep.subr.bf16.mxu0 0
        %5844 = vmatpush1.bf16.msra.mxu0 0
        %5845 = vmatprep.subr.bf16.mxu0 0
        %5846 = vmatpush1.bf16.msra.mxu0 0
        %5847 = vmatprep.subr.bf16.mxu0 0
        %5848 = vmatpush1.bf16.msra.mxu0 0
        %5849 = vmatprep.subr.bf16.mxu0 0
        %5850 = vmatpush1.bf16.msra.mxu0 0
        %5851 = vmatprep.subr.bf16.mxu0 0
        %5852 = vmatpush1.bf16.msra.mxu0 0
        %5853 = vmatprep.mubr.bf16.mxu0 0
        %5854 = vmatmul.mubr.bf16.gmra.mrb[0].mxu0 %v5819
        %v5855 = vpop.f32.mrb[0].mxu0
        %v5856 = vadd.f32 %v5813, %v5855
        %v5857 = vpop.f32.mrb[0].mxu0
        %v5858 = vadd.f32 %v5817, %v5857
        %v5859 = vpop.f32.mrb[0].mxu0
        %v5860 = vadd.f32 %v5813, %v5859
        %v5861 = vpop.f32.mrb[0].mxu0
        %v5862 = vadd.f32 %v5817, %v5861
        %5863 = vdwg.mxu0
        %v5864 = vld [vmem:[#allocation2] sm:$0xff]
        %v5865 = vld [vmem:[#allocation2 + $0x10] sm:$0xff]
        %v5866 = vld [vmem:[#allocation2 + $0x20] sm:$0xff]
        %v5867 = vld [vmem:[#allocation2 + $0x30] sm:$0xff]
        %v5868 = vld [vmem:[#allocation2 + $0x40] sm:$0xff]
        %v5869 = vld [vmem:[#allocation2 + $0x50] sm:$0xff]
        %v5870 = vld [vmem:[#allocation2 + $0x60] sm:$0xff]
        %v5871 = vld [vmem:[#allocation2 + $0x70] sm:$0xff]
        %v5872 = vld [vmem:[#allocation2 + $0x80] sm:$0xff]
        %v5873 = vld [vmem:[#allocation2 + $0x90] sm:$0xff]
        %v5874 = vld [vmem:[#allocation2 + $0xa0] sm:$0xff]
        %v5875 = vld [vmem:[#allocation2 + $0xb0] sm:$0xff]
        %v5876 = vld [vmem:[#allocation2 + $0xc0] sm:$0xff]
        %v5877 = vld [vmem:[#allocation2 + $0xd0] sm:$0xff]
        %v5878 = vld [vmem:[#allocation2 + $0xe0] sm:$0xff]
        %v5879 = vld [vmem:[#allocation2 + $0xf0] sm:$0xff]
        %v5880 = vld [vmem:[#allocation2 + $0x100] sm:$0xff]
        %v5881 = vld [vmem:[#allocation2 + $0x110] sm:$0xff]
        %v5882 = vld [vmem:[#allocation2 + $0x120] sm:$0xff]
        %v5883 = vld [vmem:[#allocation2 + $0x130] sm:$0xff]
        %v5884 = vld [vmem:[#allocation2 + $0x140] sm:$0xff]
        %v5885 = vld [vmem:[#allocation2 + $0x150] sm:$0xff]
        %v5886 = vld [vmem:[#allocation2 + $0x160] sm:$0xff]
        %v5887 = vld [vmem:[#allocation2 + $0x170] sm:$0xff]
        %v5888 = vld [vmem:[#allocation2 + $0x180] sm:$0xff]
        %v5889 = vld [vmem:[#allocation2 + $0x190] sm:$0xff]
        %v5890 = vld [vmem:[#allocation2 + $0x1a0] sm:$0xff]
        %v5891 = vld [vmem:[#allocation2 + $0x1b0] sm:$0xff]
        %v5892 = vld [vmem:[#allocation2 + $0x1c0] sm:$0xff]
        %v5893 = vld [vmem:[#allocation2 + $0x1d0] sm:$0xff]
        %v5894 = vld [vmem:[#allocation2 + $0x1e0] sm:$0xff]
        %v5895 = vld [vmem:[#allocation2 + $0x1f0] sm:$0xff]
        %5898 = vrot.lane.b32.xlu0 %v5856, 32
        %v5899 = vpop.permute.xlu0 %5898
        %5900 = vrot.lane.b32.xlu0 %v5860, 32
        %v5901 = vpop.permute.xlu0 %5900
        %v5904 = vadd.f32 %v5864, %v5899
        %v5905 = vadd.f32 %v5865, %v5901
        %v5906 = vadd.f32 %v5866, %v5899
        %v5907 = vadd.f32 %v5867, %v5901
        %v5908 = vadd.f32 %v5868, %v5899
        %v5909 = vadd.f32 %v5869, %v5901
        %v5910 = vadd.f32 %v5870, %v5899
        %v5911 = vadd.f32 %v5871, %v5901
        %v5912 = vadd.f32 %v5872, %v5899
        %v5913 = vadd.f32 %v5873, %v5901
        %v5914 = vadd.f32 %v5874, %v5899
        %v5915 = vadd.f32 %v5875, %v5901
        %v5916 = vadd.f32 %v5876, %v5899
        %v5917 = vadd.f32 %v5877, %v5901
        %v5918 = vadd.f32 %v5878, %v5899
        %v5919 = vadd.f32 %v5879, %v5901
        %v5920 = vadd.f32 %v5880, %v5899
        %v5921 = vadd.f32 %v5881, %v5901
        %v5922 = vadd.f32 %v5882, %v5899
        %v5923 = vadd.f32 %v5883, %v5901
        %v5924 = vadd.f32 %v5884, %v5899
        %v5925 = vadd.f32 %v5885, %v5901
        %v5926 = vadd.f32 %v5886, %v5899
        %v5927 = vadd.f32 %v5887, %v5901
        %v5928 = vadd.f32 %v5888, %v5899
        %v5929 = vadd.f32 %v5889, %v5901
        %v5930 = vadd.f32 %v5890, %v5899
        %v5931 = vadd.f32 %v5891, %v5901
        %v5932 = vadd.f32 %v5892, %v5899
        %v5933 = vadd.f32 %v5893, %v5901
        %v5934 = vadd.f32 %v5894, %v5899
        %v5935 = vadd.f32 %v5895, %v5901
        %v5936 = vcombine.high %v5856, %v5856
        %v5938 = vunpack.c.l.s4 1966171168
        %v5939 = vunpack.c.0.s8 %v5938
        %v5940 = vlaneseq
        %v5941 = vshrl.u32 %v5940, 7
        %v5942 = vsub.s32 %v5939, %v5941
        %v5943 = vrot.slane %v5856, %v5942
        %v5945 = vunpack.c.l.s4 1966171168
        %v5946 = vunpack.c.0.s8 %v5945
        %v5947 = vlaneseq
        %v5948 = vshrl.u32 %v5947, 7
        %v5949 = vsub.s32 %v5946, %v5948
        %v5950 = vrot.slane %v5936, %v5949
        %v5951 = vcombine.high %v5943, %v5943
        %v5952 = vcombine.high %v5950, %v5950
        %v5954 = vunpack.c.l.s4 1966171168
        %v5955 = vunpack.c.0.s8 %v5954
        %v5956 = vlaneseq
        %v5957 = vshrl.u32 %v5956, 7
        %v5958 = vsub.s32 %v5955, %v5957
        %v5959 = vrot.slane %v5943, %v5958
        %v5961 = vunpack.c.l.s4 1966171168
        %v5962 = vunpack.c.0.s8 %v5961
        %v5963 = vlaneseq
        %v5964 = vshrl.u32 %v5963, 7
        %v5965 = vsub.s32 %v5962, %v5964
        %v5966 = vrot.slane %v5950, %v5965
        %v5968 = vunpack.c.l.s4 1966171168
        %v5969 = vunpack.c.0.s8 %v5968
        %v5970 = vlaneseq
        %v5971 = vshrl.u32 %v5970, 7
        %v5972 = vsub.s32 %v5969, %v5971
        %v5973 = vrot.slane %v5951, %v5972
        %v5975 = vunpack.c.l.s4 1966171168
        %v5976 = vunpack.c.0.s8 %v5975
        %v5977 = vlaneseq
        %v5978 = vshrl.u32 %v5977, 7
        %v5979 = vsub.s32 %v5976, %v5978
        %v5980 = vrot.slane %v5952, %v5979
        %v5981 = vcombine.high %v5959, %v5959
        %v5982 = vcombine.high %v5966, %v5966
        %v5983 = vcombine.high %v5973, %v5973
        %v5984 = vcombine.high %v5980, %v5980
        %v5985 = vcombine.high %v5860, %v5860
        %v5987 = vunpack.c.l.s4 1966171168
        %v5988 = vunpack.c.0.s8 %v5987
        %v5989 = vlaneseq
        %v5990 = vshrl.u32 %v5989, 7
        %v5991 = vsub.s32 %v5988, %v5990
        %v5992 = vrot.slane %v5860, %v5991
        %v5994 = vunpack.c.l.s4 1966171168
        %v5995 = vunpack.c.0.s8 %v5994
        %v5996 = vlaneseq
        %v5997 = vshrl.u32 %v5996, 7
        %v5998 = vsub.s32 %v5995, %v5997
        %v5999 = vrot.slane %v5985, %v5998
        %v6000 = vcombine.high %v5992, %v5992
        %v6001 = vcombine.high %v5999, %v5999
        %v6003 = vunpack.c.l.s4 1966171168
        %v6004 = vunpack.c.0.s8 %v6003
        %v6005 = vlaneseq
        %v6006 = vshrl.u32 %v6005, 7
        %v6007 = vsub.s32 %v6004, %v6006
        %v6008 = vrot.slane %v5992, %v6007
        %v6010 = vunpack.c.l.s4 1966171168
        %v6011 = vunpack.c.0.s8 %v6010
        %v6012 = vlaneseq
        %v6013 = vshrl.u32 %v6012, 7
        %v6014 = vsub.s32 %v6011, %v6013
        %v6015 = vrot.slane %v5999, %v6014
        %v6017 = vunpack.c.l.s4 1966171168
        %v6018 = vunpack.c.0.s8 %v6017
        %v6019 = vlaneseq
        %v6020 = vshrl.u32 %v6019, 7
        %v6021 = vsub.s32 %v6018, %v6020
        %v6022 = vrot.slane %v6000, %v6021
        %v6024 = vunpack.c.l.s4 1966171168
        %v6025 = vunpack.c.0.s8 %v6024
        %v6026 = vlaneseq
        %v6027 = vshrl.u32 %v6026, 7
        %v6028 = vsub.s32 %v6025, %v6027
        %v6029 = vrot.slane %v6001, %v6028
        %v6030 = vcombine.high %v6008, %v6008
        %v6031 = vcombine.high %v6015, %v6015
        %v6032 = vcombine.high %v6022, %v6022
        %v6033 = vcombine.high %v6029, %v6029
        %v6034 = vlaneseq
        %v6035 = vshrl.u32 %v6034, 7
        %v6036 = vsub.s32 0, %v6035
        %v6037 = vrot.slane %v5959, %v6036
        %v6038 = vlaneseq
        %v6039 = vshrl.u32 %v6038, 7
        %v6040 = vsub.s32 0, %v6039
        %v6041 = vrot.slane %v5973, %v6040
        %v6042 = vlaneseq
        %v6043 = vshrl.u32 %v6042, 7
        %v6044 = vsub.s32 0, %v6043
        %v6045 = vrot.slane %v5981, %v6044
        %v6046 = vlaneseq
        %v6047 = vshrl.u32 %v6046, 7
        %v6048 = vsub.s32 0, %v6047
        %v6049 = vrot.slane %v5983, %v6048
        %v6050 = vlaneseq
        %v6051 = vshrl.u32 %v6050, 7
        %v6052 = vsub.s32 0, %v6051
        %v6053 = vrot.slane %v5966, %v6052
        %v6054 = vlaneseq
        %v6055 = vshrl.u32 %v6054, 7
        %v6056 = vsub.s32 0, %v6055
        %v6057 = vrot.slane %v5980, %v6056
        %v6058 = vlaneseq
        %v6059 = vshrl.u32 %v6058, 7
        %v6060 = vsub.s32 0, %v6059
        %v6061 = vrot.slane %v5982, %v6060
        %v6062 = vlaneseq
        %v6063 = vshrl.u32 %v6062, 7
        %v6064 = vsub.s32 0, %v6063
        %v6065 = vrot.slane %v5984, %v6064
        %v6066 = vlaneseq
        %v6067 = vshrl.u32 %v6066, 7
        %v6068 = vsub.s32 0, %v6067
        %v6069 = vrot.slane %v6008, %v6068
        %v6070 = vlaneseq
        %v6071 = vshrl.u32 %v6070, 7
        %v6072 = vsub.s32 0, %v6071
        %v6073 = vrot.slane %v6022, %v6072
        %v6074 = vlaneseq
        %v6075 = vshrl.u32 %v6074, 7
        %v6076 = vsub.s32 0, %v6075
        %v6077 = vrot.slane %v6030, %v6076
        %v6078 = vlaneseq
        %v6079 = vshrl.u32 %v6078, 7
        %v6080 = vsub.s32 0, %v6079
        %v6081 = vrot.slane %v6032, %v6080
        %v6082 = vlaneseq
        %v6083 = vshrl.u32 %v6082, 7
        %v6084 = vsub.s32 0, %v6083
        %v6085 = vrot.slane %v6015, %v6084
        %v6086 = vlaneseq
        %v6087 = vshrl.u32 %v6086, 7
        %v6088 = vsub.s32 0, %v6087
        %v6089 = vrot.slane %v6029, %v6088
        %v6090 = vlaneseq
        %v6091 = vshrl.u32 %v6090, 7
        %v6092 = vsub.s32 0, %v6091
        %v6093 = vrot.slane %v6031, %v6092
        %v6094 = vlaneseq
        %v6095 = vshrl.u32 %v6094, 7
        %v6096 = vsub.s32 0, %v6095
        %v6097 = vrot.slane %v6033, %v6096
        %6146 = vrot.lane.b32.xlu0 %v5904, 64
        %v6147 = vpop.permute.xlu0 %6146
        %6148 = vrot.lane.b32.xlu0 %v5905, 64
        %v6149 = vpop.permute.xlu0 %6148
        %6150 = vrot.lane.b32.xlu0 %v5906, 64
        %v6151 = vpop.permute.xlu0 %6150
        %6152 = vrot.lane.b32.xlu0 %v5907, 64
        %v6153 = vpop.permute.xlu0 %6152
        %6154 = vrot.lane.b32.xlu0 %v5908, 64
        %v6155 = vpop.permute.xlu0 %6154
        %6156 = vrot.lane.b32.xlu0 %v5909, 64
        %v6157 = vpop.permute.xlu0 %6156
        %6158 = vrot.lane.b32.xlu0 %v5910, 64
        %v6159 = vpop.permute.xlu0 %6158
        %6160 = vrot.lane.b32.xlu0 %v5911, 64
        %v6161 = vpop.permute.xlu0 %6160
        %6162 = vrot.lane.b32.xlu0 %v5912, 64
        %v6163 = vpop.permute.xlu0 %6162
        %6164 = vrot.lane.b32.xlu0 %v5913, 64
        %v6165 = vpop.permute.xlu0 %6164
        %6166 = vrot.lane.b32.xlu0 %v5914, 64
        %v6167 = vpop.permute.xlu0 %6166
        %6168 = vrot.lane.b32.xlu0 %v5915, 64
        %v6169 = vpop.permute.xlu0 %6168
        %6170 = vrot.lane.b32.xlu0 %v5916, 64
        %v6171 = vpop.permute.xlu0 %6170
        %6172 = vrot.lane.b32.xlu0 %v5917, 64
        %v6173 = vpop.permute.xlu0 %6172
        %6174 = vrot.lane.b32.xlu0 %v5918, 64
        %v6175 = vpop.permute.xlu0 %6174
        %6176 = vrot.lane.b32.xlu0 %v5919, 64
        %v6177 = vpop.permute.xlu0 %6176
        %6178 = vrot.lane.b32.xlu0 %v5920, 64
        %v6179 = vpop.permute.xlu0 %6178
        %6180 = vrot.lane.b32.xlu0 %v5921, 64
        %v6181 = vpop.permute.xlu0 %6180
        %6182 = vrot.lane.b32.xlu0 %v5922, 64
        %v6183 = vpop.permute.xlu0 %6182
        %6184 = vrot.lane.b32.xlu0 %v5923, 64
        %v6185 = vpop.permute.xlu0 %6184
        %6186 = vrot.lane.b32.xlu0 %v5924, 64
        %v6187 = vpop.permute.xlu0 %6186
        %6188 = vrot.lane.b32.xlu0 %v5925, 64
        %v6189 = vpop.permute.xlu0 %6188
        %6190 = vrot.lane.b32.xlu0 %v5926, 64
        %v6191 = vpop.permute.xlu0 %6190
        %6192 = vrot.lane.b32.xlu0 %v5927, 64
        %v6193 = vpop.permute.xlu0 %6192
        %6194 = vrot.lane.b32.xlu0 %v5928, 64
        %v6195 = vpop.permute.xlu0 %6194
        %6196 = vrot.lane.b32.xlu0 %v5929, 64
        %v6197 = vpop.permute.xlu0 %6196
        %6198 = vrot.lane.b32.xlu0 %v5930, 64
        %v6199 = vpop.permute.xlu0 %6198
        %6200 = vrot.lane.b32.xlu0 %v5931, 64
        %v6201 = vpop.permute.xlu0 %6200
        %6202 = vrot.lane.b32.xlu0 %v5932, 64
        %v6203 = vpop.permute.xlu0 %6202
        %6204 = vrot.lane.b32.xlu0 %v5933, 64
        %v6205 = vpop.permute.xlu0 %6204
        %6206 = vrot.lane.b32.xlu0 %v5934, 64
        %v6207 = vpop.permute.xlu0 %6206
        %6208 = vrot.lane.b32.xlu0 %v5935, 64
        %v6209 = vpop.permute.xlu0 %6208
        %v6242 = vmul.f32 %v6037, %v6147
        %v6243 = vmul.f32 %v6037, %v6149
        %v6244 = vmul.f32 %v6041, %v6151
        %v6245 = vmul.f32 %v6041, %v6153
        %v6246 = vmul.f32 %v6045, %v6155
        %v6247 = vmul.f32 %v6045, %v6157
        %v6248 = vmul.f32 %v6049, %v6159
        %v6249 = vmul.f32 %v6049, %v6161
        %v6250 = vmul.f32 %v6053, %v6163
        %v6251 = vmul.f32 %v6053, %v6165
        %v6252 = vmul.f32 %v6057, %v6167
        %v6253 = vmul.f32 %v6057, %v6169
        %v6254 = vmul.f32 %v6061, %v6171
        %v6255 = vmul.f32 %v6061, %v6173
        %v6256 = vmul.f32 %v6065, %v6175
        %v6257 = vmul.f32 %v6065, %v6177
        %v6258 = vmul.f32 %v6069, %v6179
        %v6259 = vmul.f32 %v6069, %v6181
        %v6260 = vmul.f32 %v6073, %v6183
        %v6261 = vmul.f32 %v6073, %v6185
        %v6262 = vmul.f32 %v6077, %v6187
        %v6263 = vmul.f32 %v6077, %v6189
        %v6264 = vmul.f32 %v6081, %v6191
        %v6265 = vmul.f32 %v6081, %v6193
        %v6266 = vmul.f32 %v6085, %v6195
        %v6267 = vmul.f32 %v6085, %v6197
        %v6268 = vmul.f32 %v6089, %v6199
        %v6269 = vmul.f32 %v6089, %v6201
        %v6270 = vmul.f32 %v6093, %v6203
        %v6271 = vmul.f32 %v6093, %v6205
        %v6272 = vmul.f32 %v6097, %v6207
        %v6273 = vmul.f32 %v6097, %v6209
        %v6274 = vpack.c.bf16 %v6243, %v6242
        %v6275 = vpack.c.bf16 %v6245, %v6244
        %v6276 = vpack.c.bf16 %v6247, %v6246
        %v6277 = vpack.c.bf16 %v6249, %v6248
        %v6278 = vpack.c.bf16 %v6251, %v6250
        %v6279 = vpack.c.bf16 %v6253, %v6252
        %v6280 = vpack.c.bf16 %v6255, %v6254
        %v6281 = vpack.c.bf16 %v6257, %v6256
        %v6282 = vpack.c.bf16 %v6259, %v6258
        %v6283 = vpack.c.bf16 %v6261, %v6260
        %v6284 = vpack.c.bf16 %v6263, %v6262
        %v6285 = vpack.c.bf16 %v6265, %v6264
        %v6286 = vpack.c.bf16 %v6267, %v6266
        %v6287 = vpack.c.bf16 %v6269, %v6268
        %v6288 = vpack.c.bf16 %v6271, %v6270
        %v6289 = vpack.c.bf16 %v6273, %v6272
        %v6291 = vsel %vm712, %v6274, 0
        %v6294 = vsel %vm712, %v6275, 0
        %v6297 = vsel %vm712, %v6276, 0
        %v6300 = vsel %vm712, %v6277, 0
        %v6303 = vsel %vm712, %v6278, 0
        %v6306 = vsel %vm712, %v6279, 0
        %v6309 = vsel %vm712, %v6280, 0
        %v6312 = vsel %vm712, %v6281, 0
        %v6315 = vsel %vm712, %v6282, 0
        %v6318 = vsel %vm712, %v6283, 0
        %v6321 = vsel %vm712, %v6284, 0
        %v6324 = vsel %vm712, %v6285, 0
        %v6327 = vsel %vm712, %v6286, 0
        %v6330 = vsel %vm712, %v6287, 0
        %v6333 = vsel %vm712, %v6288, 0
        %v6336 = vsel %vm712, %v6289, 0
        %6338 = vmatprep.subr.bf16.mxu0 0
        %6339 = vmatpush1.bf16.msra.mxu0 %v3842
        %6340 = vmatprep.subr.bf16.mxu0 0
        %6341 = vmatpush1.bf16.msra.mxu0 %v3843
        %6342 = vmatprep.subr.bf16.mxu0 0
        %6343 = vmatpush1.bf16.msra.mxu0 0
        %6344 = vmatprep.subr.bf16.mxu0 0
        %6345 = vmatpush1.bf16.msra.mxu0 0
        %6346 = vmatprep.subr.bf16.mxu0 0
        %6347 = vmatpush1.bf16.msra.mxu0 0
        %6348 = vmatprep.subr.bf16.mxu0 0
        %6349 = vmatpush1.bf16.msra.mxu0 0
        %6350 = vmatprep.subr.bf16.mxu0 0
        %6351 = vmatpush1.bf16.msra.mxu0 0
        %6352 = vmatprep.subr.bf16.mxu0 0
        %6353 = vmatpush1.bf16.msra.mxu0 0
        %6354 = vmatprep.subr.bf16.mxu0 0
        %6355 = vmatpush1.bf16.msra.mxu0 0
        %6356 = vmatprep.subr.bf16.mxu0 0
        %6357 = vmatpush1.bf16.msra.mxu0 0
        %6358 = vmatprep.subr.bf16.mxu0 0
        %6359 = vmatpush1.bf16.msra.mxu0 0
        %6360 = vmatprep.subr.bf16.mxu0 0
        %6361 = vmatpush1.bf16.msra.mxu0 0
        %6362 = vmatprep.subr.bf16.mxu0 0
        %6363 = vmatpush1.bf16.msra.mxu0 0
        %6364 = vmatprep.subr.bf16.mxu0 0
        %6365 = vmatpush1.bf16.msra.mxu0 0
        %6366 = vmatprep.subr.bf16.mxu0 0
        %6367 = vmatpush1.bf16.msra.mxu0 0
        %6368 = vmatprep.subr.bf16.mxu0 0
        %6369 = vmatpush1.bf16.msra.mxu0 0
        %6370 = vmatprep.mubr.bf16.mxu0 0
        %6371 = vmatmul.mubr.bf16.gmra.mrb[0].mxu0 %v6291
        %v6372 = vpop.f32.mrb[0].mxu0
        %v6373 = vadd.f32 0.0, %v6372
        %v6374 = vpop.f32.mrb[0].mxu0
        %v6375 = vpop.f32.mrb[0].mxu0
        %v6376 = vadd.f32 0.0, %v6375
        %v6377 = vpop.f32.mrb[0].mxu0
        %6378 = vmatprep.mubr.bf16.mxu0 0
        %6379 = vmatmul.mubr.bf16.gmra.mrb[0].mxu0 %v6294
        %v6380 = vpop.f32.mrb[0].mxu0
        %v6381 = vadd.f32 0.0, %v6380
        %v6382 = vpop.f32.mrb[0].mxu0
        %v6383 = vpop.f32.mrb[0].mxu0
        %v6384 = vadd.f32 0.0, %v6383
        %v6385 = vpop.f32.mrb[0].mxu0
        %6386 = vmatprep.mubr.bf16.mxu0 0
        %6387 = vmatmul.mubr.bf16.gmra.mrb[0].mxu0 %v6297
        %v6388 = vpop.f32.mrb[0].mxu0
        %v6389 = vadd.f32 0.0, %v6388
        %v6390 = vpop.f32.mrb[0].mxu0
        %v6391 = vpop.f32.mrb[0].mxu0
        %v6392 = vadd.f32 0.0, %v6391
        %v6393 = vpop.f32.mrb[0].mxu0
        %6394 = vmatprep.mubr.bf16.mxu0 0
        %6395 = vmatmul.mubr.bf16.gmra.mrb[0].mxu0 %v6300
        %v6396 = vpop.f32.mrb[0].mxu0
        %v6397 = vadd.f32 0.0, %v6396
        %v6398 = vpop.f32.mrb[0].mxu0
        %v6399 = vpop.f32.mrb[0].mxu0
        %v6400 = vadd.f32 0.0, %v6399
        %v6401 = vpop.f32.mrb[0].mxu0
        %6402 = vmatprep.mubr.bf16.mxu0 0
        %6403 = vmatmul.mubr.bf16.gmra.mrb[0].mxu0 %v6303
        %v6404 = vpop.f32.mrb[0].mxu0
        %v6405 = vadd.f32 0.0, %v6404
        %v6406 = vpop.f32.mrb[0].mxu0
        %v6407 = vpop.f32.mrb[0].mxu0
        %v6408 = vadd.f32 0.0, %v6407
        %v6409 = vpop.f32.mrb[0].mxu0
        %6410 = vmatprep.mubr.bf16.mxu0 0
        %6411 = vmatmul.mubr.bf16.gmra.mrb[0].mxu0 %v6306
        %v6412 = vpop.f32.mrb[0].mxu0
        %v6413 = vadd.f32 0.0, %v6412
        %v6414 = vpop.f32.mrb[0].mxu0
        %v6415 = vpop.f32.mrb[0].mxu0
        %v6416 = vadd.f32 0.0, %v6415
        %v6417 = vpop.f32.mrb[0].mxu0
        %6418 = vmatprep.mubr.bf16.mxu0 0
        %6419 = vmatmul.mubr.bf16.gmra.mrb[0].mxu0 %v6309
        %v6420 = vpop.f32.mrb[0].mxu0
        %v6421 = vadd.f32 0.0, %v6420
        %v6422 = vpop.f32.mrb[0].mxu0
        %v6423 = vpop.f32.mrb[0].mxu0
        %v6424 = vadd.f32 0.0, %v6423
        %v6425 = vpop.f32.mrb[0].mxu0
        %6426 = vmatprep.mubr.bf16.mxu0 0
        %6427 = vmatmul.mubr.bf16.gmra.mrb[0].mxu0 %v6312
        %v6428 = vpop.f32.mrb[0].mxu0
        %v6429 = vadd.f32 0.0, %v6428
        %v6430 = vpop.f32.mrb[0].mxu0
        %v6431 = vpop.f32.mrb[0].mxu0
        %v6432 = vadd.f32 0.0, %v6431
        %v6433 = vpop.f32.mrb[0].mxu0
        %6434 = vmatprep.mubr.bf16.mxu0 0
        %6435 = vmatmul.mubr.bf16.gmra.mrb[0].mxu0 %v6315
        %v6436 = vpop.f32.mrb[0].mxu0
        %v6437 = vadd.f32 0.0, %v6436
        %v6438 = vpop.f32.mrb[0].mxu0
        %v6439 = vpop.f32.mrb[0].mxu0
        %v6440 = vadd.f32 0.0, %v6439
        %v6441 = vpop.f32.mrb[0].mxu0
        %6442 = vmatprep.mubr.bf16.mxu0 0
        %6443 = vmatmul.mubr.bf16.gmra.mrb[0].mxu0 %v6318
        %v6444 = vpop.f32.mrb[0].mxu0
        %v6445 = vadd.f32 0.0, %v6444
        %v6446 = vpop.f32.mrb[0].mxu0
        %v6447 = vpop.f32.mrb[0].mxu0
        %v6448 = vadd.f32 0.0, %v6447
        %v6449 = vpop.f32.mrb[0].mxu0
        %6450 = vmatprep.mubr.bf16.mxu0 0
        %6451 = vmatmul.mubr.bf16.gmra.mrb[0].mxu0 %v6321
        %v6452 = vpop.f32.mrb[0].mxu0
        %v6453 = vadd.f32 0.0, %v6452
        %v6454 = vpop.f32.mrb[0].mxu0
        %v6455 = vpop.f32.mrb[0].mxu0
        %v6456 = vadd.f32 0.0, %v6455
        %v6457 = vpop.f32.mrb[0].mxu0
        %6458 = vmatprep.mubr.bf16.mxu0 0
        %6459 = vmatmul.mubr.bf16.gmra.mrb[0].mxu0 %v6324
        %v6460 = vpop.f32.mrb[0].mxu0
        %v6461 = vadd.f32 0.0, %v6460
        %v6462 = vpop.f32.mrb[0].mxu0
        %v6463 = vpop.f32.mrb[0].mxu0
        %v6464 = vadd.f32 0.0, %v6463
        %v6465 = vpop.f32.mrb[0].mxu0
        %6466 = vmatprep.mubr.bf16.mxu0 0
        %6467 = vmatmul.mubr.bf16.gmra.mrb[0].mxu0 %v6327
        %v6468 = vpop.f32.mrb[0].mxu0
        %v6469 = vadd.f32 0.0, %v6468
        %v6470 = vpop.f32.mrb[0].mxu0
        %v6471 = vpop.f32.mrb[0].mxu0
        %v6472 = vadd.f32 0.0, %v6471
        %v6473 = vpop.f32.mrb[0].mxu0
        %6474 = vmatprep.mubr.bf16.mxu0 0
        %6475 = vmatmul.mubr.bf16.gmra.mrb[0].mxu0 %v6330
        %v6476 = vpop.f32.mrb[0].mxu0
        %v6477 = vadd.f32 0.0, %v6476
        %v6478 = vpop.f32.mrb[0].mxu0
        %v6479 = vpop.f32.mrb[0].mxu0
        %v6480 = vadd.f32 0.0, %v6479
        %v6481 = vpop.f32.mrb[0].mxu0
        %6482 = vmatprep.mubr.bf16.mxu0 0
        %6483 = vmatmul.mubr.bf16.gmra.mrb[0].mxu0 %v6333
        %v6484 = vpop.f32.mrb[0].mxu0
        %v6485 = vadd.f32 0.0, %v6484
        %v6486 = vpop.f32.mrb[0].mxu0
        %v6487 = vpop.f32.mrb[0].mxu0
        %v6488 = vadd.f32 0.0, %v6487
        %v6489 = vpop.f32.mrb[0].mxu0
        %6490 = vmatprep.mubr.bf16.mxu0 0
        %6491 = vmatmul.mubr.bf16.gmra.mrb[0].mxu0 %v6336
        %v6492 = vpop.f32.mrb[0].mxu0
        %v6493 = vadd.f32 0.0, %v6492
        %v6494 = vpop.f32.mrb[0].mxu0
        %v6495 = vpop.f32.mrb[0].mxu0
        %v6496 = vadd.f32 0.0, %v6495
        %v6497 = vpop.f32.mrb[0].mxu0
        %6498 = vdwg.mxu0
        %v6499 = vsel %vm4213, %v6373, -1e+30
        %v6500 = vsel %vm4214, %v6376, -1e+30
        %v6501 = vsel %vm4215, %v6381, -1e+30
        %v6502 = vsel %vm4216, %v6384, -1e+30
        %v6503 = vsel %vm4217, %v6389, -1e+30
        %v6504 = vsel %vm4218, %v6392, -1e+30
        %v6505 = vsel %vm4219, %v6397, -1e+30
        %v6506 = vsel %vm4220, %v6400, -1e+30
        %v6507 = vsel %vm4221, %v6405, -1e+30
        %v6508 = vsel %vm4222, %v6408, -1e+30
        %v6509 = vsel %vm4223, %v6413, -1e+30
        %v6510 = vsel %vm4224, %v6416, -1e+30
        %v6511 = vsel %vm4225, %v6421, -1e+30
        %v6512 = vsel %vm4226, %v6424, -1e+30
        %v6513 = vsel %vm4227, %v6429, -1e+30
        %v6514 = vsel %vm4228, %v6432, -1e+30
        %v6515 = vsel %vm4229, %v6437, -1e+30
        %v6516 = vsel %vm4230, %v6440, -1e+30
        %v6517 = vsel %vm4231, %v6445, -1e+30
        %v6518 = vsel %vm4232, %v6448, -1e+30
        %v6519 = vsel %vm4233, %v6453, -1e+30
        %v6520 = vsel %vm4234, %v6456, -1e+30
        %v6521 = vsel %vm4235, %v6461, -1e+30
        %v6522 = vsel %vm4236, %v6464, -1e+30
        %v6523 = vsel %vm4237, %v6469, -1e+30
        %v6524 = vsel %vm4238, %v6472, -1e+30
        %v6525 = vsel %vm4239, %v6477, -1e+30
        %v6526 = vsel %vm4240, %v6480, -1e+30
        %v6527 = vsel %vm4241, %v6485, -1e+30
        %v6528 = vsel %vm4242, %v6488, -1e+30
        %v6529 = vsel %vm4243, %v6493, -1e+30
        %v6530 = vsel %vm4244, %v6496, -1e+30
        %v6531 = vsel %vm712, %v6499, -inf
        %v6532 = vsel %vm712, %v6500, -inf
        %v6533 = vmax.f32 %v6531, %v6532
        %v6534 = vrot.slane %v6533, 4
        %v6535 = vmax.f32 %v6533, %v6534
        %v6536 = vrot.slane %v6535, 2
        %v6537 = vmax.f32 %v6535, %v6536
        %v6538 = vrot.slane %v6537, 1
        %v6539 = vmax.f32 %v6537, %v6538
        %v6540 = vsel %vm712, %v6501, -inf
        %v6541 = vsel %vm712, %v6502, -inf
        %v6542 = vmax.f32 %v6540, %v6541
        %v6543 = vrot.slane %v6542, 4
        %v6544 = vmax.f32 %v6542, %v6543
        %v6545 = vrot.slane %v6544, 2
        %v6546 = vmax.f32 %v6544, %v6545
        %v6547 = vrot.slane %v6546, 1
        %v6548 = vmax.f32 %v6546, %v6547
        %v6549 = vsel %vm712, %v6503, -inf
        %v6550 = vsel %vm712, %v6504, -inf
        %v6551 = vmax.f32 %v6549, %v6550
        %v6552 = vrot.slane %v6551, 4
        %v6553 = vmax.f32 %v6551, %v6552
        %v6554 = vrot.slane %v6553, 2
        %v6555 = vmax.f32 %v6553, %v6554
        %v6556 = vrot.slane %v6555, 1
        %v6557 = vmax.f32 %v6555, %v6556
        %v6558 = vsel %vm712, %v6505, -inf
        %v6559 = vsel %vm712, %v6506, -inf
        %v6560 = vmax.f32 %v6558, %v6559
        %v6561 = vrot.slane %v6560, 4
        %v6562 = vmax.f32 %v6560, %v6561
        %v6563 = vrot.slane %v6562, 2
        %v6564 = vmax.f32 %v6562, %v6563
        %v6565 = vrot.slane %v6564, 1
        %v6566 = vmax.f32 %v6564, %v6565
        %v6567 = vsel %vm712, %v6507, -inf
        %v6568 = vsel %vm712, %v6508, -inf
        %v6569 = vmax.f32 %v6567, %v6568
        %v6570 = vrot.slane %v6569, 4
        %v6571 = vmax.f32 %v6569, %v6570
        %v6572 = vrot.slane %v6571, 2
        %v6573 = vmax.f32 %v6571, %v6572
        %v6574 = vrot.slane %v6573, 1
        %v6575 = vmax.f32 %v6573, %v6574
        %v6576 = vsel %vm712, %v6509, -inf
        %v6577 = vsel %vm712, %v6510, -inf
        %v6578 = vmax.f32 %v6576, %v6577
        %v6579 = vrot.slane %v6578, 4
        %v6580 = vmax.f32 %v6578, %v6579
        %v6581 = vrot.slane %v6580, 2
        %v6582 = vmax.f32 %v6580, %v6581
        %v6583 = vrot.slane %v6582, 1
        %v6584 = vmax.f32 %v6582, %v6583
        %v6585 = vsel %vm712, %v6511, -inf
        %v6586 = vsel %vm712, %v6512, -inf
        %v6587 = vmax.f32 %v6585, %v6586
        %v6588 = vrot.slane %v6587, 4
        %v6589 = vmax.f32 %v6587, %v6588
        %v6590 = vrot.slane %v6589, 2
        %v6591 = vmax.f32 %v6589, %v6590
        %v6592 = vrot.slane %v6591, 1
        %v6593 = vmax.f32 %v6591, %v6592
        %v6594 = vsel %vm712, %v6513, -inf
        %v6595 = vsel %vm712, %v6514, -inf
        %v6596 = vmax.f32 %v6594, %v6595
        %v6597 = vrot.slane %v6596, 4
        %v6598 = vmax.f32 %v6596, %v6597
        %v6599 = vrot.slane %v6598, 2
        %v6600 = vmax.f32 %v6598, %v6599
        %v6601 = vrot.slane %v6600, 1
        %v6602 = vmax.f32 %v6600, %v6601
        %v6603 = vsel %vm712, %v6515, -inf
        %v6604 = vsel %vm712, %v6516, -inf
        %v6605 = vmax.f32 %v6603, %v6604
        %v6606 = vrot.slane %v6605, 4
        %v6607 = vmax.f32 %v6605, %v6606
        %v6608 = vrot.slane %v6607, 2
        %v6609 = vmax.f32 %v6607, %v6608
        %v6610 = vrot.slane %v6609, 1
        %v6611 = vmax.f32 %v6609, %v6610
        %v6612 = vsel %vm712, %v6517, -inf
        %v6613 = vsel %vm712, %v6518, -inf
        %v6614 = vmax.f32 %v6612, %v6613
        %v6615 = vrot.slane %v6614, 4
        %v6616 = vmax.f32 %v6614, %v6615
        %v6617 = vrot.slane %v6616, 2
        %v6618 = vmax.f32 %v6616, %v6617
        %v6619 = vrot.slane %v6618, 1
        %v6620 = vmax.f32 %v6618, %v6619
        %v6621 = vsel %vm712, %v6519, -inf
        %v6622 = vsel %vm712, %v6520, -inf
        %v6623 = vmax.f32 %v6621, %v6622
        %v6624 = vrot.slane %v6623, 4
        %v6625 = vmax.f32 %v6623, %v6624
        %v6626 = vrot.slane %v6625, 2
        %v6627 = vmax.f32 %v6625, %v6626
        %v6628 = vrot.slane %v6627, 1
        %v6629 = vmax.f32 %v6627, %v6628
        %v6630 = vsel %vm712, %v6521, -inf
        %v6631 = vsel %vm712, %v6522, -inf
        %v6632 = vmax.f32 %v6630, %v6631
        %v6633 = vrot.slane %v6632, 4
        %v6634 = vmax.f32 %v6632, %v6633
        %v6635 = vrot.slane %v6634, 2
        %v6636 = vmax.f32 %v6634, %v6635
        %v6637 = vrot.slane %v6636, 1
        %v6638 = vmax.f32 %v6636, %v6637
        %v6639 = vsel %vm712, %v6523, -inf
        %v6640 = vsel %vm712, %v6524, -inf
        %v6641 = vmax.f32 %v6639, %v6640
        %v6642 = vrot.slane %v6641, 4
        %v6643 = vmax.f32 %v6641, %v6642
        %v6644 = vrot.slane %v6643, 2
        %v6645 = vmax.f32 %v6643, %v6644
        %v6646 = vrot.slane %v6645, 1
        %v6647 = vmax.f32 %v6645, %v6646
        %v6648 = vsel %vm712, %v6525, -inf
        %v6649 = vsel %vm712, %v6526, -inf
        %v6650 = vmax.f32 %v6648, %v6649
        %v6651 = vrot.slane %v6650, 4
        %v6652 = vmax.f32 %v6650, %v6651
        %v6653 = vrot.slane %v6652, 2
        %v6654 = vmax.f32 %v6652, %v6653
        %v6655 = vrot.slane %v6654, 1
        %v6656 = vmax.f32 %v6654, %v6655
        %v6657 = vsel %vm712, %v6527, -inf
        %v6658 = vsel %vm712, %v6528, -inf
        %v6659 = vmax.f32 %v6657, %v6658
        %v6660 = vrot.slane %v6659, 4
        %v6661 = vmax.f32 %v6659, %v6660
        %v6662 = vrot.slane %v6661, 2
        %v6663 = vmax.f32 %v6661, %v6662
        %v6664 = vrot.slane %v6663, 1
        %v6665 = vmax.f32 %v6663, %v6664
        %v6666 = vsel %vm712, %v6529, -inf
        %v6667 = vsel %vm712, %v6530, -inf
        %v6668 = vmax.f32 %v6666, %v6667
        %v6669 = vrot.slane %v6668, 4
        %v6670 = vmax.f32 %v6668, %v6669
        %v6671 = vrot.slane %v6670, 2
        %v6672 = vmax.f32 %v6670, %v6671
        %v6673 = vrot.slane %v6672, 1
        %v6674 = vmax.f32 %v6672, %v6673
        %v6675 = vsub.f32 %v6499, %v6539
        %v6676 = vsub.f32 %v6500, %v6539
        %v6677 = vsub.f32 %v6501, %v6548
        %v6678 = vsub.f32 %v6502, %v6548
        %v6679 = vsub.f32 %v6503, %v6557
        %v6680 = vsub.f32 %v6504, %v6557
        %v6681 = vsub.f32 %v6505, %v6566
        %v6682 = vsub.f32 %v6506, %v6566
        %v6683 = vsub.f32 %v6507, %v6575
        %v6684 = vsub.f32 %v6508, %v6575
        %v6685 = vsub.f32 %v6509, %v6584
        %v6686 = vsub.f32 %v6510, %v6584
        %v6687 = vsub.f32 %v6511, %v6593
        %v6688 = vsub.f32 %v6512, %v6593
        %v6689 = vsub.f32 %v6513, %v6602
        %v6690 = vsub.f32 %v6514, %v6602
        %v6691 = vsub.f32 %v6515, %v6611
        %v6692 = vsub.f32 %v6516, %v6611
        %v6693 = vsub.f32 %v6517, %v6620
        %v6694 = vsub.f32 %v6518, %v6620
        %v6695 = vsub.f32 %v6519, %v6629
        %v6696 = vsub.f32 %v6520, %v6629
        %v6697 = vsub.f32 %v6521, %v6638
        %v6698 = vsub.f32 %v6522, %v6638
        %v6699 = vsub.f32 %v6523, %v6647
        %v6700 = vsub.f32 %v6524, %v6647
        %v6701 = vsub.f32 %v6525, %v6656
        %v6702 = vsub.f32 %v6526, %v6656
        %v6703 = vsub.f32 %v6527, %v6665
        %v6704 = vsub.f32 %v6528, %v6665
        %v6705 = vsub.f32 %v6529, %v6674
        %v6706 = vsub.f32 %v6530, %v6674
        %v6707 = vmul.f32 %v6675, 1.442695
        %v6708 = vpow.pop %v6707
        %v6709 = vmul.f32 %v6676, 1.442695
        %v6710 = vpow.pop %v6709
        %v6711 = vmul.f32 %v6677, 1.442695
        %v6712 = vpow.pop %v6711
        %v6713 = vmul.f32 %v6678, 1.442695
        %v6714 = vpow.pop %v6713
        %v6715 = vmul.f32 %v6679, 1.442695
        %v6716 = vpow.pop %v6715
        %v6717 = vmul.f32 %v6680, 1.442695
        %v6718 = vpow.pop %v6717
        %v6719 = vmul.f32 %v6681, 1.442695
        %v6720 = vpow.pop %v6719
        %v6721 = vmul.f32 %v6682, 1.442695
        %v6722 = vpow.pop %v6721
        %v6723 = vmul.f32 %v6683, 1.442695
        %v6724 = vpow.pop %v6723
        %v6725 = vmul.f32 %v6684, 1.442695
        %v6726 = vpow.pop %v6725
        %v6727 = vmul.f32 %v6685, 1.442695
        %v6728 = vpow.pop %v6727
        %v6729 = vmul.f32 %v6686, 1.442695
        %v6730 = vpow.pop %v6729
        %v6731 = vmul.f32 %v6687, 1.442695
        %v6732 = vpow.pop %v6731
        %v6733 = vmul.f32 %v6688, 1.442695
        %v6734 = vpow.pop %v6733
        %v6735 = vmul.f32 %v6689, 1.442695
        %v6736 = vpow.pop %v6735
        %v6737 = vmul.f32 %v6690, 1.442695
        %v6738 = vpow.pop %v6737
        %v6739 = vmul.f32 %v6691, 1.442695
        %v6740 = vpow.pop %v6739
        %v6741 = vmul.f32 %v6692, 1.442695
        %v6742 = vpow.pop %v6741
        %v6743 = vmul.f32 %v6693, 1.442695
        %v6744 = vpow.pop %v6743
        %v6745 = vmul.f32 %v6694, 1.442695
        %v6746 = vpow.pop %v6745
        %v6747 = vmul.f32 %v6695, 1.442695
        %v6748 = vpow.pop %v6747
        %v6749 = vmul.f32 %v6696, 1.442695
        %v6750 = vpow.pop %v6749
        %v6751 = vmul.f32 %v6697, 1.442695
        %v6752 = vpow.pop %v6751
        %v6753 = vmul.f32 %v6698, 1.442695
        %v6754 = vpow.pop %v6753
        %v6755 = vmul.f32 %v6699, 1.442695
        %v6756 = vpow.pop %v6755
        %v6757 = vmul.f32 %v6700, 1.442695
        %v6758 = vpow.pop %v6757
        %v6759 = vmul.f32 %v6701, 1.442695
        %v6760 = vpow.pop %v6759
        %v6761 = vmul.f32 %v6702, 1.442695
        %v6762 = vpow.pop %v6761
        %v6763 = vmul.f32 %v6703, 1.442695
        %v6764 = vpow.pop %v6763
        %v6765 = vmul.f32 %v6704, 1.442695
        %v6766 = vpow.pop %v6765
        %v6767 = vmul.f32 %v6705, 1.442695
        %v6768 = vpow.pop %v6767
        %v6769 = vmul.f32 %v6706, 1.442695
        %v6770 = vpow.pop %v6769
        %v6771 = vmul.f32 %v6708, %v4520
        %v6772 = vmul.f32 %v6710, %v4525
        %v6773 = vmul.f32 %v6712, %v4530
        %v6774 = vmul.f32 %v6714, %v4535
        %v6775 = vmul.f32 %v6716, %v4540
        %v6776 = vmul.f32 %v6718, %v4545
        %v6777 = vmul.f32 %v6720, %v4550
        %v6778 = vmul.f32 %v6722, %v4555
        %v6779 = vmul.f32 %v6724, %v4560
        %v6780 = vmul.f32 %v6726, %v4565
        %v6781 = vmul.f32 %v6728, %v4570
        %v6782 = vmul.f32 %v6730, %v4575
        %v6783 = vmul.f32 %v6732, %v4580
        %v6784 = vmul.f32 %v6734, %v4585
        %v6785 = vmul.f32 %v6736, %v4590
        %v6786 = vmul.f32 %v6738, %v4595
        %v6787 = vmul.f32 %v6740, %v4600
        %v6788 = vmul.f32 %v6742, %v4605
        %v6789 = vmul.f32 %v6744, %v4610
        %v6790 = vmul.f32 %v6746, %v4615
        %v6791 = vmul.f32 %v6748, %v4620
        %v6792 = vmul.f32 %v6750, %v4625
        %v6793 = vmul.f32 %v6752, %v4630
        %v6794 = vmul.f32 %v6754, %v4635
        %v6795 = vmul.f32 %v6756, %v4640
        %v6796 = vmul.f32 %v6758, %v4645
        %v6797 = vmul.f32 %v6760, %v4650
        %v6798 = vmul.f32 %v6762, %v4655
        %v6799 = vmul.f32 %v6764, %v4660
        %v6800 = vmul.f32 %v6766, %v4665
        %v6801 = vmul.f32 %v6768, %v4670
        %v6802 = vmul.f32 %v6770, %v4675
        %6803 = vrot.lane.b32.xlu0 %v5904, 32
        %v6804 = vpop.permute.xlu0 %6803
        %6805 = vrot.lane.b32.xlu0 %v5905, 32
        %v6806 = vpop.permute.xlu0 %6805
        %6807 = vrot.lane.b32.xlu0 %v5906, 32
        %v6808 = vpop.permute.xlu0 %6807
        %6809 = vrot.lane.b32.xlu0 %v5907, 32
        %v6810 = vpop.permute.xlu0 %6809
        %6811 = vrot.lane.b32.xlu0 %v5908, 32
        %v6812 = vpop.permute.xlu0 %6811
        %6813 = vrot.lane.b32.xlu0 %v5909, 32
        %v6814 = vpop.permute.xlu0 %6813
        %6815 = vrot.lane.b32.xlu0 %v5910, 32
        %v6816 = vpop.permute.xlu0 %6815
        %6817 = vrot.lane.b32.xlu0 %v5911, 32
        %v6818 = vpop.permute.xlu0 %6817
        %6819 = vrot.lane.b32.xlu0 %v5912, 32
        %v6820 = vpop.permute.xlu0 %6819
        %6821 = vrot.lane.b32.xlu0 %v5913, 32
        %v6822 = vpop.permute.xlu0 %6821
        %6823 = vrot.lane.b32.xlu0 %v5914, 32
        %v6824 = vpop.permute.xlu0 %6823
        %6825 = vrot.lane.b32.xlu0 %v5915, 32
        %v6826 = vpop.permute.xlu0 %6825
        %6827 = vrot.lane.b32.xlu0 %v5916, 32
        %v6828 = vpop.permute.xlu0 %6827
        %6829 = vrot.lane.b32.xlu0 %v5917, 32
        %v6830 = vpop.permute.xlu0 %6829
        %6831 = vrot.lane.b32.xlu0 %v5918, 32
        %v6832 = vpop.permute.xlu0 %6831
        %6833 = vrot.lane.b32.xlu0 %v5919, 32
        %v6834 = vpop.permute.xlu0 %6833
        %6835 = vrot.lane.b32.xlu0 %v5920, 32
        %v6836 = vpop.permute.xlu0 %6835
        %6837 = vrot.lane.b32.xlu0 %v5921, 32
        %v6838 = vpop.permute.xlu0 %6837
        %6839 = vrot.lane.b32.xlu0 %v5922, 32
        %v6840 = vpop.permute.xlu0 %6839
        %6841 = vrot.lane.b32.xlu0 %v5923, 32
        %v6842 = vpop.permute.xlu0 %6841
        %6843 = vrot.lane.b32.xlu0 %v5924, 32
        %v6844 = vpop.permute.xlu0 %6843
        %6845 = vrot.lane.b32.xlu0 %v5925, 32
        %v6846 = vpop.permute.xlu0 %6845
        %6847 = vrot.lane.b32.xlu0 %v5926, 32
        %v6848 = vpop.permute.xlu0 %6847
        %6849 = vrot.lane.b32.xlu0 %v5927, 32
        %v6850 = vpop.permute.xlu0 %6849
        %6851 = vrot.lane.b32.xlu0 %v5928, 32
        %v6852 = vpop.permute.xlu0 %6851
        %6853 = vrot.lane.b32.xlu0 %v5929, 32
        %v6854 = vpop.permute.xlu0 %6853
        %6855 = vrot.lane.b32.xlu0 %v5930, 32
        %v6856 = vpop.permute.xlu0 %6855
        %6857 = vrot.lane.b32.xlu0 %v5931, 32
        %v6858 = vpop.permute.xlu0 %6857
        %6859 = vrot.lane.b32.xlu0 %v5932, 32
        %v6860 = vpop.permute.xlu0 %6859
        %6861 = vrot.lane.b32.xlu0 %v5933, 32
        %v6862 = vpop.permute.xlu0 %6861
        %6863 = vrot.lane.b32.xlu0 %v5934, 32
        %v6864 = vpop.permute.xlu0 %6863
        %6865 = vrot.lane.b32.xlu0 %v5935, 32
        %v6866 = vpop.permute.xlu0 %6865
        %v6899 = vmul.f32 %v6771, %v6804
        %v6900 = vmul.f32 %v6772, %v6806
        %v6901 = vmul.f32 %v6773, %v6808
        %v6902 = vmul.f32 %v6774, %v6810
        %v6903 = vmul.f32 %v6775, %v6812
        %v6904 = vmul.f32 %v6776, %v6814
        %v6905 = vmul.f32 %v6777, %v6816
        %v6906 = vmul.f32 %v6778, %v6818
        %v6907 = vmul.f32 %v6779, %v6820
        %v6908 = vmul.f32 %v6780, %v6822
        %v6909 = vmul.f32 %v6781, %v6824
        %v6910 = vmul.f32 %v6782, %v6826
        %v6911 = vmul.f32 %v6783, %v6828
        %v6912 = vmul.f32 %v6784, %v6830
        %v6913 = vmul.f32 %v6785, %v6832
        %v6914 = vmul.f32 %v6786, %v6834
        %v6915 = vmul.f32 %v6787, %v6836
        %v6916 = vmul.f32 %v6788, %v6838
        %v6917 = vmul.f32 %v6789, %v6840
        %v6918 = vmul.f32 %v6790, %v6842
        %v6919 = vmul.f32 %v6791, %v6844
        %v6920 = vmul.f32 %v6792, %v6846
        %v6921 = vmul.f32 %v6793, %v6848
        %v6922 = vmul.f32 %v6794, %v6850
        %v6923 = vmul.f32 %v6795, %v6852
        %v6924 = vmul.f32 %v6796, %v6854
        %v6925 = vmul.f32 %v6797, %v6856
        %v6926 = vmul.f32 %v6798, %v6858
        %v6927 = vmul.f32 %v6799, %v6860
        %v6928 = vmul.f32 %v6800, %v6862
        %v6929 = vmul.f32 %v6801, %v6864
        %v6930 = vmul.f32 %v6802, %v6866
        %v6931 = vsel %vm712, %v6899, 0.0
        %v6932 = vsel %vm712, %v6900, 0.0
        %v6933 = vadd.f32 %v6931, %v6932
        %v6934 = vrot.slane %v6933, 4
        %v6935 = vadd.f32 %v6933, %v6934
        %v6936 = vrot.slane %v6935, 2
        %v6937 = vadd.f32 %v6935, %v6936
        %v6938 = vrot.slane %v6937, 1
        %v6939 = vadd.f32 %v6937, %v6938
        %v6940 = vsel %vm712, %v6901, 0.0
        %v6941 = vsel %vm712, %v6902, 0.0
        %v6942 = vadd.f32 %v6940, %v6941
        %v6943 = vrot.slane %v6942, 4
        %v6944 = vadd.f32 %v6942, %v6943
        %v6945 = vrot.slane %v6944, 2
        %v6946 = vadd.f32 %v6944, %v6945
        %v6947 = vrot.slane %v6946, 1
        %v6948 = vadd.f32 %v6946, %v6947
        %v6949 = vsel %vm712, %v6903, 0.0
        %v6950 = vsel %vm712, %v6904, 0.0
        %v6951 = vadd.f32 %v6949, %v6950
        %v6952 = vrot.slane %v6951, 4
        %v6953 = vadd.f32 %v6951, %v6952
        %v6954 = vrot.slane %v6953, 2
        %v6955 = vadd.f32 %v6953, %v6954
        %v6956 = vrot.slane %v6955, 1
        %v6957 = vadd.f32 %v6955, %v6956
        %v6958 = vsel %vm712, %v6905, 0.0
        %v6959 = vsel %vm712, %v6906, 0.0
        %v6960 = vadd.f32 %v6958, %v6959
        %v6961 = vrot.slane %v6960, 4
        %v6962 = vadd.f32 %v6960, %v6961
        %v6963 = vrot.slane %v6962, 2
        %v6964 = vadd.f32 %v6962, %v6963
        %v6965 = vrot.slane %v6964, 1
        %v6966 = vadd.f32 %v6964, %v6965
        %v6967 = vsel %vm712, %v6907, 0.0
        %v6968 = vsel %vm712, %v6908, 0.0
        %v6969 = vadd.f32 %v6967, %v6968
        %v6970 = vrot.slane %v6969, 4
        %v6971 = vadd.f32 %v6969, %v6970
        %v6972 = vrot.slane %v6971, 2
        %v6973 = vadd.f32 %v6971, %v6972
        %v6974 = vrot.slane %v6973, 1
        %v6975 = vadd.f32 %v6973, %v6974
        %v6976 = vsel %vm712, %v6909, 0.0
        %v6977 = vsel %vm712, %v6910, 0.0
        %v6978 = vadd.f32 %v6976, %v6977
        %v6979 = vrot.slane %v6978, 4
        %v6980 = vadd.f32 %v6978, %v6979
        %v6981 = vrot.slane %v6980, 2
        %v6982 = vadd.f32 %v6980, %v6981
        %v6983 = vrot.slane %v6982, 1
        %v6984 = vadd.f32 %v6982, %v6983
        %v6985 = vsel %vm712, %v6911, 0.0
        %v6986 = vsel %vm712, %v6912, 0.0
        %v6987 = vadd.f32 %v6985, %v6986
        %v6988 = vrot.slane %v6987, 4
        %v6989 = vadd.f32 %v6987, %v6988
        %v6990 = vrot.slane %v6989, 2
        %v6991 = vadd.f32 %v6989, %v6990
        %v6992 = vrot.slane %v6991, 1
        %v6993 = vadd.f32 %v6991, %v6992
        %v6994 = vsel %vm712, %v6913, 0.0
        %v6995 = vsel %vm712, %v6914, 0.0
        %v6996 = vadd.f32 %v6994, %v6995
        %v6997 = vrot.slane %v6996, 4
        %v6998 = vadd.f32 %v6996, %v6997
        %v6999 = vrot.slane %v6998, 2
        %v7000 = vadd.f32 %v6998, %v6999
        %v7001 = vrot.slane %v7000, 1
        %v7002 = vadd.f32 %v7000, %v7001
        %v7003 = vsel %vm712, %v6915, 0.0
        %v7004 = vsel %vm712, %v6916, 0.0
        %v7005 = vadd.f32 %v7003, %v7004
        %v7006 = vrot.slane %v7005, 4
        %v7007 = vadd.f32 %v7005, %v7006
        %v7008 = vrot.slane %v7007, 2
        %v7009 = vadd.f32 %v7007, %v7008
        %v7010 = vrot.slane %v7009, 1
        %v7011 = vadd.f32 %v7009, %v7010
        %v7012 = vsel %vm712, %v6917, 0.0
        %v7013 = vsel %vm712, %v6918, 0.0
        %v7014 = vadd.f32 %v7012, %v7013
        %v7015 = vrot.slane %v7014, 4
        %v7016 = vadd.f32 %v7014, %v7015
        %v7017 = vrot.slane %v7016, 2
        %v7018 = vadd.f32 %v7016, %v7017
        %v7019 = vrot.slane %v7018, 1
        %v7020 = vadd.f32 %v7018, %v7019
        %v7021 = vsel %vm712, %v6919, 0.0
        %v7022 = vsel %vm712, %v6920, 0.0
        %v7023 = vadd.f32 %v7021, %v7022
        %v7024 = vrot.slane %v7023, 4
        %v7025 = vadd.f32 %v7023, %v7024
        %v7026 = vrot.slane %v7025, 2
        %v7027 = vadd.f32 %v7025, %v7026
        %v7028 = vrot.slane %v7027, 1
        %v7029 = vadd.f32 %v7027, %v7028
        %v7030 = vsel %vm712, %v6921, 0.0
        %v7031 = vsel %vm712, %v6922, 0.0
        %v7032 = vadd.f32 %v7030, %v7031
        %v7033 = vrot.slane %v7032, 4
        %v7034 = vadd.f32 %v7032, %v7033
        %v7035 = vrot.slane %v7034, 2
        %v7036 = vadd.f32 %v7034, %v7035
        %v7037 = vrot.slane %v7036, 1
        %v7038 = vadd.f32 %v7036, %v7037
        %v7039 = vsel %vm712, %v6923, 0.0
        %v7040 = vsel %vm712, %v6924, 0.0
        %v7041 = vadd.f32 %v7039, %v7040
        %v7042 = vrot.slane %v7041, 4
        %v7043 = vadd.f32 %v7041, %v7042
        %v7044 = vrot.slane %v7043, 2
        %v7045 = vadd.f32 %v7043, %v7044
        %v7046 = vrot.slane %v7045, 1
        %v7047 = vadd.f32 %v7045, %v7046
        %v7048 = vsel %vm712, %v6925, 0.0
        %v7049 = vsel %vm712, %v6926, 0.0
        %v7050 = vadd.f32 %v7048, %v7049
        %v7051 = vrot.slane %v7050, 4
        %v7052 = vadd.f32 %v7050, %v7051
        %v7053 = vrot.slane %v7052, 2
        %v7054 = vadd.f32 %v7052, %v7053
        %v7055 = vrot.slane %v7054, 1
        %v7056 = vadd.f32 %v7054, %v7055
        %v7057 = vsel %vm712, %v6927, 0.0
        %v7058 = vsel %vm712, %v6928, 0.0
        %v7059 = vadd.f32 %v7057, %v7058
        %v7060 = vrot.slane %v7059, 4
        %v7061 = vadd.f32 %v7059, %v7060
        %v7062 = vrot.slane %v7061, 2
        %v7063 = vadd.f32 %v7061, %v7062
        %v7064 = vrot.slane %v7063, 1
        %v7065 = vadd.f32 %v7063, %v7064
        %v7066 = vsel %vm712, %v6929, 0.0
        %v7067 = vsel %vm712, %v6930, 0.0
        %v7068 = vadd.f32 %v7066, %v7067
        %v7069 = vrot.slane %v7068, 4
        %v7070 = vadd.f32 %v7068, %v7069
        %v7071 = vrot.slane %v7070, 2
        %v7072 = vadd.f32 %v7070, %v7071
        %v7073 = vrot.slane %v7072, 1
        %v7074 = vadd.f32 %v7072, %v7073
        %v7075 = vsel %vm712, %v6771, 0.0
        %v7076 = vsel %vm712, %v6772, 0.0
        %v7077 = vadd.f32 %v7075, %v7076
        %v7078 = vrot.slane %v7077, 4
        %v7079 = vadd.f32 %v7077, %v7078
        %v7080 = vrot.slane %v7079, 2
        %v7081 = vadd.f32 %v7079, %v7080
        %v7082 = vrot.slane %v7081, 1
        %v7083 = vadd.f32 %v7081, %v7082
        %v7084 = vsel %vm712, %v6773, 0.0
        %v7085 = vsel %vm712, %v6774, 0.0
        %v7086 = vadd.f32 %v7084, %v7085
        %v7087 = vrot.slane %v7086, 4
        %v7088 = vadd.f32 %v7086, %v7087
        %v7089 = vrot.slane %v7088, 2
        %v7090 = vadd.f32 %v7088, %v7089
        %v7091 = vrot.slane %v7090, 1
        %v7092 = vadd.f32 %v7090, %v7091
        %v7093 = vsel %vm712, %v6775, 0.0
        %v7094 = vsel %vm712, %v6776, 0.0
        %v7095 = vadd.f32 %v7093, %v7094
        %v7096 = vrot.slane %v7095, 4
        %v7097 = vadd.f32 %v7095, %v7096
        %v7098 = vrot.slane %v7097, 2
        %v7099 = vadd.f32 %v7097, %v7098
        %v7100 = vrot.slane %v7099, 1
        %v7101 = vadd.f32 %v7099, %v7100
        %v7102 = vsel %vm712, %v6777, 0.0
        %v7103 = vsel %vm712, %v6778, 0.0
        %v7104 = vadd.f32 %v7102, %v7103
        %v7105 = vrot.slane %v7104, 4
        %v7106 = vadd.f32 %v7104, %v7105
        %v7107 = vrot.slane %v7106, 2
        %v7108 = vadd.f32 %v7106, %v7107
        %v7109 = vrot.slane %v7108, 1
        %v7110 = vadd.f32 %v7108, %v7109
        %v7111 = vsel %vm712, %v6779, 0.0
        %v7112 = vsel %vm712, %v6780, 0.0
        %v7113 = vadd.f32 %v7111, %v7112
        %v7114 = vrot.slane %v7113, 4
        %v7115 = vadd.f32 %v7113, %v7114
        %v7116 = vrot.slane %v7115, 2
        %v7117 = vadd.f32 %v7115, %v7116
        %v7118 = vrot.slane %v7117, 1
        %v7119 = vadd.f32 %v7117, %v7118
        %v7120 = vsel %vm712, %v6781, 0.0
        %v7121 = vsel %vm712, %v6782, 0.0
        %v7122 = vadd.f32 %v7120, %v7121
        %v7123 = vrot.slane %v7122, 4
        %v7124 = vadd.f32 %v7122, %v7123
        %v7125 = vrot.slane %v7124, 2
        %v7126 = vadd.f32 %v7124, %v7125
        %v7127 = vrot.slane %v7126, 1
        %v7128 = vadd.f32 %v7126, %v7127
        %v7129 = vsel %vm712, %v6783, 0.0
        %v7130 = vsel %vm712, %v6784, 0.0
        %v7131 = vadd.f32 %v7129, %v7130
        %v7132 = vrot.slane %v7131, 4
        %v7133 = vadd.f32 %v7131, %v7132
        %v7134 = vrot.slane %v7133, 2
        %v7135 = vadd.f32 %v7133, %v7134
        %v7136 = vrot.slane %v7135, 1
        %v7137 = vadd.f32 %v7135, %v7136
        %v7138 = vsel %vm712, %v6785, 0.0
        %v7139 = vsel %vm712, %v6786, 0.0
        %v7140 = vadd.f32 %v7138, %v7139
        %v7141 = vrot.slane %v7140, 4
        %v7142 = vadd.f32 %v7140, %v7141
        %v7143 = vrot.slane %v7142, 2
        %v7144 = vadd.f32 %v7142, %v7143
        %v7145 = vrot.slane %v7144, 1
        %v7146 = vadd.f32 %v7144, %v7145
        %v7147 = vsel %vm712, %v6787, 0.0
        %v7148 = vsel %vm712, %v6788, 0.0
        %v7149 = vadd.f32 %v7147, %v7148
        %v7150 = vrot.slane %v7149, 4
        %v7151 = vadd.f32 %v7149, %v7150
        %v7152 = vrot.slane %v7151, 2
        %v7153 = vadd.f32 %v7151, %v7152
        %v7154 = vrot.slane %v7153, 1
        %v7155 = vadd.f32 %v7153, %v7154
        %v7156 = vsel %vm712, %v6789, 0.0
        %v7157 = vsel %vm712, %v6790, 0.0
        %v7158 = vadd.f32 %v7156, %v7157
        %v7159 = vrot.slane %v7158, 4
        %v7160 = vadd.f32 %v7158, %v7159
        %v7161 = vrot.slane %v7160, 2
        %v7162 = vadd.f32 %v7160, %v7161
        %v7163 = vrot.slane %v7162, 1
        %v7164 = vadd.f32 %v7162, %v7163
        %v7165 = vsel %vm712, %v6791, 0.0
        %v7166 = vsel %vm712, %v6792, 0.0
        %v7167 = vadd.f32 %v7165, %v7166
        %v7168 = vrot.slane %v7167, 4
        %v7169 = vadd.f32 %v7167, %v7168
        %v7170 = vrot.slane %v7169, 2
        %v7171 = vadd.f32 %v7169, %v7170
        %v7172 = vrot.slane %v7171, 1
        %v7173 = vadd.f32 %v7171, %v7172
        %v7174 = vsel %vm712, %v6793, 0.0
        %v7175 = vsel %vm712, %v6794, 0.0
        %v7176 = vadd.f32 %v7174, %v7175
        %v7177 = vrot.slane %v7176, 4
        %v7178 = vadd.f32 %v7176, %v7177
        %v7179 = vrot.slane %v7178, 2
        %v7180 = vadd.f32 %v7178, %v7179
        %v7181 = vrot.slane %v7180, 1
        %v7182 = vadd.f32 %v7180, %v7181
        %v7183 = vsel %vm712, %v6795, 0.0
        %v7184 = vsel %vm712, %v6796, 0.0
        %v7185 = vadd.f32 %v7183, %v7184
        %v7186 = vrot.slane %v7185, 4
        %v7187 = vadd.f32 %v7185, %v7186
        %v7188 = vrot.slane %v7187, 2
        %v7189 = vadd.f32 %v7187, %v7188
        %v7190 = vrot.slane %v7189, 1
        %v7191 = vadd.f32 %v7189, %v7190
        %v7192 = vsel %vm712, %v6797, 0.0
        %v7193 = vsel %vm712, %v6798, 0.0
        %v7194 = vadd.f32 %v7192, %v7193
        %v7195 = vrot.slane %v7194, 4
        %v7196 = vadd.f32 %v7194, %v7195
        %v7197 = vrot.slane %v7196, 2
        %v7198 = vadd.f32 %v7196, %v7197
        %v7199 = vrot.slane %v7198, 1
        %v7200 = vadd.f32 %v7198, %v7199
        %v7201 = vsel %vm712, %v6799, 0.0
        %v7202 = vsel %vm712, %v6800, 0.0
        %v7203 = vadd.f32 %v7201, %v7202
        %v7204 = vrot.slane %v7203, 4
        %v7205 = vadd.f32 %v7203, %v7204
        %v7206 = vrot.slane %v7205, 2
        %v7207 = vadd.f32 %v7205, %v7206
        %v7208 = vrot.slane %v7207, 1
        %v7209 = vadd.f32 %v7207, %v7208
        %v7210 = vsel %vm712, %v6801, 0.0
        %v7211 = vsel %vm712, %v6802, 0.0
        %v7212 = vadd.f32 %v7210, %v7211
        %v7213 = vrot.slane %v7212, 4
        %v7214 = vadd.f32 %v7212, %v7213
        %v7215 = vrot.slane %v7214, 2
        %v7216 = vadd.f32 %v7214, %v7215
        %v7217 = vrot.slane %v7216, 1
        %v7218 = vadd.f32 %v7216, %v7217
        %v7219 = vmax.f32 %v7083, 1e-20
        %v7220 = vmax.f32 %v7092, 1e-20
        %v7221 = vmax.f32 %v7101, 1e-20
        %v7222 = vmax.f32 %v7110, 1e-20
        %v7223 = vmax.f32 %v7119, 1e-20
        %v7224 = vmax.f32 %v7128, 1e-20
        %v7225 = vmax.f32 %v7137, 1e-20
        %v7226 = vmax.f32 %v7146, 1e-20
        %v7227 = vmax.f32 %v7155, 1e-20
        %v7228 = vmax.f32 %v7164, 1e-20
        %v7229 = vmax.f32 %v7173, 1e-20
        %v7230 = vmax.f32 %v7182, 1e-20
        %v7231 = vmax.f32 %v7191, 1e-20
        %v7232 = vmax.f32 %v7200, 1e-20
        %v7233 = vmax.f32 %v7209, 1e-20
        %v7234 = vmax.f32 %v7218, 1e-20
        %v7235 = vrcp.pop %v7219
        %v7236 = vmul.f32 %v6939, %v7235
        %v7237 = vrcp.pop %v7220
        %v7238 = vmul.f32 %v6948, %v7237
        %v7239 = vrcp.pop %v7221
        %v7240 = vmul.f32 %v6957, %v7239
        %v7241 = vrcp.pop %v7222
        %v7242 = vmul.f32 %v6966, %v7241
        %v7243 = vrcp.pop %v7223
        %v7244 = vmul.f32 %v6975, %v7243
        %v7245 = vrcp.pop %v7224
        %v7246 = vmul.f32 %v6984, %v7245
        %v7247 = vrcp.pop %v7225
        %v7248 = vmul.f32 %v6993, %v7247
        %v7249 = vrcp.pop %v7226
        %v7250 = vmul.f32 %v7002, %v7249
        %v7251 = vrcp.pop %v7227
        %v7252 = vmul.f32 %v7011, %v7251
        %v7253 = vrcp.pop %v7228
        %v7254 = vmul.f32 %v7020, %v7253
        %v7255 = vrcp.pop %v7229
        %v7256 = vmul.f32 %v7029, %v7255
        %v7257 = vrcp.pop %v7230
        %v7258 = vmul.f32 %v7038, %v7257
        %v7259 = vrcp.pop %v7231
        %v7260 = vmul.f32 %v7047, %v7259
        %v7261 = vrcp.pop %v7232
        %v7262 = vmul.f32 %v7056, %v7261
        %v7263 = vrcp.pop %v7233
        %v7264 = vmul.f32 %v7065, %v7263
        %v7265 = vrcp.pop %v7234
        %v7266 = vmul.f32 %v7074, %v7265
        %v7267 = vpack.c.bf16 %v7236, %v7236
        %v7268 = vpack.c.bf16 %v7238, %v7238
        %v7269 = vpack.c.bf16 %v7240, %v7240
        %v7270 = vpack.c.bf16 %v7242, %v7242
        %v7271 = vpack.c.bf16 %v7244, %v7244
        %v7272 = vpack.c.bf16 %v7246, %v7246
        %v7273 = vpack.c.bf16 %v7248, %v7248
        %v7274 = vpack.c.bf16 %v7250, %v7250
        %v7275 = vpack.c.bf16 %v7252, %v7252
        %v7276 = vpack.c.bf16 %v7254, %v7254
        %v7277 = vpack.c.bf16 %v7256, %v7256
        %v7278 = vpack.c.bf16 %v7258, %v7258
        %v7279 = vpack.c.bf16 %v7260, %v7260
        %v7280 = vpack.c.bf16 %v7262, %v7262
        %v7281 = vpack.c.bf16 %v7264, %v7264
        %v7282 = vpack.c.bf16 %v7266, %v7266
        %v7283 = vlaneseq
        %v7284 = vshrl.u32 %v7283, 7
        %v7285 = vsub.s32 0, %v7284
        %v7286 = vrot.slane %v5744, %v7285
        %v7303 = vunpack.c.l.b16 %v7267
        %v7304 = vunpack.c.l.b16 %v7268
        %v7305 = vunpack.c.l.b16 %v7269
        %v7306 = vunpack.c.l.b16 %v7270
        %v7307 = vunpack.c.l.b16 %v7271
        %v7308 = vunpack.c.l.b16 %v7272
        %v7309 = vunpack.c.l.b16 %v7273
        %v7310 = vunpack.c.l.b16 %v7274
        %v7311 = vunpack.c.l.b16 %v7275
        %v7312 = vunpack.c.l.b16 %v7276
        %v7313 = vunpack.c.l.b16 %v7277
        %v7314 = vunpack.c.l.b16 %v7278
        %v7315 = vunpack.c.l.b16 %v7279
        %v7316 = vunpack.c.l.b16 %v7280
        %v7317 = vunpack.c.l.b16 %v7281
        %v7318 = vunpack.c.l.b16 %v7282
        %v7319 = vsel %vm5257, %v7304, %v7303
        %v7320 = vsel %vm5259, %v7305, %v7319
        %v7321 = vsel %vm5261, %v7306, %v7320
        %v7322 = vsel %vm5263, %v7307, %v7321
        %v7323 = vsel %vm5265, %v7308, %v7322
        %v7324 = vsel %vm5267, %v7309, %v7323
        %v7325 = vsel %vm5269, %v7310, %v7324
        %v7326 = vsel %vm5257, %v7312, %v7311
        %v7327 = vsel %vm5259, %v7313, %v7326
        %v7328 = vsel %vm5261, %v7314, %v7327
        %v7329 = vsel %vm5263, %v7315, %v7328
        %v7330 = vsel %vm5265, %v7316, %v7329
        %v7331 = vsel %vm5267, %v7317, %v7330
        %v7332 = vsel %vm5269, %v7318, %v7331
        %v7333 = vpack.c.b16 %v7332, %v7325
        %7336 = vrot.lane.b32.xlu0 %v5796, 96
        %v7337 = vpop.permute.xlu0 %7336
        %7338 = vrot.lane.b32.xlu0 %v5798, 96
        %v7339 = vpop.permute.xlu0 %7338
        %v7343 = vsel %vm712, %v7333, 0
        %7345 = vmatprep.subr.bf16.mxu0 0
        %7346 = vmatpush1.bf16.msra.mxu0 %v7337
        %7347 = vmatprep.subr.bf16.mxu0 0
        %7348 = vmatpush1.bf16.msra.mxu0 %v7339
        %7349 = vmatprep.subr.bf16.mxu0 0
        %7350 = vmatpush1.bf16.msra.mxu0 0
        %7351 = vmatprep.subr.bf16.mxu0 0
        %7352 = vmatpush1.bf16.msra.mxu0 0
        %7353 = vmatprep.subr.bf16.mxu0 0
        %7354 = vmatpush1.bf16.msra.mxu0 0
        %7355 = vmatprep.subr.bf16.mxu0 0
        %7356 = vmatpush1.bf16.msra.mxu0 0
        %7357 = vmatprep.subr.bf16.mxu0 0
        %7358 = vmatpush1.bf16.msra.mxu0 0
        %7359 = vmatprep.subr.bf16.mxu0 0
        %7360 = vmatpush1.bf16.msra.mxu0 0
        %7361 = vmatprep.subr.bf16.mxu0 0
        %7362 = vmatpush1.bf16.msra.mxu0 0
        %7363 = vmatprep.subr.bf16.mxu0 0
        %7364 = vmatpush1.bf16.msra.mxu0 0
        %7365 = vmatprep.subr.bf16.mxu0 0
        %7366 = vmatpush1.bf16.msra.mxu0 0
        %7367 = vmatprep.subr.bf16.mxu0 0
        %7368 = vmatpush1.bf16.msra.mxu0 0
        %7369 = vmatprep.subr.bf16.mxu0 0
        %7370 = vmatpush1.bf16.msra.mxu0 0
        %7371 = vmatprep.subr.bf16.mxu0 0
        %7372 = vmatpush1.bf16.msra.mxu0 0
        %7373 = vmatprep.subr.bf16.mxu0 0
        %7374 = vmatpush1.bf16.msra.mxu0 0
        %7375 = vmatprep.subr.bf16.mxu0 0
        %7376 = vmatpush1.bf16.msra.mxu0 0
        %7377 = vmatprep.mubr.bf16.mxu0 0
        %7378 = vmatmul.mubr.bf16.gmra.mrb[0].mxu0 %v7343
        %v7379 = vpop.f32.mrb[0].mxu0
        %v7380 = vadd.f32 %v7286, %v7379
        %v7381 = vpop.f32.mrb[0].mxu0
        %v7382 = vpop.f32.mrb[0].mxu0
        %v7383 = vadd.f32 %v7286, %v7382
        %v7384 = vpop.f32.mrb[0].mxu0
        %7385 = vdwg.mxu0
        %v7386 = vadd.f32 %v7380, %v5858
        %v7387 = vadd.f32 %v7383, %v5862
        %v7388 = vxor.u32 %v7386, 2147483648
        %v7389 = vxor.u32 %v7387, 2147483648
        %v7390 = vmul.f32 %v7388, 1.442695
        %v7391 = vpow.pop %v7390
        %v7392 = vmul.f32 %v7389, 1.442695
        %v7393 = vpow.pop %v7392
        %v7394 = vadd.f32 %v7391, 1.0
        %v7395 = vadd.f32 %v7393, 1.0
        %v7396 = vrcp.pop %v7394
        %v7397 = vmul.f32 1.0, %v7396
        %v7398 = vrcp.pop %v7395
        %v7399 = vmul.f32 1.0, %v7398
        %v7416 = vsel %vm5257, %v7238, %v7236
        %v7417 = vsel %vm5259, %v7240, %v7416
        %v7418 = vsel %vm5261, %v7242, %v7417
        %v7419 = vsel %vm5263, %v7244, %v7418
        %v7420 = vsel %vm5265, %v7246, %v7419
        %v7421 = vsel %vm5267, %v7248, %v7420
        %v7422 = vsel %vm5269, %v7250, %v7421
        %v7423 = vsel %vm5257, %v7254, %v7252
        %v7424 = vsel %vm5259, %v7256, %v7423
        %v7425 = vsel %vm5261, %v7258, %v7424
        %v7426 = vsel %vm5263, %v7260, %v7425
        %v7427 = vsel %vm5265, %v7262, %v7426
        %v7428 = vsel %vm5267, %v7264, %v7427
        %v7429 = vsel %vm5269, %v7266, %v7428
        %7430 = vrot.lane.b32.xlu0 %v7422, 96
        %v7431 = vpop.permute.xlu0 %7430
        %7432 = vrot.lane.b32.xlu0 %v7429, 96
        %v7433 = vpop.permute.xlu0 %7432
        %v7436 = vsub.f32 %v5856, %v7431
        %v7437 = vsub.f32 %v5860, %v7433
        %7440 = vrot.lane.b32.xlu0 %v7436, 32
        %v7441 = vpop.permute.xlu0 %7440
        %7442 = vrot.lane.b32.xlu0 %v7437, 32
        %v7443 = vpop.permute.xlu0 %7442
        %v7446 = vmul.f32 %v7397, %v7441
        %v7447 = vmul.f32 %v7399, %v7443
        %v7450 = vrot.slane %v7446, 1
        %v7451 = vrot.slane %v7446, 2
        %v7452 = vrot.slane %v7446, 3
        %v7453 = vrot.slane %v7446, 4
        %v7454 = vrot.slane %v7446, 5
        %v7455 = vrot.slane %v7446, 6
        %v7456 = vrot.slane %v7446, 7
        %v7457 = vrot.slane %v7447, 1
        %v7458 = vrot.slane %v7447, 2
        %v7459 = vrot.slane %v7447, 3
        %v7460 = vrot.slane %v7447, 4
        %v7461 = vrot.slane %v7447, 5
        %v7462 = vrot.slane %v7447, 6
        %v7463 = vrot.slane %v7447, 7
        %v7480 = vadd.f32 %v7236, %v7446
        %v7481 = vadd.f32 %v7238, %v7450
        %v7482 = vadd.f32 %v7240, %v7451
        %v7483 = vadd.f32 %v7242, %v7452
        %v7484 = vadd.f32 %v7244, %v7453
        %v7485 = vadd.f32 %v7246, %v7454
        %v7486 = vadd.f32 %v7248, %v7455
        %v7487 = vadd.f32 %v7250, %v7456
        %v7488 = vadd.f32 %v7252, %v7447
        %v7489 = vadd.f32 %v7254, %v7457
        %v7490 = vadd.f32 %v7256, %v7458
        %v7491 = vadd.f32 %v7258, %v7459
        %v7492 = vadd.f32 %v7260, %v7460
        %v7493 = vadd.f32 %v7262, %v7461
        %v7494 = vadd.f32 %v7264, %v7462
        %v7495 = vadd.f32 %v7266, %v7463
        %v7496 = vpack.c.bf16 %v7480, %v7480
        %v7497 = vpack.c.bf16 %v7481, %v7481
        %v7498 = vpack.c.bf16 %v7482, %v7482
        %v7499 = vpack.c.bf16 %v7483, %v7483
        %v7500 = vpack.c.bf16 %v7484, %v7484
        %v7501 = vpack.c.bf16 %v7485, %v7485
        %v7502 = vpack.c.bf16 %v7486, %v7486
        %v7503 = vpack.c.bf16 %v7487, %v7487
        %v7504 = vpack.c.bf16 %v7488, %v7488
        %v7505 = vpack.c.bf16 %v7489, %v7489
        %v7506 = vpack.c.bf16 %v7490, %v7490
        %v7507 = vpack.c.bf16 %v7491, %v7491
        %v7508 = vpack.c.bf16 %v7492, %v7492
        %v7509 = vpack.c.bf16 %v7493, %v7493
        %v7510 = vpack.c.bf16 %v7494, %v7494
        %v7511 = vpack.c.bf16 %v7495, %v7495
        %v7512 = vlaneseq
        %v7513 = vshrl.u32 %v7512, 7
        %v7514 = vsub.s32 1, %v7513
        %v7515 = vrot.slane %v5744, %v7514
        %v7532 = vunpack.c.l.b16 %v7496
        %v7533 = vunpack.c.l.b16 %v7497
        %v7534 = vunpack.c.l.b16 %v7498
        %v7535 = vunpack.c.l.b16 %v7499
        %v7536 = vunpack.c.l.b16 %v7500
        %v7537 = vunpack.c.l.b16 %v7501
        %v7538 = vunpack.c.l.b16 %v7502
        %v7539 = vunpack.c.l.b16 %v7503
        %v7540 = vunpack.c.l.b16 %v7504
        %v7541 = vunpack.c.l.b16 %v7505
        %v7542 = vunpack.c.l.b16 %v7506
        %v7543 = vunpack.c.l.b16 %v7507
        %v7544 = vunpack.c.l.b16 %v7508
        %v7545 = vunpack.c.l.b16 %v7509
        %v7546 = vunpack.c.l.b16 %v7510
        %v7547 = vunpack.c.l.b16 %v7511
        %v7548 = vrot.slane %v7533, 7
        %v7549 = vsel %vm5257, %v7548, %v7532
        %v7550 = vrot.slane %v7534, 6
        %v7551 = vsel %vm5259, %v7550, %v7549
        %v7552 = vrot.slane %v7535, 5
        %v7553 = vsel %vm5261, %v7552, %v7551
        %v7554 = vrot.slane %v7536, 4
        %v7555 = vsel %vm5263, %v7554, %v7553
        %v7556 = vrot.slane %v7537, 3
        %v7557 = vsel %vm5265, %v7556, %v7555
        %v7558 = vrot.slane %v7538, 2
        %v7559 = vsel %vm5267, %v7558, %v7557
        %v7560 = vrot.slane %v7539, 1
        %v7561 = vsel %vm5269, %v7560, %v7559
        %v7562 = vrot.slane %v7541, 7
        %v7563 = vsel %vm5257, %v7562, %v7540
        %v7564 = vrot.slane %v7542, 6
        %v7565 = vsel %vm5259, %v7564, %v7563
        %v7566 = vrot.slane %v7543, 5
        %v7567 = vsel %vm5261, %v7566, %v7565
        %v7568 = vrot.slane %v7544, 4
        %v7569 = vsel %vm5263, %v7568, %v7567
        %v7570 = vrot.slane %v7545, 3
        %v7571 = vsel %vm5265, %v7570, %v7569
        %v7572 = vrot.slane %v7546, 2
        %v7573 = vsel %vm5267, %v7572, %v7571
        %v7574 = vrot.slane %v7547, 1
        %v7575 = vsel %vm5269, %v7574, %v7573
        %v7576 = vpack.c.b16 %v7575, %v7561
        %7577 = vrot.lane.b32.xlu0 %v5796, 64
        %v7578 = vpop.permute.xlu0 %7577
        %7579 = vrot.lane.b32.xlu0 %v5798, 64
        %v7580 = vpop.permute.xlu0 %7579
        %v7584 = vsel %vm712, %v7576, 0
        %7586 = vmatprep.subr.bf16.mxu0 0
        %7587 = vmatpush1.bf16.msra.mxu0 %v7578
        %7588 = vmatprep.subr.bf16.mxu0 0
        %7589 = vmatpush1.bf16.msra.mxu0 %v7580
        %7590 = vmatprep.subr.bf16.mxu0 0
        %7591 = vmatpush1.bf16.msra.mxu0 0
        %7592 = vmatprep.subr.bf16.mxu0 0
        %7593 = vmatpush1.bf16.msra.mxu0 0
        %7594 = vmatprep.subr.bf16.mxu0 0
        %7595 = vmatpush1.bf16.msra.mxu0 0
        %7596 = vmatprep.subr.bf16.mxu0 0
        %7597 = vmatpush1.bf16.msra.mxu0 0
        %7598 = vmatprep.subr.bf16.mxu0 0
        %7599 = vmatpush1.bf16.msra.mxu0 0
        %7600 = vmatprep.subr.bf16.mxu0 0
        %7601 = vmatpush1.bf16.msra.mxu0 0
        %7602 = vmatprep.subr.bf16.mxu0 0
        %7603 = vmatpush1.bf16.msra.mxu0 0
        %7604 = vmatprep.subr.bf16.mxu0 0
        %7605 = vmatpush1.bf16.msra.mxu0 0
        %7606 = vmatprep.subr.bf16.mxu0 0
        %7607 = vmatpush1.bf16.msra.mxu0 0
        %7608 = vmatprep.subr.bf16.mxu0 0
        %7609 = vmatpush1.bf16.msra.mxu0 0
        %7610 = vmatprep.subr.bf16.mxu0 0
        %7611 = vmatpush1.bf16.msra.mxu0 0
        %7612 = vmatprep.subr.bf16.mxu0 0
        %7613 = vmatpush1.bf16.msra.mxu0 0
        %7614 = vmatprep.subr.bf16.mxu0 0
        %7615 = vmatpush1.bf16.msra.mxu0 0
        %7616 = vmatprep.subr.bf16.mxu0 0
        %7617 = vmatpush1.bf16.msra.mxu0 0
        %7618 = vmatprep.mubr.bf16.mxu0 0
        %7619 = vmatmul.mubr.bf16.gmra.mrb[0].mxu0 %v7584
        %v7620 = vpop.f32.mrb[0].mxu0
        %v7621 = vadd.f32 %v7515, %v7620
        %v7622 = vpop.f32.mrb[0].mxu0
        %v7623 = vpop.f32.mrb[0].mxu0
        %v7624 = vadd.f32 %v7515, %v7623
        %v7625 = vpop.f32.mrb[0].mxu0
        %7626 = vdwg.mxu0
        %v7627 = vadd.f32 %v5741, %v7621
        %v7628 = vadd.f32 %v5742, %v7624
        %v7629 = vsel %vm712, %v7627, 0.0
        %7630 = vadd.xlane.f32.xlu0 %v7629
        %v7631 = vpop.xlane.xlu0 %7630
        %v7632 = vsel %vm712, %v7628, 0.0
        %7633 = vadd.xlane.f32.xlu0 %v7632
        %v7634 = vpop.xlane.xlu0 %7633
        %v7635 = vmul.f32 %v7631, %v1914
        %v7636 = vmul.f32 %v7634, %v1914
        %v7637 = vsub.f32 %v7627, %v7635
        %v7638 = vsub.f32 %v7628, %v7636
        %v7639 = vmul.f32 %v7637, %v7637
        %v7640 = vmul.f32 %v7638, %v7638
        %v7641 = vsel %vm712, %v7639, 0.0
        %7642 = vadd.xlane.f32.xlu0 %v7641
        %v7643 = vpop.xlane.xlu0 %7642
        %v7644 = vsel %vm712, %v7640, 0.0
        %7645 = vadd.xlane.f32.xlu0 %v7644
        %v7646 = vpop.xlane.xlu0 %7645
        %v7647 = vmul.f32 %v7643, %v1914
        %v7648 = vmul.f32 %v7646, %v1914
        %v7649 = vadd.f32 %v7647, 1e-05
        %v7650 = vadd.f32 %v7648, 1e-05
        %v7651 = vrsqrt.pop %v7649
        %v7652 = vrsqrt.pop %v7650
        %v7653 = vmul.f32 %v7637, %v7651
        %v7654 = vmul.f32 %v7638, %v7652
        %v7655 = vlaneseq
        %v7656 = vshrl.u32 %v7655, 7
        %v7657 = vsub.s32 5, %v7656
        %v7658 = vrot.slane %v5744, %v7657
        %v7659 = vmul.f32 %v7653, %v7658
        %v7660 = vmul.f32 %v7654, %v7658
        %v7661 = vlaneseq
        %v7662 = vshrl.u32 %v7661, 7
        %v7663 = vsub.s32 6, %v7662
        %v7664 = vrot.slane %v5744, %v7663
        %v7665 = vadd.f32 %v7659, %v7664
        %v7666 = vadd.f32 %v7660, %v7664
        %s7667 = scalar_lea.vmem %s7, 32
        %v7668 = vld [vmem:[%s7667] sm:$0xff]
        %v7669 = vld [vmem:[%s7667 + $0x8] sm:$0xff]
        %v7670 = vld [vmem:[%s7667 + $0x10] sm:$0xff]
        %v7671 = vld [vmem:[%s7667 + $0x18] sm:$0xff]
        %v7672 = vpack.c.bf16 %v7666, %v7665
        %v7673 = vpack.c.bf16 %v7669, %v7668
        %v7674 = vpack.c.bf16 %v7671, %v7670
        %v7675 = vlaneseq
        %v7676 = vshrl.u32 %v7675, 7
        %v7677 = vsub.s32 1, %v7676
        %v7678 = vrot.slane %v5746, %v7677
        %v7680 = vsel %vm712, %v7672, 0
        %7682 = vmatprep.subr.bf16.mxu0 0
        %7683 = vmatpush1.bf16.msra.mxu0 %v7673
        %7684 = vmatprep.subr.bf16.mxu0 0
        %7685 = vmatpush1.bf16.msra.mxu0 %v7674
        %7686 = vmatprep.subr.bf16.mxu0 0
        %7687 = vmatpush1.bf16.msra.mxu0 0
        %7688 = vmatprep.subr.bf16.mxu0 0
        %7689 = vmatpush1.bf16.msra.mxu0 0
        %7690 = vmatprep.subr.bf16.mxu0 0
        %7691 = vmatpush1.bf16.msra.mxu0 0
        %7692 = vmatprep.subr.bf16.mxu0 0
        %7693 = vmatpush1.bf16.msra.mxu0 0
        %7694 = vmatprep.subr.bf16.mxu0 0
        %7695 = vmatpush1.bf16.msra.mxu0 0
        %7696 = vmatprep.subr.bf16.mxu0 0
        %7697 = vmatpush1.bf16.msra.mxu0 0
        %7698 = vmatprep.subr.bf16.mxu0 0
        %7699 = vmatpush1.bf16.msra.mxu0 0
        %7700 = vmatprep.subr.bf16.mxu0 0
        %7701 = vmatpush1.bf16.msra.mxu0 0
        %7702 = vmatprep.subr.bf16.mxu0 0
        %7703 = vmatpush1.bf16.msra.mxu0 0
        %7704 = vmatprep.subr.bf16.mxu0 0
        %7705 = vmatpush1.bf16.msra.mxu0 0
        %7706 = vmatprep.subr.bf16.mxu0 0
        %7707 = vmatpush1.bf16.msra.mxu0 0
        %7708 = vmatprep.subr.bf16.mxu0 0
        %7709 = vmatpush1.bf16.msra.mxu0 0
        %7710 = vmatprep.subr.bf16.mxu0 0
        %7711 = vmatpush1.bf16.msra.mxu0 0
        %7712 = vmatprep.subr.bf16.mxu0 0
        %7713 = vmatpush1.bf16.msra.mxu0 0
        %7714 = vmatprep.mubr.bf16.mxu0 0
        %7715 = vmatmul.mubr.bf16.gmra.mrb[0].mxu0 %v7680
        %v7716 = vpop.f32.mrb[0].mxu0
        %v7717 = vadd.f32 %v7678, %v7716
        %v7718 = vpop.f32.mrb[0].mxu0
        %v7719 = vpop.f32.mrb[0].mxu0
        %v7720 = vadd.f32 %v7678, %v7719
        %v7721 = vpop.f32.mrb[0].mxu0
        %7722 = vdwg.mxu0
        %v7723 = vmax.f32 %v7717, 0.0
        %v7724 = vmax.f32 %v7720, 0.0
        %s7725 = scalar_lea.vmem %s8, 128
        %v7726 = vld [vmem:[%s7725] sm:$0xff]
        %v7727 = vld [vmem:[%s7725 + $0x8] sm:$0xff]
        %v7728 = vld [vmem:[%s7725 + $0x10] sm:$0xff]
        %v7729 = vld [vmem:[%s7725 + $0x18] sm:$0xff]
        %v7730 = vld [vmem:[%s7725 + $0x20] sm:$0xff]
        %v7731 = vld [vmem:[%s7725 + $0x28] sm:$0xff]
        %v7732 = vld [vmem:[%s7725 + $0x30] sm:$0xff]
        %v7733 = vld [vmem:[%s7725 + $0x38] sm:$0xff]
        %v7734 = vld [vmem:[%s7725 + $0x40] sm:$0xff]
        %v7735 = vld [vmem:[%s7725 + $0x48] sm:$0xff]
        %v7736 = vld [vmem:[%s7725 + $0x50] sm:$0xff]
        %v7737 = vld [vmem:[%s7725 + $0x58] sm:$0xff]
        %v7738 = vld [vmem:[%s7725 + $0x60] sm:$0xff]
        %v7739 = vld [vmem:[%s7725 + $0x68] sm:$0xff]
        %v7740 = vld [vmem:[%s7725 + $0x70] sm:$0xff]
        %v7741 = vld [vmem:[%s7725 + $0x78] sm:$0xff]
        %v7742 = vpack.c.bf16 %v7724, %v7723
        %v7743 = vpack.c.bf16 %v7727, %v7726
        %v7744 = vpack.c.bf16 %v7729, %v7728
        %v7745 = vpack.c.bf16 %v7731, %v7730
        %v7746 = vpack.c.bf16 %v7733, %v7732
        %v7747 = vpack.c.bf16 %v7735, %v7734
        %v7748 = vpack.c.bf16 %v7737, %v7736
        %v7749 = vpack.c.bf16 %v7739, %v7738
        %v7750 = vpack.c.bf16 %v7741, %v7740
        %7751 = vmatprep.subr.bf16.mxu0 0
        %7752 = vmatpush1.bf16.msra.mxu0 %v7743
        %7753 = vmatprep.subr.bf16.mxu0 0
        %7754 = vmatpush1.bf16.msra.mxu0 %v7744
        %7755 = vmatprep.subr.bf16.mxu0 0
        %7756 = vmatpush1.bf16.msra.mxu0 %v7745
        %7757 = vmatprep.subr.bf16.mxu0 0
        %7758 = vmatpush1.bf16.msra.mxu0 %v7746
        %7759 = vmatprep.subr.bf16.mxu0 0
        %7760 = vmatpush1.bf16.msra.mxu0 %v7747
        %7761 = vmatprep.subr.bf16.mxu0 0
        %7762 = vmatpush1.bf16.msra.mxu0 %v7748
        %7763 = vmatprep.subr.bf16.mxu0 0
        %7764 = vmatpush1.bf16.msra.mxu0 %v7749
        %7765 = vmatprep.subr.bf16.mxu0 0
        %7766 = vmatpush1.bf16.msra.mxu0 %v7750
        %7767 = vmatprep.subr.bf16.mxu0 0
        %7768 = vmatpush1.bf16.msra.mxu0 0
        %7769 = vmatprep.subr.bf16.mxu0 0
        %7770 = vmatpush1.bf16.msra.mxu0 0
        %7771 = vmatprep.subr.bf16.mxu0 0
        %7772 = vmatpush1.bf16.msra.mxu0 0
        %7773 = vmatprep.subr.bf16.mxu0 0
        %7774 = vmatpush1.bf16.msra.mxu0 0
        %7775 = vmatprep.subr.bf16.mxu0 0
        %7776 = vmatpush1.bf16.msra.mxu0 0
        %7777 = vmatprep.subr.bf16.mxu0 0
        %7778 = vmatpush1.bf16.msra.mxu0 0
        %7779 = vmatprep.subr.bf16.mxu0 0
        %7780 = vmatpush1.bf16.msra.mxu0 0
        %7781 = vmatprep.subr.bf16.mxu0 0
        %7782 = vmatpush1.bf16.msra.mxu0 0
        %7783 = vmatprep.mubr.bf16.mxu0 0
        %7784 = vmatmul.mubr.bf16.gmra.mrb[0].mxu0 %v7742
        %v7785 = vpop.f32.mrb[0].mxu0
        %v7786 = vadd.f32 0.0, %v7785
        %v7787 = vpop.f32.mrb[0].mxu0
        %v7788 = vpop.f32.mrb[0].mxu0
        %v7789 = vadd.f32 0.0, %v7788
        %v7790 = vpop.f32.mrb[0].mxu0
        %7791 = vdwg.mxu0
        %v7792 = vadd.f32 %v7627, %v7786
        %v7793 = vadd.f32 %v7628, %v7789
        %v7794 = vlaneseq
        %v7795 = vshrl.u32 %v7794, 7
        %v7796 = vsub.s32 2, %v7795
        %v7797 = vrot.slane %v5744, %v7796
        %v7798 = vadd.f32 %v7792, %v7797
        %v7799 = vadd.f32 %v7793, %v7797
        %s7800 = scalar_lea.vmem %s10, 16
        %v7801 = vld [vmem:[%s7800] sm:$0xff]
        %s7802 = scalar_lea.vmem %s9, 8
        %v7803 = vld [vmem:[%s7802] sm:$0xf]
        %s7804 = scalar_lea.vmem %s6, 128
        %v7805 = vld [vmem:[%s7804] sm:$0xff]
        %v7806 = vld [vmem:[%s7804 + $0x8] sm:$0xff]
        %v7807 = vld [vmem:[%s7804 + $0x10] sm:$0xff]
        %v7808 = vld [vmem:[%s7804 + $0x18] sm:$0xff]
        %v7809 = vld [vmem:[%s7804 + $0x20] sm:$0xff]
        %v7810 = vld [vmem:[%s7804 + $0x28] sm:$0xff]
        %v7811 = vld [vmem:[%s7804 + $0x30] sm:$0xff]
        %v7812 = vld [vmem:[%s7804 + $0x38] sm:$0xff]
        %v7813 = vsel %vm712, %v7798, 0.0
        %7814 = vadd.xlane.f32.xlu0 %v7813
        %v7815 = vpop.xlane.xlu0 %7814
        %v7816 = vsel %vm712, %v7799, 0.0
        %7817 = vadd.xlane.f32.xlu0 %v7816
        %v7818 = vpop.xlane.xlu0 %7817
        %v7819 = vmul.f32 %v7815, %v1914
        %v7820 = vmul.f32 %v7818, %v1914
        %v7821 = vsub.f32 %v7798, %v7819
        %v7822 = vsub.f32 %v7799, %v7820
        %v7823 = vmul.f32 %v7821, %v7821
        %v7824 = vmul.f32 %v7822, %v7822
        %v7825 = vsel %vm712, %v7823, 0.0
        %7826 = vadd.xlane.f32.xlu0 %v7825
        %v7827 = vpop.xlane.xlu0 %7826
        %v7828 = vsel %vm712, %v7824, 0.0
        %7829 = vadd.xlane.f32.xlu0 %v7828
        %v7830 = vpop.xlane.xlu0 %7829
        %v7831 = vmul.f32 %v7827, %v1914
        %v7832 = vmul.f32 %v7830, %v1914
        %v7833 = vadd.f32 %v7831, 1e-05
        %v7834 = vadd.f32 %v7832, 1e-05
        %v7835 = vrsqrt.pop %v7833
        %v7836 = vrsqrt.pop %v7834
        %v7837 = vmul.f32 %v7821, %v7835
        %v7838 = vmul.f32 %v7822, %v7836
        %v7839 = vlaneseq
        %v7840 = vshrl.u32 %v7839, 7
        %v7841 = vsub.s32 3, %v7840
        %v7842 = vrot.slane %v7801, %v7841
        %v7843 = vmul.f32 %v7837, %v7842
        %v7844 = vmul.f32 %v7838, %v7842
        %v7845 = vlaneseq
        %v7846 = vshrl.u32 %v7845, 7
        %v7847 = vsub.s32 4, %v7846
        %v7848 = vrot.slane %v7801, %v7847
        %v7849 = vadd.f32 %v7843, %v7848
        %v7850 = vadd.f32 %v7844, %v7848
        %v7851 = vpack.c.bf16 %v7850, %v7849
        %v7852 = vpack.c.bf16 %v7807, %v7805
        %v7853 = vpack.c.bf16 %v7808, %v7806
        %v7854 = vpack.c.bf16 %v7811, %v7809
        %v7855 = vpack.c.bf16 %v7812, %v7810
        %v7857 = vlaneseq
        %v7858 = vshrl.u32 %v7857, 7
        %v7859 = vsub.s32 0, %v7858
        %v7860 = vrot.slane %v7803, %v7859
        %v7861 = vlaneseq
        %v7862 = vshrl.u32 %v7861, 7
        %v7863 = vsub.s32 2, %v7862
        %v7864 = vrot.slane %v7803, %v7863
        %v7867 = vlaneseq
        %v7868 = vshrl.u32 %v7867, 7
        %v7869 = vsub.s32 0, %v7868
        %v7870 = vrot.slane %v7860, %v7869
        %v7871 = vlaneseq
        %v7872 = vshrl.u32 %v7871, 7
        %v7873 = vsub.s32 0, %v7872
        %v7874 = vrot.slane %v7864, %v7873
        %v7876 = vsel %vm712, %v7851, 0
        %7878 = vmatprep.subr.bf16.mxu0 %v7853
        %7879 = vmatpush1.bf16.msra.mxu0 %v7852
        %7880 = vmatprep.subr.bf16.mxu0 %v7855
        %7881 = vmatpush1.bf16.msra.mxu0 %v7854
        %7882 = vmatprep.subr.bf16.mxu0 0
        %7883 = vmatpush1.bf16.msra.mxu0 0
        %7884 = vmatprep.subr.bf16.mxu0 0
        %7885 = vmatpush1.bf16.msra.mxu0 0
        %7886 = vmatprep.subr.bf16.mxu0 0
        %7887 = vmatpush1.bf16.msra.mxu0 0
        %7888 = vmatprep.subr.bf16.mxu0 0
        %7889 = vmatpush1.bf16.msra.mxu0 0
        %7890 = vmatprep.subr.bf16.mxu0 0
        %7891 = vmatpush1.bf16.msra.mxu0 0
        %7892 = vmatprep.subr.bf16.mxu0 0
        %7893 = vmatpush1.bf16.msra.mxu0 0
        %7894 = vmatprep.subr.bf16.mxu0 0
        %7895 = vmatpush1.bf16.msra.mxu0 0
        %7896 = vmatprep.subr.bf16.mxu0 0
        %7897 = vmatpush1.bf16.msra.mxu0 0
        %7898 = vmatprep.subr.bf16.mxu0 0
        %7899 = vmatpush1.bf16.msra.mxu0 0
        %7900 = vmatprep.subr.bf16.mxu0 0
        %7901 = vmatpush1.bf16.msra.mxu0 0
        %7902 = vmatprep.subr.bf16.mxu0 0
        %7903 = vmatpush1.bf16.msra.mxu0 0
        %7904 = vmatprep.subr.bf16.mxu0 0
        %7905 = vmatpush1.bf16.msra.mxu0 0
        %7906 = vmatprep.subr.bf16.mxu0 0
        %7907 = vmatpush1.bf16.msra.mxu0 0
        %7908 = vmatprep.subr.bf16.mxu0 0
        %7909 = vmatpush1.bf16.msra.mxu0 0
        %7910 = vmatprep.mubr.bf16.mxu0 0
        %7911 = vmatmul.mubr.bf16.gmra.mrb[0].mxu0 %v7876
        %v7912 = vpop.f32.mrb[0].mxu0
        %v7913 = vadd.f32 %v7870, %v7912
        %v7914 = vpop.f32.mrb[0].mxu0
        %v7915 = vadd.f32 %v7874, %v7914
        %v7916 = vpop.f32.mrb[0].mxu0
        %v7917 = vadd.f32 %v7870, %v7916
        %v7918 = vpop.f32.mrb[0].mxu0
        %v7919 = vadd.f32 %v7874, %v7918
        %7920 = vdwg.mxu0
        %v7921 = vld [vmem:[#allocation2 + $0x8] sm:$0xff]
        %v7922 = vld [vmem:[#allocation2 + $0x18] sm:$0xff]
        %v7923 = vld [vmem:[#allocation2 + $0x28] sm:$0xff]
        %v7924 = vld [vmem:[#allocation2 + $0x38] sm:$0xff]
        %v7925 = vld [vmem:[#allocation2 + $0x48] sm:$0xff]
        %v7926 = vld [vmem:[#allocation2 + $0x58] sm:$0xff]
        %v7927 = vld [vmem:[#allocation2 + $0x68] sm:$0xff]
        %v7928 = vld [vmem:[#allocation2 + $0x78] sm:$0xff]
        %v7929 = vld [vmem:[#allocation2 + $0x88] sm:$0xff]
        %v7930 = vld [vmem:[#allocation2 + $0x98] sm:$0xff]
        %v7931 = vld [vmem:[#allocation2 + $0xa8] sm:$0xff]
        %v7932 = vld [vmem:[#allocation2 + $0xb8] sm:$0xff]
        %v7933 = vld [vmem:[#allocation2 + $0xc8] sm:$0xff]
        %v7934 = vld [vmem:[#allocation2 + $0xd8] sm:$0xff]
        %v7935 = vld [vmem:[#allocation2 + $0xe8] sm:$0xff]
        %v7936 = vld [vmem:[#allocation2 + $0xf8] sm:$0xff]
        %v7937 = vld [vmem:[#allocation2 + $0x108] sm:$0xff]
        %v7938 = vld [vmem:[#allocation2 + $0x118] sm:$0xff]
        %v7939 = vld [vmem:[#allocation2 + $0x128] sm:$0xff]
        %v7940 = vld [vmem:[#allocation2 + $0x138] sm:$0xff]
        %v7941 = vld [vmem:[#allocation2 + $0x148] sm:$0xff]
        %v7942 = vld [vmem:[#allocation2 + $0x158] sm:$0xff]
        %v7943 = vld [vmem:[#allocation2 + $0x168] sm:$0xff]
        %v7944 = vld [vmem:[#allocation2 + $0x178] sm:$0xff]
        %v7945 = vld [vmem:[#allocation2 + $0x188] sm:$0xff]
        %v7946 = vld [vmem:[#allocation2 + $0x198] sm:$0xff]
        %v7947 = vld [vmem:[#allocation2 + $0x1a8] sm:$0xff]
        %v7948 = vld [vmem:[#allocation2 + $0x1b8] sm:$0xff]
        %v7949 = vld [vmem:[#allocation2 + $0x1c8] sm:$0xff]
        %v7950 = vld [vmem:[#allocation2 + $0x1d8] sm:$0xff]
        %v7951 = vld [vmem:[#allocation2 + $0x1e8] sm:$0xff]
        %v7952 = vld [vmem:[#allocation2 + $0x1f8] sm:$0xff]
        %7955 = vrot.lane.b32.xlu0 %v7913, 96
        %v7956 = vpop.permute.xlu0 %7955
        %7957 = vrot.lane.b32.xlu0 %v7917, 96
        %v7958 = vpop.permute.xlu0 %7957
        %v7961 = vadd.f32 %v7921, %v7956
        %v7962 = vadd.f32 %v7922, %v7958
        %v7963 = vadd.f32 %v7923, %v7956
        %v7964 = vadd.f32 %v7924, %v7958
        %v7965 = vadd.f32 %v7925, %v7956
        %v7966 = vadd.f32 %v7926, %v7958
        %v7967 = vadd.f32 %v7927, %v7956
        %v7968 = vadd.f32 %v7928, %v7958
        %v7969 = vadd.f32 %v7929, %v7956
        %v7970 = vadd.f32 %v7930, %v7958
        %v7971 = vadd.f32 %v7931, %v7956
        %v7972 = vadd.f32 %v7932, %v7958
        %v7973 = vadd.f32 %v7933, %v7956
        %v7974 = vadd.f32 %v7934, %v7958
        %v7975 = vadd.f32 %v7935, %v7956
        %v7976 = vadd.f32 %v7936, %v7958
        %v7977 = vadd.f32 %v7937, %v7956
        %v7978 = vadd.f32 %v7938, %v7958
        %v7979 = vadd.f32 %v7939, %v7956
        %v7980 = vadd.f32 %v7940, %v7958
        %v7981 = vadd.f32 %v7941, %v7956
        %v7982 = vadd.f32 %v7942, %v7958
        %v7983 = vadd.f32 %v7943, %v7956
        %v7984 = vadd.f32 %v7944, %v7958
        %v7985 = vadd.f32 %v7945, %v7956
        %v7986 = vadd.f32 %v7946, %v7958
        %v7987 = vadd.f32 %v7947, %v7956
        %v7988 = vadd.f32 %v7948, %v7958
        %v7989 = vadd.f32 %v7949, %v7956
        %v7990 = vadd.f32 %v7950, %v7958
        %v7991 = vadd.f32 %v7951, %v7956
        %v7992 = vadd.f32 %v7952, %v7958
        %v7993 = vcombine.high %v7913, %v7913
        %v7995 = vunpack.c.l.s4 1966171168
        %v7996 = vunpack.c.0.s8 %v7995
        %v7997 = vlaneseq
        %v7998 = vshrl.u32 %v7997, 7
        %v7999 = vsub.s32 %v7996, %v7998
        %v8000 = vrot.slane %v7913, %v7999
        %v8002 = vunpack.c.l.s4 1966171168
        %v8003 = vunpack.c.0.s8 %v8002
        %v8004 = vlaneseq
        %v8005 = vshrl.u32 %v8004, 7
        %v8006 = vsub.s32 %v8003, %v8005
        %v8007 = vrot.slane %v7993, %v8006
        %v8008 = vcombine.high %v8000, %v8000
        %v8009 = vcombine.high %v8007, %v8007
        %v8011 = vunpack.c.l.s4 1966171168
        %v8012 = vunpack.c.0.s8 %v8011
        %v8013 = vlaneseq
        %v8014 = vshrl.u32 %v8013, 7
        %v8015 = vsub.s32 %v8012, %v8014
        %v8016 = vrot.slane %v8000, %v8015
        %v8018 = vunpack.c.l.s4 1966171168
        %v8019 = vunpack.c.0.s8 %v8018
        %v8020 = vlaneseq
        %v8021 = vshrl.u32 %v8020, 7
        %v8022 = vsub.s32 %v8019, %v8021
        %v8023 = vrot.slane %v8007, %v8022
        %v8025 = vunpack.c.l.s4 1966171168
        %v8026 = vunpack.c.0.s8 %v8025
        %v8027 = vlaneseq
        %v8028 = vshrl.u32 %v8027, 7
        %v8029 = vsub.s32 %v8026, %v8028
        %v8030 = vrot.slane %v8008, %v8029
        %v8032 = vunpack.c.l.s4 1966171168
        %v8033 = vunpack.c.0.s8 %v8032
        %v8034 = vlaneseq
        %v8035 = vshrl.u32 %v8034, 7
        %v8036 = vsub.s32 %v8033, %v8035
        %v8037 = vrot.slane %v8009, %v8036
        %v8038 = vcombine.high %v8016, %v8016
        %v8039 = vcombine.high %v8023, %v8023
        %v8040 = vcombine.high %v8030, %v8030
        %v8041 = vcombine.high %v8037, %v8037
        %v8042 = vcombine.high %v7917, %v7917
        %v8044 = vunpack.c.l.s4 1966171168
        %v8045 = vunpack.c.0.s8 %v8044
        %v8046 = vlaneseq
        %v8047 = vshrl.u32 %v8046, 7
        %v8048 = vsub.s32 %v8045, %v8047
        %v8049 = vrot.slane %v7917, %v8048
        %v8051 = vunpack.c.l.s4 1966171168
        %v8052 = vunpack.c.0.s8 %v8051
        %v8053 = vlaneseq
        %v8054 = vshrl.u32 %v8053, 7
        %v8055 = vsub.s32 %v8052, %v8054
        %v8056 = vrot.slane %v8042, %v8055
        %v8057 = vcombine.high %v8049, %v8049
        %v8058 = vcombine.high %v8056, %v8056
        %v8060 = vunpack.c.l.s4 1966171168
        %v8061 = vunpack.c.0.s8 %v8060
        %v8062 = vlaneseq
        %v8063 = vshrl.u32 %v8062, 7
        %v8064 = vsub.s32 %v8061, %v8063
        %v8065 = vrot.slane %v8049, %v8064
        %v8067 = vunpack.c.l.s4 1966171168
        %v8068 = vunpack.c.0.s8 %v8067
        %v8069 = vlaneseq
        %v8070 = vshrl.u32 %v8069, 7
        %v8071 = vsub.s32 %v8068, %v8070
        %v8072 = vrot.slane %v8056, %v8071
        %v8074 = vunpack.c.l.s4 1966171168
        %v8075 = vunpack.c.0.s8 %v8074
        %v8076 = vlaneseq
        %v8077 = vshrl.u32 %v8076, 7
        %v8078 = vsub.s32 %v8075, %v8077
        %v8079 = vrot.slane %v8057, %v8078
        %v8081 = vunpack.c.l.s4 1966171168
        %v8082 = vunpack.c.0.s8 %v8081
        %v8083 = vlaneseq
        %v8084 = vshrl.u32 %v8083, 7
        %v8085 = vsub.s32 %v8082, %v8084
        %v8086 = vrot.slane %v8058, %v8085
        %v8087 = vcombine.high %v8065, %v8065
        %v8088 = vcombine.high %v8072, %v8072
        %v8089 = vcombine.high %v8079, %v8079
        %v8090 = vcombine.high %v8086, %v8086
        %v8091 = vlaneseq
        %v8092 = vshrl.u32 %v8091, 7
        %v8093 = vsub.s32 0, %v8092
        %v8094 = vrot.slane %v8016, %v8093
        %v8095 = vlaneseq
        %v8096 = vshrl.u32 %v8095, 7
        %v8097 = vsub.s32 0, %v8096
        %v8098 = vrot.slane %v8030, %v8097
        %v8099 = vlaneseq
        %v8100 = vshrl.u32 %v8099, 7
        %v8101 = vsub.s32 0, %v8100
        %v8102 = vrot.slane %v8038, %v8101
        %v8103 = vlaneseq
        %v8104 = vshrl.u32 %v8103, 7
        %v8105 = vsub.s32 0, %v8104
        %v8106 = vrot.slane %v8040, %v8105
        %v8107 = vlaneseq
        %v8108 = vshrl.u32 %v8107, 7
        %v8109 = vsub.s32 0, %v8108
        %v8110 = vrot.slane %v8023, %v8109
        %v8111 = vlaneseq
        %v8112 = vshrl.u32 %v8111, 7
        %v8113 = vsub.s32 0, %v8112
        %v8114 = vrot.slane %v8037, %v8113
        %v8115 = vlaneseq
        %v8116 = vshrl.u32 %v8115, 7
        %v8117 = vsub.s32 0, %v8116
        %v8118 = vrot.slane %v8039, %v8117
        %v8119 = vlaneseq
        %v8120 = vshrl.u32 %v8119, 7
        %v8121 = vsub.s32 0, %v8120
        %v8122 = vrot.slane %v8041, %v8121
        %v8123 = vlaneseq
        %v8124 = vshrl.u32 %v8123, 7
        %v8125 = vsub.s32 0, %v8124
        %v8126 = vrot.slane %v8065, %v8125
        %v8127 = vlaneseq
        %v8128 = vshrl.u32 %v8127, 7
        %v8129 = vsub.s32 0, %v8128
        %v8130 = vrot.slane %v8079, %v8129
        %v8131 = vlaneseq
        %v8132 = vshrl.u32 %v8131, 7
        %v8133 = vsub.s32 0, %v8132
        %v8134 = vrot.slane %v8087, %v8133
        %v8135 = vlaneseq
        %v8136 = vshrl.u32 %v8135, 7
        %v8137 = vsub.s32 0, %v8136
        %v8138 = vrot.slane %v8089, %v8137
        %v8139 = vlaneseq
        %v8140 = vshrl.u32 %v8139, 7
        %v8141 = vsub.s32 0, %v8140
        %v8142 = vrot.slane %v8072, %v8141
        %v8143 = vlaneseq
        %v8144 = vshrl.u32 %v8143, 7
        %v8145 = vsub.s32 0, %v8144
        %v8146 = vrot.slane %v8086, %v8145
        %v8147 = vlaneseq
        %v8148 = vshrl.u32 %v8147, 7
        %v8149 = vsub.s32 0, %v8148
        %v8150 = vrot.slane %v8088, %v8149
        %v8151 = vlaneseq
        %v8152 = vshrl.u32 %v8151, 7
        %v8153 = vsub.s32 0, %v8152
        %v8154 = vrot.slane %v8090, %v8153
        %v8171 = vmul.f32 %v8094, %v7961
        %v8172 = vmul.f32 %v8094, %v7962
        %v8173 = vmul.f32 %v8098, %v7963
        %v8174 = vmul.f32 %v8098, %v7964
        %v8175 = vmul.f32 %v8102, %v7965
        %v8176 = vmul.f32 %v8102, %v7966
        %v8177 = vmul.f32 %v8106, %v7967
        %v8178 = vmul.f32 %v8106, %v7968
        %v8179 = vmul.f32 %v8110, %v7969
        %v8180 = vmul.f32 %v8110, %v7970
        %v8181 = vmul.f32 %v8114, %v7971
        %v8182 = vmul.f32 %v8114, %v7972
        %v8183 = vmul.f32 %v8118, %v7973
        %v8184 = vmul.f32 %v8118, %v7974
        %v8185 = vmul.f32 %v8122, %v7975
        %v8186 = vmul.f32 %v8122, %v7976
        %v8187 = vmul.f32 %v8126, %v7977
        %v8188 = vmul.f32 %v8126, %v7978
        %v8189 = vmul.f32 %v8130, %v7979
        %v8190 = vmul.f32 %v8130, %v7980
        %v8191 = vmul.f32 %v8134, %v7981
        %v8192 = vmul.f32 %v8134, %v7982
        %v8193 = vmul.f32 %v8138, %v7983
        %v8194 = vmul.f32 %v8138, %v7984
        %v8195 = vmul.f32 %v8142, %v7985
        %v8196 = vmul.f32 %v8142, %v7986
        %v8197 = vmul.f32 %v8146, %v7987
        %v8198 = vmul.f32 %v8146, %v7988
        %v8199 = vmul.f32 %v8150, %v7989
        %v8200 = vmul.f32 %v8150, %v7990
        %v8201 = vmul.f32 %v8154, %v7991
        %v8202 = vmul.f32 %v8154, %v7992
        %v8203 = vpack.c.bf16 %v8172, %v8171
        %v8204 = vpack.c.bf16 %v8174, %v8173
        %v8205 = vpack.c.bf16 %v8176, %v8175
        %v8206 = vpack.c.bf16 %v8178, %v8177
        %v8207 = vpack.c.bf16 %v8180, %v8179
        %v8208 = vpack.c.bf16 %v8182, %v8181
        %v8209 = vpack.c.bf16 %v8184, %v8183
        %v8210 = vpack.c.bf16 %v8186, %v8185
        %v8211 = vpack.c.bf16 %v8188, %v8187
        %v8212 = vpack.c.bf16 %v8190, %v8189
        %v8213 = vpack.c.bf16 %v8192, %v8191
        %v8214 = vpack.c.bf16 %v8194, %v8193
        %v8215 = vpack.c.bf16 %v8196, %v8195
        %v8216 = vpack.c.bf16 %v8198, %v8197
        %v8217 = vpack.c.bf16 %v8200, %v8199
        %v8218 = vpack.c.bf16 %v8202, %v8201
        %v8220 = vsel %vm712, %v8203, 0
        %v8223 = vsel %vm712, %v8204, 0
        %v8226 = vsel %vm712, %v8205, 0
        %v8229 = vsel %vm712, %v8206, 0
        %v8232 = vsel %vm712, %v8207, 0
        %v8235 = vsel %vm712, %v8208, 0
        %v8238 = vsel %vm712, %v8209, 0
        %v8241 = vsel %vm712, %v8210, 0
        %v8244 = vsel %vm712, %v8211, 0
        %v8247 = vsel %vm712, %v8212, 0
        %v8250 = vsel %vm712, %v8213, 0
        %v8253 = vsel %vm712, %v8214, 0
        %v8256 = vsel %vm712, %v8215, 0
        %v8259 = vsel %vm712, %v8216, 0
        %v8262 = vsel %vm712, %v8217, 0
        %v8265 = vsel %vm712, %v8218, 0
        %8267 = vmatprep.subr.bf16.mxu0 0
        %8268 = vmatpush1.bf16.msra.mxu0 %v3842
        %8269 = vmatprep.subr.bf16.mxu0 0
        %8270 = vmatpush1.bf16.msra.mxu0 %v3843
        %8271 = vmatprep.subr.bf16.mxu0 0
        %8272 = vmatpush1.bf16.msra.mxu0 0
        %8273 = vmatprep.subr.bf16.mxu0 0
        %8274 = vmatpush1.bf16.msra.mxu0 0
        %8275 = vmatprep.subr.bf16.mxu0 0
        %8276 = vmatpush1.bf16.msra.mxu0 0
        %8277 = vmatprep.subr.bf16.mxu0 0
        %8278 = vmatpush1.bf16.msra.mxu0 0
        %8279 = vmatprep.subr.bf16.mxu0 0
        %8280 = vmatpush1.bf16.msra.mxu0 0
        %8281 = vmatprep.subr.bf16.mxu0 0
        %8282 = vmatpush1.bf16.msra.mxu0 0
        %8283 = vmatprep.subr.bf16.mxu0 0
        %8284 = vmatpush1.bf16.msra.mxu0 0
        %8285 = vmatprep.subr.bf16.mxu0 0
        %8286 = vmatpush1.bf16.msra.mxu0 0
        %8287 = vmatprep.subr.bf16.mxu0 0
        %8288 = vmatpush1.bf16.msra.mxu0 0
        %8289 = vmatprep.subr.bf16.mxu0 0
        %8290 = vmatpush1.bf16.msra.mxu0 0
        %8291 = vmatprep.subr.bf16.mxu0 0
        %8292 = vmatpush1.bf16.msra.mxu0 0
        %8293 = vmatprep.subr.bf16.mxu0 0
        %8294 = vmatpush1.bf16.msra.mxu0 0
        %8295 = vmatprep.subr.bf16.mxu0 0
        %8296 = vmatpush1.bf16.msra.mxu0 0
        %8297 = vmatprep.subr.bf16.mxu0 0
        %8298 = vmatpush1.bf16.msra.mxu0 0
        %8299 = vmatprep.mubr.bf16.mxu0 0
        %8300 = vmatmul.mubr.bf16.gmra.mrb[0].mxu0 %v8220
        %v8301 = vpop.f32.mrb[0].mxu0
        %v8302 = vadd.f32 0.0, %v8301
        %v8303 = vpop.f32.mrb[0].mxu0
        %v8304 = vpop.f32.mrb[0].mxu0
        %v8305 = vadd.f32 0.0, %v8304
        %v8306 = vpop.f32.mrb[0].mxu0
        %8307 = vmatprep.mubr.bf16.mxu0 0
        %8308 = vmatmul.mubr.bf16.gmra.mrb[0].mxu0 %v8223
        %v8309 = vpop.f32.mrb[0].mxu0
        %v8310 = vadd.f32 0.0, %v8309
        %v8311 = vpop.f32.mrb[0].mxu0
        %v8312 = vpop.f32.mrb[0].mxu0
        %v8313 = vadd.f32 0.0, %v8312
        %v8314 = vpop.f32.mrb[0].mxu0
        %8315 = vmatprep.mubr.bf16.mxu0 0
        %8316 = vmatmul.mubr.bf16.gmra.mrb[0].mxu0 %v8226
        %v8317 = vpop.f32.mrb[0].mxu0
        %v8318 = vadd.f32 0.0, %v8317
        %v8319 = vpop.f32.mrb[0].mxu0
        %v8320 = vpop.f32.mrb[0].mxu0
        %v8321 = vadd.f32 0.0, %v8320
        %v8322 = vpop.f32.mrb[0].mxu0
        %8323 = vmatprep.mubr.bf16.mxu0 0
        %8324 = vmatmul.mubr.bf16.gmra.mrb[0].mxu0 %v8229
        %v8325 = vpop.f32.mrb[0].mxu0
        %v8326 = vadd.f32 0.0, %v8325
        %v8327 = vpop.f32.mrb[0].mxu0
        %v8328 = vpop.f32.mrb[0].mxu0
        %v8329 = vadd.f32 0.0, %v8328
        %v8330 = vpop.f32.mrb[0].mxu0
        %8331 = vmatprep.mubr.bf16.mxu0 0
        %8332 = vmatmul.mubr.bf16.gmra.mrb[0].mxu0 %v8232
        %v8333 = vpop.f32.mrb[0].mxu0
        %v8334 = vadd.f32 0.0, %v8333
        %v8335 = vpop.f32.mrb[0].mxu0
        %v8336 = vpop.f32.mrb[0].mxu0
        %v8337 = vadd.f32 0.0, %v8336
        %v8338 = vpop.f32.mrb[0].mxu0
        %8339 = vmatprep.mubr.bf16.mxu0 0
        %8340 = vmatmul.mubr.bf16.gmra.mrb[0].mxu0 %v8235
        %v8341 = vpop.f32.mrb[0].mxu0
        %v8342 = vadd.f32 0.0, %v8341
        %v8343 = vpop.f32.mrb[0].mxu0
        %v8344 = vpop.f32.mrb[0].mxu0
        %v8345 = vadd.f32 0.0, %v8344
        %v8346 = vpop.f32.mrb[0].mxu0
        %8347 = vmatprep.mubr.bf16.mxu0 0
        %8348 = vmatmul.mubr.bf16.gmra.mrb[0].mxu0 %v8238
        %v8349 = vpop.f32.mrb[0].mxu0
        %v8350 = vadd.f32 0.0, %v8349
        %v8351 = vpop.f32.mrb[0].mxu0
        %v8352 = vpop.f32.mrb[0].mxu0
        %v8353 = vadd.f32 0.0, %v8352
        %v8354 = vpop.f32.mrb[0].mxu0
        %8355 = vmatprep.mubr.bf16.mxu0 0
        %8356 = vmatmul.mubr.bf16.gmra.mrb[0].mxu0 %v8241
        %v8357 = vpop.f32.mrb[0].mxu0
        %v8358 = vadd.f32 0.0, %v8357
        %v8359 = vpop.f32.mrb[0].mxu0
        %v8360 = vpop.f32.mrb[0].mxu0
        %v8361 = vadd.f32 0.0, %v8360
        %v8362 = vpop.f32.mrb[0].mxu0
        %8363 = vmatprep.mubr.bf16.mxu0 0
        %8364 = vmatmul.mubr.bf16.gmra.mrb[0].mxu0 %v8244
        %v8365 = vpop.f32.mrb[0].mxu0
        %v8366 = vadd.f32 0.0, %v8365
        %v8367 = vpop.f32.mrb[0].mxu0
        %v8368 = vpop.f32.mrb[0].mxu0
        %v8369 = vadd.f32 0.0, %v8368
        %v8370 = vpop.f32.mrb[0].mxu0
        %8371 = vmatprep.mubr.bf16.mxu0 0
        %8372 = vmatmul.mubr.bf16.gmra.mrb[0].mxu0 %v8247
        %v8373 = vpop.f32.mrb[0].mxu0
        %v8374 = vadd.f32 0.0, %v8373
        %v8375 = vpop.f32.mrb[0].mxu0
        %v8376 = vpop.f32.mrb[0].mxu0
        %v8377 = vadd.f32 0.0, %v8376
        %v8378 = vpop.f32.mrb[0].mxu0
        %8379 = vmatprep.mubr.bf16.mxu0 0
        %8380 = vmatmul.mubr.bf16.gmra.mrb[0].mxu0 %v8250
        %v8381 = vpop.f32.mrb[0].mxu0
        %v8382 = vadd.f32 0.0, %v8381
        %v8383 = vpop.f32.mrb[0].mxu0
        %v8384 = vpop.f32.mrb[0].mxu0
        %v8385 = vadd.f32 0.0, %v8384
        %v8386 = vpop.f32.mrb[0].mxu0
        %8387 = vmatprep.mubr.bf16.mxu0 0
        %8388 = vmatmul.mubr.bf16.gmra.mrb[0].mxu0 %v8253
        %v8389 = vpop.f32.mrb[0].mxu0
        %v8390 = vadd.f32 0.0, %v8389
        %v8391 = vpop.f32.mrb[0].mxu0
        %v8392 = vpop.f32.mrb[0].mxu0
        %v8393 = vadd.f32 0.0, %v8392
        %v8394 = vpop.f32.mrb[0].mxu0
        %8395 = vmatprep.mubr.bf16.mxu0 0
        %8396 = vmatmul.mubr.bf16.gmra.mrb[0].mxu0 %v8256
        %v8397 = vpop.f32.mrb[0].mxu0
        %v8398 = vadd.f32 0.0, %v8397
        %v8399 = vpop.f32.mrb[0].mxu0
        %v8400 = vpop.f32.mrb[0].mxu0
        %v8401 = vadd.f32 0.0, %v8400
        %v8402 = vpop.f32.mrb[0].mxu0
        %8403 = vmatprep.mubr.bf16.mxu0 0
        %8404 = vmatmul.mubr.bf16.gmra.mrb[0].mxu0 %v8259
        %v8405 = vpop.f32.mrb[0].mxu0
        %v8406 = vadd.f32 0.0, %v8405
        %v8407 = vpop.f32.mrb[0].mxu0
        %v8408 = vpop.f32.mrb[0].mxu0
        %v8409 = vadd.f32 0.0, %v8408
        %v8410 = vpop.f32.mrb[0].mxu0
        %8411 = vmatprep.mubr.bf16.mxu0 0
        %8412 = vmatmul.mubr.bf16.gmra.mrb[0].mxu0 %v8262
        %v8413 = vpop.f32.mrb[0].mxu0
        %v8414 = vadd.f32 0.0, %v8413
        %v8415 = vpop.f32.mrb[0].mxu0
        %v8416 = vpop.f32.mrb[0].mxu0
        %v8417 = vadd.f32 0.0, %v8416
        %v8418 = vpop.f32.mrb[0].mxu0
        %8419 = vmatprep.mubr.bf16.mxu0 0
        %8420 = vmatmul.mubr.bf16.gmra.mrb[0].mxu0 %v8265
        %v8421 = vpop.f32.mrb[0].mxu0
        %v8422 = vadd.f32 0.0, %v8421
        %v8423 = vpop.f32.mrb[0].mxu0
        %v8424 = vpop.f32.mrb[0].mxu0
        %v8425 = vadd.f32 0.0, %v8424
        %v8426 = vpop.f32.mrb[0].mxu0
        %8427 = vdwg.mxu0
        %v8428 = vsel %vm4213, %v8302, -1e+30
        %v8429 = vsel %vm4214, %v8305, -1e+30
        %v8430 = vsel %vm4215, %v8310, -1e+30
        %v8431 = vsel %vm4216, %v8313, -1e+30
        %v8432 = vsel %vm4217, %v8318, -1e+30
        %v8433 = vsel %vm4218, %v8321, -1e+30
        %v8434 = vsel %vm4219, %v8326, -1e+30
        %v8435 = vsel %vm4220, %v8329, -1e+30
        %v8436 = vsel %vm4221, %v8334, -1e+30
        %v8437 = vsel %vm4222, %v8337, -1e+30
        %v8438 = vsel %vm4223, %v8342, -1e+30
        %v8439 = vsel %vm4224, %v8345, -1e+30
        %v8440 = vsel %vm4225, %v8350, -1e+30
        %v8441 = vsel %vm4226, %v8353, -1e+30
        %v8442 = vsel %vm4227, %v8358, -1e+30
        %v8443 = vsel %vm4228, %v8361, -1e+30
        %v8444 = vsel %vm4229, %v8366, -1e+30
        %v8445 = vsel %vm4230, %v8369, -1e+30
        %v8446 = vsel %vm4231, %v8374, -1e+30
        %v8447 = vsel %vm4232, %v8377, -1e+30
        %v8448 = vsel %vm4233, %v8382, -1e+30
        %v8449 = vsel %vm4234, %v8385, -1e+30
        %v8450 = vsel %vm4235, %v8390, -1e+30
        %v8451 = vsel %vm4236, %v8393, -1e+30
        %v8452 = vsel %vm4237, %v8398, -1e+30
        %v8453 = vsel %vm4238, %v8401, -1e+30
        %v8454 = vsel %vm4239, %v8406, -1e+30
        %v8455 = vsel %vm4240, %v8409, -1e+30
        %v8456 = vsel %vm4241, %v8414, -1e+30
        %v8457 = vsel %vm4242, %v8417, -1e+30
        %v8458 = vsel %vm4243, %v8422, -1e+30
        %v8459 = vsel %vm4244, %v8425, -1e+30
        %v8460 = vsel %vm712, %v8428, -inf
        %v8461 = vsel %vm712, %v8429, -inf
        %v8462 = vmax.f32 %v8460, %v8461
        %v8463 = vrot.slane %v8462, 4
        %v8464 = vmax.f32 %v8462, %v8463
        %v8465 = vrot.slane %v8464, 2
        %v8466 = vmax.f32 %v8464, %v8465
        %v8467 = vrot.slane %v8466, 1
        %v8468 = vmax.f32 %v8466, %v8467
        %v8469 = vsel %vm712, %v8430, -inf
        %v8470 = vsel %vm712, %v8431, -inf
        %v8471 = vmax.f32 %v8469, %v8470
        %v8472 = vrot.slane %v8471, 4
        %v8473 = vmax.f32 %v8471, %v8472
        %v8474 = vrot.slane %v8473, 2
        %v8475 = vmax.f32 %v8473, %v8474
        %v8476 = vrot.slane %v8475, 1
        %v8477 = vmax.f32 %v8475, %v8476
        %v8478 = vsel %vm712, %v8432, -inf
        %v8479 = vsel %vm712, %v8433, -inf
        %v8480 = vmax.f32 %v8478, %v8479
        %v8481 = vrot.slane %v8480, 4
        %v8482 = vmax.f32 %v8480, %v8481
        %v8483 = vrot.slane %v8482, 2
        %v8484 = vmax.f32 %v8482, %v8483
        %v8485 = vrot.slane %v8484, 1
        %v8486 = vmax.f32 %v8484, %v8485
        %v8487 = vsel %vm712, %v8434, -inf
        %v8488 = vsel %vm712, %v8435, -inf
        %v8489 = vmax.f32 %v8487, %v8488
        %v8490 = vrot.slane %v8489, 4
        %v8491 = vmax.f32 %v8489, %v8490
        %v8492 = vrot.slane %v8491, 2
        %v8493 = vmax.f32 %v8491, %v8492
        %v8494 = vrot.slane %v8493, 1
        %v8495 = vmax.f32 %v8493, %v8494
        %v8496 = vsel %vm712, %v8436, -inf
        %v8497 = vsel %vm712, %v8437, -inf
        %v8498 = vmax.f32 %v8496, %v8497
        %v8499 = vrot.slane %v8498, 4
        %v8500 = vmax.f32 %v8498, %v8499
        %v8501 = vrot.slane %v8500, 2
        %v8502 = vmax.f32 %v8500, %v8501
        %v8503 = vrot.slane %v8502, 1
        %v8504 = vmax.f32 %v8502, %v8503
        %v8505 = vsel %vm712, %v8438, -inf
        %v8506 = vsel %vm712, %v8439, -inf
        %v8507 = vmax.f32 %v8505, %v8506
        %v8508 = vrot.slane %v8507, 4
        %v8509 = vmax.f32 %v8507, %v8508
        %v8510 = vrot.slane %v8509, 2
        %v8511 = vmax.f32 %v8509, %v8510
        %v8512 = vrot.slane %v8511, 1
        %v8513 = vmax.f32 %v8511, %v8512
        %v8514 = vsel %vm712, %v8440, -inf
        %v8515 = vsel %vm712, %v8441, -inf
        %v8516 = vmax.f32 %v8514, %v8515
        %v8517 = vrot.slane %v8516, 4
        %v8518 = vmax.f32 %v8516, %v8517
        %v8519 = vrot.slane %v8518, 2
        %v8520 = vmax.f32 %v8518, %v8519
        %v8521 = vrot.slane %v8520, 1
        %v8522 = vmax.f32 %v8520, %v8521
        %v8523 = vsel %vm712, %v8442, -inf
        %v8524 = vsel %vm712, %v8443, -inf
        %v8525 = vmax.f32 %v8523, %v8524
        %v8526 = vrot.slane %v8525, 4
        %v8527 = vmax.f32 %v8525, %v8526
        %v8528 = vrot.slane %v8527, 2
        %v8529 = vmax.f32 %v8527, %v8528
        %v8530 = vrot.slane %v8529, 1
        %v8531 = vmax.f32 %v8529, %v8530
        %v8532 = vsel %vm712, %v8444, -inf
        %v8533 = vsel %vm712, %v8445, -inf
        %v8534 = vmax.f32 %v8532, %v8533
        %v8535 = vrot.slane %v8534, 4
        %v8536 = vmax.f32 %v8534, %v8535
        %v8537 = vrot.slane %v8536, 2
        %v8538 = vmax.f32 %v8536, %v8537
        %v8539 = vrot.slane %v8538, 1
        %v8540 = vmax.f32 %v8538, %v8539
        %v8541 = vsel %vm712, %v8446, -inf
        %v8542 = vsel %vm712, %v8447, -inf
        %v8543 = vmax.f32 %v8541, %v8542
        %v8544 = vrot.slane %v8543, 4
        %v8545 = vmax.f32 %v8543, %v8544
        %v8546 = vrot.slane %v8545, 2
        %v8547 = vmax.f32 %v8545, %v8546
        %v8548 = vrot.slane %v8547, 1
        %v8549 = vmax.f32 %v8547, %v8548
        %v8550 = vsel %vm712, %v8448, -inf
        %v8551 = vsel %vm712, %v8449, -inf
        %v8552 = vmax.f32 %v8550, %v8551
        %v8553 = vrot.slane %v8552, 4
        %v8554 = vmax.f32 %v8552, %v8553
        %v8555 = vrot.slane %v8554, 2
        %v8556 = vmax.f32 %v8554, %v8555
        %v8557 = vrot.slane %v8556, 1
        %v8558 = vmax.f32 %v8556, %v8557
        %v8559 = vsel %vm712, %v8450, -inf
        %v8560 = vsel %vm712, %v8451, -inf
        %v8561 = vmax.f32 %v8559, %v8560
        %v8562 = vrot.slane %v8561, 4
        %v8563 = vmax.f32 %v8561, %v8562
        %v8564 = vrot.slane %v8563, 2
        %v8565 = vmax.f32 %v8563, %v8564
        %v8566 = vrot.slane %v8565, 1
        %v8567 = vmax.f32 %v8565, %v8566
        %v8568 = vsel %vm712, %v8452, -inf
        %v8569 = vsel %vm712, %v8453, -inf
        %v8570 = vmax.f32 %v8568, %v8569
        %v8571 = vrot.slane %v8570, 4
        %v8572 = vmax.f32 %v8570, %v8571
        %v8573 = vrot.slane %v8572, 2
        %v8574 = vmax.f32 %v8572, %v8573
        %v8575 = vrot.slane %v8574, 1
        %v8576 = vmax.f32 %v8574, %v8575
        %v8577 = vsel %vm712, %v8454, -inf
        %v8578 = vsel %vm712, %v8455, -inf
        %v8579 = vmax.f32 %v8577, %v8578
        %v8580 = vrot.slane %v8579, 4
        %v8581 = vmax.f32 %v8579, %v8580
        %v8582 = vrot.slane %v8581, 2
        %v8583 = vmax.f32 %v8581, %v8582
        %v8584 = vrot.slane %v8583, 1
        %v8585 = vmax.f32 %v8583, %v8584
        %v8586 = vsel %vm712, %v8456, -inf
        %v8587 = vsel %vm712, %v8457, -inf
        %v8588 = vmax.f32 %v8586, %v8587
        %v8589 = vrot.slane %v8588, 4
        %v8590 = vmax.f32 %v8588, %v8589
        %v8591 = vrot.slane %v8590, 2
        %v8592 = vmax.f32 %v8590, %v8591
        %v8593 = vrot.slane %v8592, 1
        %v8594 = vmax.f32 %v8592, %v8593
        %v8595 = vsel %vm712, %v8458, -inf
        %v8596 = vsel %vm712, %v8459, -inf
        %v8597 = vmax.f32 %v8595, %v8596
        %v8598 = vrot.slane %v8597, 4
        %v8599 = vmax.f32 %v8597, %v8598
        %v8600 = vrot.slane %v8599, 2
        %v8601 = vmax.f32 %v8599, %v8600
        %v8602 = vrot.slane %v8601, 1
        %v8603 = vmax.f32 %v8601, %v8602
        %v8604 = vsub.f32 %v8428, %v8468
        %v8605 = vsub.f32 %v8429, %v8468
        %v8606 = vsub.f32 %v8430, %v8477
        %v8607 = vsub.f32 %v8431, %v8477
        %v8608 = vsub.f32 %v8432, %v8486
        %v8609 = vsub.f32 %v8433, %v8486
        %v8610 = vsub.f32 %v8434, %v8495
        %v8611 = vsub.f32 %v8435, %v8495
        %v8612 = vsub.f32 %v8436, %v8504
        %v8613 = vsub.f32 %v8437, %v8504
        %v8614 = vsub.f32 %v8438, %v8513
        %v8615 = vsub.f32 %v8439, %v8513
        %v8616 = vsub.f32 %v8440, %v8522
        %v8617 = vsub.f32 %v8441, %v8522
        %v8618 = vsub.f32 %v8442, %v8531
        %v8619 = vsub.f32 %v8443, %v8531
        %v8620 = vsub.f32 %v8444, %v8540
        %v8621 = vsub.f32 %v8445, %v8540
        %v8622 = vsub.f32 %v8446, %v8549
        %v8623 = vsub.f32 %v8447, %v8549
        %v8624 = vsub.f32 %v8448, %v8558
        %v8625 = vsub.f32 %v8449, %v8558
        %v8626 = vsub.f32 %v8450, %v8567
        %v8627 = vsub.f32 %v8451, %v8567
        %v8628 = vsub.f32 %v8452, %v8576
        %v8629 = vsub.f32 %v8453, %v8576
        %v8630 = vsub.f32 %v8454, %v8585
        %v8631 = vsub.f32 %v8455, %v8585
        %v8632 = vsub.f32 %v8456, %v8594
        %v8633 = vsub.f32 %v8457, %v8594
        %v8634 = vsub.f32 %v8458, %v8603
        %v8635 = vsub.f32 %v8459, %v8603
        %v8636 = vmul.f32 %v8604, 1.442695
        %v8637 = vpow.pop %v8636
        %v8638 = vmul.f32 %v8605, 1.442695
        %v8639 = vpow.pop %v8638
        %v8640 = vmul.f32 %v8606, 1.442695
        %v8641 = vpow.pop %v8640
        %v8642 = vmul.f32 %v8607, 1.442695
        %v8643 = vpow.pop %v8642
        %v8644 = vmul.f32 %v8608, 1.442695
        %v8645 = vpow.pop %v8644
        %v8646 = vmul.f32 %v8609, 1.442695
        %v8647 = vpow.pop %v8646
        %v8648 = vmul.f32 %v8610, 1.442695
        %v8649 = vpow.pop %v8648
        %v8650 = vmul.f32 %v8611, 1.442695
        %v8651 = vpow.pop %v8650
        %v8652 = vmul.f32 %v8612, 1.442695
        %v8653 = vpow.pop %v8652
        %v8654 = vmul.f32 %v8613, 1.442695
        %v8655 = vpow.pop %v8654
        %v8656 = vmul.f32 %v8614, 1.442695
        %v8657 = vpow.pop %v8656
        %v8658 = vmul.f32 %v8615, 1.442695
        %v8659 = vpow.pop %v8658
        %v8660 = vmul.f32 %v8616, 1.442695
        %v8661 = vpow.pop %v8660
        %v8662 = vmul.f32 %v8617, 1.442695
        %v8663 = vpow.pop %v8662
        %v8664 = vmul.f32 %v8618, 1.442695
        %v8665 = vpow.pop %v8664
        %v8666 = vmul.f32 %v8619, 1.442695
        %v8667 = vpow.pop %v8666
        %v8668 = vmul.f32 %v8620, 1.442695
        %v8669 = vpow.pop %v8668
        %v8670 = vmul.f32 %v8621, 1.442695
        %v8671 = vpow.pop %v8670
        %v8672 = vmul.f32 %v8622, 1.442695
        %v8673 = vpow.pop %v8672
        %v8674 = vmul.f32 %v8623, 1.442695
        %v8675 = vpow.pop %v8674
        %v8676 = vmul.f32 %v8624, 1.442695
        %v8677 = vpow.pop %v8676
        %v8678 = vmul.f32 %v8625, 1.442695
        %v8679 = vpow.pop %v8678
        %v8680 = vmul.f32 %v8626, 1.442695
        %v8681 = vpow.pop %v8680
        %v8682 = vmul.f32 %v8627, 1.442695
        %v8683 = vpow.pop %v8682
        %v8684 = vmul.f32 %v8628, 1.442695
        %v8685 = vpow.pop %v8684
        %v8686 = vmul.f32 %v8629, 1.442695
        %v8687 = vpow.pop %v8686
        %v8688 = vmul.f32 %v8630, 1.442695
        %v8689 = vpow.pop %v8688
        %v8690 = vmul.f32 %v8631, 1.442695
        %v8691 = vpow.pop %v8690
        %v8692 = vmul.f32 %v8632, 1.442695
        %v8693 = vpow.pop %v8692
        %v8694 = vmul.f32 %v8633, 1.442695
        %v8695 = vpow.pop %v8694
        %v8696 = vmul.f32 %v8634, 1.442695
        %v8697 = vpow.pop %v8696
        %v8698 = vmul.f32 %v8635, 1.442695
        %v8699 = vpow.pop %v8698
        %v8700 = vmul.f32 %v8637, %v4520
        %v8701 = vmul.f32 %v8639, %v4525
        %v8702 = vmul.f32 %v8641, %v4530
        %v8703 = vmul.f32 %v8643, %v4535
        %v8704 = vmul.f32 %v8645, %v4540
        %v8705 = vmul.f32 %v8647, %v4545
        %v8706 = vmul.f32 %v8649, %v4550
        %v8707 = vmul.f32 %v8651, %v4555
        %v8708 = vmul.f32 %v8653, %v4560
        %v8709 = vmul.f32 %v8655, %v4565
        %v8710 = vmul.f32 %v8657, %v4570
        %v8711 = vmul.f32 %v8659, %v4575
        %v8712 = vmul.f32 %v8661, %v4580
        %v8713 = vmul.f32 %v8663, %v4585
        %v8714 = vmul.f32 %v8665, %v4590
        %v8715 = vmul.f32 %v8667, %v4595
        %v8716 = vmul.f32 %v8669, %v4600
        %v8717 = vmul.f32 %v8671, %v4605
        %v8718 = vmul.f32 %v8673, %v4610
        %v8719 = vmul.f32 %v8675, %v4615
        %v8720 = vmul.f32 %v8677, %v4620
        %v8721 = vmul.f32 %v8679, %v4625
        %v8722 = vmul.f32 %v8681, %v4630
        %v8723 = vmul.f32 %v8683, %v4635
        %v8724 = vmul.f32 %v8685, %v4640
        %v8725 = vmul.f32 %v8687, %v4645
        %v8726 = vmul.f32 %v8689, %v4650
        %v8727 = vmul.f32 %v8691, %v4655
        %v8728 = vmul.f32 %v8693, %v4660
        %v8729 = vmul.f32 %v8695, %v4665
        %v8730 = vmul.f32 %v8697, %v4670
        %v8731 = vmul.f32 %v8699, %v4675
        %8764 = vrot.lane.b32.xlu0 %v7961, 96
        %v8765 = vpop.permute.xlu0 %8764
        %8766 = vrot.lane.b32.xlu0 %v7962, 96
        %v8767 = vpop.permute.xlu0 %8766
        %8768 = vrot.lane.b32.xlu0 %v7963, 96
        %v8769 = vpop.permute.xlu0 %8768
        %8770 = vrot.lane.b32.xlu0 %v7964, 96
        %v8771 = vpop.permute.xlu0 %8770
        %8772 = vrot.lane.b32.xlu0 %v7965, 96
        %v8773 = vpop.permute.xlu0 %8772
        %8774 = vrot.lane.b32.xlu0 %v7966, 96
        %v8775 = vpop.permute.xlu0 %8774
        %8776 = vrot.lane.b32.xlu0 %v7967, 96
        %v8777 = vpop.permute.xlu0 %8776
        %8778 = vrot.lane.b32.xlu0 %v7968, 96
        %v8779 = vpop.permute.xlu0 %8778
        %8780 = vrot.lane.b32.xlu0 %v7969, 96
        %v8781 = vpop.permute.xlu0 %8780
        %8782 = vrot.lane.b32.xlu0 %v7970, 96
        %v8783 = vpop.permute.xlu0 %8782
        %8784 = vrot.lane.b32.xlu0 %v7971, 96
        %v8785 = vpop.permute.xlu0 %8784
        %8786 = vrot.lane.b32.xlu0 %v7972, 96
        %v8787 = vpop.permute.xlu0 %8786
        %8788 = vrot.lane.b32.xlu0 %v7973, 96
        %v8789 = vpop.permute.xlu0 %8788
        %8790 = vrot.lane.b32.xlu0 %v7974, 96
        %v8791 = vpop.permute.xlu0 %8790
        %8792 = vrot.lane.b32.xlu0 %v7975, 96
        %v8793 = vpop.permute.xlu0 %8792
        %8794 = vrot.lane.b32.xlu0 %v7976, 96
        %v8795 = vpop.permute.xlu0 %8794
        %8796 = vrot.lane.b32.xlu0 %v7977, 96
        %v8797 = vpop.permute.xlu0 %8796
        %8798 = vrot.lane.b32.xlu0 %v7978, 96
        %v8799 = vpop.permute.xlu0 %8798
        %8800 = vrot.lane.b32.xlu0 %v7979, 96
        %v8801 = vpop.permute.xlu0 %8800
        %8802 = vrot.lane.b32.xlu0 %v7980, 96
        %v8803 = vpop.permute.xlu0 %8802
        %8804 = vrot.lane.b32.xlu0 %v7981, 96
        %v8805 = vpop.permute.xlu0 %8804
        %8806 = vrot.lane.b32.xlu0 %v7982, 96
        %v8807 = vpop.permute.xlu0 %8806
        %8808 = vrot.lane.b32.xlu0 %v7983, 96
        %v8809 = vpop.permute.xlu0 %8808
        %8810 = vrot.lane.b32.xlu0 %v7984, 96
        %v8811 = vpop.permute.xlu0 %8810
        %8812 = vrot.lane.b32.xlu0 %v7985, 96
        %v8813 = vpop.permute.xlu0 %8812
        %8814 = vrot.lane.b32.xlu0 %v7986, 96
        %v8815 = vpop.permute.xlu0 %8814
        %8816 = vrot.lane.b32.xlu0 %v7987, 96
        %v8817 = vpop.permute.xlu0 %8816
        %8818 = vrot.lane.b32.xlu0 %v7988, 96
        %v8819 = vpop.permute.xlu0 %8818
        %8820 = vrot.lane.b32.xlu0 %v7989, 96
        %v8821 = vpop.permute.xlu0 %8820
        %8822 = vrot.lane.b32.xlu0 %v7990, 96
        %v8823 = vpop.permute.xlu0 %8822
        %8824 = vrot.lane.b32.xlu0 %v7991, 96
        %v8825 = vpop.permute.xlu0 %8824
        %8826 = vrot.lane.b32.xlu0 %v7992, 96
        %v8827 = vpop.permute.xlu0 %8826
        %v8860 = vmul.f32 %v8700, %v8765
        %v8861 = vmul.f32 %v8701, %v8767
        %v8862 = vmul.f32 %v8702, %v8769
        %v8863 = vmul.f32 %v8703, %v8771
        %v8864 = vmul.f32 %v8704, %v8773
        %v8865 = vmul.f32 %v8705, %v8775
        %v8866 = vmul.f32 %v8706, %v8777
        %v8867 = vmul.f32 %v8707, %v8779
        %v8868 = vmul.f32 %v8708, %v8781
        %v8869 = vmul.f32 %v8709, %v8783
        %v8870 = vmul.f32 %v8710, %v8785
        %v8871 = vmul.f32 %v8711, %v8787
        %v8872 = vmul.f32 %v8712, %v8789
        %v8873 = vmul.f32 %v8713, %v8791
        %v8874 = vmul.f32 %v8714, %v8793
        %v8875 = vmul.f32 %v8715, %v8795
        %v8876 = vmul.f32 %v8716, %v8797
        %v8877 = vmul.f32 %v8717, %v8799
        %v8878 = vmul.f32 %v8718, %v8801
        %v8879 = vmul.f32 %v8719, %v8803
        %v8880 = vmul.f32 %v8720, %v8805
        %v8881 = vmul.f32 %v8721, %v8807
        %v8882 = vmul.f32 %v8722, %v8809
        %v8883 = vmul.f32 %v8723, %v8811
        %v8884 = vmul.f32 %v8724, %v8813
        %v8885 = vmul.f32 %v8725, %v8815
        %v8886 = vmul.f32 %v8726, %v8817
        %v8887 = vmul.f32 %v8727, %v8819
        %v8888 = vmul.f32 %v8728, %v8821
        %v8889 = vmul.f32 %v8729, %v8823
        %v8890 = vmul.f32 %v8730, %v8825
        %v8891 = vmul.f32 %v8731, %v8827
        %v8892 = vsel %vm712, %v8860, 0.0
        %v8893 = vsel %vm712, %v8861, 0.0
        %v8894 = vadd.f32 %v8892, %v8893
        %v8895 = vrot.slane %v8894, 4
        %v8896 = vadd.f32 %v8894, %v8895
        %v8897 = vrot.slane %v8896, 2
        %v8898 = vadd.f32 %v8896, %v8897
        %v8899 = vrot.slane %v8898, 1
        %v8900 = vadd.f32 %v8898, %v8899
        %v8901 = vsel %vm712, %v8862, 0.0
        %v8902 = vsel %vm712, %v8863, 0.0
        %v8903 = vadd.f32 %v8901, %v8902
        %v8904 = vrot.slane %v8903, 4
        %v8905 = vadd.f32 %v8903, %v8904
        %v8906 = vrot.slane %v8905, 2
        %v8907 = vadd.f32 %v8905, %v8906
        %v8908 = vrot.slane %v8907, 1
        %v8909 = vadd.f32 %v8907, %v8908
        %v8910 = vsel %vm712, %v8864, 0.0
        %v8911 = vsel %vm712, %v8865, 0.0
        %v8912 = vadd.f32 %v8910, %v8911
        %v8913 = vrot.slane %v8912, 4
        %v8914 = vadd.f32 %v8912, %v8913
        %v8915 = vrot.slane %v8914, 2
        %v8916 = vadd.f32 %v8914, %v8915
        %v8917 = vrot.slane %v8916, 1
        %v8918 = vadd.f32 %v8916, %v8917
        %v8919 = vsel %vm712, %v8866, 0.0
        %v8920 = vsel %vm712, %v8867, 0.0
        %v8921 = vadd.f32 %v8919, %v8920
        %v8922 = vrot.slane %v8921, 4
        %v8923 = vadd.f32 %v8921, %v8922
        %v8924 = vrot.slane %v8923, 2
        %v8925 = vadd.f32 %v8923, %v8924
        %v8926 = vrot.slane %v8925, 1
        %v8927 = vadd.f32 %v8925, %v8926
        %v8928 = vsel %vm712, %v8868, 0.0
        %v8929 = vsel %vm712, %v8869, 0.0
        %v8930 = vadd.f32 %v8928, %v8929
        %v8931 = vrot.slane %v8930, 4
        %v8932 = vadd.f32 %v8930, %v8931
        %v8933 = vrot.slane %v8932, 2
        %v8934 = vadd.f32 %v8932, %v8933
        %v8935 = vrot.slane %v8934, 1
        %v8936 = vadd.f32 %v8934, %v8935
        %v8937 = vsel %vm712, %v8870, 0.0
        %v8938 = vsel %vm712, %v8871, 0.0
        %v8939 = vadd.f32 %v8937, %v8938
        %v8940 = vrot.slane %v8939, 4
        %v8941 = vadd.f32 %v8939, %v8940
        %v8942 = vrot.slane %v8941, 2
        %v8943 = vadd.f32 %v8941, %v8942
        %v8944 = vrot.slane %v8943, 1
        %v8945 = vadd.f32 %v8943, %v8944
        %v8946 = vsel %vm712, %v8872, 0.0
        %v8947 = vsel %vm712, %v8873, 0.0
        %v8948 = vadd.f32 %v8946, %v8947
        %v8949 = vrot.slane %v8948, 4
        %v8950 = vadd.f32 %v8948, %v8949
        %v8951 = vrot.slane %v8950, 2
        %v8952 = vadd.f32 %v8950, %v8951
        %v8953 = vrot.slane %v8952, 1
        %v8954 = vadd.f32 %v8952, %v8953
        %v8955 = vsel %vm712, %v8874, 0.0
        %v8956 = vsel %vm712, %v8875, 0.0
        %v8957 = vadd.f32 %v8955, %v8956
        %v8958 = vrot.slane %v8957, 4
        %v8959 = vadd.f32 %v8957, %v8958
        %v8960 = vrot.slane %v8959, 2
        %v8961 = vadd.f32 %v8959, %v8960
        %v8962 = vrot.slane %v8961, 1
        %v8963 = vadd.f32 %v8961, %v8962
        %v8964 = vsel %vm712, %v8876, 0.0
        %v8965 = vsel %vm712, %v8877, 0.0
        %v8966 = vadd.f32 %v8964, %v8965
        %v8967 = vrot.slane %v8966, 4
        %v8968 = vadd.f32 %v8966, %v8967
        %v8969 = vrot.slane %v8968, 2
        %v8970 = vadd.f32 %v8968, %v8969
        %v8971 = vrot.slane %v8970, 1
        %v8972 = vadd.f32 %v8970, %v8971
        %v8973 = vsel %vm712, %v8878, 0.0
        %v8974 = vsel %vm712, %v8879, 0.0
        %v8975 = vadd.f32 %v8973, %v8974
        %v8976 = vrot.slane %v8975, 4
        %v8977 = vadd.f32 %v8975, %v8976
        %v8978 = vrot.slane %v8977, 2
        %v8979 = vadd.f32 %v8977, %v8978
        %v8980 = vrot.slane %v8979, 1
        %v8981 = vadd.f32 %v8979, %v8980
        %v8982 = vsel %vm712, %v8880, 0.0
        %v8983 = vsel %vm712, %v8881, 0.0
        %v8984 = vadd.f32 %v8982, %v8983
        %v8985 = vrot.slane %v8984, 4
        %v8986 = vadd.f32 %v8984, %v8985
        %v8987 = vrot.slane %v8986, 2
        %v8988 = vadd.f32 %v8986, %v8987
        %v8989 = vrot.slane %v8988, 1
        %v8990 = vadd.f32 %v8988, %v8989
        %v8991 = vsel %vm712, %v8882, 0.0
        %v8992 = vsel %vm712, %v8883, 0.0
        %v8993 = vadd.f32 %v8991, %v8992
        %v8994 = vrot.slane %v8993, 4
        %v8995 = vadd.f32 %v8993, %v8994
        %v8996 = vrot.slane %v8995, 2
        %v8997 = vadd.f32 %v8995, %v8996
        %v8998 = vrot.slane %v8997, 1
        %v8999 = vadd.f32 %v8997, %v8998
        %v9000 = vsel %vm712, %v8884, 0.0
        %v9001 = vsel %vm712, %v8885, 0.0
        %v9002 = vadd.f32 %v9000, %v9001
        %v9003 = vrot.slane %v9002, 4
        %v9004 = vadd.f32 %v9002, %v9003
        %v9005 = vrot.slane %v9004, 2
        %v9006 = vadd.f32 %v9004, %v9005
        %v9007 = vrot.slane %v9006, 1
        %v9008 = vadd.f32 %v9006, %v9007
        %v9009 = vsel %vm712, %v8886, 0.0
        %v9010 = vsel %vm712, %v8887, 0.0
        %v9011 = vadd.f32 %v9009, %v9010
        %v9012 = vrot.slane %v9011, 4
        %v9013 = vadd.f32 %v9011, %v9012
        %v9014 = vrot.slane %v9013, 2
        %v9015 = vadd.f32 %v9013, %v9014
        %v9016 = vrot.slane %v9015, 1
        %v9017 = vadd.f32 %v9015, %v9016
        %v9018 = vsel %vm712, %v8888, 0.0
        %v9019 = vsel %vm712, %v8889, 0.0
        %v9020 = vadd.f32 %v9018, %v9019
        %v9021 = vrot.slane %v9020, 4
        %v9022 = vadd.f32 %v9020, %v9021
        %v9023 = vrot.slane %v9022, 2
        %v9024 = vadd.f32 %v9022, %v9023
        %v9025 = vrot.slane %v9024, 1
        %v9026 = vadd.f32 %v9024, %v9025
        %v9027 = vsel %vm712, %v8890, 0.0
        %v9028 = vsel %vm712, %v8891, 0.0
        %v9029 = vadd.f32 %v9027, %v9028
        %v9030 = vrot.slane %v9029, 4
        %v9031 = vadd.f32 %v9029, %v9030
        %v9032 = vrot.slane %v9031, 2
        %v9033 = vadd.f32 %v9031, %v9032
        %v9034 = vrot.slane %v9033, 1
        %v9035 = vadd.f32 %v9033, %v9034
        %v9036 = vsel %vm712, %v8700, 0.0
        %v9037 = vsel %vm712, %v8701, 0.0
        %v9038 = vadd.f32 %v9036, %v9037
        %v9039 = vrot.slane %v9038, 4
        %v9040 = vadd.f32 %v9038, %v9039
        %v9041 = vrot.slane %v9040, 2
        %v9042 = vadd.f32 %v9040, %v9041
        %v9043 = vrot.slane %v9042, 1
        %v9044 = vadd.f32 %v9042, %v9043
        %v9045 = vsel %vm712, %v8702, 0.0
        %v9046 = vsel %vm712, %v8703, 0.0
        %v9047 = vadd.f32 %v9045, %v9046
        %v9048 = vrot.slane %v9047, 4
        %v9049 = vadd.f32 %v9047, %v9048
        %v9050 = vrot.slane %v9049, 2
        %v9051 = vadd.f32 %v9049, %v9050
        %v9052 = vrot.slane %v9051, 1
        %v9053 = vadd.f32 %v9051, %v9052
        %v9054 = vsel %vm712, %v8704, 0.0
        %v9055 = vsel %vm712, %v8705, 0.0
        %v9056 = vadd.f32 %v9054, %v9055
        %v9057 = vrot.slane %v9056, 4
        %v9058 = vadd.f32 %v9056, %v9057
        %v9059 = vrot.slane %v9058, 2
        %v9060 = vadd.f32 %v9058, %v9059
        %v9061 = vrot.slane %v9060, 1
        %v9062 = vadd.f32 %v9060, %v9061
        %v9063 = vsel %vm712, %v8706, 0.0
        %v9064 = vsel %vm712, %v8707, 0.0
        %v9065 = vadd.f32 %v9063, %v9064
        %v9066 = vrot.slane %v9065, 4
        %v9067 = vadd.f32 %v9065, %v9066
        %v9068 = vrot.slane %v9067, 2
        %v9069 = vadd.f32 %v9067, %v9068
        %v9070 = vrot.slane %v9069, 1
        %v9071 = vadd.f32 %v9069, %v9070
        %v9072 = vsel %vm712, %v8708, 0.0
        %v9073 = vsel %vm712, %v8709, 0.0
        %v9074 = vadd.f32 %v9072, %v9073
        %v9075 = vrot.slane %v9074, 4
        %v9076 = vadd.f32 %v9074, %v9075
        %v9077 = vrot.slane %v9076, 2
        %v9078 = vadd.f32 %v9076, %v9077
        %v9079 = vrot.slane %v9078, 1
        %v9080 = vadd.f32 %v9078, %v9079
        %v9081 = vsel %vm712, %v8710, 0.0
        %v9082 = vsel %vm712, %v8711, 0.0
        %v9083 = vadd.f32 %v9081, %v9082
        %v9084 = vrot.slane %v9083, 4
        %v9085 = vadd.f32 %v9083, %v9084
        %v9086 = vrot.slane %v9085, 2
        %v9087 = vadd.f32 %v9085, %v9086
        %v9088 = vrot.slane %v9087, 1
        %v9089 = vadd.f32 %v9087, %v9088
        %v9090 = vsel %vm712, %v8712, 0.0
        %v9091 = vsel %vm712, %v8713, 0.0
        %v9092 = vadd.f32 %v9090, %v9091
        %v9093 = vrot.slane %v9092, 4
        %v9094 = vadd.f32 %v9092, %v9093
        %v9095 = vrot.slane %v9094, 2
        %v9096 = vadd.f32 %v9094, %v9095
        %v9097 = vrot.slane %v9096, 1
        %v9098 = vadd.f32 %v9096, %v9097
        %v9099 = vsel %vm712, %v8714, 0.0
        %v9100 = vsel %vm712, %v8715, 0.0
        %v9101 = vadd.f32 %v9099, %v9100
        %v9102 = vrot.slane %v9101, 4
        %v9103 = vadd.f32 %v9101, %v9102
        %v9104 = vrot.slane %v9103, 2
        %v9105 = vadd.f32 %v9103, %v9104
        %v9106 = vrot.slane %v9105, 1
        %v9107 = vadd.f32 %v9105, %v9106
        %v9108 = vsel %vm712, %v8716, 0.0
        %v9109 = vsel %vm712, %v8717, 0.0
        %v9110 = vadd.f32 %v9108, %v9109
        %v9111 = vrot.slane %v9110, 4
        %v9112 = vadd.f32 %v9110, %v9111
        %v9113 = vrot.slane %v9112, 2
        %v9114 = vadd.f32 %v9112, %v9113
        %v9115 = vrot.slane %v9114, 1
        %v9116 = vadd.f32 %v9114, %v9115
        %v9117 = vsel %vm712, %v8718, 0.0
        %v9118 = vsel %vm712, %v8719, 0.0
        %v9119 = vadd.f32 %v9117, %v9118
        %v9120 = vrot.slane %v9119, 4
        %v9121 = vadd.f32 %v9119, %v9120
        %v9122 = vrot.slane %v9121, 2
        %v9123 = vadd.f32 %v9121, %v9122
        %v9124 = vrot.slane %v9123, 1
        %v9125 = vadd.f32 %v9123, %v9124
        %v9126 = vsel %vm712, %v8720, 0.0
        %v9127 = vsel %vm712, %v8721, 0.0
        %v9128 = vadd.f32 %v9126, %v9127
        %v9129 = vrot.slane %v9128, 4
        %v9130 = vadd.f32 %v9128, %v9129
        %v9131 = vrot.slane %v9130, 2
        %v9132 = vadd.f32 %v9130, %v9131
        %v9133 = vrot.slane %v9132, 1
        %v9134 = vadd.f32 %v9132, %v9133
        %v9135 = vsel %vm712, %v8722, 0.0
        %v9136 = vsel %vm712, %v8723, 0.0
        %v9137 = vadd.f32 %v9135, %v9136
        %v9138 = vrot.slane %v9137, 4
        %v9139 = vadd.f32 %v9137, %v9138
        %v9140 = vrot.slane %v9139, 2
        %v9141 = vadd.f32 %v9139, %v9140
        %v9142 = vrot.slane %v9141, 1
        %v9143 = vadd.f32 %v9141, %v9142
        %v9144 = vsel %vm712, %v8724, 0.0
        %v9145 = vsel %vm712, %v8725, 0.0
        %v9146 = vadd.f32 %v9144, %v9145
        %v9147 = vrot.slane %v9146, 4
        %v9148 = vadd.f32 %v9146, %v9147
        %v9149 = vrot.slane %v9148, 2
        %v9150 = vadd.f32 %v9148, %v9149
        %v9151 = vrot.slane %v9150, 1
        %v9152 = vadd.f32 %v9150, %v9151
        %v9153 = vsel %vm712, %v8726, 0.0
        %v9154 = vsel %vm712, %v8727, 0.0
        %v9155 = vadd.f32 %v9153, %v9154
        %v9156 = vrot.slane %v9155, 4
        %v9157 = vadd.f32 %v9155, %v9156
        %v9158 = vrot.slane %v9157, 2
        %v9159 = vadd.f32 %v9157, %v9158
        %v9160 = vrot.slane %v9159, 1
        %v9161 = vadd.f32 %v9159, %v9160
        %v9162 = vsel %vm712, %v8728, 0.0
        %v9163 = vsel %vm712, %v8729, 0.0
        %v9164 = vadd.f32 %v9162, %v9163
        %v9165 = vrot.slane %v9164, 4
        %v9166 = vadd.f32 %v9164, %v9165
        %v9167 = vrot.slane %v9166, 2
        %v9168 = vadd.f32 %v9166, %v9167
        %v9169 = vrot.slane %v9168, 1
        %v9170 = vadd.f32 %v9168, %v9169
        %v9171 = vsel %vm712, %v8730, 0.0
        %v9172 = vsel %vm712, %v8731, 0.0
        %v9173 = vadd.f32 %v9171, %v9172
        %v9174 = vrot.slane %v9173, 4
        %v9175 = vadd.f32 %v9173, %v9174
        %v9176 = vrot.slane %v9175, 2
        %v9177 = vadd.f32 %v9175, %v9176
        %v9178 = vrot.slane %v9177, 1
        %v9179 = vadd.f32 %v9177, %v9178
        %v9180 = vmax.f32 %v9044, 1e-20
        %v9181 = vmax.f32 %v9053, 1e-20
        %v9182 = vmax.f32 %v9062, 1e-20
        %v9183 = vmax.f32 %v9071, 1e-20
        %v9184 = vmax.f32 %v9080, 1e-20
        %v9185 = vmax.f32 %v9089, 1e-20
        %v9186 = vmax.f32 %v9098, 1e-20
        %v9187 = vmax.f32 %v9107, 1e-20
        %v9188 = vmax.f32 %v9116, 1e-20
        %v9189 = vmax.f32 %v9125, 1e-20
        %v9190 = vmax.f32 %v9134, 1e-20
        %v9191 = vmax.f32 %v9143, 1e-20
        %v9192 = vmax.f32 %v9152, 1e-20
        %v9193 = vmax.f32 %v9161, 1e-20
        %v9194 = vmax.f32 %v9170, 1e-20
        %v9195 = vmax.f32 %v9179, 1e-20
        %v9196 = vrcp.pop %v9180
        %v9197 = vmul.f32 %v8900, %v9196
        %v9198 = vrcp.pop %v9181
        %v9199 = vmul.f32 %v8909, %v9198
        %v9200 = vrcp.pop %v9182
        %v9201 = vmul.f32 %v8918, %v9200
        %v9202 = vrcp.pop %v9183
        %v9203 = vmul.f32 %v8927, %v9202
        %v9204 = vrcp.pop %v9184
        %v9205 = vmul.f32 %v8936, %v9204
        %v9206 = vrcp.pop %v9185
        %v9207 = vmul.f32 %v8945, %v9206
        %v9208 = vrcp.pop %v9186
        %v9209 = vmul.f32 %v8954, %v9208
        %v9210 = vrcp.pop %v9187
        %v9211 = vmul.f32 %v8963, %v9210
        %v9212 = vrcp.pop %v9188
        %v9213 = vmul.f32 %v8972, %v9212
        %v9214 = vrcp.pop %v9189
        %v9215 = vmul.f32 %v8981, %v9214
        %v9216 = vrcp.pop %v9190
        %v9217 = vmul.f32 %v8990, %v9216
        %v9218 = vrcp.pop %v9191
        %v9219 = vmul.f32 %v8999, %v9218
        %v9220 = vrcp.pop %v9192
        %v9221 = vmul.f32 %v9008, %v9220
        %v9222 = vrcp.pop %v9193
        %v9223 = vmul.f32 %v9017, %v9222
        %v9224 = vrcp.pop %v9194
        %v9225 = vmul.f32 %v9026, %v9224
        %v9226 = vrcp.pop %v9195
        %v9227 = vmul.f32 %v9035, %v9226
        %v9228 = vpack.c.bf16 %v9197, %v9197
        %v9229 = vpack.c.bf16 %v9199, %v9199
        %v9230 = vpack.c.bf16 %v9201, %v9201
        %v9231 = vpack.c.bf16 %v9203, %v9203
        %v9232 = vpack.c.bf16 %v9205, %v9205
        %v9233 = vpack.c.bf16 %v9207, %v9207
        %v9234 = vpack.c.bf16 %v9209, %v9209
        %v9235 = vpack.c.bf16 %v9211, %v9211
        %v9236 = vpack.c.bf16 %v9213, %v9213
        %v9237 = vpack.c.bf16 %v9215, %v9215
        %v9238 = vpack.c.bf16 %v9217, %v9217
        %v9239 = vpack.c.bf16 %v9219, %v9219
        %v9240 = vpack.c.bf16 %v9221, %v9221
        %v9241 = vpack.c.bf16 %v9223, %v9223
        %v9242 = vpack.c.bf16 %v9225, %v9225
        %v9243 = vpack.c.bf16 %v9227, %v9227
        %v9244 = vlaneseq
        %v9245 = vshrl.u32 %v9244, 7
        %v9246 = vsub.s32 0, %v9245
        %v9247 = vrot.slane %v7801, %v9246
        %v9264 = vunpack.c.l.b16 %v9228
        %v9265 = vunpack.c.l.b16 %v9229
        %v9266 = vunpack.c.l.b16 %v9230
        %v9267 = vunpack.c.l.b16 %v9231
        %v9268 = vunpack.c.l.b16 %v9232
        %v9269 = vunpack.c.l.b16 %v9233
        %v9270 = vunpack.c.l.b16 %v9234
        %v9271 = vunpack.c.l.b16 %v9235
        %v9272 = vunpack.c.l.b16 %v9236
        %v9273 = vunpack.c.l.b16 %v9237
        %v9274 = vunpack.c.l.b16 %v9238
        %v9275 = vunpack.c.l.b16 %v9239
        %v9276 = vunpack.c.l.b16 %v9240
        %v9277 = vunpack.c.l.b16 %v9241
        %v9278 = vunpack.c.l.b16 %v9242
        %v9279 = vunpack.c.l.b16 %v9243
        %v9280 = vsel %vm5257, %v9265, %v9264
        %v9281 = vsel %vm5259, %v9266, %v9280
        %v9282 = vsel %vm5261, %v9267, %v9281
        %v9283 = vsel %vm5263, %v9268, %v9282
        %v9284 = vsel %vm5265, %v9269, %v9283
        %v9285 = vsel %vm5267, %v9270, %v9284
        %v9286 = vsel %vm5269, %v9271, %v9285
        %v9287 = vsel %vm5257, %v9273, %v9272
        %v9288 = vsel %vm5259, %v9274, %v9287
        %v9289 = vsel %vm5261, %v9275, %v9288
        %v9290 = vsel %vm5263, %v9276, %v9289
        %v9291 = vsel %vm5265, %v9277, %v9290
        %v9292 = vsel %vm5267, %v9278, %v9291
        %v9293 = vsel %vm5269, %v9279, %v9292
        %v9294 = vpack.c.b16 %v9293, %v9286
        %9297 = vrot.lane.b32.xlu0 %v7853, 96
        %v9298 = vpop.permute.xlu0 %9297
        %9299 = vrot.lane.b32.xlu0 %v7855, 96
        %v9300 = vpop.permute.xlu0 %9299
        %v9304 = vsel %vm712, %v9294, 0
        %9306 = vmatprep.subr.bf16.mxu0 0
        %9307 = vmatpush1.bf16.msra.mxu0 %v9298
        %9308 = vmatprep.subr.bf16.mxu0 0
        %9309 = vmatpush1.bf16.msra.mxu0 %v9300
        %9310 = vmatprep.subr.bf16.mxu0 0
        %9311 = vmatpush1.bf16.msra.mxu0 0
        %9312 = vmatprep.subr.bf16.mxu0 0
        %9313 = vmatpush1.bf16.msra.mxu0 0
        %9314 = vmatprep.subr.bf16.mxu0 0
        %9315 = vmatpush1.bf16.msra.mxu0 0
        %9316 = vmatprep.subr.bf16.mxu0 0
        %9317 = vmatpush1.bf16.msra.mxu0 0
        %9318 = vmatprep.subr.bf16.mxu0 0
        %9319 = vmatpush1.bf16.msra.mxu0 0
        %9320 = vmatprep.subr.bf16.mxu0 0
        %9321 = vmatpush1.bf16.msra.mxu0 0
        %9322 = vmatprep.subr.bf16.mxu0 0
        %9323 = vmatpush1.bf16.msra.mxu0 0
        %9324 = vmatprep.subr.bf16.mxu0 0
        %9325 = vmatpush1.bf16.msra.mxu0 0
        %9326 = vmatprep.subr.bf16.mxu0 0
        %9327 = vmatpush1.bf16.msra.mxu0 0
        %9328 = vmatprep.subr.bf16.mxu0 0
        %9329 = vmatpush1.bf16.msra.mxu0 0
        %9330 = vmatprep.subr.bf16.mxu0 0
        %9331 = vmatpush1.bf16.msra.mxu0 0
        %9332 = vmatprep.subr.bf16.mxu0 0
        %9333 = vmatpush1.bf16.msra.mxu0 0
        %9334 = vmatprep.subr.bf16.mxu0 0
        %9335 = vmatpush1.bf16.msra.mxu0 0
        %9336 = vmatprep.subr.bf16.mxu0 0
        %9337 = vmatpush1.bf16.msra.mxu0 0
        %9338 = vmatprep.mubr.bf16.mxu0 0
        %9339 = vmatmul.mubr.bf16.gmra.mrb[0].mxu0 %v9304
        %v9340 = vpop.f32.mrb[0].mxu0
        %v9341 = vadd.f32 %v9247, %v9340
        %v9342 = vpop.f32.mrb[0].mxu0
        %v9343 = vpop.f32.mrb[0].mxu0
        %v9344 = vadd.f32 %v9247, %v9343
        %v9345 = vpop.f32.mrb[0].mxu0
        %9346 = vdwg.mxu0
        %v9347 = vadd.f32 %v9341, %v7915
        %v9348 = vadd.f32 %v9344, %v7919
        %v9349 = vxor.u32 %v9347, 2147483648
        %v9350 = vxor.u32 %v9348, 2147483648
        %v9351 = vmul.f32 %v9349, 1.442695
        %v9352 = vpow.pop %v9351
        %v9353 = vmul.f32 %v9350, 1.442695
        %v9354 = vpow.pop %v9353
        %v9355 = vadd.f32 %v9352, 1.0
        %v9356 = vadd.f32 %v9354, 1.0
        %v9357 = vrcp.pop %v9355
        %v9358 = vmul.f32 1.0, %v9357
        %v9359 = vrcp.pop %v9356
        %v9360 = vmul.f32 1.0, %v9359
        %v9377 = vsel %vm5257, %v9199, %v9197
        %v9378 = vsel %vm5259, %v9201, %v9377
        %v9379 = vsel %vm5261, %v9203, %v9378
        %v9380 = vsel %vm5263, %v9205, %v9379
        %v9381 = vsel %vm5265, %v9207, %v9380
        %v9382 = vsel %vm5267, %v9209, %v9381
        %v9383 = vsel %vm5269, %v9211, %v9382
        %v9384 = vsel %vm5257, %v9215, %v9213
        %v9385 = vsel %vm5259, %v9217, %v9384
        %v9386 = vsel %vm5261, %v9219, %v9385
        %v9387 = vsel %vm5263, %v9221, %v9386
        %v9388 = vsel %vm5265, %v9223, %v9387
        %v9389 = vsel %vm5267, %v9225, %v9388
        %v9390 = vsel %vm5269, %v9227, %v9389
        %9391 = vrot.lane.b32.xlu0 %v9383, 96
        %v9392 = vpop.permute.xlu0 %9391
        %9393 = vrot.lane.b32.xlu0 %v9390, 96
        %v9394 = vpop.permute.xlu0 %9393
        %v9397 = vsub.f32 %v7913, %v9392
        %v9398 = vsub.f32 %v7917, %v9394
        %9401 = vrot.lane.b32.xlu0 %v9397, 32
        %v9402 = vpop.permute.xlu0 %9401
        %9403 = vrot.lane.b32.xlu0 %v9398, 32
        %v9404 = vpop.permute.xlu0 %9403
        %v9407 = vmul.f32 %v9358, %v9402
        %v9408 = vmul.f32 %v9360, %v9404
        %v9411 = vrot.slane %v9407, 1
        %v9412 = vrot.slane %v9407, 2
        %v9413 = vrot.slane %v9407, 3
        %v9414 = vrot.slane %v9407, 4
        %v9415 = vrot.slane %v9407, 5
        %v9416 = vrot.slane %v9407, 6
        %v9417 = vrot.slane %v9407, 7
        %v9418 = vrot.slane %v9408, 1
        %v9419 = vrot.slane %v9408, 2
        %v9420 = vrot.slane %v9408, 3
        %v9421 = vrot.slane %v9408, 4
        %v9422 = vrot.slane %v9408, 5
        %v9423 = vrot.slane %v9408, 6
        %v9424 = vrot.slane %v9408, 7
        %v9441 = vadd.f32 %v9197, %v9407
        %v9442 = vadd.f32 %v9199, %v9411
        %v9443 = vadd.f32 %v9201, %v9412
        %v9444 = vadd.f32 %v9203, %v9413
        %v9445 = vadd.f32 %v9205, %v9414
        %v9446 = vadd.f32 %v9207, %v9415
        %v9447 = vadd.f32 %v9209, %v9416
        %v9448 = vadd.f32 %v9211, %v9417
        %v9449 = vadd.f32 %v9213, %v9408
        %v9450 = vadd.f32 %v9215, %v9418
        %v9451 = vadd.f32 %v9217, %v9419
        %v9452 = vadd.f32 %v9219, %v9420
        %v9453 = vadd.f32 %v9221, %v9421
        %v9454 = vadd.f32 %v9223, %v9422
        %v9455 = vadd.f32 %v9225, %v9423
        %v9456 = vadd.f32 %v9227, %v9424
        %v9457 = vpack.c.bf16 %v9441, %v9441
        %v9458 = vpack.c.bf16 %v9442, %v9442
        %v9459 = vpack.c.bf16 %v9443, %v9443
        %v9460 = vpack.c.bf16 %v9444, %v9444
        %v9461 = vpack.c.bf16 %v9445, %v9445
        %v9462 = vpack.c.bf16 %v9446, %v9446
        %v9463 = vpack.c.bf16 %v9447, %v9447
        %v9464 = vpack.c.bf16 %v9448, %v9448
        %v9465 = vpack.c.bf16 %v9449, %v9449
        %v9466 = vpack.c.bf16 %v9450, %v9450
        %v9467 = vpack.c.bf16 %v9451, %v9451
        %v9468 = vpack.c.bf16 %v9452, %v9452
        %v9469 = vpack.c.bf16 %v9453, %v9453
        %v9470 = vpack.c.bf16 %v9454, %v9454
        %v9471 = vpack.c.bf16 %v9455, %v9455
        %v9472 = vpack.c.bf16 %v9456, %v9456
        %v9473 = vlaneseq
        %v9474 = vshrl.u32 %v9473, 7
        %v9475 = vsub.s32 1, %v9474
        %v9476 = vrot.slane %v7801, %v9475
        %v9493 = vunpack.c.l.b16 %v9457
        %v9494 = vunpack.c.l.b16 %v9458
        %v9495 = vunpack.c.l.b16 %v9459
        %v9496 = vunpack.c.l.b16 %v9460
        %v9497 = vunpack.c.l.b16 %v9461
        %v9498 = vunpack.c.l.b16 %v9462
        %v9499 = vunpack.c.l.b16 %v9463
        %v9500 = vunpack.c.l.b16 %v9464
        %v9501 = vunpack.c.l.b16 %v9465
        %v9502 = vunpack.c.l.b16 %v9466
        %v9503 = vunpack.c.l.b16 %v9467
        %v9504 = vunpack.c.l.b16 %v9468
        %v9505 = vunpack.c.l.b16 %v9469
        %v9506 = vunpack.c.l.b16 %v9470
        %v9507 = vunpack.c.l.b16 %v9471
        %v9508 = vunpack.c.l.b16 %v9472
        %v9509 = vrot.slane %v9494, 7
        %v9510 = vsel %vm5257, %v9509, %v9493
        %v9511 = vrot.slane %v9495, 6
        %v9512 = vsel %vm5259, %v9511, %v9510
        %v9513 = vrot.slane %v9496, 5
        %v9514 = vsel %vm5261, %v9513, %v9512
        %v9515 = vrot.slane %v9497, 4
        %v9516 = vsel %vm5263, %v9515, %v9514
        %v9517 = vrot.slane %v9498, 3
        %v9518 = vsel %vm5265, %v9517, %v9516
        %v9519 = vrot.slane %v9499, 2
        %v9520 = vsel %vm5267, %v9519, %v9518
        %v9521 = vrot.slane %v9500, 1
        %v9522 = vsel %vm5269, %v9521, %v9520
        %v9523 = vrot.slane %v9502, 7
        %v9524 = vsel %vm5257, %v9523, %v9501
        %v9525 = vrot.slane %v9503, 6
        %v9526 = vsel %vm5259, %v9525, %v9524
        %v9527 = vrot.slane %v9504, 5
        %v9528 = vsel %vm5261, %v9527, %v9526
        %v9529 = vrot.slane %v9505, 4
        %v9530 = vsel %vm5263, %v9529, %v9528
        %v9531 = vrot.slane %v9506, 3
        %v9532 = vsel %vm5265, %v9531, %v9530
        %v9533 = vrot.slane %v9507, 2
        %v9534 = vsel %vm5267, %v9533, %v9532
        %v9535 = vrot.slane %v9508, 1
        %v9536 = vsel %vm5269, %v9535, %v9534
        %v9537 = vpack.c.b16 %v9536, %v9522
        %9538 = vrot.lane.b32.xlu0 %v7853, 64
        %v9539 = vpop.permute.xlu0 %9538
        %9540 = vrot.lane.b32.xlu0 %v7855, 64
        %v9541 = vpop.permute.xlu0 %9540
        %v9545 = vsel %vm712, %v9537, 0
        %9547 = vmatprep.subr.bf16.mxu0 0
        %9548 = vmatpush1.bf16.msra.mxu0 %v9539
        %9549 = vmatprep.subr.bf16.mxu0 0
        %9550 = vmatpush1.bf16.msra.mxu0 %v9541
        %9551 = vmatprep.subr.bf16.mxu0 0
        %9552 = vmatpush1.bf16.msra.mxu0 0
        %9553 = vmatprep.subr.bf16.mxu0 0
        %9554 = vmatpush1.bf16.msra.mxu0 0
        %9555 = vmatprep.subr.bf16.mxu0 0
        %9556 = vmatpush1.bf16.msra.mxu0 0
        %9557 = vmatprep.subr.bf16.mxu0 0
        %9558 = vmatpush1.bf16.msra.mxu0 0
        %9559 = vmatprep.subr.bf16.mxu0 0
        %9560 = vmatpush1.bf16.msra.mxu0 0
        %9561 = vmatprep.subr.bf16.mxu0 0
        %9562 = vmatpush1.bf16.msra.mxu0 0
        %9563 = vmatprep.subr.bf16.mxu0 0
        %9564 = vmatpush1.bf16.msra.mxu0 0
        %9565 = vmatprep.subr.bf16.mxu0 0
        %9566 = vmatpush1.bf16.msra.mxu0 0
        %9567 = vmatprep.subr.bf16.mxu0 0
        %9568 = vmatpush1.bf16.msra.mxu0 0
        %9569 = vmatprep.subr.bf16.mxu0 0
        %9570 = vmatpush1.bf16.msra.mxu0 0
        %9571 = vmatprep.subr.bf16.mxu0 0
        %9572 = vmatpush1.bf16.msra.mxu0 0
        %9573 = vmatprep.subr.bf16.mxu0 0
        %9574 = vmatpush1.bf16.msra.mxu0 0
        %9575 = vmatprep.subr.bf16.mxu0 0
        %9576 = vmatpush1.bf16.msra.mxu0 0
        %9577 = vmatprep.subr.bf16.mxu0 0
        %9578 = vmatpush1.bf16.msra.mxu0 0
        %9579 = vmatprep.mubr.bf16.mxu0 0
        %9580 = vmatmul.mubr.bf16.gmra.mrb[0].mxu0 %v9545
        %v9581 = vpop.f32.mrb[0].mxu0
        %v9582 = vadd.f32 %v9476, %v9581
        %v9583 = vpop.f32.mrb[0].mxu0
        %v9584 = vpop.f32.mrb[0].mxu0
        %v9585 = vadd.f32 %v9476, %v9584
        %v9586 = vpop.f32.mrb[0].mxu0
        %9587 = vdwg.mxu0
        %v9588 = vadd.f32 %v7798, %v9582
        %v9589 = vadd.f32 %v7799, %v9585
        %v9590 = vsel %vm712, %v9588, 0.0
        %9591 = vadd.xlane.f32.xlu0 %v9590
        %v9592 = vpop.xlane.xlu0 %9591
        %v9593 = vsel %vm712, %v9589, 0.0
        %9594 = vadd.xlane.f32.xlu0 %v9593
        %v9595 = vpop.xlane.xlu0 %9594
        %v9596 = vmul.f32 %v9592, %v1914
        %v9597 = vmul.f32 %v9595, %v1914
        %v9598 = vsub.f32 %v9588, %v9596
        %v9599 = vsub.f32 %v9589, %v9597
        %v9600 = vmul.f32 %v9598, %v9598
        %v9601 = vmul.f32 %v9599, %v9599
        %v9602 = vsel %vm712, %v9600, 0.0
        %9603 = vadd.xlane.f32.xlu0 %v9602
        %v9604 = vpop.xlane.xlu0 %9603
        %v9605 = vsel %vm712, %v9601, 0.0
        %9606 = vadd.xlane.f32.xlu0 %v9605
        %v9607 = vpop.xlane.xlu0 %9606
        %v9608 = vmul.f32 %v9604, %v1914
        %v9609 = vmul.f32 %v9607, %v1914
        %v9610 = vadd.f32 %v9608, 1e-05
        %v9611 = vadd.f32 %v9609, 1e-05
        %v9612 = vrsqrt.pop %v9610
        %v9613 = vrsqrt.pop %v9611
        %v9614 = vmul.f32 %v9598, %v9612
        %v9615 = vmul.f32 %v9599, %v9613
        %v9616 = vlaneseq
        %v9617 = vshrl.u32 %v9616, 7
        %v9618 = vsub.s32 5, %v9617
        %v9619 = vrot.slane %v7801, %v9618
        %v9620 = vmul.f32 %v9614, %v9619
        %v9621 = vmul.f32 %v9615, %v9619
        %v9622 = vlaneseq
        %v9623 = vshrl.u32 %v9622, 7
        %v9624 = vsub.s32 6, %v9623
        %v9625 = vrot.slane %v7801, %v9624
        %v9626 = vadd.f32 %v9620, %v9625
        %v9627 = vadd.f32 %v9621, %v9625
        %s9628 = scalar_lea.vmem %s7, 64
        %v9629 = vld [vmem:[%s9628] sm:$0xff]
        %v9630 = vld [vmem:[%s9628 + $0x8] sm:$0xff]
        %v9631 = vld [vmem:[%s9628 + $0x10] sm:$0xff]
        %v9632 = vld [vmem:[%s9628 + $0x18] sm:$0xff]
        %v9633 = vpack.c.bf16 %v9627, %v9626
        %v9634 = vpack.c.bf16 %v9630, %v9629
        %v9635 = vpack.c.bf16 %v9632, %v9631
        %v9636 = vlaneseq
        %v9637 = vshrl.u32 %v9636, 7
        %v9638 = vsub.s32 1, %v9637
        %v9639 = vrot.slane %v7803, %v9638
        %v9641 = vsel %vm712, %v9633, 0
        %9643 = vmatprep.subr.bf16.mxu0 0
        %9644 = vmatpush1.bf16.msra.mxu0 %v9634
        %9645 = vmatprep.subr.bf16.mxu0 0
        %9646 = vmatpush1.bf16.msra.mxu0 %v9635
        %9647 = vmatprep.subr.bf16.mxu0 0
        %9648 = vmatpush1.bf16.msra.mxu0 0
        %9649 = vmatprep.subr.bf16.mxu0 0
        %9650 = vmatpush1.bf16.msra.mxu0 0
        %9651 = vmatprep.subr.bf16.mxu0 0
        %9652 = vmatpush1.bf16.msra.mxu0 0
        %9653 = vmatprep.subr.bf16.mxu0 0
        %9654 = vmatpush1.bf16.msra.mxu0 0
        %9655 = vmatprep.subr.bf16.mxu0 0
        %9656 = vmatpush1.bf16.msra.mxu0 0
        %9657 = vmatprep.subr.bf16.mxu0 0
        %9658 = vmatpush1.bf16.msra.mxu0 0
        %9659 = vmatprep.subr.bf16.mxu0 0
        %9660 = vmatpush1.bf16.msra.mxu0 0
        %9661 = vmatprep.subr.bf16.mxu0 0
        %9662 = vmatpush1.bf16.msra.mxu0 0
        %9663 = vmatprep.subr.bf16.mxu0 0
        %9664 = vmatpush1.bf16.msra.mxu0 0
        %9665 = vmatprep.subr.bf16.mxu0 0
        %9666 = vmatpush1.bf16.msra.mxu0 0
        %9667 = vmatprep.subr.bf16.mxu0 0
        %9668 = vmatpush1.bf16.msra.mxu0 0
        %9669 = vmatprep.subr.bf16.mxu0 0
        %9670 = vmatpush1.bf16.msra.mxu0 0
        %9671 = vmatprep.subr.bf16.mxu0 0
        %9672 = vmatpush1.bf16.msra.mxu0 0
        %9673 = vmatprep.subr.bf16.mxu0 0
        %9674 = vmatpush1.bf16.msra.mxu0 0
        %9675 = vmatprep.mubr.bf16.mxu0 0
        %9676 = vmatmul.mubr.bf16.gmra.mrb[0].mxu0 %v9641
        %v9677 = vpop.f32.mrb[0].mxu0
        %v9678 = vadd.f32 %v9639, %v9677
        %v9679 = vpop.f32.mrb[0].mxu0
        %v9680 = vpop.f32.mrb[0].mxu0
        %v9681 = vadd.f32 %v9639, %v9680
        %v9682 = vpop.f32.mrb[0].mxu0
        %9683 = vdwg.mxu0
        %v9684 = vmax.f32 %v9678, 0.0
        %v9685 = vmax.f32 %v9681, 0.0
        %s9686 = scalar_lea.vmem %s8, 256
        %v9687 = vld [vmem:[%s9686] sm:$0xff]
        %v9688 = vld [vmem:[%s9686 + $0x8] sm:$0xff]
        %v9689 = vld [vmem:[%s9686 + $0x10] sm:$0xff]
        %v9690 = vld [vmem:[%s9686 + $0x18] sm:$0xff]
        %v9691 = vld [vmem:[%s9686 + $0x20] sm:$0xff]
        %v9692 = vld [vmem:[%s9686 + $0x28] sm:$0xff]
        %v9693 = vld [vmem:[%s9686 + $0x30] sm:$0xff]
        %v9694 = vld [vmem:[%s9686 + $0x38] sm:$0xff]
        %v9695 = vld [vmem:[%s9686 + $0x40] sm:$0xff]
        %v9696 = vld [vmem:[%s9686 + $0x48] sm:$0xff]
        %v9697 = vld [vmem:[%s9686 + $0x50] sm:$0xff]
        %v9698 = vld [vmem:[%s9686 + $0x58] sm:$0xff]
        %v9699 = vld [vmem:[%s9686 + $0x60] sm:$0xff]
        %v9700 = vld [vmem:[%s9686 + $0x68] sm:$0xff]
        %v9701 = vld [vmem:[%s9686 + $0x70] sm:$0xff]
        %v9702 = vld [vmem:[%s9686 + $0x78] sm:$0xff]
        %v9703 = vpack.c.bf16 %v9685, %v9684
        %v9704 = vpack.c.bf16 %v9688, %v9687
        %v9705 = vpack.c.bf16 %v9690, %v9689
        %v9706 = vpack.c.bf16 %v9692, %v9691
        %v9707 = vpack.c.bf16 %v9694, %v9693
        %v9708 = vpack.c.bf16 %v9696, %v9695
        %v9709 = vpack.c.bf16 %v9698, %v9697
        %v9710 = vpack.c.bf16 %v9700, %v9699
        %v9711 = vpack.c.bf16 %v9702, %v9701
        %9712 = vmatprep.subr.bf16.mxu0 0
        %9713 = vmatpush1.bf16.msra.mxu0 %v9704
        %9714 = vmatprep.subr.bf16.mxu0 0
        %9715 = vmatpush1.bf16.msra.mxu0 %v9705
        %9716 = vmatprep.subr.bf16.mxu0 0
        %9717 = vmatpush1.bf16.msra.mxu0 %v9706
        %9718 = vmatprep.subr.bf16.mxu0 0
        %9719 = vmatpush1.bf16.msra.mxu0 %v9707
        %9720 = vmatprep.subr.bf16.mxu0 0
        %9721 = vmatpush1.bf16.msra.mxu0 %v9708
        %9722 = vmatprep.subr.bf16.mxu0 0
        %9723 = vmatpush1.bf16.msra.mxu0 %v9709
        %9724 = vmatprep.subr.bf16.mxu0 0
        %9725 = vmatpush1.bf16.msra.mxu0 %v9710
        %9726 = vmatprep.subr.bf16.mxu0 0
        %9727 = vmatpush1.bf16.msra.mxu0 %v9711
        %9728 = vmatprep.subr.bf16.mxu0 0
        %9729 = vmatpush1.bf16.msra.mxu0 0
        %9730 = vmatprep.subr.bf16.mxu0 0
        %9731 = vmatpush1.bf16.msra.mxu0 0
        %9732 = vmatprep.subr.bf16.mxu0 0
        %9733 = vmatpush1.bf16.msra.mxu0 0
        %9734 = vmatprep.subr.bf16.mxu0 0
        %9735 = vmatpush1.bf16.msra.mxu0 0
        %9736 = vmatprep.subr.bf16.mxu0 0
        %9737 = vmatpush1.bf16.msra.mxu0 0
        %9738 = vmatprep.subr.bf16.mxu0 0
        %9739 = vmatpush1.bf16.msra.mxu0 0
        %9740 = vmatprep.subr.bf16.mxu0 0
        %9741 = vmatpush1.bf16.msra.mxu0 0
        %9742 = vmatprep.subr.bf16.mxu0 0
        %9743 = vmatpush1.bf16.msra.mxu0 0
        %9744 = vmatprep.mubr.bf16.mxu0 0
        %9745 = vmatmul.mubr.bf16.gmra.mrb[0].mxu0 %v9703
        %v9746 = vpop.f32.mrb[0].mxu0
        %v9747 = vadd.f32 0.0, %v9746
        %v9748 = vpop.f32.mrb[0].mxu0
        %v9749 = vpop.f32.mrb[0].mxu0
        %v9750 = vadd.f32 0.0, %v9749
        %v9751 = vpop.f32.mrb[0].mxu0
        %9752 = vdwg.mxu0
        %v9753 = vadd.f32 %v9588, %v9747
        %v9754 = vadd.f32 %v9589, %v9750
        %v9755 = vlaneseq
        %v9756 = vshrl.u32 %v9755, 7
        %v9757 = vsub.s32 2, %v9756
        %v9758 = vrot.slane %v7801, %v9757
        %v9759 = vadd.f32 %v9753, %v9758
        %v9760 = vadd.f32 %v9754, %v9758
        %9761 = vst.msk [vmem:[%s409] sm:$0xff] %vm712, %v9759
        %9762 = vst.msk [vmem:[%s409 + $0x8] sm:$0xff] %vm712, %v9760
        %s9763 = sand.u32 %s279, 1
        %s9764 = scalar_lea.sflag [#allocation4], %s9763
        %s9765 = sand.u32 %s279, 1
        %s9766 = smul.addr %s9765, 16
        %s9767 = scalar_lea.vmem [#allocation3], %s9766
        // Predicated region
        $region65: #{global_interactor_forward.1} parent=63 // pred_check
          %p9768 = pneg %p289
        $region66: #{global_interactor_forward.1} parent=63 // pred_check_branch
          %9770 = sbr.rel (%p9768) target = $region68
        $region67: #{global_interactor_forward.1} parent=63 // pred_region
          %s9772 = ssub.s32 256, 256
          %9773 = vsyncadd %s9764, %s9772
          %s9774 = smul.addr %s25, 2
          %s9775 = smul.addr %s9774, 128
          %s9776 = scalar_lea.hbm %s11, %s9775
          %s9777 = sshll.u32 %s9767, 4
          %s9778 = int_to_ptr.vmem [resolvable:$true] %s9777
          %9783 = dma.vmem_to_hbm [thread:$0]  %s9778, 256, %s9776, %s9764, 128, 128, 8
        $region68: #{global_interactor_forward.1} parent=63 // pred_fallthru
          _
      $region64: #{global_interactor_forward.1} parent=5 // pred_fallthru
        _
      %p9784 = scmp.le.s32.totalorder 2, %s20
      // Predicated region
      $region69: #{global_interactor_forward.1} parent=5 // pred_check
        %p9785 = pneg %p9784
      $region70: #{global_interactor_forward.1} parent=5 // pred_check_branch
        %9787 = sbr.rel (%p9785) target = $region72
      $region71: #{global_interactor_forward.1} parent=5 // pred_region
        %s9788 = ssub.s32 %s20, 2
        // Predicated region
        $region73: #{global_interactor_forward.1} parent=71 // pred_check
          %p9789 = pneg %p295
        $region74: #{global_interactor_forward.1} parent=71 // pred_check_branch
          %9791 = sbr.rel (%p9789) target = $region76
        $region75: #{global_interactor_forward.1} parent=71 // pred_region
          %s9792 = sand.u32 %s280, 1
          %s9793 = scalar_lea.sflag [#allocation4], %s9792
          %s9794 = sand.u32 %s280, 1
          %s9795 = smul.addr %s9794, 16
          %s9796 = scalar_lea.vmem [#allocation3], %s9795
          %9797 = dma.done %s9793, 256
        $region76: #{global_interactor_forward.1} parent=71 // pred_fallthru
          _
      $region72: #{global_interactor_forward.1} parent=5 // pred_fallthru
        _
    $region6: #{global_interactor_forward.1} parent=1 // loop_footer
      %s24 = sadd.s32 1, %s20
    $region7: #{global_interactor_forward.1} parent=1 // loop_footer_branch
      %19 = sbr.rel target = $region3
    $region8: #{global_interactor_forward.1} parent=1 // loop_exit
      _
    %9798 = vsyncpa [#allocation4], 1
    %s9799 = scalar_lea.sflag [#allocation4], 1
    %9800 = vsyncpa %s9799, 1

</llo_original>
